<compile_context>
chip_gen: v5e
topology: v5e:2x2
jax: 0.10.0
libtpu: 0.0.40
codegen_flags: <defaults>
</compile_context>

<pallas_src>
import functools

import jax
import jax.numpy as jnp
from jax import lax
from jax.experimental import pallas as pl
from jax.experimental.pallas import tpu as pltpu

_EPS = 1e-12


def _round_up(x, m):
    return (x + m - 1) // m * m


def _smish(y):
    # Smish(y) = y * tanh(log(1 + sigmoid(y))).
    # sigmoid expressed through tanh: mathematically identical, numerically robust
    # (no exp overflow), and the whole chain (tanh/log1p/tanh) stays on the EUP slot.
    sig = 0.5 * (jnp.tanh(0.5 * y) + 1.0)
    return y * jnp.tanh(jnp.log1p(sig))


def _power_iteration(w_mat, u):
    """One power iteration, identical to torch.nn.utils.spectral_norm (training mode)."""
    v = w_mat.T @ u
    v = v / (jnp.linalg.norm(v) + _EPS)
    u_new = w_mat @ v
    u_new = u_new / (jnp.linalg.norm(u_new) + _EPS)
    sigma = u_new @ (w_mat @ v)
    return sigma, u_new


def _vmem_limit_bytes():
    # Re-derive the VMEM budget per chip: ~96 MiB on v5e/v6e (128 MiB physical),
    # ~48 MiB on v7x (64 MiB physical).  Fall back conservatively if the query fails.
    try:
        cap = int(pltpu.get_tpu_info().vmem_capacity_bytes)
    except Exception:
        cap = 64 * 1024 * 1024
    return min(cap * 3 // 4, 100 * 1024 * 1024)


def _pick_d_tile(Do, Ho, Wo, Cin, Hp, Wp, kD, stride, K_pad, Cout_pad, out_bytes, budget):
    """Largest output-depth tile whose double-buffered blocks fit the VMEM budget."""
    fallback = None
    for Dt in range(Do, 0, -1):
        if Do % Dt:
            continue
        M_tile = Dt * Ho * Wo
        if M_tile % 8:                      # output block second-minor dim must be 8-aligned
            continue
        fallback = Dt                       # smallest valid tile seen so far (loop descends)
        Dhalo = (Dt - 1) * stride + kD
        x_blk = 2 * Dhalo * Hp * Wp * Cin * 2          # bf16 input slab, double-buffered
        o_blk = 2 * M_tile * Cout_pad * out_bytes      # output block, double-buffered
        col = M_tile * K_pad * 2                       # im2col scratch (single buffer)
        w_b = 2 * K_pad * Cout_pad * 2                 # weight block, double-buffered
        if x_blk + o_blk + col + w_b <= budget:
            return Dt
    return fallback if fallback is not None else Do


# ---------------------------------------------------------------------------
# Fused conv + bias + Smish kernel (spectral-norm scale pre-folded into the weight).
# One grid step = one (batch, depth-tile) output block.  The halo'd channels-last
# input slab lives in VMEM; taps are gathered in-kernel into a lane-dense bf16
# im2col scratch, then ONE full-depth MXU matmul produces the tile.
# ---------------------------------------------------------------------------
def _conv_smish_kernel(x_ref, w_ref, b_ref, o_ref, col_ref, *,
                       Dt, Ho, Wo, kD, kH, kW, Cin, K, stride, use_act):
    # x_ref  : (Dhalo, Hp, Wp, Cin)  bf16   halo'd channels-last input slab
    # w_ref  : (K_pad, Cout_pad)     bf16   rows (kd,kh,kw,cin); 1/sigma folded; zero-padded
    # b_ref  : (1, Cout_pad)         f32
    # o_ref  : (M_tile, Cout_pad)    out_dtype
    # col_ref: (M_tile, K_pad)       bf16   VMEM scratch — im2col patches (never in HBM)
    M_tile = Dt * Ho * Wo
    K_pad = col_ref.shape[-1]

    tap = 0
    for kd in range(kD):
        for kh in range(kH):
            for kw in range(kW):
                if stride == 1:
                    slab = x_ref[kd:kd + Dt, kh:kh + Ho, kw:kw + Wo, :]
                else:
                    # TODO(synk): stride > 1 uses strided in-kernel gathers (untested path).
                    slab = x_ref[pl.ds(kd, Dt, stride),
                                 pl.ds(kh, Ho, stride),
                                 pl.ds(kw, Wo, stride), :]
                col_ref[:, tap * Cin:(tap + 1) * Cin] = slab.reshape(M_tile, Cin)
                tap += 1
    if K_pad > K:
        # Keep the lane-padding columns zero (weight pad rows are zero too; this guards
        # against NaN garbage in uninitialized scratch producing NaN * 0).
        col_ref[:, K:] = jnp.zeros((M_tile, K_pad - K), col_ref.dtype)

    # Single full-depth MXU matmul with f32 accumulation; bias + Smish epilogue in f32.
    y = jnp.dot(col_ref[...], w_ref[...], preferred_element_type=jnp.float32)
    y = y + b_ref[...]
    if use_act:
        y = _smish(y)
    o_ref[...] = y.astype(o_ref.dtype)


def spectral_norm_conv3d(x, weight, bias, u, *, stride=1, padding=0, use_act=True,
                         out_dtype=None, channels_last_out=False, d_tile=None):
    """SpectralNormConv3d forward pass.  Returns (out, u_new).

    x: (N, Cin, D, H, W)  weight: (Cout, Cin, kD, kH, kW)  bias: (Cout,)  u: (Cout,)
    """
    N, Cin, D, H, W = x.shape
    Cout, _, kD, kH, kW = weight.shape
    K = Cin * kD * kH * kW
    s, p = stride, padding
    out_dtype = x.dtype if out_dtype is None else out_dtype
    out_bytes = jnp.dtype(out_dtype).itemsize

    # --- spectral norm: one power iteration on the (Cout, K) weight matrix (tiny matvecs
    # -> plain XLA).  1/sigma is folded into the kernel weight below.
    w_mat = weight.reshape(Cout, K).astype(jnp.float32)
    sigma, u_new = _power_iteration(w_mat, u.astype(jnp.float32))
    inv_sigma = 1.0 / sigma

    Do = (D + 2 * p - kD) // s + 1
    Ho = (H + 2 * p - kH) // s + 1
    Wo = (W + 2 * p - kW) // s + 1
    Dp, Hp, Wp = D + 2 * p, H + 2 * p, W + 2 * p
    M = Do * Ho * Wo

    # Lane-dense padding.  v6e/v7x MXUs are 256-wide: pad to 256 once the real dim exceeds
    # 128; 128 is optimal on v5e and sufficient for small channel counts.
    Cout_pad = _round_up(Cout, 256 if Cout > 128 else 128)
    K_pad = _round_up(K, 256 if K > 128 else 128)

    vmem_limit = _vmem_limit_bytes()
    if d_tile is None:
        d_tile = _pick_d_tile(Do, Ho, Wo, Cin, Hp, Wp, kD, s, K_pad, Cout_pad,
                              out_bytes, budget=vmem_limit // 2)
    Dt = int(d_tile)
    if Do % Dt != 0:
        raise ValueError(f"d_tile={Dt} must divide Do={Do}")
    M_tile = Dt * Ho * Wo
    if M_tile % 8 != 0:
        raise ValueError(f"M_tile={M_tile} must be a multiple of 8 (pick another d_tile)")
    n_dt = Do // Dt
    Dhalo = (Dt - 1) * s + kD

    # Channels-last padded input in bf16, then per-depth-tile halo'd slabs so each grid
    # step reads a clean rank-4 block (no im2col in HBM; halo duplication is ~Dhalo/Dt).
    xb = x.astype(jnp.bfloat16)
    xp = jnp.pad(xb, ((0, 0), (0, 0), (p, p), (p, p), (p, p))).transpose(0, 2, 3, 4, 1)
    if n_dt == 1:
        xt = xp[:, :Dhalo]
    else:
        xt = jnp.stack([xp[:, i * Dt * s: i * Dt * s + Dhalo] for i in range(n_dt)], axis=1)
        xt = xt.reshape(N * n_dt, Dhalo, Hp, Wp, Cin)

    # Weight rows ordered (kd, kh, kw, cin) to match the in-kernel gather order; spectral
    # scale folded in f32 before the bf16 cast; zero-padded to (K_pad, Cout_pad).
    w_k = (weight.astype(jnp.float32) * inv_sigma).transpose(2, 3, 4, 1, 0).reshape(K, Cout)
    w_k = jnp.pad(w_k, ((0, K_pad - K), (0, Cout_pad - Cout))).astype(jnp.bfloat16)
    b_row = jnp.pad(bias.astype(jnp.float32).reshape(1, Cout),
                    ((0, 0), (0, Cout_pad - Cout)))

    kernel = functools.partial(
        _conv_smish_kernel, Dt=Dt, Ho=Ho, Wo=Wo, kD=kD, kH=kH, kW=kW,
        Cin=Cin, K=K, stride=s, use_act=use_act)

    out_flat = pl.pallas_call(
        kernel,
        out_shape=jax.ShapeDtypeStruct((N * M, Cout_pad), out_dtype),
        grid_spec=pltpu.PrefetchScalarGridSpec(
            num_scalar_prefetch=0,
            grid=(N * n_dt,),                                   # batch x depth-tiles
            in_specs=[
                pl.BlockSpec((None, Dhalo, Hp, Wp, Cin), lambda i: (i, 0, 0, 0, 0)),
                pl.BlockSpec((K_pad, Cout_pad), lambda i: (0, 0)),
                pl.BlockSpec((1, Cout_pad), lambda i: (0, 0)),
            ],
            out_specs=pl.BlockSpec((M_tile, Cout_pad), lambda i: (i, 0)),
            scratch_shapes=[pltpu.VMEM((M_tile, K_pad), jnp.bfloat16)],
        ),
        compiler_params=pltpu.CompilerParams(
            dimension_semantics=("parallel",),                  # independent output tiles
            vmem_limit_bytes=vmem_limit),
    )(xt, w_k, b_row)

    out = out_flat[:, :Cout].reshape(N, Do, Ho, Wo, Cout)
    if not channels_last_out:
        out = out.transpose(0, 4, 1, 2, 3)                      # back to NCDHW (PyTorch layout)
    return out.astype(out_dtype), u_new.astype(u.dtype)


# ---------------------------------------------------------------------------
# Pure-JAX reference for validation.
# ---------------------------------------------------------------------------
def _reference(x, weight, bias, u, *, stride, padding, use_act):
    Cout = weight.shape[0]
    w_mat = weight.reshape(Cout, -1)
    sigma, u_new = _power_iteration(w_mat, u)
    w_sn = weight / sigma
    y = lax.conv_general_dilated(
        x, w_sn, window_strides=(stride,) * 3,
        padding=[(padding, padding)] * 3,
        dimension_numbers=("NCDHW", "OIDHW", "NCDHW"))
    y = y + bias.reshape(1, Cout, 1, 1, 1)
    if use_act:
        y = y * jnp.tanh(jnp.log1p(jax.nn.sigmoid(y)))
    return y, u_new


if __name__ == "__main__":
    key = jax.random.PRNGKey(0)
    k1, k2, k3, k4 = jax.random.split(key, 4)

    N, Cin, Cout = 2, 4, 8
    D = H = W = 8
    ksz, stride, padding = 3, 1, 1

    x = jax.random.normal(k1, (N, Cin, D, H, W), jnp.float32)
    weight = jax.random.normal(k2, (Cout, Cin, ksz, ksz, ksz), jnp.float32) * 0.1
    bias = jax.random.normal(k3, (Cout,), jnp.float32) * 0.1
    u0 = jax.random.normal(k4, (Cout,), jnp.float32)
    u0 = u0 / (jnp.linalg.norm(u0) + _EPS)

    ref, u_ref = _reference(x, weight, bias, u0,
                            stride=stride, padding=padding, use_act=True)

    # d_tile=4 exercises the depth-tiled grid (grid = N * 2); d_tile=None exercises the
    # automatic VMEM-budgeted tile choice (whole depth per step at these tiny shapes).
    for dt in (4, None):
        out, u_new = spectral_norm_conv3d(x, weight, bias, u0, stride=stride,
                                          padding=padding, use_act=True, d_tile=dt)
        out = jax.block_until_ready(out)
        assert out.shape == ref.shape, (out.shape, ref.shape)
        max_err = float(jnp.max(jnp.abs(out - ref)))
        assert jnp.allclose(out, ref, atol=3e-2, rtol=3e-2), (dt, max_err)   # bf16 tolerance
        assert jnp.allclose(u_new, u_ref, atol=1e-4, rtol=1e-4)

    print("KERNEL_OK")
</pallas_src>

<mosaic_0001>
module attributes {stable_mosaic.version = 11 : i64} {
  func.func @_conv_smish_kernel(%arg0: i32, %arg1: memref<1x6x10x10x4xbf16, #tpu.memory_space<vmem>>, %arg2: memref<128x128xbf16, #tpu.memory_space<vmem>>, %arg3: memref<1x128xf32, #tpu.memory_space<vmem>>, %arg4: memref<256x128xf32, #tpu.memory_space<vmem>>, %arg5: memref<256x128xbf16, #tpu.memory_space<vmem>>) attributes {dimension_semantics = [#tpu.dimension_semantics<parallel>], iteration_bounds = array<i64: 4>, scalar_prefetch = 0 : i64, scratch_operands = 1 : i64, tpu.core_type = #tpu.core_type<tc>, window_params = [{transform_indices = @transform_0, window_bounds = array<i64: 1, 6, 10, 10, 4>}, {pipeline_mode = #tpu.pipeline_mode<synchronous>, transform_indices = @transform_1, window_bounds = array<i64: 128, 128>}, {pipeline_mode = #tpu.pipeline_mode<synchronous>, transform_indices = @transform_2, window_bounds = array<i64: 1, 128>}, {transform_indices = @transform_3, window_bounds = array<i64: 256, 128>}]} {
    %c0 = arith.constant 0 : index
    %c0_0 = arith.constant 0 : index
    %c0_1 = arith.constant 0 : index
    %c0_2 = arith.constant 0 : index
    %c0_3 = arith.constant 0 : index
    %0 = vector.load %arg1[%c0, %c0_0, %c0_1, %c0_2, %c0_3] : memref<1x6x10x10x4xbf16, #tpu.memory_space<vmem>>, vector<1x4x8x8x4xbf16>
    %1 = vector.shape_cast %0 : vector<1x4x8x8x4xbf16> to vector<4x8x8x4xbf16>
    %2 = vector.shape_cast %1 : vector<4x8x8x4xbf16> to vector<256x4xbf16>
    %c0_4 = arith.constant 0 : index
    %c0_5 = arith.constant 0 : index
    %3 = vector.load %arg5[%c0_4, %c0_5] : memref<256x128xbf16, #tpu.memory_space<vmem>>, vector<256x4xbf16>
    tpu.vector_store %arg5[%c0_4, %c0_5], %2 {strides = array<i32>} : memref<256x128xbf16, #tpu.memory_space<vmem>>, vector<256x4xbf16>,
    %c0_6 = arith.constant 0 : index
    %c0_7 = arith.constant 0 : index
    %c0_8 = arith.constant 0 : index
    %c1 = arith.constant 1 : index
    %c0_9 = arith.constant 0 : index
    %4 = vector.load %arg1[%c0_6, %c0_7, %c0_8, %c1, %c0_9] : memref<1x6x10x10x4xbf16, #tpu.memory_space<vmem>>, vector<1x4x8x8x4xbf16>
    %5 = vector.shape_cast %4 : vector<1x4x8x8x4xbf16> to vector<4x8x8x4xbf16>
    %6 = vector.shape_cast %5 : vector<4x8x8x4xbf16> to vector<256x4xbf16>
    %c0_10 = arith.constant 0 : index
    %c4 = arith.constant 4 : index
    %7 = vector.load %arg5[%c0_10, %c4] : memref<256x128xbf16, #tpu.memory_space<vmem>>, vector<256x4xbf16>
    tpu.vector_store %arg5[%c0_10, %c4], %6 {strides = array<i32>} : memref<256x128xbf16, #tpu.memory_space<vmem>>, vector<256x4xbf16>,
    %c0_11 = arith.constant 0 : index
    %c0_12 = arith.constant 0 : index
    %c0_13 = arith.constant 0 : index
    %c2 = arith.constant 2 : index
    %c0_14 = arith.constant 0 : index
    %8 = vector.load %arg1[%c0_11, %c0_12, %c0_13, %c2, %c0_14] : memref<1x6x10x10x4xbf16, #tpu.memory_space<vmem>>, vector<1x4x8x8x4xbf16>
    %9 = vector.shape_cast %8 : vector<1x4x8x8x4xbf16> to vector<4x8x8x4xbf16>
    %10 = vector.shape_cast %9 : vector<4x8x8x4xbf16> to vector<256x4xbf16>
    %c0_15 = arith.constant 0 : index
    %c8 = arith.constant 8 : index
    %11 = vector.load %arg5[%c0_15, %c8] : memref<256x128xbf16, #tpu.memory_space<vmem>>, vector<256x4xbf16>
    tpu.vector_store %arg5[%c0_15, %c8], %10 {strides = array<i32>} : memref<256x128xbf16, #tpu.memory_space<vmem>>, vector<256x4xbf16>,
    %c0_16 = arith.constant 0 : index
    %c0_17 = arith.constant 0 : index
    %c1_18 = arith.constant 1 : index
    %c0_19 = arith.constant 0 : index
    %c0_20 = arith.constant 0 : index
    %12 = vector.load %arg1[%c0_16, %c0_17, %c1_18, %c0_19, %c0_20] : memref<1x6x10x10x4xbf16, #tpu.memory_space<vmem>>, vector<1x4x8x8x4xbf16>
    %13 = vector.shape_cast %12 : vector<1x4x8x8x4xbf16> to vector<4x8x8x4xbf16>
    %14 = vector.shape_cast %13 : vector<4x8x8x4xbf16> to vector<256x4xbf16>
    %c0_21 = arith.constant 0 : index
    %c12 = arith.constant 12 : index
    %15 = vector.load %arg5[%c0_21, %c12] : memref<256x128xbf16, #tpu.memory_space<vmem>>, vector<256x4xbf16>
    tpu.vector_store %arg5[%c0_21, %c12], %14 {strides = array<i32>} : memref<256x128xbf16, #tpu.memory_space<vmem>>, vector<256x4xbf16>,
    %c0_22 = arith.constant 0 : index
    %c0_23 = arith.constant 0 : index
    %c1_24 = arith.constant 1 : index
    %c1_25 = arith.constant 1 : index
    %c0_26 = arith.constant 0 : index
    %16 = vector.load %arg1[%c0_22, %c0_23, %c1_24, %c1_25, %c0_26] : memref<1x6x10x10x4xbf16, #tpu.memory_space<vmem>>, vector<1x4x8x8x4xbf16>
    %17 = vector.shape_cast %16 : vector<1x4x8x8x4xbf16> to vector<4x8x8x4xbf16>
    %18 = vector.shape_cast %17 : vector<4x8x8x4xbf16> to vector<256x4xbf16>
    %c0_27 = arith.constant 0 : index
    %c16 = arith.constant 16 : index
    %19 = vector.load %arg5[%c0_27, %c16] : memref<256x128xbf16, #tpu.memory_space<vmem>>, vector<256x4xbf16>
    tpu.vector_store %arg5[%c0_27, %c16], %18 {strides = array<i32>} : memref<256x128xbf16, #tpu.memory_space<vmem>>, vector<256x4xbf16>,
    %c0_28 = arith.constant 0 : index
    %c0_29 = arith.constant 0 : index
    %c1_30 = arith.constant 1 : index
    %c2_31 = arith.constant 2 : index
    %c0_32 = arith.constant 0 : index
    %20 = vector.load %arg1[%c0_28, %c0_29, %c1_30, %c2_31, %c0_32] : memref<1x6x10x10x4xbf16, #tpu.memory_space<vmem>>, vector<1x4x8x8x4xbf16>
    %21 = vector.shape_cast %20 : vector<1x4x8x8x4xbf16> to vector<4x8x8x4xbf16>
    %22 = vector.shape_cast %21 : vector<4x8x8x4xbf16> to vector<256x4xbf16>
    %c0_33 = arith.constant 0 : index
    %c20 = arith.constant 20 : index
    %23 = vector.load %arg5[%c0_33, %c20] : memref<256x128xbf16, #tpu.memory_space<vmem>>, vector<256x4xbf16>
    tpu.vector_store %arg5[%c0_33, %c20], %22 {strides = array<i32>} : memref<256x128xbf16, #tpu.memory_space<vmem>>, vector<256x4xbf16>,
    %c0_34 = arith.constant 0 : index
    %c0_35 = arith.constant 0 : index
    %c2_36 = arith.constant 2 : index
    %c0_37 = arith.constant 0 : index
    %c0_38 = arith.constant 0 : index
    %24 = vector.load %arg1[%c0_34, %c0_35, %c2_36, %c0_37, %c0_38] : memref<1x6x10x10x4xbf16, #tpu.memory_space<vmem>>, vector<1x4x8x8x4xbf16>
    %25 = vector.shape_cast %24 : vector<1x4x8x8x4xbf16> to vector<4x8x8x4xbf16>
    %26 = vector.shape_cast %25 : vector<4x8x8x4xbf16> to vector<256x4xbf16>
    %c0_39 = arith.constant 0 : index
    %c24 = arith.constant 24 : index
    %27 = vector.load %arg5[%c0_39, %c24] : memref<256x128xbf16, #tpu.memory_space<vmem>>, vector<256x4xbf16>
    tpu.vector_store %arg5[%c0_39, %c24], %26 {strides = array<i32>} : memref<256x128xbf16, #tpu.memory_space<vmem>>, vector<256x4xbf16>,
    %c0_40 = arith.constant 0 : index
    %c0_41 = arith.constant 0 : index
    %c2_42 = arith.constant 2 : index
    %c1_43 = arith.constant 1 : index
    %c0_44 = arith.constant 0 : index
    %28 = vector.load %arg1[%c0_40, %c0_41, %c2_42, %c1_43, %c0_44] : memref<1x6x10x10x4xbf16, #tpu.memory_space<vmem>>, vector<1x4x8x8x4xbf16>
    %29 = vector.shape_cast %28 : vector<1x4x8x8x4xbf16> to vector<4x8x8x4xbf16>
    %30 = vector.shape_cast %29 : vector<4x8x8x4xbf16> to vector<256x4xbf16>
    %c0_45 = arith.constant 0 : index
    %c28 = arith.constant 28 : index
    %31 = vector.load %arg5[%c0_45, %c28] : memref<256x128xbf16, #tpu.memory_space<vmem>>, vector<256x4xbf16>
    tpu.vector_store %arg5[%c0_45, %c28], %30 {strides = array<i32>} : memref<256x128xbf16, #tpu.memory_space<vmem>>, vector<256x4xbf16>,
    %c0_46 = arith.constant 0 : index
    %c0_47 = arith.constant 0 : index
    %c2_48 = arith.constant 2 : index
    %c2_49 = arith.constant 2 : index
    %c0_50 = arith.constant 0 : index
    %32 = vector.load %arg1[%c0_46, %c0_47, %c2_48, %c2_49, %c0_50] : memref<1x6x10x10x4xbf16, #tpu.memory_space<vmem>>, vector<1x4x8x8x4xbf16>
    %33 = vector.shape_cast %32 : vector<1x4x8x8x4xbf16> to vector<4x8x8x4xbf16>
    %34 = vector.shape_cast %33 : vector<4x8x8x4xbf16> to vector<256x4xbf16>
    %c0_51 = arith.constant 0 : index
    %c32 = arith.constant 32 : index
    %35 = vector.load %arg5[%c0_51, %c32] : memref<256x128xbf16, #tpu.memory_space<vmem>>, vector<256x4xbf16>
    tpu.vector_store %arg5[%c0_51, %c32], %34 {strides = array<i32>} : memref<256x128xbf16, #tpu.memory_space<vmem>>, vector<256x4xbf16>,
    %c0_52 = arith.constant 0 : index
    %c1_53 = arith.constant 1 : index
    %c0_54 = arith.constant 0 : index
    %c0_55 = arith.constant 0 : index
    %c0_56 = arith.constant 0 : index
    %36 = vector.load %arg1[%c0_52, %c1_53, %c0_54, %c0_55, %c0_56] : memref<1x6x10x10x4xbf16, #tpu.memory_space<vmem>>, vector<1x4x8x8x4xbf16>
    %37 = vector.shape_cast %36 : vector<1x4x8x8x4xbf16> to vector<4x8x8x4xbf16>
    %38 = vector.shape_cast %37 : vector<4x8x8x4xbf16> to vector<256x4xbf16>
    %c0_57 = arith.constant 0 : index
    %c36 = arith.constant 36 : index
    %39 = vector.load %arg5[%c0_57, %c36] : memref<256x128xbf16, #tpu.memory_space<vmem>>, vector<256x4xbf16>
    tpu.vector_store %arg5[%c0_57, %c36], %38 {strides = array<i32>} : memref<256x128xbf16, #tpu.memory_space<vmem>>, vector<256x4xbf16>,
    %c0_58 = arith.constant 0 : index
    %c1_59 = arith.constant 1 : index
    %c0_60 = arith.constant 0 : index
    %c1_61 = arith.constant 1 : index
    %c0_62 = arith.constant 0 : index
    %40 = vector.load %arg1[%c0_58, %c1_59, %c0_60, %c1_61, %c0_62] : memref<1x6x10x10x4xbf16, #tpu.memory_space<vmem>>, vector<1x4x8x8x4xbf16>
    %41 = vector.shape_cast %40 : vector<1x4x8x8x4xbf16> to vector<4x8x8x4xbf16>
    %42 = vector.shape_cast %41 : vector<4x8x8x4xbf16> to vector<256x4xbf16>
    %c0_63 = arith.constant 0 : index
    %c40 = arith.constant 40 : index
    %43 = vector.load %arg5[%c0_63, %c40] : memref<256x128xbf16, #tpu.memory_space<vmem>>, vector<256x4xbf16>
    tpu.vector_store %arg5[%c0_63, %c40], %42 {strides = array<i32>} : memref<256x128xbf16, #tpu.memory_space<vmem>>, vector<256x4xbf16>,
    %c0_64 = arith.constant 0 : index
    %c1_65 = arith.constant 1 : index
    %c0_66 = arith.constant 0 : index
    %c2_67 = arith.constant 2 : index
    %c0_68 = arith.constant 0 : index
    %44 = vector.load %arg1[%c0_64, %c1_65, %c0_66, %c2_67, %c0_68] : memref<1x6x10x10x4xbf16, #tpu.memory_space<vmem>>, vector<1x4x8x8x4xbf16>
    %45 = vector.shape_cast %44 : vector<1x4x8x8x4xbf16> to vector<4x8x8x4xbf16>
    %46 = vector.shape_cast %45 : vector<4x8x8x4xbf16> to vector<256x4xbf16>
    %c0_69 = arith.constant 0 : index
    %c44 = arith.constant 44 : index
    %47 = vector.load %arg5[%c0_69, %c44] : memref<256x128xbf16, #tpu.memory_space<vmem>>, vector<256x4xbf16>
    tpu.vector_store %arg5[%c0_69, %c44], %46 {strides = array<i32>} : memref<256x128xbf16, #tpu.memory_space<vmem>>, vector<256x4xbf16>,
    %c0_70 = arith.constant 0 : index
    %c1_71 = arith.constant 1 : index
    %c1_72 = arith.constant 1 : index
    %c0_73 = arith.constant 0 : index
    %c0_74 = arith.constant 0 : index
    %48 = vector.load %arg1[%c0_70, %c1_71, %c1_72, %c0_73, %c0_74] : memref<1x6x10x10x4xbf16, #tpu.memory_space<vmem>>, vector<1x4x8x8x4xbf16>
    %49 = vector.shape_cast %48 : vector<1x4x8x8x4xbf16> to vector<4x8x8x4xbf16>
    %50 = vector.shape_cast %49 : vector<4x8x8x4xbf16> to vector<256x4xbf16>
    %c0_75 = arith.constant 0 : index
    %c48 = arith.constant 48 : index
    %51 = vector.load %arg5[%c0_75, %c48] : memref<256x128xbf16, #tpu.memory_space<vmem>>, vector<256x4xbf16>
    tpu.vector_store %arg5[%c0_75, %c48], %50 {strides = array<i32>} : memref<256x128xbf16, #tpu.memory_space<vmem>>, vector<256x4xbf16>,
    %c0_76 = arith.constant 0 : index
    %c1_77 = arith.constant 1 : index
    %c1_78 = arith.constant 1 : index
    %c1_79 = arith.constant 1 : index
    %c0_80 = arith.constant 0 : index
    %52 = vector.load %arg1[%c0_76, %c1_77, %c1_78, %c1_79, %c0_80] : memref<1x6x10x10x4xbf16, #tpu.memory_space<vmem>>, vector<1x4x8x8x4xbf16>
    %53 = vector.shape_cast %52 : vector<1x4x8x8x4xbf16> to vector<4x8x8x4xbf16>
    %54 = vector.shape_cast %53 : vector<4x8x8x4xbf16> to vector<256x4xbf16>
    %c0_81 = arith.constant 0 : index
    %c52 = arith.constant 52 : index
    %55 = vector.load %arg5[%c0_81, %c52] : memref<256x128xbf16, #tpu.memory_space<vmem>>, vector<256x4xbf16>
    tpu.vector_store %arg5[%c0_81, %c52], %54 {strides = array<i32>} : memref<256x128xbf16, #tpu.memory_space<vmem>>, vector<256x4xbf16>,
    %c0_82 = arith.constant 0 : index
    %c1_83 = arith.constant 1 : index
    %c1_84 = arith.constant 1 : index
    %c2_85 = arith.constant 2 : index
    %c0_86 = arith.constant 0 : index
    %56 = vector.load %arg1[%c0_82, %c1_83, %c1_84, %c2_85, %c0_86] : memref<1x6x10x10x4xbf16, #tpu.memory_space<vmem>>, vector<1x4x8x8x4xbf16>
    %57 = vector.shape_cast %56 : vector<1x4x8x8x4xbf16> to vector<4x8x8x4xbf16>
    %58 = vector.shape_cast %57 : vector<4x8x8x4xbf16> to vector<256x4xbf16>
    %c0_87 = arith.constant 0 : index
    %c56 = arith.constant 56 : index
    %59 = vector.load %arg5[%c0_87, %c56] : memref<256x128xbf16, #tpu.memory_space<vmem>>, vector<256x4xbf16>
    tpu.vector_store %arg5[%c0_87, %c56], %58 {strides = array<i32>} : memref<256x128xbf16, #tpu.memory_space<vmem>>, vector<256x4xbf16>,
    %c0_88 = arith.constant 0 : index
    %c1_89 = arith.constant 1 : index
    %c2_90 = arith.constant 2 : index
    %c0_91 = arith.constant 0 : index
    %c0_92 = arith.constant 0 : index
    %60 = vector.load %arg1[%c0_88, %c1_89, %c2_90, %c0_91, %c0_92] : memref<1x6x10x10x4xbf16, #tpu.memory_space<vmem>>, vector<1x4x8x8x4xbf16>
    %61 = vector.shape_cast %60 : vector<1x4x8x8x4xbf16> to vector<4x8x8x4xbf16>
    %62 = vector.shape_cast %61 : vector<4x8x8x4xbf16> to vector<256x4xbf16>
    %c0_93 = arith.constant 0 : index
    %c60 = arith.constant 60 : index
    %63 = vector.load %arg5[%c0_93, %c60] : memref<256x128xbf16, #tpu.memory_space<vmem>>, vector<256x4xbf16>
    tpu.vector_store %arg5[%c0_93, %c60], %62 {strides = array<i32>} : memref<256x128xbf16, #tpu.memory_space<vmem>>, vector<256x4xbf16>,
    %c0_94 = arith.constant 0 : index
    %c1_95 = arith.constant 1 : index
    %c2_96 = arith.constant 2 : index
    %c1_97 = arith.constant 1 : index
    %c0_98 = arith.constant 0 : index
    %64 = vector.load %arg1[%c0_94, %c1_95, %c2_96, %c1_97, %c0_98] : memref<1x6x10x10x4xbf16, #tpu.memory_space<vmem>>, vector<1x4x8x8x4xbf16>
    %65 = vector.shape_cast %64 : vector<1x4x8x8x4xbf16> to vector<4x8x8x4xbf16>
    %66 = vector.shape_cast %65 : vector<4x8x8x4xbf16> to vector<256x4xbf16>
    %c0_99 = arith.constant 0 : index
    %c64 = arith.constant 64 : index
    %67 = vector.load %arg5[%c0_99, %c64] : memref<256x128xbf16, #tpu.memory_space<vmem>>, vector<256x4xbf16>
    tpu.vector_store %arg5[%c0_99, %c64], %66 {strides = array<i32>} : memref<256x128xbf16, #tpu.memory_space<vmem>>, vector<256x4xbf16>,
    %c0_100 = arith.constant 0 : index
    %c1_101 = arith.constant 1 : index
    %c2_102 = arith.constant 2 : index
    %c2_103 = arith.constant 2 : index
    %c0_104 = arith.constant 0 : index
    %68 = vector.load %arg1[%c0_100, %c1_101, %c2_102, %c2_103, %c0_104] : memref<1x6x10x10x4xbf16, #tpu.memory_space<vmem>>, vector<1x4x8x8x4xbf16>
    %69 = vector.shape_cast %68 : vector<1x4x8x8x4xbf16> to vector<4x8x8x4xbf16>
    %70 = vector.shape_cast %69 : vector<4x8x8x4xbf16> to vector<256x4xbf16>
    %c0_105 = arith.constant 0 : index
    %c68 = arith.constant 68 : index
    %71 = vector.load %arg5[%c0_105, %c68] : memref<256x128xbf16, #tpu.memory_space<vmem>>, vector<256x4xbf16>
    tpu.vector_store %arg5[%c0_105, %c68], %70 {strides = array<i32>} : memref<256x128xbf16, #tpu.memory_space<vmem>>, vector<256x4xbf16>,
    %c0_106 = arith.constant 0 : index
    %c2_107 = arith.constant 2 : index
    %c0_108 = arith.constant 0 : index
    %c0_109 = arith.constant 0 : index
    %c0_110 = arith.constant 0 : index
    %72 = vector.load %arg1[%c0_106, %c2_107, %c0_108, %c0_109, %c0_110] : memref<1x6x10x10x4xbf16, #tpu.memory_space<vmem>>, vector<1x4x8x8x4xbf16>
    %73 = vector.shape_cast %72 : vector<1x4x8x8x4xbf16> to vector<4x8x8x4xbf16>
    %74 = vector.shape_cast %73 : vector<4x8x8x4xbf16> to vector<256x4xbf16>
    %c0_111 = arith.constant 0 : index
    %c72 = arith.constant 72 : index
    %75 = vector.load %arg5[%c0_111, %c72] : memref<256x128xbf16, #tpu.memory_space<vmem>>, vector<256x4xbf16>
    tpu.vector_store %arg5[%c0_111, %c72], %74 {strides = array<i32>} : memref<256x128xbf16, #tpu.memory_space<vmem>>, vector<256x4xbf16>,
    %c0_112 = arith.constant 0 : index
    %c2_113 = arith.constant 2 : index
    %c0_114 = arith.constant 0 : index
    %c1_115 = arith.constant 1 : index
    %c0_116 = arith.constant 0 : index
    %76 = vector.load %arg1[%c0_112, %c2_113, %c0_114, %c1_115, %c0_116] : memref<1x6x10x10x4xbf16, #tpu.memory_space<vmem>>, vector<1x4x8x8x4xbf16>
    %77 = vector.shape_cast %76 : vector<1x4x8x8x4xbf16> to vector<4x8x8x4xbf16>
    %78 = vector.shape_cast %77 : vector<4x8x8x4xbf16> to vector<256x4xbf16>
    %c0_117 = arith.constant 0 : index
    %c76 = arith.constant 76 : index
    %79 = vector.load %arg5[%c0_117, %c76] : memref<256x128xbf16, #tpu.memory_space<vmem>>, vector<256x4xbf16>
    tpu.vector_store %arg5[%c0_117, %c76], %78 {strides = array<i32>} : memref<256x128xbf16, #tpu.memory_space<vmem>>, vector<256x4xbf16>,
    %c0_118 = arith.constant 0 : index
    %c2_119 = arith.constant 2 : index
    %c0_120 = arith.constant 0 : index
    %c2_121 = arith.constant 2 : index
    %c0_122 = arith.constant 0 : index
    %80 = vector.load %arg1[%c0_118, %c2_119, %c0_120, %c2_121, %c0_122] : memref<1x6x10x10x4xbf16, #tpu.memory_space<vmem>>, vector<1x4x8x8x4xbf16>
    %81 = vector.shape_cast %80 : vector<1x4x8x8x4xbf16> to vector<4x8x8x4xbf16>
    %82 = vector.shape_cast %81 : vector<4x8x8x4xbf16> to vector<256x4xbf16>
    %c0_123 = arith.constant 0 : index
    %c80 = arith.constant 80 : index
    %83 = vector.load %arg5[%c0_123, %c80] : memref<256x128xbf16, #tpu.memory_space<vmem>>, vector<256x4xbf16>
    tpu.vector_store %arg5[%c0_123, %c80], %82 {strides = array<i32>} : memref<256x128xbf16, #tpu.memory_space<vmem>>, vector<256x4xbf16>,
    %c0_124 = arith.constant 0 : index
    %c2_125 = arith.constant 2 : index
    %c1_126 = arith.constant 1 : index
    %c0_127 = arith.constant 0 : index
    %c0_128 = arith.constant 0 : index
    %84 = vector.load %arg1[%c0_124, %c2_125, %c1_126, %c0_127, %c0_128] : memref<1x6x10x10x4xbf16, #tpu.memory_space<vmem>>, vector<1x4x8x8x4xbf16>
    %85 = vector.shape_cast %84 : vector<1x4x8x8x4xbf16> to vector<4x8x8x4xbf16>
    %86 = vector.shape_cast %85 : vector<4x8x8x4xbf16> to vector<256x4xbf16>
    %c0_129 = arith.constant 0 : index
    %c84 = arith.constant 84 : index
    %87 = vector.load %arg5[%c0_129, %c84] : memref<256x128xbf16, #tpu.memory_space<vmem>>, vector<256x4xbf16>
    tpu.vector_store %arg5[%c0_129, %c84], %86 {strides = array<i32>} : memref<256x128xbf16, #tpu.memory_space<vmem>>, vector<256x4xbf16>,
    %c0_130 = arith.constant 0 : index
    %c2_131 = arith.constant 2 : index
    %c1_132 = arith.constant 1 : index
    %c1_133 = arith.constant 1 : index
    %c0_134 = arith.constant 0 : index
    %88 = vector.load %arg1[%c0_130, %c2_131, %c1_132, %c1_133, %c0_134] : memref<1x6x10x10x4xbf16, #tpu.memory_space<vmem>>, vector<1x4x8x8x4xbf16>
    %89 = vector.shape_cast %88 : vector<1x4x8x8x4xbf16> to vector<4x8x8x4xbf16>
    %90 = vector.shape_cast %89 : vector<4x8x8x4xbf16> to vector<256x4xbf16>
    %c0_135 = arith.constant 0 : index
    %c88 = arith.constant 88 : index
    %91 = vector.load %arg5[%c0_135, %c88] : memref<256x128xbf16, #tpu.memory_space<vmem>>, vector<256x4xbf16>
    tpu.vector_store %arg5[%c0_135, %c88], %90 {strides = array<i32>} : memref<256x128xbf16, #tpu.memory_space<vmem>>, vector<256x4xbf16>,
    %c0_136 = arith.constant 0 : index
    %c2_137 = arith.constant 2 : index
    %c1_138 = arith.constant 1 : index
    %c2_139 = arith.constant 2 : index
    %c0_140 = arith.constant 0 : index
    %92 = vector.load %arg1[%c0_136, %c2_137, %c1_138, %c2_139, %c0_140] : memref<1x6x10x10x4xbf16, #tpu.memory_space<vmem>>, vector<1x4x8x8x4xbf16>
    %93 = vector.shape_cast %92 : vector<1x4x8x8x4xbf16> to vector<4x8x8x4xbf16>
    %94 = vector.shape_cast %93 : vector<4x8x8x4xbf16> to vector<256x4xbf16>
    %c0_141 = arith.constant 0 : index
    %c92 = arith.constant 92 : index
    %95 = vector.load %arg5[%c0_141, %c92] : memref<256x128xbf16, #tpu.memory_space<vmem>>, vector<256x4xbf16>
    tpu.vector_store %arg5[%c0_141, %c92], %94 {strides = array<i32>} : memref<256x128xbf16, #tpu.memory_space<vmem>>, vector<256x4xbf16>,
    %c0_142 = arith.constant 0 : index
    %c2_143 = arith.constant 2 : index
    %c2_144 = arith.constant 2 : index
    %c0_145 = arith.constant 0 : index
    %c0_146 = arith.constant 0 : index
    %96 = vector.load %arg1[%c0_142, %c2_143, %c2_144, %c0_145, %c0_146] : memref<1x6x10x10x4xbf16, #tpu.memory_space<vmem>>, vector<1x4x8x8x4xbf16>
    %97 = vector.shape_cast %96 : vector<1x4x8x8x4xbf16> to vector<4x8x8x4xbf16>
    %98 = vector.shape_cast %97 : vector<4x8x8x4xbf16> to vector<256x4xbf16>
    %c0_147 = arith.constant 0 : index
    %c96 = arith.constant 96 : index
    %99 = vector.load %arg5[%c0_147, %c96] : memref<256x128xbf16, #tpu.memory_space<vmem>>, vector<256x4xbf16>
    tpu.vector_store %arg5[%c0_147, %c96], %98 {strides = array<i32>} : memref<256x128xbf16, #tpu.memory_space<vmem>>, vector<256x4xbf16>,
    %c0_148 = arith.constant 0 : index
    %c2_149 = arith.constant 2 : index
    %c2_150 = arith.constant 2 : index
    %c1_151 = arith.constant 1 : index
    %c0_152 = arith.constant 0 : index
    %100 = vector.load %arg1[%c0_148, %c2_149, %c2_150, %c1_151, %c0_152] : memref<1x6x10x10x4xbf16, #tpu.memory_space<vmem>>, vector<1x4x8x8x4xbf16>
    %101 = vector.shape_cast %100 : vector<1x4x8x8x4xbf16> to vector<4x8x8x4xbf16>
    %102 = vector.shape_cast %101 : vector<4x8x8x4xbf16> to vector<256x4xbf16>
    %c0_153 = arith.constant 0 : index
    %c100 = arith.constant 100 : index
    %103 = vector.load %arg5[%c0_153, %c100] : memref<256x128xbf16, #tpu.memory_space<vmem>>, vector<256x4xbf16>
    tpu.vector_store %arg5[%c0_153, %c100], %102 {strides = array<i32>} : memref<256x128xbf16, #tpu.memory_space<vmem>>, vector<256x4xbf16>,
    %c0_154 = arith.constant 0 : index
    %c2_155 = arith.constant 2 : index
    %c2_156 = arith.constant 2 : index
    %c2_157 = arith.constant 2 : index
    %c0_158 = arith.constant 0 : index
    %104 = vector.load %arg1[%c0_154, %c2_155, %c2_156, %c2_157, %c0_158] : memref<1x6x10x10x4xbf16, #tpu.memory_space<vmem>>, vector<1x4x8x8x4xbf16>
    %105 = vector.shape_cast %104 : vector<1x4x8x8x4xbf16> to vector<4x8x8x4xbf16>
    %106 = vector.shape_cast %105 : vector<4x8x8x4xbf16> to vector<256x4xbf16>
    %c0_159 = arith.constant 0 : index
    %c104 = arith.constant 104 : index
    %107 = vector.load %arg5[%c0_159, %c104] : memref<256x128xbf16, #tpu.memory_space<vmem>>, vector<256x4xbf16>
    tpu.vector_store %arg5[%c0_159, %c104], %106 {strides = array<i32>} : memref<256x128xbf16, #tpu.memory_space<vmem>>, vector<256x4xbf16>,
    %cst = arith.constant 0.000000e+00 : bf16
    %108 = vector.broadcast %cst : bf16 to vector<256x20xbf16>
    %c0_160 = arith.constant 0 : index
    %c108 = arith.constant 108 : index
    %109 = vector.load %arg5[%c0_160, %c108] : memref<256x128xbf16, #tpu.memory_space<vmem>>, vector<256x20xbf16>
    tpu.vector_store %arg5[%c0_160, %c108], %108 {strides = array<i32>} : memref<256x128xbf16, #tpu.memory_space<vmem>>, vector<256x20xbf16>,
    %c0_161 = arith.constant 0 : index
    %c0_162 = arith.constant 0 : index
    %110 = vector.load %arg5[%c0_161, %c0_162] : memref<256x128xbf16, #tpu.memory_space<vmem>>, vector<256x128xbf16>
    %c0_163 = arith.constant 0 : index
    %c0_164 = arith.constant 0 : index
    %111 = vector.load %arg2[%c0_163, %c0_164] : memref<128x128xbf16, #tpu.memory_space<vmem>>, vector<128x128xbf16>
    %cst_165 = arith.constant dense<0.000000e+00> : vector<256x128xf32>
    %112 = tpu.matmul %110, %111, %cst_165 {dimension_numbers = #tpu.dot_dimension_numbers<[1], [0], [0], [1], [0, 0, 1, 1], [], []>} : vector<256x128xbf16>, vector<128x128xbf16>, vector<256x128xf32> -> vector<256x128xf32>
    %c0_166 = arith.constant 0 : index
    %c0_167 = arith.constant 0 : index
    %113 = vector.load %arg3[%c0_166, %c0_167] : memref<1x128xf32, #tpu.memory_space<vmem>>, vector<1x128xf32>
    %114 = vector.broadcast %113 : vector<1x128xf32> to vector<256x128xf32>
    %115 = arith.addf %112, %114 : vector<256x128xf32>
    %cst_168 = arith.constant 5.000000e-01 : f32
    %116 = vector.broadcast %cst_168 : f32 to vector<256x128xf32>
    %117 = arith.mulf %116, %115 : vector<256x128xf32>
    %118 = math.tanh %117 : vector<256x128xf32>
    %cst_169 = arith.constant 1.000000e+00 : f32
    %119 = vector.broadcast %cst_169 : f32 to vector<256x128xf32>
    %120 = arith.addf %118, %119 : vector<256x128xf32>
    %cst_170 = arith.constant 5.000000e-01 : f32
    %121 = vector.broadcast %cst_170 : f32 to vector<256x128xf32>
    %122 = arith.mulf %121, %120 : vector<256x128xf32>
    %123 = math.log1p %122 : vector<256x128xf32>
    %124 = math.tanh %123 : vector<256x128xf32>
    %125 = arith.mulf %115, %124 : vector<256x128xf32>
    %c0_171 = arith.constant 0 : index
    %c0_172 = arith.constant 0 : index
    %126 = vector.load %arg4[%c0_171, %c0_172] : memref<256x128xf32, #tpu.memory_space<vmem>>, vector<256x128xf32>
    tpu.vector_store %arg4[%c0_171, %c0_172], %125 {strides = array<i32>} : memref<256x128xf32, #tpu.memory_space<vmem>>, vector<256x128xf32>,
    return
  }
  func.func @transform_0(%arg0: i32) -> (i32, i32, i32, i32, i32) {
    %c0_i32 = arith.constant 0 : i32
    %c0_i32_0 = arith.constant 0 : i32
    %c0_i32_1 = arith.constant 0 : i32
    %c0_i32_2 = arith.constant 0 : i32
    %c0_i32_3 = arith.constant 0 : i32
    return %arg0, %c0_i32, %c0_i32_0, %c0_i32_1, %c0_i32_2 : i32, i32, i32, i32, i32
  }
  func.func @transform_1(%arg0: i32) -> (i32, i32) {
    %c0_i32 = arith.constant 0 : i32
    %c0_i32_0 = arith.constant 0 : i32
    %c0_i32_1 = arith.constant 0 : i32
    return %c0_i32, %c0_i32_0 : i32, i32
  }
  func.func @transform_2(%arg0: i32) -> (i32, i32) {
    %c0_i32 = arith.constant 0 : i32
    %c0_i32_0 = arith.constant 0 : i32
    %c0_i32_1 = arith.constant 0 : i32
    return %c0_i32, %c0_i32_0 : i32, i32
  }
  func.func @transform_3(%arg0: i32) -> (i32, i32) {
    %c0_i32 = arith.constant 0 : i32
    %c0_i32_0 = arith.constant 0 : i32
    return %arg0, %c0_i32 : i32, i32
  }
}

</mosaic_0001>

<llo_original>
// kernel: tpu_custom_call.1
$region0: #{tpu_custom_call.1}
  #allocation0 [shape = 'u32[]', space=smem, size = 0x4, offset = 0x4, fixed_abs, tag = 'smem constant byte address 0x4 - core index']
  #allocation1 [shape = 'u32[72,128]{1,0:T(1,128)}', space=vmem, size = 0x9000, scoped, tag = 'internal scratch']
  #allocation2 [shape = 'bf16[256,128]{1,0:T(8,128)(2,1)}', space=vmem, size = 0x10000, scoped, tag = 'scratch operand']
  %s0 = inlined_call_operand.vmem [shape: bf16[4,6,10,10,4], index: 0, kind: input, shape index: {}]
  %s1 = inlined_call_operand.vmem [shape: bf16[128,128], index: 1, kind: input, shape index: {}]
  %s2 = inlined_call_operand.vmem [shape: f32[1,128], index: 2, kind: input, shape index: {}]
  %s3 = inlined_call_operand.hbm [shape: f32[1024,128], index: 3, kind: output, shape index: {}]
  %s4 = sld [smem:[#allocation0]]
  $region45: #{tpu_custom_call.1} parent=0
    _
  %s6 = ssub.s32 1, %s4
  %s7 = scalar_select 0, %s6, %s4
  $region1: #{tpu_custom_call.1} parent=0
    #allocation3 [shape = 'u8[262144]{0}', space=vmem, size = 0x40000, scoped, tag = 'output window, operand 0']
    #allocation4 [shape = 's32[2]{0}', space=sflag, size = 0x8, scoped, tag = 'scoped memory for tpu_custom_call.1']
    %8 = vsyncpa [#allocation4], 0
    %s9 = scalar_lea.sflag [#allocation4], 1
    %10 = vsyncpa %s9, 0
    loop: start=0, step=1, limit=6
    $region2: #{tpu_custom_call.1} parent=1 // loop_pre_header
      _
    $region3: #{tpu_custom_call.1} parent=1 // loop_header
      %s12 = sphi 0, %s16
      %p13 = scmp.ge.s32.totalorder %s12, 6
      %s22 = sphi 0, %s24
      %s25 = sphi 0, %s22
      %s26 = sphi 0, %s25
      %s42 = sphi 0, %s26
      %s46 = sphi 0, %s46
      %s48 = sphi 0, %s46
      %s49 = sphi 0, %s48
      %s63 = sphi 0, %s49
      %s67 = sphi 0, %s67
      %s69 = sphi 0, %s67
      %s70 = sphi 0, %s69
      %s84 = sphi 0, %s70
      %s90 = sphi 0, %s92
      %s93 = sphi 0, %s90
      %s94 = sphi 0, %s93
      %s110 = sphi 0, %s94
    $region4: #{tpu_custom_call.1} parent=1 // loop_header_branch
      %15 = sbr.rel (%p13) target = $region8
    $region5: #{tpu_custom_call.1} parent=1 // loop_body
      %s17 = ssub.s32 %s12, 1
      %s18 = ssub.s32 %s12, 2
      %s19 = sadd.s32 %s12, 1
      %s20 = ssub.s32 %s12, %s19
      %p21 = scmp.eq.s32.totalorder %s20, 0
      %s23 = sadd.s32 %s22, 1
      %s24 = scalar_select %p21, %s22, %s23
      %p27 = pneg %p21
      %p28 = scmp.eq.s32.totalorder %s12, 3
      %p29 = por %p27, %p28
      %p30 = scmp.ne.s32.totalorder %s22, %s25
      %p31 = scmp.eq.s32.totalorder %s12, 0
      %p32 = por %p30, %p31
      %p33 = scmp.ne.s32.totalorder %s22, %s25
      %p34 = scmp.eq.s32.totalorder %s17, 3
      %p35 = por %p33, %p34
      %p36 = scmp.ne.s32.totalorder %s25, %s26
      %p37 = scmp.eq.s32.totalorder %s17, 0
      %p38 = por %p36, %p37
      %p39 = scmp.ne.s32.totalorder %s25, %s26
      %p40 = scmp.eq.s32.totalorder %s18, 3
      %p41 = por %p39, %p40
      %p43 = scmp.ne.s32.totalorder %s26, %s42
      %p44 = scmp.eq.s32.totalorder %s18, 0
      %p45 = por %p43, %p44
      %s47 = sadd.s32 %s46, 1
      %p50 = scmp.eq.s32.totalorder %s12, 3
      %p51 = scmp.ne.s32.totalorder %s46, %s48
      %p52 = scmp.eq.s32.totalorder %s12, 0
      %p53 = por %p51, %p52
      %p54 = scmp.ne.s32.totalorder %s46, %s48
      %p55 = scmp.eq.s32.totalorder %s17, 3
      %p56 = por %p54, %p55
      %p57 = scmp.ne.s32.totalorder %s48, %s49
      %p58 = scmp.eq.s32.totalorder %s17, 0
      %p59 = por %p57, %p58
      %p60 = scmp.ne.s32.totalorder %s48, %s49
      %p61 = scmp.eq.s32.totalorder %s18, 3
      %p62 = por %p60, %p61
      %p64 = scmp.ne.s32.totalorder %s49, %s63
      %p65 = scmp.eq.s32.totalorder %s18, 0
      %p66 = por %p64, %p65
      %s68 = sadd.s32 %s67, 1
      %p71 = scmp.eq.s32.totalorder %s12, 3
      %p72 = scmp.ne.s32.totalorder %s67, %s69
      %p73 = scmp.eq.s32.totalorder %s12, 0
      %p74 = por %p72, %p73
      %p75 = scmp.ne.s32.totalorder %s67, %s69
      %p76 = scmp.eq.s32.totalorder %s17, 3
      %p77 = por %p75, %p76
      %p78 = scmp.ne.s32.totalorder %s69, %s70
      %p79 = scmp.eq.s32.totalorder %s17, 0
      %p80 = por %p78, %p79
      %p81 = scmp.ne.s32.totalorder %s69, %s70
      %p82 = scmp.eq.s32.totalorder %s18, 3
      %p83 = por %p81, %p82
      %p85 = scmp.ne.s32.totalorder %s70, %s84
      %p86 = scmp.eq.s32.totalorder %s18, 0
      %p87 = por %p85, %p86
      %s88 = ssub.s32 %s12, %s19
      %p89 = scmp.eq.s32.totalorder %s88, 0
      %s91 = sadd.s32 %s90, 1
      %s92 = scalar_select %p89, %s90, %s91
      %p95 = pneg %p89
      %p96 = scmp.eq.s32.totalorder %s12, 3
      %p97 = por %p95, %p96
      %p98 = scmp.ne.s32.totalorder %s90, %s93
      %p99 = scmp.eq.s32.totalorder %s12, 0
      %p100 = por %p98, %p99
      %p101 = scmp.ne.s32.totalorder %s90, %s93
      %p102 = scmp.eq.s32.totalorder %s17, 3
      %p103 = por %p101, %p102
      %p104 = scmp.ne.s32.totalorder %s93, %s94
      %p105 = scmp.eq.s32.totalorder %s17, 0
      %p106 = por %p104, %p105
      %p107 = scmp.ne.s32.totalorder %s93, %s94
      %p108 = scmp.eq.s32.totalorder %s18, 3
      %p109 = por %p107, %p108
      %p111 = scmp.ne.s32.totalorder %s94, %s110
      %p112 = scmp.eq.s32.totalorder %s18, 0
      %p113 = por %p111, %p112
      %p114 = scmp.le.s32.totalorder 1, %s12
      %p115 = scmp.lt.s32.totalorder %s12, 5
      %p116 = pnand %p114, %p115
      %p117 = pneg %p116
      // Predicated region
      $region9: #{tpu_custom_call.1} parent=5 // pred_check
        _
      $region10: #{tpu_custom_call.1} parent=5 // pred_check_branch
        %119 = sbr.rel (%p116) target = $region12
      $region11: #{tpu_custom_call.1} parent=5 // pred_region
        %s120 = ssub.s32 %s12, 1
        // Predicated region
        $region13: #{tpu_custom_call.1} parent=11 // pred_check
          %p121 = pneg %p59
        $region14: #{tpu_custom_call.1} parent=11 // pred_check_branch
          %123 = sbr.rel (%p121) target = $region16
        $region15: #{tpu_custom_call.1} parent=11 // pred_region
          _
        $region16: #{tpu_custom_call.1} parent=11 // pred_fallthru
          _
        // Predicated region
        $region17: #{tpu_custom_call.1} parent=11 // pred_check
          %p124 = pneg %p80
        $region18: #{tpu_custom_call.1} parent=11 // pred_check_branch
          %126 = sbr.rel (%p124) target = $region20
        $region19: #{tpu_custom_call.1} parent=11 // pred_region
          _
        $region20: #{tpu_custom_call.1} parent=11 // pred_fallthru
          _
      $region12: #{tpu_custom_call.1} parent=5 // pred_fallthru
        _
      %p127 = scmp.lt.s32.totalorder %s12, 4
      // Predicated region
      $region21: #{tpu_custom_call.1} parent=5 // pred_check
        %p128 = pneg %p127
      $region22: #{tpu_custom_call.1} parent=5 // pred_check_branch
        %130 = sbr.rel (%p128) target = $region24
      $region23: #{tpu_custom_call.1} parent=5 // pred_region
        // Predicated region
        $region25: #{tpu_custom_call.1} parent=23 // pred_check
          %p131 = pneg %p32
        $region26: #{tpu_custom_call.1} parent=23 // pred_check_branch
          %133 = sbr.rel (%p131) target = $region28
        $region27: #{tpu_custom_call.1} parent=23 // pred_region
          %p134 = scmp.lt.s32.totalorder %s12, 3
          %s135 = scalar_select %p134, %s12, 3
          %s136 = smul.addr %s135, 120
          %s137 = smul.addr %s136, 4
          %s138 = scalar_lea.vmem %s0, %s137
        $region28: #{tpu_custom_call.1} parent=23 // pred_fallthru
          _
      $region24: #{tpu_custom_call.1} parent=5 // pred_fallthru
        _
      %p139 = scmp.le.s32.totalorder 1, %s12
      %p140 = scmp.lt.s32.totalorder %s12, 5
      %p141 = pnand %p139, %p140
      %p142 = pneg %p141
      // Predicated region
      $region29: #{tpu_custom_call.1} parent=5 // pred_check
        _
      $region30: #{tpu_custom_call.1} parent=5 // pred_check_branch
        %144 = sbr.rel (%p141) target = $region32
      $region31: #{tpu_custom_call.1} parent=5 // pred_region
        %s145 = ssub.s32 %s12, 1
        %p146 = scmp.lt.s32.totalorder %s17, 3
        %s147 = scalar_select %p146, %s17, 3
        %s148 = smul.addr %s147, 120
        %s149 = smul.addr %s148, 4
        %s150 = scalar_lea.vmem %s0, %s149
        %p151 = pneg %p38
        %p152 = pneg %p35
        %p153 = pneg %p59
        %p154 = pneg %p56
        %p155 = pneg %p80
        %p156 = pneg %p77
        %p157 = pneg %p106
        %p158 = pneg %p103
        %s159 = sand.u32 %s93, 1
        %s160 = scalar_lea.sflag [#allocation4], %s159
        %s161 = sand.u32 %s93, 1
        %s162 = smul.addr %s161, 256
        %s163 = scalar_lea.vmem [#allocation3], %s162
        %p164 = scmp.lt.s32.totalorder %s17, 3
        %s165 = scalar_select %p164, %s17, 3
        %s166 = smul.addr %s165, 120
        %s167 = smul.addr %s166, 4
        %s168 = scalar_lea.vmem %s0, %s167
        %s169 = smul.u32 32, %s17
        %v171 = vld [vmem:[%s168] sm:$0xf]
        %v172 = vld [vmem:[%s168 + $0x8] sm:$0xf]
        %v173 = vld [vmem:[%s168 + $0x10] sm:$0xf]
        %v174 = vld [vmem:[%s168 + $0x18] sm:$0xf]
        %v175 = vld [vmem:[%s168 + $0x20] sm:$0xf]
        %v176 = vld [vmem:[%s168 + $0x28] sm:$0xf]
        %v177 = vld [vmem:[%s168 + $0x30] sm:$0xf]
        %v178 = vld [vmem:[%s168 + $0x38] sm:$0xf]
        %v179 = vld [vmem:[%s168 + $0x50] sm:$0xf]
        %v180 = vld [vmem:[%s168 + $0x58] sm:$0xf]
        %v181 = vld [vmem:[%s168 + $0x60] sm:$0xf]
        %v182 = vld [vmem:[%s168 + $0x68] sm:$0xf]
        %v183 = vld [vmem:[%s168 + $0x70] sm:$0xf]
        %v184 = vld [vmem:[%s168 + $0x78] sm:$0xf]
        %v185 = vld [vmem:[%s168 + $0x80] sm:$0xf]
        %v186 = vld [vmem:[%s168 + $0x88] sm:$0xf]
        %v187 = vld [vmem:[%s168 + $0xa0] sm:$0xf]
        %v188 = vld [vmem:[%s168 + $0xa8] sm:$0xf]
        %v189 = vld [vmem:[%s168 + $0xb0] sm:$0xf]
        %v190 = vld [vmem:[%s168 + $0xb8] sm:$0xf]
        %v191 = vld [vmem:[%s168 + $0xc0] sm:$0xf]
        %v192 = vld [vmem:[%s168 + $0xc8] sm:$0xf]
        %v193 = vld [vmem:[%s168 + $0xd0] sm:$0xf]
        %v194 = vld [vmem:[%s168 + $0xd8] sm:$0xf]
        %v195 = vld [vmem:[%s168 + $0xf0] sm:$0xf]
        %v196 = vld [vmem:[%s168 + $0xf8] sm:$0xf]
        %v197 = vld [vmem:[%s168 + $0x100] sm:$0xf]
        %v198 = vld [vmem:[%s168 + $0x108] sm:$0xf]
        %v199 = vld [vmem:[%s168 + $0x110] sm:$0xf]
        %v200 = vld [vmem:[%s168 + $0x118] sm:$0xf]
        %v201 = vld [vmem:[%s168 + $0x120] sm:$0xf]
        %v202 = vld [vmem:[%s168 + $0x128] sm:$0xf]
        %vm203 = vcmask 27648
        %204 = vst.msk [vmem:[#allocation2] sm:$0xf] %vm203, %v171
        %205 = vst.msk [vmem:[#allocation2 + $0x4] sm:$0xf] %vm203, %v172
        %206 = vst.msk [vmem:[#allocation2 + $0x8] sm:$0xf] %vm203, %v173
        %207 = vst.msk [vmem:[#allocation2 + $0xc] sm:$0xf] %vm203, %v174
        %208 = vst.msk [vmem:[#allocation2 + $0x10] sm:$0xf] %vm203, %v175
        %209 = vst.msk [vmem:[#allocation2 + $0x14] sm:$0xf] %vm203, %v176
        %210 = vst.msk [vmem:[#allocation2 + $0x18] sm:$0xf] %vm203, %v177
        %211 = vst.msk [vmem:[#allocation2 + $0x1c] sm:$0xf] %vm203, %v178
        %212 = vst.msk [vmem:[#allocation2 + $0x20] sm:$0xf] %vm203, %v179
        %213 = vst.msk [vmem:[#allocation2 + $0x24] sm:$0xf] %vm203, %v180
        %214 = vst.msk [vmem:[#allocation2 + $0x28] sm:$0xf] %vm203, %v181
        %215 = vst.msk [vmem:[#allocation2 + $0x2c] sm:$0xf] %vm203, %v182
        %216 = vst.msk [vmem:[#allocation2 + $0x30] sm:$0xf] %vm203, %v183
        %217 = vst.msk [vmem:[#allocation2 + $0x34] sm:$0xf] %vm203, %v184
        %218 = vst.msk [vmem:[#allocation2 + $0x38] sm:$0xf] %vm203, %v185
        %219 = vst.msk [vmem:[#allocation2 + $0x3c] sm:$0xf] %vm203, %v186
        %220 = vst.msk [vmem:[#allocation2 + $0x40] sm:$0xf] %vm203, %v187
        %221 = vst.msk [vmem:[#allocation2 + $0x44] sm:$0xf] %vm203, %v188
        %222 = vst.msk [vmem:[#allocation2 + $0x48] sm:$0xf] %vm203, %v189
        %223 = vst.msk [vmem:[#allocation2 + $0x4c] sm:$0xf] %vm203, %v190
        %224 = vst.msk [vmem:[#allocation2 + $0x50] sm:$0xf] %vm203, %v191
        %225 = vst.msk [vmem:[#allocation2 + $0x54] sm:$0xf] %vm203, %v192
        %226 = vst.msk [vmem:[#allocation2 + $0x58] sm:$0xf] %vm203, %v193
        %227 = vst.msk [vmem:[#allocation2 + $0x5c] sm:$0xf] %vm203, %v194
        %228 = vst.msk [vmem:[#allocation2 + $0x60] sm:$0xf] %vm203, %v195
        %229 = vst.msk [vmem:[#allocation2 + $0x64] sm:$0xf] %vm203, %v196
        %230 = vst.msk [vmem:[#allocation2 + $0x68] sm:$0xf] %vm203, %v197
        %231 = vst.msk [vmem:[#allocation2 + $0x6c] sm:$0xf] %vm203, %v198
        %232 = vst.msk [vmem:[#allocation2 + $0x70] sm:$0xf] %vm203, %v199
        %233 = vst.msk [vmem:[#allocation2 + $0x74] sm:$0xf] %vm203, %v200
        %234 = vst.msk [vmem:[#allocation2 + $0x78] sm:$0xf] %vm203, %v201
        %235 = vst.msk [vmem:[#allocation2 + $0x7c] sm:$0xf] %vm203, %v202
        %v236 = vld [vmem:[%s168] sm:$0xf]
        %v237 = vld [vmem:[%s168 + $0x4] sm:$0x1]
        %v238 = vld [vmem:[%s168 + $0x8] sm:$0xf]
        %v239 = vld [vmem:[%s168 + $0xc] sm:$0x1]
        %v240 = vld [vmem:[%s168 + $0x10] sm:$0xf]
        %v241 = vld [vmem:[%s168 + $0x14] sm:$0x1]
        %v242 = vld [vmem:[%s168 + $0x18] sm:$0xf]
        %v243 = vld [vmem:[%s168 + $0x1c] sm:$0x1]
        %v244 = vld [vmem:[%s168 + $0x20] sm:$0xf]
        %v245 = vld [vmem:[%s168 + $0x24] sm:$0x1]
        %v246 = vld [vmem:[%s168 + $0x28] sm:$0xf]
        %v247 = vld [vmem:[%s168 + $0x2c] sm:$0x1]
        %v248 = vld [vmem:[%s168 + $0x30] sm:$0xf]
        %v249 = vld [vmem:[%s168 + $0x34] sm:$0x1]
        %v250 = vld [vmem:[%s168 + $0x38] sm:$0xf]
        %v251 = vld [vmem:[%s168 + $0x3c] sm:$0x1]
        %v252 = vld [vmem:[%s168 + $0x50] sm:$0xf]
        %v253 = vld [vmem:[%s168 + $0x54] sm:$0x1]
        %v254 = vld [vmem:[%s168 + $0x58] sm:$0xf]
        %v255 = vld [vmem:[%s168 + $0x5c] sm:$0x1]
        %v256 = vld [vmem:[%s168 + $0x60] sm:$0xf]
        %v257 = vld [vmem:[%s168 + $0x64] sm:$0x1]
        %v258 = vld [vmem:[%s168 + $0x68] sm:$0xf]
        %v259 = vld [vmem:[%s168 + $0x6c] sm:$0x1]
        %v260 = vld [vmem:[%s168 + $0x70] sm:$0xf]
        %v261 = vld [vmem:[%s168 + $0x74] sm:$0x1]
        %v262 = vld [vmem:[%s168 + $0x78] sm:$0xf]
        %v263 = vld [vmem:[%s168 + $0x7c] sm:$0x1]
        %v264 = vld [vmem:[%s168 + $0x80] sm:$0xf]
        %v265 = vld [vmem:[%s168 + $0x84] sm:$0x1]
        %v266 = vld [vmem:[%s168 + $0x88] sm:$0xf]
        %v267 = vld [vmem:[%s168 + $0x8c] sm:$0x1]
        %v268 = vld [vmem:[%s168 + $0xa0] sm:$0xf]
        %v269 = vld [vmem:[%s168 + $0xa4] sm:$0x1]
        %v270 = vld [vmem:[%s168 + $0xa8] sm:$0xf]
        %v271 = vld [vmem:[%s168 + $0xac] sm:$0x1]
        %v272 = vld [vmem:[%s168 + $0xb0] sm:$0xf]
        %v273 = vld [vmem:[%s168 + $0xb4] sm:$0x1]
        %v274 = vld [vmem:[%s168 + $0xb8] sm:$0xf]
        %v275 = vld [vmem:[%s168 + $0xbc] sm:$0x1]
        %v276 = vld [vmem:[%s168 + $0xc0] sm:$0xf]
        %v277 = vld [vmem:[%s168 + $0xc4] sm:$0x1]
        %v278 = vld [vmem:[%s168 + $0xc8] sm:$0xf]
        %v279 = vld [vmem:[%s168 + $0xcc] sm:$0x1]
        %v280 = vld [vmem:[%s168 + $0xd0] sm:$0xf]
        %v281 = vld [vmem:[%s168 + $0xd4] sm:$0x1]
        %v282 = vld [vmem:[%s168 + $0xd8] sm:$0xf]
        %v283 = vld [vmem:[%s168 + $0xdc] sm:$0x1]
        %v284 = vld [vmem:[%s168 + $0xf0] sm:$0xf]
        %v285 = vld [vmem:[%s168 + $0xf4] sm:$0x1]
        %v286 = vld [vmem:[%s168 + $0xf8] sm:$0xf]
        %v287 = vld [vmem:[%s168 + $0xfc] sm:$0x1]
        %v288 = vld [vmem:[%s168 + $0x100] sm:$0xf]
        %v289 = vld [vmem:[%s168 + $0x104] sm:$0x1]
        %v290 = vld [vmem:[%s168 + $0x108] sm:$0xf]
        %v291 = vld [vmem:[%s168 + $0x10c] sm:$0x1]
        %v292 = vld [vmem:[%s168 + $0x110] sm:$0xf]
        %v293 = vld [vmem:[%s168 + $0x114] sm:$0x1]
        %v294 = vld [vmem:[%s168 + $0x118] sm:$0xf]
        %v295 = vld [vmem:[%s168 + $0x11c] sm:$0x1]
        %v296 = vld [vmem:[%s168 + $0x120] sm:$0xf]
        %v297 = vld [vmem:[%s168 + $0x124] sm:$0x1]
        %v298 = vld [vmem:[%s168 + $0x128] sm:$0xf]
        %v299 = vld [vmem:[%s168 + $0x12c] sm:$0x1]
        %vm300 = vsmask.f32 3328
        %vm301 = vsmask.f32 7440
        %vm302 = vmor %vm300, %vm301
        %v304 = vshrl.u32 %v236, 16
        %v306 = vrot.slane %v304, 4
        %v307 = vshll.u32 %v236, 16
        %v309 = vrot.slane %v307, 5
        %v310 = vor.u32 %v306, %v309
        %v311 = vrot.slane %v310, 4
        %v313 = vshll.u32 %v237, 16
        %v315 = vrot.slane %v313, 5
        %v316 = vsel %vm302, %v311, %v315
        %v318 = vshrl.u32 %v238, 16
        %v320 = vrot.slane %v318, 4
        %v321 = vshll.u32 %v238, 16
        %v323 = vrot.slane %v321, 5
        %v324 = vor.u32 %v320, %v323
        %v325 = vrot.slane %v324, 4
        %v327 = vshll.u32 %v239, 16
        %v329 = vrot.slane %v327, 5
        %v330 = vsel %vm302, %v325, %v329
        %v332 = vshrl.u32 %v240, 16
        %v334 = vrot.slane %v332, 4
        %v335 = vshll.u32 %v240, 16
        %v337 = vrot.slane %v335, 5
        %v338 = vor.u32 %v334, %v337
        %v339 = vrot.slane %v338, 4
        %v341 = vshll.u32 %v241, 16
        %v343 = vrot.slane %v341, 5
        %v344 = vsel %vm302, %v339, %v343
        %v346 = vshrl.u32 %v242, 16
        %v348 = vrot.slane %v346, 4
        %v349 = vshll.u32 %v242, 16
        %v351 = vrot.slane %v349, 5
        %v352 = vor.u32 %v348, %v351
        %v353 = vrot.slane %v352, 4
        %v355 = vshll.u32 %v243, 16
        %v357 = vrot.slane %v355, 5
        %v358 = vsel %vm302, %v353, %v357
        %v360 = vshrl.u32 %v244, 16
        %v362 = vrot.slane %v360, 4
        %v363 = vshll.u32 %v244, 16
        %v365 = vrot.slane %v363, 5
        %v366 = vor.u32 %v362, %v365
        %v367 = vrot.slane %v366, 4
        %v369 = vshll.u32 %v245, 16
        %v371 = vrot.slane %v369, 5
        %v372 = vsel %vm302, %v367, %v371
        %v374 = vshrl.u32 %v246, 16
        %v376 = vrot.slane %v374, 4
        %v377 = vshll.u32 %v246, 16
        %v379 = vrot.slane %v377, 5
        %v380 = vor.u32 %v376, %v379
        %v381 = vrot.slane %v380, 4
        %v383 = vshll.u32 %v247, 16
        %v385 = vrot.slane %v383, 5
        %v386 = vsel %vm302, %v381, %v385
        %v388 = vshrl.u32 %v248, 16
        %v390 = vrot.slane %v388, 4
        %v391 = vshll.u32 %v248, 16
        %v393 = vrot.slane %v391, 5
        %v394 = vor.u32 %v390, %v393
        %v395 = vrot.slane %v394, 4
        %v397 = vshll.u32 %v249, 16
        %v399 = vrot.slane %v397, 5
        %v400 = vsel %vm302, %v395, %v399
        %v402 = vshrl.u32 %v250, 16
        %v404 = vrot.slane %v402, 4
        %v405 = vshll.u32 %v250, 16
        %v407 = vrot.slane %v405, 5
        %v408 = vor.u32 %v404, %v407
        %v409 = vrot.slane %v408, 4
        %v411 = vshll.u32 %v251, 16
        %v413 = vrot.slane %v411, 5
        %v414 = vsel %vm302, %v409, %v413
        %v416 = vshrl.u32 %v252, 16
        %v418 = vrot.slane %v416, 4
        %v419 = vshll.u32 %v252, 16
        %v421 = vrot.slane %v419, 5
        %v422 = vor.u32 %v418, %v421
        %v423 = vrot.slane %v422, 4
        %v425 = vshll.u32 %v253, 16
        %v427 = vrot.slane %v425, 5
        %v428 = vsel %vm302, %v423, %v427
        %v430 = vshrl.u32 %v254, 16
        %v432 = vrot.slane %v430, 4
        %v433 = vshll.u32 %v254, 16
        %v435 = vrot.slane %v433, 5
        %v436 = vor.u32 %v432, %v435
        %v437 = vrot.slane %v436, 4
        %v439 = vshll.u32 %v255, 16
        %v441 = vrot.slane %v439, 5
        %v442 = vsel %vm302, %v437, %v441
        %v444 = vshrl.u32 %v256, 16
        %v446 = vrot.slane %v444, 4
        %v447 = vshll.u32 %v256, 16
        %v449 = vrot.slane %v447, 5
        %v450 = vor.u32 %v446, %v449
        %v451 = vrot.slane %v450, 4
        %v453 = vshll.u32 %v257, 16
        %v455 = vrot.slane %v453, 5
        %v456 = vsel %vm302, %v451, %v455
        %v458 = vshrl.u32 %v258, 16
        %v460 = vrot.slane %v458, 4
        %v461 = vshll.u32 %v258, 16
        %v463 = vrot.slane %v461, 5
        %v464 = vor.u32 %v460, %v463
        %v465 = vrot.slane %v464, 4
        %v467 = vshll.u32 %v259, 16
        %v469 = vrot.slane %v467, 5
        %v470 = vsel %vm302, %v465, %v469
        %v472 = vshrl.u32 %v260, 16
        %v474 = vrot.slane %v472, 4
        %v475 = vshll.u32 %v260, 16
        %v477 = vrot.slane %v475, 5
        %v478 = vor.u32 %v474, %v477
        %v479 = vrot.slane %v478, 4
        %v481 = vshll.u32 %v261, 16
        %v483 = vrot.slane %v481, 5
        %v484 = vsel %vm302, %v479, %v483
        %v486 = vshrl.u32 %v262, 16
        %v488 = vrot.slane %v486, 4
        %v489 = vshll.u32 %v262, 16
        %v491 = vrot.slane %v489, 5
        %v492 = vor.u32 %v488, %v491
        %v493 = vrot.slane %v492, 4
        %v495 = vshll.u32 %v263, 16
        %v497 = vrot.slane %v495, 5
        %v498 = vsel %vm302, %v493, %v497
        %v500 = vshrl.u32 %v264, 16
        %v502 = vrot.slane %v500, 4
        %v503 = vshll.u32 %v264, 16
        %v505 = vrot.slane %v503, 5
        %v506 = vor.u32 %v502, %v505
        %v507 = vrot.slane %v506, 4
        %v509 = vshll.u32 %v265, 16
        %v511 = vrot.slane %v509, 5
        %v512 = vsel %vm302, %v507, %v511
        %v514 = vshrl.u32 %v266, 16
        %v516 = vrot.slane %v514, 4
        %v517 = vshll.u32 %v266, 16
        %v519 = vrot.slane %v517, 5
        %v520 = vor.u32 %v516, %v519
        %v521 = vrot.slane %v520, 4
        %v523 = vshll.u32 %v267, 16
        %v525 = vrot.slane %v523, 5
        %v526 = vsel %vm302, %v521, %v525
        %v528 = vshrl.u32 %v268, 16
        %v530 = vrot.slane %v528, 4
        %v531 = vshll.u32 %v268, 16
        %v533 = vrot.slane %v531, 5
        %v534 = vor.u32 %v530, %v533
        %v535 = vrot.slane %v534, 4
        %v537 = vshll.u32 %v269, 16
        %v539 = vrot.slane %v537, 5
        %v540 = vsel %vm302, %v535, %v539
        %v542 = vshrl.u32 %v270, 16
        %v544 = vrot.slane %v542, 4
        %v545 = vshll.u32 %v270, 16
        %v547 = vrot.slane %v545, 5
        %v548 = vor.u32 %v544, %v547
        %v549 = vrot.slane %v548, 4
        %v551 = vshll.u32 %v271, 16
        %v553 = vrot.slane %v551, 5
        %v554 = vsel %vm302, %v549, %v553
        %v556 = vshrl.u32 %v272, 16
        %v558 = vrot.slane %v556, 4
        %v559 = vshll.u32 %v272, 16
        %v561 = vrot.slane %v559, 5
        %v562 = vor.u32 %v558, %v561
        %v563 = vrot.slane %v562, 4
        %v565 = vshll.u32 %v273, 16
        %v567 = vrot.slane %v565, 5
        %v568 = vsel %vm302, %v563, %v567
        %v570 = vshrl.u32 %v274, 16
        %v572 = vrot.slane %v570, 4
        %v573 = vshll.u32 %v274, 16
        %v575 = vrot.slane %v573, 5
        %v576 = vor.u32 %v572, %v575
        %v577 = vrot.slane %v576, 4
        %v579 = vshll.u32 %v275, 16
        %v581 = vrot.slane %v579, 5
        %v582 = vsel %vm302, %v577, %v581
        %v584 = vshrl.u32 %v276, 16
        %v586 = vrot.slane %v584, 4
        %v587 = vshll.u32 %v276, 16
        %v589 = vrot.slane %v587, 5
        %v590 = vor.u32 %v586, %v589
        %v591 = vrot.slane %v590, 4
        %v593 = vshll.u32 %v277, 16
        %v595 = vrot.slane %v593, 5
        %v596 = vsel %vm302, %v591, %v595
        %v598 = vshrl.u32 %v278, 16
        %v600 = vrot.slane %v598, 4
        %v601 = vshll.u32 %v278, 16
        %v603 = vrot.slane %v601, 5
        %v604 = vor.u32 %v600, %v603
        %v605 = vrot.slane %v604, 4
        %v607 = vshll.u32 %v279, 16
        %v609 = vrot.slane %v607, 5
        %v610 = vsel %vm302, %v605, %v609
        %v612 = vshrl.u32 %v280, 16
        %v614 = vrot.slane %v612, 4
        %v615 = vshll.u32 %v280, 16
        %v617 = vrot.slane %v615, 5
        %v618 = vor.u32 %v614, %v617
        %v619 = vrot.slane %v618, 4
        %v621 = vshll.u32 %v281, 16
        %v623 = vrot.slane %v621, 5
        %v624 = vsel %vm302, %v619, %v623
        %v626 = vshrl.u32 %v282, 16
        %v628 = vrot.slane %v626, 4
        %v629 = vshll.u32 %v282, 16
        %v631 = vrot.slane %v629, 5
        %v632 = vor.u32 %v628, %v631
        %v633 = vrot.slane %v632, 4
        %v635 = vshll.u32 %v283, 16
        %v637 = vrot.slane %v635, 5
        %v638 = vsel %vm302, %v633, %v637
        %v640 = vshrl.u32 %v284, 16
        %v642 = vrot.slane %v640, 4
        %v643 = vshll.u32 %v284, 16
        %v645 = vrot.slane %v643, 5
        %v646 = vor.u32 %v642, %v645
        %v647 = vrot.slane %v646, 4
        %v649 = vshll.u32 %v285, 16
        %v651 = vrot.slane %v649, 5
        %v652 = vsel %vm302, %v647, %v651
        %v654 = vshrl.u32 %v286, 16
        %v656 = vrot.slane %v654, 4
        %v657 = vshll.u32 %v286, 16
        %v659 = vrot.slane %v657, 5
        %v660 = vor.u32 %v656, %v659
        %v661 = vrot.slane %v660, 4
        %v663 = vshll.u32 %v287, 16
        %v665 = vrot.slane %v663, 5
        %v666 = vsel %vm302, %v661, %v665
        %v668 = vshrl.u32 %v288, 16
        %v670 = vrot.slane %v668, 4
        %v671 = vshll.u32 %v288, 16
        %v673 = vrot.slane %v671, 5
        %v674 = vor.u32 %v670, %v673
        %v675 = vrot.slane %v674, 4
        %v677 = vshll.u32 %v289, 16
        %v679 = vrot.slane %v677, 5
        %v680 = vsel %vm302, %v675, %v679
        %v682 = vshrl.u32 %v290, 16
        %v684 = vrot.slane %v682, 4
        %v685 = vshll.u32 %v290, 16
        %v687 = vrot.slane %v685, 5
        %v688 = vor.u32 %v684, %v687
        %v689 = vrot.slane %v688, 4
        %v691 = vshll.u32 %v291, 16
        %v693 = vrot.slane %v691, 5
        %v694 = vsel %vm302, %v689, %v693
        %v696 = vshrl.u32 %v292, 16
        %v698 = vrot.slane %v696, 4
        %v699 = vshll.u32 %v292, 16
        %v701 = vrot.slane %v699, 5
        %v702 = vor.u32 %v698, %v701
        %v703 = vrot.slane %v702, 4
        %v705 = vshll.u32 %v293, 16
        %v707 = vrot.slane %v705, 5
        %v708 = vsel %vm302, %v703, %v707
        %v710 = vshrl.u32 %v294, 16
        %v712 = vrot.slane %v710, 4
        %v713 = vshll.u32 %v294, 16
        %v715 = vrot.slane %v713, 5
        %v716 = vor.u32 %v712, %v715
        %v717 = vrot.slane %v716, 4
        %v719 = vshll.u32 %v295, 16
        %v721 = vrot.slane %v719, 5
        %v722 = vsel %vm302, %v717, %v721
        %v724 = vshrl.u32 %v296, 16
        %v726 = vrot.slane %v724, 4
        %v727 = vshll.u32 %v296, 16
        %v729 = vrot.slane %v727, 5
        %v730 = vor.u32 %v726, %v729
        %v731 = vrot.slane %v730, 4
        %v733 = vshll.u32 %v297, 16
        %v735 = vrot.slane %v733, 5
        %v736 = vsel %vm302, %v731, %v735
        %v738 = vshrl.u32 %v298, 16
        %v740 = vrot.slane %v738, 4
        %v741 = vshll.u32 %v298, 16
        %v743 = vrot.slane %v741, 5
        %v744 = vor.u32 %v740, %v743
        %v745 = vrot.slane %v744, 4
        %v747 = vshll.u32 %v299, 16
        %v749 = vrot.slane %v747, 5
        %v750 = vsel %vm302, %v745, %v749
        %751 = vrot.lane.b32.xlu0 %v316, 4
        %v752 = vpop.permute.xlu0 %751
        %753 = vrot.lane.b32.xlu0 %v330, 4
        %v754 = vpop.permute.xlu0 %753
        %755 = vrot.lane.b32.xlu0 %v344, 4
        %v756 = vpop.permute.xlu0 %755
        %757 = vrot.lane.b32.xlu0 %v358, 4
        %v758 = vpop.permute.xlu0 %757
        %759 = vrot.lane.b32.xlu0 %v372, 4
        %v760 = vpop.permute.xlu0 %759
        %761 = vrot.lane.b32.xlu0 %v386, 4
        %v762 = vpop.permute.xlu0 %761
        %763 = vrot.lane.b32.xlu0 %v400, 4
        %v764 = vpop.permute.xlu0 %763
        %765 = vrot.lane.b32.xlu0 %v414, 4
        %v766 = vpop.permute.xlu0 %765
        %767 = vrot.lane.b32.xlu0 %v428, 4
        %v768 = vpop.permute.xlu0 %767
        %769 = vrot.lane.b32.xlu0 %v442, 4
        %v770 = vpop.permute.xlu0 %769
        %771 = vrot.lane.b32.xlu0 %v456, 4
        %v772 = vpop.permute.xlu0 %771
        %773 = vrot.lane.b32.xlu0 %v470, 4
        %v774 = vpop.permute.xlu0 %773
        %775 = vrot.lane.b32.xlu0 %v484, 4
        %v776 = vpop.permute.xlu0 %775
        %777 = vrot.lane.b32.xlu0 %v498, 4
        %v778 = vpop.permute.xlu0 %777
        %779 = vrot.lane.b32.xlu0 %v512, 4
        %v780 = vpop.permute.xlu0 %779
        %781 = vrot.lane.b32.xlu0 %v526, 4
        %v782 = vpop.permute.xlu0 %781
        %783 = vrot.lane.b32.xlu0 %v540, 4
        %v784 = vpop.permute.xlu0 %783
        %785 = vrot.lane.b32.xlu0 %v554, 4
        %v786 = vpop.permute.xlu0 %785
        %787 = vrot.lane.b32.xlu0 %v568, 4
        %v788 = vpop.permute.xlu0 %787
        %789 = vrot.lane.b32.xlu0 %v582, 4
        %v790 = vpop.permute.xlu0 %789
        %791 = vrot.lane.b32.xlu0 %v596, 4
        %v792 = vpop.permute.xlu0 %791
        %793 = vrot.lane.b32.xlu0 %v610, 4
        %v794 = vpop.permute.xlu0 %793
        %795 = vrot.lane.b32.xlu0 %v624, 4
        %v796 = vpop.permute.xlu0 %795
        %797 = vrot.lane.b32.xlu0 %v638, 4
        %v798 = vpop.permute.xlu0 %797
        %799 = vrot.lane.b32.xlu0 %v652, 4
        %v800 = vpop.permute.xlu0 %799
        %801 = vrot.lane.b32.xlu0 %v666, 4
        %v802 = vpop.permute.xlu0 %801
        %803 = vrot.lane.b32.xlu0 %v680, 4
        %v804 = vpop.permute.xlu0 %803
        %805 = vrot.lane.b32.xlu0 %v694, 4
        %v806 = vpop.permute.xlu0 %805
        %807 = vrot.lane.b32.xlu0 %v708, 4
        %v808 = vpop.permute.xlu0 %807
        %809 = vrot.lane.b32.xlu0 %v722, 4
        %v810 = vpop.permute.xlu0 %809
        %811 = vrot.lane.b32.xlu0 %v736, 4
        %v812 = vpop.permute.xlu0 %811
        %813 = vrot.lane.b32.xlu0 %v750, 4
        %v814 = vpop.permute.xlu0 %813
        %vm847 = vcmask 60448
        %848 = vst.msk [vmem:[#allocation2] sm:$0xf] %vm847, %v752
        %849 = vst.msk [vmem:[#allocation2 + $0x4] sm:$0xf] %vm847, %v754
        %850 = vst.msk [vmem:[#allocation2 + $0x8] sm:$0xf] %vm847, %v756
        %851 = vst.msk [vmem:[#allocation2 + $0xc] sm:$0xf] %vm847, %v758
        %852 = vst.msk [vmem:[#allocation2 + $0x10] sm:$0xf] %vm847, %v760
        %853 = vst.msk [vmem:[#allocation2 + $0x14] sm:$0xf] %vm847, %v762
        %854 = vst.msk [vmem:[#allocation2 + $0x18] sm:$0xf] %vm847, %v764
        %855 = vst.msk [vmem:[#allocation2 + $0x1c] sm:$0xf] %vm847, %v766
        %856 = vst.msk [vmem:[#allocation2 + $0x20] sm:$0xf] %vm847, %v768
        %857 = vst.msk [vmem:[#allocation2 + $0x24] sm:$0xf] %vm847, %v770
        %858 = vst.msk [vmem:[#allocation2 + $0x28] sm:$0xf] %vm847, %v772
        %859 = vst.msk [vmem:[#allocation2 + $0x2c] sm:$0xf] %vm847, %v774
        %860 = vst.msk [vmem:[#allocation2 + $0x30] sm:$0xf] %vm847, %v776
        %861 = vst.msk [vmem:[#allocation2 + $0x34] sm:$0xf] %vm847, %v778
        %862 = vst.msk [vmem:[#allocation2 + $0x38] sm:$0xf] %vm847, %v780
        %863 = vst.msk [vmem:[#allocation2 + $0x3c] sm:$0xf] %vm847, %v782
        %864 = vst.msk [vmem:[#allocation2 + $0x40] sm:$0xf] %vm847, %v784
        %865 = vst.msk [vmem:[#allocation2 + $0x44] sm:$0xf] %vm847, %v786
        %866 = vst.msk [vmem:[#allocation2 + $0x48] sm:$0xf] %vm847, %v788
        %867 = vst.msk [vmem:[#allocation2 + $0x4c] sm:$0xf] %vm847, %v790
        %868 = vst.msk [vmem:[#allocation2 + $0x50] sm:$0xf] %vm847, %v792
        %869 = vst.msk [vmem:[#allocation2 + $0x54] sm:$0xf] %vm847, %v794
        %870 = vst.msk [vmem:[#allocation2 + $0x58] sm:$0xf] %vm847, %v796
        %871 = vst.msk [vmem:[#allocation2 + $0x5c] sm:$0xf] %vm847, %v798
        %872 = vst.msk [vmem:[#allocation2 + $0x60] sm:$0xf] %vm847, %v800
        %873 = vst.msk [vmem:[#allocation2 + $0x64] sm:$0xf] %vm847, %v802
        %874 = vst.msk [vmem:[#allocation2 + $0x68] sm:$0xf] %vm847, %v804
        %875 = vst.msk [vmem:[#allocation2 + $0x6c] sm:$0xf] %vm847, %v806
        %876 = vst.msk [vmem:[#allocation2 + $0x70] sm:$0xf] %vm847, %v808
        %877 = vst.msk [vmem:[#allocation2 + $0x74] sm:$0xf] %vm847, %v810
        %878 = vst.msk [vmem:[#allocation2 + $0x78] sm:$0xf] %vm847, %v812
        %879 = vst.msk [vmem:[#allocation2 + $0x7c] sm:$0xf] %vm847, %v814
        %v880 = vld [vmem:[%s168] sm:$0xe]
        %v881 = vld [vmem:[%s168 + $0x4] sm:$0x1]
        %v882 = vld [vmem:[%s168 + $0x8] sm:$0xe]
        %v883 = vld [vmem:[%s168 + $0xc] sm:$0x1]
        %v884 = vld [vmem:[%s168 + $0x10] sm:$0xe]
        %v885 = vld [vmem:[%s168 + $0x14] sm:$0x1]
        %v886 = vld [vmem:[%s168 + $0x18] sm:$0xe]
        %v887 = vld [vmem:[%s168 + $0x1c] sm:$0x1]
        %v888 = vld [vmem:[%s168 + $0x20] sm:$0xe]
        %v889 = vld [vmem:[%s168 + $0x24] sm:$0x1]
        %v890 = vld [vmem:[%s168 + $0x28] sm:$0xe]
        %v891 = vld [vmem:[%s168 + $0x2c] sm:$0x1]
        %v892 = vld [vmem:[%s168 + $0x30] sm:$0xe]
        %v893 = vld [vmem:[%s168 + $0x34] sm:$0x1]
        %v894 = vld [vmem:[%s168 + $0x38] sm:$0xe]
        %v895 = vld [vmem:[%s168 + $0x3c] sm:$0x1]
        %v896 = vld [vmem:[%s168 + $0x50] sm:$0xe]
        %v897 = vld [vmem:[%s168 + $0x54] sm:$0x1]
        %v898 = vld [vmem:[%s168 + $0x58] sm:$0xe]
        %v899 = vld [vmem:[%s168 + $0x5c] sm:$0x1]
        %v900 = vld [vmem:[%s168 + $0x60] sm:$0xe]
        %v901 = vld [vmem:[%s168 + $0x64] sm:$0x1]
        %v902 = vld [vmem:[%s168 + $0x68] sm:$0xe]
        %v903 = vld [vmem:[%s168 + $0x6c] sm:$0x1]
        %v904 = vld [vmem:[%s168 + $0x70] sm:$0xe]
        %v905 = vld [vmem:[%s168 + $0x74] sm:$0x1]
        %v906 = vld [vmem:[%s168 + $0x78] sm:$0xe]
        %v907 = vld [vmem:[%s168 + $0x7c] sm:$0x1]
        %v908 = vld [vmem:[%s168 + $0x80] sm:$0xe]
        %v909 = vld [vmem:[%s168 + $0x84] sm:$0x1]
        %v910 = vld [vmem:[%s168 + $0x88] sm:$0xe]
        %v911 = vld [vmem:[%s168 + $0x8c] sm:$0x1]
        %v912 = vld [vmem:[%s168 + $0xa0] sm:$0xe]
        %v913 = vld [vmem:[%s168 + $0xa4] sm:$0x1]
        %v914 = vld [vmem:[%s168 + $0xa8] sm:$0xe]
        %v915 = vld [vmem:[%s168 + $0xac] sm:$0x1]
        %v916 = vld [vmem:[%s168 + $0xb0] sm:$0xe]
        %v917 = vld [vmem:[%s168 + $0xb4] sm:$0x1]
        %v918 = vld [vmem:[%s168 + $0xb8] sm:$0xe]
        %v919 = vld [vmem:[%s168 + $0xbc] sm:$0x1]
        %v920 = vld [vmem:[%s168 + $0xc0] sm:$0xe]
        %v921 = vld [vmem:[%s168 + $0xc4] sm:$0x1]
        %v922 = vld [vmem:[%s168 + $0xc8] sm:$0xe]
        %v923 = vld [vmem:[%s168 + $0xcc] sm:$0x1]
        %v924 = vld [vmem:[%s168 + $0xd0] sm:$0xe]
        %v925 = vld [vmem:[%s168 + $0xd4] sm:$0x1]
        %v926 = vld [vmem:[%s168 + $0xd8] sm:$0xe]
        %v927 = vld [vmem:[%s168 + $0xdc] sm:$0x1]
        %v928 = vld [vmem:[%s168 + $0xf0] sm:$0xe]
        %v929 = vld [vmem:[%s168 + $0xf4] sm:$0x1]
        %v930 = vld [vmem:[%s168 + $0xf8] sm:$0xe]
        %v931 = vld [vmem:[%s168 + $0xfc] sm:$0x1]
        %v932 = vld [vmem:[%s168 + $0x100] sm:$0xe]
        %v933 = vld [vmem:[%s168 + $0x104] sm:$0x1]
        %v934 = vld [vmem:[%s168 + $0x108] sm:$0xe]
        %v935 = vld [vmem:[%s168 + $0x10c] sm:$0x1]
        %v936 = vld [vmem:[%s168 + $0x110] sm:$0xe]
        %v937 = vld [vmem:[%s168 + $0x114] sm:$0x1]
        %v938 = vld [vmem:[%s168 + $0x118] sm:$0xe]
        %v939 = vld [vmem:[%s168 + $0x11c] sm:$0x1]
        %v940 = vld [vmem:[%s168 + $0x120] sm:$0xe]
        %v941 = vld [vmem:[%s168 + $0x124] sm:$0x1]
        %v942 = vld [vmem:[%s168 + $0x128] sm:$0xe]
        %v943 = vld [vmem:[%s168 + $0x12c] sm:$0x1]
        %vm1008 = vcmask 1042432
        %vm1009 = vcmask 1046532
        %vm1010 = vmor %vm1008, %vm1009
        %v1011 = vrot.slane %v880, 5
        %v1012 = vrot.slane %v1011, 4
        %v1013 = vrot.slane %v881, 5
        %v1014 = vsel %vm1010, %v1012, %v1013
        %v1015 = vrot.slane %v882, 5
        %v1016 = vrot.slane %v1015, 4
        %v1017 = vrot.slane %v883, 5
        %v1018 = vsel %vm1010, %v1016, %v1017
        %v1019 = vrot.slane %v884, 5
        %v1020 = vrot.slane %v1019, 4
        %v1021 = vrot.slane %v885, 5
        %v1022 = vsel %vm1010, %v1020, %v1021
        %v1023 = vrot.slane %v886, 5
        %v1024 = vrot.slane %v1023, 4
        %v1025 = vrot.slane %v887, 5
        %v1026 = vsel %vm1010, %v1024, %v1025
        %v1027 = vrot.slane %v888, 5
        %v1028 = vrot.slane %v1027, 4
        %v1029 = vrot.slane %v889, 5
        %v1030 = vsel %vm1010, %v1028, %v1029
        %v1031 = vrot.slane %v890, 5
        %v1032 = vrot.slane %v1031, 4
        %v1033 = vrot.slane %v891, 5
        %v1034 = vsel %vm1010, %v1032, %v1033
        %v1035 = vrot.slane %v892, 5
        %v1036 = vrot.slane %v1035, 4
        %v1037 = vrot.slane %v893, 5
        %v1038 = vsel %vm1010, %v1036, %v1037
        %v1039 = vrot.slane %v894, 5
        %v1040 = vrot.slane %v1039, 4
        %v1041 = vrot.slane %v895, 5
        %v1042 = vsel %vm1010, %v1040, %v1041
        %v1043 = vrot.slane %v896, 5
        %v1044 = vrot.slane %v1043, 4
        %v1045 = vrot.slane %v897, 5
        %v1046 = vsel %vm1010, %v1044, %v1045
        %v1047 = vrot.slane %v898, 5
        %v1048 = vrot.slane %v1047, 4
        %v1049 = vrot.slane %v899, 5
        %v1050 = vsel %vm1010, %v1048, %v1049
        %v1051 = vrot.slane %v900, 5
        %v1052 = vrot.slane %v1051, 4
        %v1053 = vrot.slane %v901, 5
        %v1054 = vsel %vm1010, %v1052, %v1053
        %v1055 = vrot.slane %v902, 5
        %v1056 = vrot.slane %v1055, 4
        %v1057 = vrot.slane %v903, 5
        %v1058 = vsel %vm1010, %v1056, %v1057
        %v1059 = vrot.slane %v904, 5
        %v1060 = vrot.slane %v1059, 4
        %v1061 = vrot.slane %v905, 5
        %v1062 = vsel %vm1010, %v1060, %v1061
        %v1063 = vrot.slane %v906, 5
        %v1064 = vrot.slane %v1063, 4
        %v1065 = vrot.slane %v907, 5
        %v1066 = vsel %vm1010, %v1064, %v1065
        %v1067 = vrot.slane %v908, 5
        %v1068 = vrot.slane %v1067, 4
        %v1069 = vrot.slane %v909, 5
        %v1070 = vsel %vm1010, %v1068, %v1069
        %v1071 = vrot.slane %v910, 5
        %v1072 = vrot.slane %v1071, 4
        %v1073 = vrot.slane %v911, 5
        %v1074 = vsel %vm1010, %v1072, %v1073
        %v1075 = vrot.slane %v912, 5
        %v1076 = vrot.slane %v1075, 4
        %v1077 = vrot.slane %v913, 5
        %v1078 = vsel %vm1010, %v1076, %v1077
        %v1079 = vrot.slane %v914, 5
        %v1080 = vrot.slane %v1079, 4
        %v1081 = vrot.slane %v915, 5
        %v1082 = vsel %vm1010, %v1080, %v1081
        %v1083 = vrot.slane %v916, 5
        %v1084 = vrot.slane %v1083, 4
        %v1085 = vrot.slane %v917, 5
        %v1086 = vsel %vm1010, %v1084, %v1085
        %v1087 = vrot.slane %v918, 5
        %v1088 = vrot.slane %v1087, 4
        %v1089 = vrot.slane %v919, 5
        %v1090 = vsel %vm1010, %v1088, %v1089
        %v1091 = vrot.slane %v920, 5
        %v1092 = vrot.slane %v1091, 4
        %v1093 = vrot.slane %v921, 5
        %v1094 = vsel %vm1010, %v1092, %v1093
        %v1095 = vrot.slane %v922, 5
        %v1096 = vrot.slane %v1095, 4
        %v1097 = vrot.slane %v923, 5
        %v1098 = vsel %vm1010, %v1096, %v1097
        %v1099 = vrot.slane %v924, 5
        %v1100 = vrot.slane %v1099, 4
        %v1101 = vrot.slane %v925, 5
        %v1102 = vsel %vm1010, %v1100, %v1101
        %v1103 = vrot.slane %v926, 5
        %v1104 = vrot.slane %v1103, 4
        %v1105 = vrot.slane %v927, 5
        %v1106 = vsel %vm1010, %v1104, %v1105
        %v1107 = vrot.slane %v928, 5
        %v1108 = vrot.slane %v1107, 4
        %v1109 = vrot.slane %v929, 5
        %v1110 = vsel %vm1010, %v1108, %v1109
        %v1111 = vrot.slane %v930, 5
        %v1112 = vrot.slane %v1111, 4
        %v1113 = vrot.slane %v931, 5
        %v1114 = vsel %vm1010, %v1112, %v1113
        %v1115 = vrot.slane %v932, 5
        %v1116 = vrot.slane %v1115, 4
        %v1117 = vrot.slane %v933, 5
        %v1118 = vsel %vm1010, %v1116, %v1117
        %v1119 = vrot.slane %v934, 5
        %v1120 = vrot.slane %v1119, 4
        %v1121 = vrot.slane %v935, 5
        %v1122 = vsel %vm1010, %v1120, %v1121
        %v1123 = vrot.slane %v936, 5
        %v1124 = vrot.slane %v1123, 4
        %v1125 = vrot.slane %v937, 5
        %v1126 = vsel %vm1010, %v1124, %v1125
        %v1127 = vrot.slane %v938, 5
        %v1128 = vrot.slane %v1127, 4
        %v1129 = vrot.slane %v939, 5
        %v1130 = vsel %vm1010, %v1128, %v1129
        %v1131 = vrot.slane %v940, 5
        %v1132 = vrot.slane %v1131, 4
        %v1133 = vrot.slane %v941, 5
        %v1134 = vsel %vm1010, %v1132, %v1133
        %v1135 = vrot.slane %v942, 5
        %v1136 = vrot.slane %v1135, 4
        %v1137 = vrot.slane %v943, 5
        %v1138 = vsel %vm1010, %v1136, %v1137
        %1139 = vrot.lane.b32.xlu0 %v1014, 8
        %v1140 = vpop.permute.xlu0 %1139
        %1141 = vrot.lane.b32.xlu0 %v1018, 8
        %v1142 = vpop.permute.xlu0 %1141
        %1143 = vrot.lane.b32.xlu0 %v1022, 8
        %v1144 = vpop.permute.xlu0 %1143
        %1145 = vrot.lane.b32.xlu0 %v1026, 8
        %v1146 = vpop.permute.xlu0 %1145
        %1147 = vrot.lane.b32.xlu0 %v1030, 8
        %v1148 = vpop.permute.xlu0 %1147
        %1149 = vrot.lane.b32.xlu0 %v1034, 8
        %v1150 = vpop.permute.xlu0 %1149
        %1151 = vrot.lane.b32.xlu0 %v1038, 8
        %v1152 = vpop.permute.xlu0 %1151
        %1153 = vrot.lane.b32.xlu0 %v1042, 8
        %v1154 = vpop.permute.xlu0 %1153
        %1155 = vrot.lane.b32.xlu0 %v1046, 8
        %v1156 = vpop.permute.xlu0 %1155
        %1157 = vrot.lane.b32.xlu0 %v1050, 8
        %v1158 = vpop.permute.xlu0 %1157
        %1159 = vrot.lane.b32.xlu0 %v1054, 8
        %v1160 = vpop.permute.xlu0 %1159
        %1161 = vrot.lane.b32.xlu0 %v1058, 8
        %v1162 = vpop.permute.xlu0 %1161
        %1163 = vrot.lane.b32.xlu0 %v1062, 8
        %v1164 = vpop.permute.xlu0 %1163
        %1165 = vrot.lane.b32.xlu0 %v1066, 8
        %v1166 = vpop.permute.xlu0 %1165
        %1167 = vrot.lane.b32.xlu0 %v1070, 8
        %v1168 = vpop.permute.xlu0 %1167
        %1169 = vrot.lane.b32.xlu0 %v1074, 8
        %v1170 = vpop.permute.xlu0 %1169
        %1171 = vrot.lane.b32.xlu0 %v1078, 8
        %v1172 = vpop.permute.xlu0 %1171
        %1173 = vrot.lane.b32.xlu0 %v1082, 8
        %v1174 = vpop.permute.xlu0 %1173
        %1175 = vrot.lane.b32.xlu0 %v1086, 8
        %v1176 = vpop.permute.xlu0 %1175
        %1177 = vrot.lane.b32.xlu0 %v1090, 8
        %v1178 = vpop.permute.xlu0 %1177
        %1179 = vrot.lane.b32.xlu0 %v1094, 8
        %v1180 = vpop.permute.xlu0 %1179
        %1181 = vrot.lane.b32.xlu0 %v1098, 8
        %v1182 = vpop.permute.xlu0 %1181
        %1183 = vrot.lane.b32.xlu0 %v1102, 8
        %v1184 = vpop.permute.xlu0 %1183
        %1185 = vrot.lane.b32.xlu0 %v1106, 8
        %v1186 = vpop.permute.xlu0 %1185
        %1187 = vrot.lane.b32.xlu0 %v1110, 8
        %v1188 = vpop.permute.xlu0 %1187
        %1189 = vrot.lane.b32.xlu0 %v1114, 8
        %v1190 = vpop.permute.xlu0 %1189
        %1191 = vrot.lane.b32.xlu0 %v1118, 8
        %v1192 = vpop.permute.xlu0 %1191
        %1193 = vrot.lane.b32.xlu0 %v1122, 8
        %v1194 = vpop.permute.xlu0 %1193
        %1195 = vrot.lane.b32.xlu0 %v1126, 8
        %v1196 = vpop.permute.xlu0 %1195
        %1197 = vrot.lane.b32.xlu0 %v1130, 8
        %v1198 = vpop.permute.xlu0 %1197
        %1199 = vrot.lane.b32.xlu0 %v1134, 8
        %v1200 = vpop.permute.xlu0 %1199
        %1201 = vrot.lane.b32.xlu0 %v1138, 8
        %v1202 = vpop.permute.xlu0 %1201
        %vm1235 = vcmask 93248
        %1236 = vst.msk [vmem:[#allocation2] sm:$0xf] %vm1235, %v1140
        %1237 = vst.msk [vmem:[#allocation2 + $0x4] sm:$0xf] %vm1235, %v1142
        %1238 = vst.msk [vmem:[#allocation2 + $0x8] sm:$0xf] %vm1235, %v1144
        %1239 = vst.msk [vmem:[#allocation2 + $0xc] sm:$0xf] %vm1235, %v1146
        %1240 = vst.msk [vmem:[#allocation2 + $0x10] sm:$0xf] %vm1235, %v1148
        %1241 = vst.msk [vmem:[#allocation2 + $0x14] sm:$0xf] %vm1235, %v1150
        %1242 = vst.msk [vmem:[#allocation2 + $0x18] sm:$0xf] %vm1235, %v1152
        %1243 = vst.msk [vmem:[#allocation2 + $0x1c] sm:$0xf] %vm1235, %v1154
        %1244 = vst.msk [vmem:[#allocation2 + $0x20] sm:$0xf] %vm1235, %v1156
        %1245 = vst.msk [vmem:[#allocation2 + $0x24] sm:$0xf] %vm1235, %v1158
        %1246 = vst.msk [vmem:[#allocation2 + $0x28] sm:$0xf] %vm1235, %v1160
        %1247 = vst.msk [vmem:[#allocation2 + $0x2c] sm:$0xf] %vm1235, %v1162
        %1248 = vst.msk [vmem:[#allocation2 + $0x30] sm:$0xf] %vm1235, %v1164
        %1249 = vst.msk [vmem:[#allocation2 + $0x34] sm:$0xf] %vm1235, %v1166
        %1250 = vst.msk [vmem:[#allocation2 + $0x38] sm:$0xf] %vm1235, %v1168
        %1251 = vst.msk [vmem:[#allocation2 + $0x3c] sm:$0xf] %vm1235, %v1170
        %1252 = vst.msk [vmem:[#allocation2 + $0x40] sm:$0xf] %vm1235, %v1172
        %1253 = vst.msk [vmem:[#allocation2 + $0x44] sm:$0xf] %vm1235, %v1174
        %1254 = vst.msk [vmem:[#allocation2 + $0x48] sm:$0xf] %vm1235, %v1176
        %1255 = vst.msk [vmem:[#allocation2 + $0x4c] sm:$0xf] %vm1235, %v1178
        %1256 = vst.msk [vmem:[#allocation2 + $0x50] sm:$0xf] %vm1235, %v1180
        %1257 = vst.msk [vmem:[#allocation2 + $0x54] sm:$0xf] %vm1235, %v1182
        %1258 = vst.msk [vmem:[#allocation2 + $0x58] sm:$0xf] %vm1235, %v1184
        %1259 = vst.msk [vmem:[#allocation2 + $0x5c] sm:$0xf] %vm1235, %v1186
        %1260 = vst.msk [vmem:[#allocation2 + $0x60] sm:$0xf] %vm1235, %v1188
        %1261 = vst.msk [vmem:[#allocation2 + $0x64] sm:$0xf] %vm1235, %v1190
        %1262 = vst.msk [vmem:[#allocation2 + $0x68] sm:$0xf] %vm1235, %v1192
        %1263 = vst.msk [vmem:[#allocation2 + $0x6c] sm:$0xf] %vm1235, %v1194
        %1264 = vst.msk [vmem:[#allocation2 + $0x70] sm:$0xf] %vm1235, %v1196
        %1265 = vst.msk [vmem:[#allocation2 + $0x74] sm:$0xf] %vm1235, %v1198
        %1266 = vst.msk [vmem:[#allocation2 + $0x78] sm:$0xf] %vm1235, %v1200
        %1267 = vst.msk [vmem:[#allocation2 + $0x7c] sm:$0xf] %vm1235, %v1202
        %s1268 = scalar_lea.vmem %s168, 8
        %v1269 = vld [vmem:[%s1268] sm:$0xf]
        %v1270 = vld [vmem:[%s1268 + $0x8] sm:$0xf]
        %v1271 = vld [vmem:[%s1268 + $0x10] sm:$0xf]
        %v1272 = vld [vmem:[%s1268 + $0x18] sm:$0xf]
        %v1273 = vld [vmem:[%s1268 + $0x20] sm:$0xf]
        %v1274 = vld [vmem:[%s1268 + $0x28] sm:$0xf]
        %v1275 = vld [vmem:[%s1268 + $0x30] sm:$0xf]
        %v1276 = vld [vmem:[%s1268 + $0x38] sm:$0xf]
        %v1277 = vld [vmem:[%s1268 + $0x50] sm:$0xf]
        %v1278 = vld [vmem:[%s1268 + $0x58] sm:$0xf]
        %v1279 = vld [vmem:[%s1268 + $0x60] sm:$0xf]
        %v1280 = vld [vmem:[%s1268 + $0x68] sm:$0xf]
        %v1281 = vld [vmem:[%s1268 + $0x70] sm:$0xf]
        %v1282 = vld [vmem:[%s1268 + $0x78] sm:$0xf]
        %v1283 = vld [vmem:[%s1268 + $0x80] sm:$0xf]
        %v1284 = vld [vmem:[%s1268 + $0x88] sm:$0xf]
        %v1285 = vld [vmem:[%s1268 + $0xa0] sm:$0xf]
        %v1286 = vld [vmem:[%s1268 + $0xa8] sm:$0xf]
        %v1287 = vld [vmem:[%s1268 + $0xb0] sm:$0xf]
        %v1288 = vld [vmem:[%s1268 + $0xb8] sm:$0xf]
        %v1289 = vld [vmem:[%s1268 + $0xc0] sm:$0xf]
        %v1290 = vld [vmem:[%s1268 + $0xc8] sm:$0xf]
        %v1291 = vld [vmem:[%s1268 + $0xd0] sm:$0xf]
        %v1292 = vld [vmem:[%s1268 + $0xd8] sm:$0xf]
        %v1293 = vld [vmem:[%s1268 + $0xf0] sm:$0xf]
        %v1294 = vld [vmem:[%s1268 + $0xf8] sm:$0xf]
        %v1295 = vld [vmem:[%s1268 + $0x100] sm:$0xf]
        %v1296 = vld [vmem:[%s1268 + $0x108] sm:$0xf]
        %v1297 = vld [vmem:[%s1268 + $0x110] sm:$0xf]
        %v1298 = vld [vmem:[%s1268 + $0x118] sm:$0xf]
        %v1299 = vld [vmem:[%s1268 + $0x120] sm:$0xf]
        %v1300 = vld [vmem:[%s1268 + $0x128] sm:$0xf]
        %1333 = vrot.lane.b32.xlu0 %v1269, 12
        %v1334 = vpop.permute.xlu0 %1333
        %1335 = vrot.lane.b32.xlu0 %v1270, 12
        %v1336 = vpop.permute.xlu0 %1335
        %1337 = vrot.lane.b32.xlu0 %v1271, 12
        %v1338 = vpop.permute.xlu0 %1337
        %1339 = vrot.lane.b32.xlu0 %v1272, 12
        %v1340 = vpop.permute.xlu0 %1339
        %1341 = vrot.lane.b32.xlu0 %v1273, 12
        %v1342 = vpop.permute.xlu0 %1341
        %1343 = vrot.lane.b32.xlu0 %v1274, 12
        %v1344 = vpop.permute.xlu0 %1343
        %1345 = vrot.lane.b32.xlu0 %v1275, 12
        %v1346 = vpop.permute.xlu0 %1345
        %1347 = vrot.lane.b32.xlu0 %v1276, 12
        %v1348 = vpop.permute.xlu0 %1347
        %1349 = vrot.lane.b32.xlu0 %v1277, 12
        %v1350 = vpop.permute.xlu0 %1349
        %1351 = vrot.lane.b32.xlu0 %v1278, 12
        %v1352 = vpop.permute.xlu0 %1351
        %1353 = vrot.lane.b32.xlu0 %v1279, 12
        %v1354 = vpop.permute.xlu0 %1353
        %1355 = vrot.lane.b32.xlu0 %v1280, 12
        %v1356 = vpop.permute.xlu0 %1355
        %1357 = vrot.lane.b32.xlu0 %v1281, 12
        %v1358 = vpop.permute.xlu0 %1357
        %1359 = vrot.lane.b32.xlu0 %v1282, 12
        %v1360 = vpop.permute.xlu0 %1359
        %1361 = vrot.lane.b32.xlu0 %v1283, 12
        %v1362 = vpop.permute.xlu0 %1361
        %1363 = vrot.lane.b32.xlu0 %v1284, 12
        %v1364 = vpop.permute.xlu0 %1363
        %1365 = vrot.lane.b32.xlu0 %v1285, 12
        %v1366 = vpop.permute.xlu0 %1365
        %1367 = vrot.lane.b32.xlu0 %v1286, 12
        %v1368 = vpop.permute.xlu0 %1367
        %1369 = vrot.lane.b32.xlu0 %v1287, 12
        %v1370 = vpop.permute.xlu0 %1369
        %1371 = vrot.lane.b32.xlu0 %v1288, 12
        %v1372 = vpop.permute.xlu0 %1371
        %1373 = vrot.lane.b32.xlu0 %v1289, 12
        %v1374 = vpop.permute.xlu0 %1373
        %1375 = vrot.lane.b32.xlu0 %v1290, 12
        %v1376 = vpop.permute.xlu0 %1375
        %1377 = vrot.lane.b32.xlu0 %v1291, 12
        %v1378 = vpop.permute.xlu0 %1377
        %1379 = vrot.lane.b32.xlu0 %v1292, 12
        %v1380 = vpop.permute.xlu0 %1379
        %1381 = vrot.lane.b32.xlu0 %v1293, 12
        %v1382 = vpop.permute.xlu0 %1381
        %1383 = vrot.lane.b32.xlu0 %v1294, 12
        %v1384 = vpop.permute.xlu0 %1383
        %1385 = vrot.lane.b32.xlu0 %v1295, 12
        %v1386 = vpop.permute.xlu0 %1385
        %1387 = vrot.lane.b32.xlu0 %v1296, 12
        %v1388 = vpop.permute.xlu0 %1387
        %1389 = vrot.lane.b32.xlu0 %v1297, 12
        %v1390 = vpop.permute.xlu0 %1389
        %1391 = vrot.lane.b32.xlu0 %v1298, 12
        %v1392 = vpop.permute.xlu0 %1391
        %1393 = vrot.lane.b32.xlu0 %v1299, 12
        %v1394 = vpop.permute.xlu0 %1393
        %1395 = vrot.lane.b32.xlu0 %v1300, 12
        %v1396 = vpop.permute.xlu0 %1395
        %vm1429 = vcmask 126048
        %1430 = vst.msk [vmem:[#allocation2] sm:$0xf] %vm1429, %v1334
        %1431 = vst.msk [vmem:[#allocation2 + $0x4] sm:$0xf] %vm1429, %v1336
        %1432 = vst.msk [vmem:[#allocation2 + $0x8] sm:$0xf] %vm1429, %v1338
        %1433 = vst.msk [vmem:[#allocation2 + $0xc] sm:$0xf] %vm1429, %v1340
        %1434 = vst.msk [vmem:[#allocation2 + $0x10] sm:$0xf] %vm1429, %v1342
        %1435 = vst.msk [vmem:[#allocation2 + $0x14] sm:$0xf] %vm1429, %v1344
        %1436 = vst.msk [vmem:[#allocation2 + $0x18] sm:$0xf] %vm1429, %v1346
        %1437 = vst.msk [vmem:[#allocation2 + $0x1c] sm:$0xf] %vm1429, %v1348
        %1438 = vst.msk [vmem:[#allocation2 + $0x20] sm:$0xf] %vm1429, %v1350
        %1439 = vst.msk [vmem:[#allocation2 + $0x24] sm:$0xf] %vm1429, %v1352
        %1440 = vst.msk [vmem:[#allocation2 + $0x28] sm:$0xf] %vm1429, %v1354
        %1441 = vst.msk [vmem:[#allocation2 + $0x2c] sm:$0xf] %vm1429, %v1356
        %1442 = vst.msk [vmem:[#allocation2 + $0x30] sm:$0xf] %vm1429, %v1358
        %1443 = vst.msk [vmem:[#allocation2 + $0x34] sm:$0xf] %vm1429, %v1360
        %1444 = vst.msk [vmem:[#allocation2 + $0x38] sm:$0xf] %vm1429, %v1362
        %1445 = vst.msk [vmem:[#allocation2 + $0x3c] sm:$0xf] %vm1429, %v1364
        %1446 = vst.msk [vmem:[#allocation2 + $0x40] sm:$0xf] %vm1429, %v1366
        %1447 = vst.msk [vmem:[#allocation2 + $0x44] sm:$0xf] %vm1429, %v1368
        %1448 = vst.msk [vmem:[#allocation2 + $0x48] sm:$0xf] %vm1429, %v1370
        %1449 = vst.msk [vmem:[#allocation2 + $0x4c] sm:$0xf] %vm1429, %v1372
        %1450 = vst.msk [vmem:[#allocation2 + $0x50] sm:$0xf] %vm1429, %v1374
        %1451 = vst.msk [vmem:[#allocation2 + $0x54] sm:$0xf] %vm1429, %v1376
        %1452 = vst.msk [vmem:[#allocation2 + $0x58] sm:$0xf] %vm1429, %v1378
        %1453 = vst.msk [vmem:[#allocation2 + $0x5c] sm:$0xf] %vm1429, %v1380
        %1454 = vst.msk [vmem:[#allocation2 + $0x60] sm:$0xf] %vm1429, %v1382
        %1455 = vst.msk [vmem:[#allocation2 + $0x64] sm:$0xf] %vm1429, %v1384
        %1456 = vst.msk [vmem:[#allocation2 + $0x68] sm:$0xf] %vm1429, %v1386
        %1457 = vst.msk [vmem:[#allocation2 + $0x6c] sm:$0xf] %vm1429, %v1388
        %1458 = vst.msk [vmem:[#allocation2 + $0x70] sm:$0xf] %vm1429, %v1390
        %1459 = vst.msk [vmem:[#allocation2 + $0x74] sm:$0xf] %vm1429, %v1392
        %1460 = vst.msk [vmem:[#allocation2 + $0x78] sm:$0xf] %vm1429, %v1394
        %1461 = vst.msk [vmem:[#allocation2 + $0x7c] sm:$0xf] %vm1429, %v1396
        %v1462 = vld [vmem:[%s1268] sm:$0xf]
        %v1463 = vld [vmem:[%s1268 + $0x4] sm:$0x1]
        %v1464 = vld [vmem:[%s1268 + $0x8] sm:$0xf]
        %v1465 = vld [vmem:[%s1268 + $0xc] sm:$0x1]
        %v1466 = vld [vmem:[%s1268 + $0x10] sm:$0xf]
        %v1467 = vld [vmem:[%s1268 + $0x14] sm:$0x1]
        %v1468 = vld [vmem:[%s1268 + $0x18] sm:$0xf]
        %v1469 = vld [vmem:[%s1268 + $0x1c] sm:$0x1]
        %v1470 = vld [vmem:[%s1268 + $0x20] sm:$0xf]
        %v1471 = vld [vmem:[%s1268 + $0x24] sm:$0x1]
        %v1472 = vld [vmem:[%s1268 + $0x28] sm:$0xf]
        %v1473 = vld [vmem:[%s1268 + $0x2c] sm:$0x1]
        %v1474 = vld [vmem:[%s1268 + $0x30] sm:$0xf]
        %v1475 = vld [vmem:[%s1268 + $0x34] sm:$0x1]
        %v1476 = vld [vmem:[%s1268 + $0x38] sm:$0xf]
        %v1477 = vld [vmem:[%s1268 + $0x3c] sm:$0x1]
        %v1478 = vld [vmem:[%s1268 + $0x50] sm:$0xf]
        %v1479 = vld [vmem:[%s1268 + $0x54] sm:$0x1]
        %v1480 = vld [vmem:[%s1268 + $0x58] sm:$0xf]
        %v1481 = vld [vmem:[%s1268 + $0x5c] sm:$0x1]
        %v1482 = vld [vmem:[%s1268 + $0x60] sm:$0xf]
        %v1483 = vld [vmem:[%s1268 + $0x64] sm:$0x1]
        %v1484 = vld [vmem:[%s1268 + $0x68] sm:$0xf]
        %v1485 = vld [vmem:[%s1268 + $0x6c] sm:$0x1]
        %v1486 = vld [vmem:[%s1268 + $0x70] sm:$0xf]
        %v1487 = vld [vmem:[%s1268 + $0x74] sm:$0x1]
        %v1488 = vld [vmem:[%s1268 + $0x78] sm:$0xf]
        %v1489 = vld [vmem:[%s1268 + $0x7c] sm:$0x1]
        %v1490 = vld [vmem:[%s1268 + $0x80] sm:$0xf]
        %v1491 = vld [vmem:[%s1268 + $0x84] sm:$0x1]
        %v1492 = vld [vmem:[%s1268 + $0x88] sm:$0xf]
        %v1493 = vld [vmem:[%s1268 + $0x8c] sm:$0x1]
        %v1494 = vld [vmem:[%s1268 + $0xa0] sm:$0xf]
        %v1495 = vld [vmem:[%s1268 + $0xa4] sm:$0x1]
        %v1496 = vld [vmem:[%s1268 + $0xa8] sm:$0xf]
        %v1497 = vld [vmem:[%s1268 + $0xac] sm:$0x1]
        %v1498 = vld [vmem:[%s1268 + $0xb0] sm:$0xf]
        %v1499 = vld [vmem:[%s1268 + $0xb4] sm:$0x1]
        %v1500 = vld [vmem:[%s1268 + $0xb8] sm:$0xf]
        %v1501 = vld [vmem:[%s1268 + $0xbc] sm:$0x1]
        %v1502 = vld [vmem:[%s1268 + $0xc0] sm:$0xf]
        %v1503 = vld [vmem:[%s1268 + $0xc4] sm:$0x1]
        %v1504 = vld [vmem:[%s1268 + $0xc8] sm:$0xf]
        %v1505 = vld [vmem:[%s1268 + $0xcc] sm:$0x1]
        %v1506 = vld [vmem:[%s1268 + $0xd0] sm:$0xf]
        %v1507 = vld [vmem:[%s1268 + $0xd4] sm:$0x1]
        %v1508 = vld [vmem:[%s1268 + $0xd8] sm:$0xf]
        %v1509 = vld [vmem:[%s1268 + $0xdc] sm:$0x1]
        %v1510 = vld [vmem:[%s1268 + $0xf0] sm:$0xf]
        %v1511 = vld [vmem:[%s1268 + $0xf4] sm:$0x1]
        %v1512 = vld [vmem:[%s1268 + $0xf8] sm:$0xf]
        %v1513 = vld [vmem:[%s1268 + $0xfc] sm:$0x1]
        %v1514 = vld [vmem:[%s1268 + $0x100] sm:$0xf]
        %v1515 = vld [vmem:[%s1268 + $0x104] sm:$0x1]
        %v1516 = vld [vmem:[%s1268 + $0x108] sm:$0xf]
        %v1517 = vld [vmem:[%s1268 + $0x10c] sm:$0x1]
        %v1518 = vld [vmem:[%s1268 + $0x110] sm:$0xf]
        %v1519 = vld [vmem:[%s1268 + $0x114] sm:$0x1]
        %v1520 = vld [vmem:[%s1268 + $0x118] sm:$0xf]
        %v1521 = vld [vmem:[%s1268 + $0x11c] sm:$0x1]
        %v1522 = vld [vmem:[%s1268 + $0x120] sm:$0xf]
        %v1523 = vld [vmem:[%s1268 + $0x124] sm:$0x1]
        %v1524 = vld [vmem:[%s1268 + $0x128] sm:$0xf]
        %v1525 = vld [vmem:[%s1268 + $0x12c] sm:$0x1]
        %v1527 = vshrl.u32 %v1462, 16
        %v1529 = vrot.slane %v1527, 4
        %v1530 = vshll.u32 %v1462, 16
        %v1532 = vrot.slane %v1530, 5
        %v1533 = vor.u32 %v1529, %v1532
        %v1534 = vrot.slane %v1533, 4
        %v1536 = vshll.u32 %v1463, 16
        %v1538 = vrot.slane %v1536, 5
        %v1539 = vsel %vm302, %v1534, %v1538
        %v1541 = vshrl.u32 %v1464, 16
        %v1543 = vrot.slane %v1541, 4
        %v1544 = vshll.u32 %v1464, 16
        %v1546 = vrot.slane %v1544, 5
        %v1547 = vor.u32 %v1543, %v1546
        %v1548 = vrot.slane %v1547, 4
        %v1550 = vshll.u32 %v1465, 16
        %v1552 = vrot.slane %v1550, 5
        %v1553 = vsel %vm302, %v1548, %v1552
        %v1555 = vshrl.u32 %v1466, 16
        %v1557 = vrot.slane %v1555, 4
        %v1558 = vshll.u32 %v1466, 16
        %v1560 = vrot.slane %v1558, 5
        %v1561 = vor.u32 %v1557, %v1560
        %v1562 = vrot.slane %v1561, 4
        %v1564 = vshll.u32 %v1467, 16
        %v1566 = vrot.slane %v1564, 5
        %v1567 = vsel %vm302, %v1562, %v1566
        %v1569 = vshrl.u32 %v1468, 16
        %v1571 = vrot.slane %v1569, 4
        %v1572 = vshll.u32 %v1468, 16
        %v1574 = vrot.slane %v1572, 5
        %v1575 = vor.u32 %v1571, %v1574
        %v1576 = vrot.slane %v1575, 4
        %v1578 = vshll.u32 %v1469, 16
        %v1580 = vrot.slane %v1578, 5
        %v1581 = vsel %vm302, %v1576, %v1580
        %v1583 = vshrl.u32 %v1470, 16
        %v1585 = vrot.slane %v1583, 4
        %v1586 = vshll.u32 %v1470, 16
        %v1588 = vrot.slane %v1586, 5
        %v1589 = vor.u32 %v1585, %v1588
        %v1590 = vrot.slane %v1589, 4
        %v1592 = vshll.u32 %v1471, 16
        %v1594 = vrot.slane %v1592, 5
        %v1595 = vsel %vm302, %v1590, %v1594
        %v1597 = vshrl.u32 %v1472, 16
        %v1599 = vrot.slane %v1597, 4
        %v1600 = vshll.u32 %v1472, 16
        %v1602 = vrot.slane %v1600, 5
        %v1603 = vor.u32 %v1599, %v1602
        %v1604 = vrot.slane %v1603, 4
        %v1606 = vshll.u32 %v1473, 16
        %v1608 = vrot.slane %v1606, 5
        %v1609 = vsel %vm302, %v1604, %v1608
        %v1611 = vshrl.u32 %v1474, 16
        %v1613 = vrot.slane %v1611, 4
        %v1614 = vshll.u32 %v1474, 16
        %v1616 = vrot.slane %v1614, 5
        %v1617 = vor.u32 %v1613, %v1616
        %v1618 = vrot.slane %v1617, 4
        %v1620 = vshll.u32 %v1475, 16
        %v1622 = vrot.slane %v1620, 5
        %v1623 = vsel %vm302, %v1618, %v1622
        %v1625 = vshrl.u32 %v1476, 16
        %v1627 = vrot.slane %v1625, 4
        %v1628 = vshll.u32 %v1476, 16
        %v1630 = vrot.slane %v1628, 5
        %v1631 = vor.u32 %v1627, %v1630
        %v1632 = vrot.slane %v1631, 4
        %v1634 = vshll.u32 %v1477, 16
        %v1636 = vrot.slane %v1634, 5
        %v1637 = vsel %vm302, %v1632, %v1636
        %v1639 = vshrl.u32 %v1478, 16
        %v1641 = vrot.slane %v1639, 4
        %v1642 = vshll.u32 %v1478, 16
        %v1644 = vrot.slane %v1642, 5
        %v1645 = vor.u32 %v1641, %v1644
        %v1646 = vrot.slane %v1645, 4
        %v1648 = vshll.u32 %v1479, 16
        %v1650 = vrot.slane %v1648, 5
        %v1651 = vsel %vm302, %v1646, %v1650
        %v1653 = vshrl.u32 %v1480, 16
        %v1655 = vrot.slane %v1653, 4
        %v1656 = vshll.u32 %v1480, 16
        %v1658 = vrot.slane %v1656, 5
        %v1659 = vor.u32 %v1655, %v1658
        %v1660 = vrot.slane %v1659, 4
        %v1662 = vshll.u32 %v1481, 16
        %v1664 = vrot.slane %v1662, 5
        %v1665 = vsel %vm302, %v1660, %v1664
        %v1667 = vshrl.u32 %v1482, 16
        %v1669 = vrot.slane %v1667, 4
        %v1670 = vshll.u32 %v1482, 16
        %v1672 = vrot.slane %v1670, 5
        %v1673 = vor.u32 %v1669, %v1672
        %v1674 = vrot.slane %v1673, 4
        %v1676 = vshll.u32 %v1483, 16
        %v1678 = vrot.slane %v1676, 5
        %v1679 = vsel %vm302, %v1674, %v1678
        %v1681 = vshrl.u32 %v1484, 16
        %v1683 = vrot.slane %v1681, 4
        %v1684 = vshll.u32 %v1484, 16
        %v1686 = vrot.slane %v1684, 5
        %v1687 = vor.u32 %v1683, %v1686
        %v1688 = vrot.slane %v1687, 4
        %v1690 = vshll.u32 %v1485, 16
        %v1692 = vrot.slane %v1690, 5
        %v1693 = vsel %vm302, %v1688, %v1692
        %v1695 = vshrl.u32 %v1486, 16
        %v1697 = vrot.slane %v1695, 4
        %v1698 = vshll.u32 %v1486, 16
        %v1700 = vrot.slane %v1698, 5
        %v1701 = vor.u32 %v1697, %v1700
        %v1702 = vrot.slane %v1701, 4
        %v1704 = vshll.u32 %v1487, 16
        %v1706 = vrot.slane %v1704, 5
        %v1707 = vsel %vm302, %v1702, %v1706
        %v1709 = vshrl.u32 %v1488, 16
        %v1711 = vrot.slane %v1709, 4
        %v1712 = vshll.u32 %v1488, 16
        %v1714 = vrot.slane %v1712, 5
        %v1715 = vor.u32 %v1711, %v1714
        %v1716 = vrot.slane %v1715, 4
        %v1718 = vshll.u32 %v1489, 16
        %v1720 = vrot.slane %v1718, 5
        %v1721 = vsel %vm302, %v1716, %v1720
        %v1723 = vshrl.u32 %v1490, 16
        %v1725 = vrot.slane %v1723, 4
        %v1726 = vshll.u32 %v1490, 16
        %v1728 = vrot.slane %v1726, 5
        %v1729 = vor.u32 %v1725, %v1728
        %v1730 = vrot.slane %v1729, 4
        %v1732 = vshll.u32 %v1491, 16
        %v1734 = vrot.slane %v1732, 5
        %v1735 = vsel %vm302, %v1730, %v1734
        %v1737 = vshrl.u32 %v1492, 16
        %v1739 = vrot.slane %v1737, 4
        %v1740 = vshll.u32 %v1492, 16
        %v1742 = vrot.slane %v1740, 5
        %v1743 = vor.u32 %v1739, %v1742
        %v1744 = vrot.slane %v1743, 4
        %v1746 = vshll.u32 %v1493, 16
        %v1748 = vrot.slane %v1746, 5
        %v1749 = vsel %vm302, %v1744, %v1748
        %v1751 = vshrl.u32 %v1494, 16
        %v1753 = vrot.slane %v1751, 4
        %v1754 = vshll.u32 %v1494, 16
        %v1756 = vrot.slane %v1754, 5
        %v1757 = vor.u32 %v1753, %v1756
        %v1758 = vrot.slane %v1757, 4
        %v1760 = vshll.u32 %v1495, 16
        %v1762 = vrot.slane %v1760, 5
        %v1763 = vsel %vm302, %v1758, %v1762
        %v1765 = vshrl.u32 %v1496, 16
        %v1767 = vrot.slane %v1765, 4
        %v1768 = vshll.u32 %v1496, 16
        %v1770 = vrot.slane %v1768, 5
        %v1771 = vor.u32 %v1767, %v1770
        %v1772 = vrot.slane %v1771, 4
        %v1774 = vshll.u32 %v1497, 16
        %v1776 = vrot.slane %v1774, 5
        %v1777 = vsel %vm302, %v1772, %v1776
        %v1779 = vshrl.u32 %v1498, 16
        %v1781 = vrot.slane %v1779, 4
        %v1782 = vshll.u32 %v1498, 16
        %v1784 = vrot.slane %v1782, 5
        %v1785 = vor.u32 %v1781, %v1784
        %v1786 = vrot.slane %v1785, 4
        %v1788 = vshll.u32 %v1499, 16
        %v1790 = vrot.slane %v1788, 5
        %v1791 = vsel %vm302, %v1786, %v1790
        %v1793 = vshrl.u32 %v1500, 16
        %v1795 = vrot.slane %v1793, 4
        %v1796 = vshll.u32 %v1500, 16
        %v1798 = vrot.slane %v1796, 5
        %v1799 = vor.u32 %v1795, %v1798
        %v1800 = vrot.slane %v1799, 4
        %v1802 = vshll.u32 %v1501, 16
        %v1804 = vrot.slane %v1802, 5
        %v1805 = vsel %vm302, %v1800, %v1804
        %v1807 = vshrl.u32 %v1502, 16
        %v1809 = vrot.slane %v1807, 4
        %v1810 = vshll.u32 %v1502, 16
        %v1812 = vrot.slane %v1810, 5
        %v1813 = vor.u32 %v1809, %v1812
        %v1814 = vrot.slane %v1813, 4
        %v1816 = vshll.u32 %v1503, 16
        %v1818 = vrot.slane %v1816, 5
        %v1819 = vsel %vm302, %v1814, %v1818
        %v1821 = vshrl.u32 %v1504, 16
        %v1823 = vrot.slane %v1821, 4
        %v1824 = vshll.u32 %v1504, 16
        %v1826 = vrot.slane %v1824, 5
        %v1827 = vor.u32 %v1823, %v1826
        %v1828 = vrot.slane %v1827, 4
        %v1830 = vshll.u32 %v1505, 16
        %v1832 = vrot.slane %v1830, 5
        %v1833 = vsel %vm302, %v1828, %v1832
        %v1835 = vshrl.u32 %v1506, 16
        %v1837 = vrot.slane %v1835, 4
        %v1838 = vshll.u32 %v1506, 16
        %v1840 = vrot.slane %v1838, 5
        %v1841 = vor.u32 %v1837, %v1840
        %v1842 = vrot.slane %v1841, 4
        %v1844 = vshll.u32 %v1507, 16
        %v1846 = vrot.slane %v1844, 5
        %v1847 = vsel %vm302, %v1842, %v1846
        %v1849 = vshrl.u32 %v1508, 16
        %v1851 = vrot.slane %v1849, 4
        %v1852 = vshll.u32 %v1508, 16
        %v1854 = vrot.slane %v1852, 5
        %v1855 = vor.u32 %v1851, %v1854
        %v1856 = vrot.slane %v1855, 4
        %v1858 = vshll.u32 %v1509, 16
        %v1860 = vrot.slane %v1858, 5
        %v1861 = vsel %vm302, %v1856, %v1860
        %v1863 = vshrl.u32 %v1510, 16
        %v1865 = vrot.slane %v1863, 4
        %v1866 = vshll.u32 %v1510, 16
        %v1868 = vrot.slane %v1866, 5
        %v1869 = vor.u32 %v1865, %v1868
        %v1870 = vrot.slane %v1869, 4
        %v1872 = vshll.u32 %v1511, 16
        %v1874 = vrot.slane %v1872, 5
        %v1875 = vsel %vm302, %v1870, %v1874
        %v1877 = vshrl.u32 %v1512, 16
        %v1879 = vrot.slane %v1877, 4
        %v1880 = vshll.u32 %v1512, 16
        %v1882 = vrot.slane %v1880, 5
        %v1883 = vor.u32 %v1879, %v1882
        %v1884 = vrot.slane %v1883, 4
        %v1886 = vshll.u32 %v1513, 16
        %v1888 = vrot.slane %v1886, 5
        %v1889 = vsel %vm302, %v1884, %v1888
        %v1891 = vshrl.u32 %v1514, 16
        %v1893 = vrot.slane %v1891, 4
        %v1894 = vshll.u32 %v1514, 16
        %v1896 = vrot.slane %v1894, 5
        %v1897 = vor.u32 %v1893, %v1896
        %v1898 = vrot.slane %v1897, 4
        %v1900 = vshll.u32 %v1515, 16
        %v1902 = vrot.slane %v1900, 5
        %v1903 = vsel %vm302, %v1898, %v1902
        %v1905 = vshrl.u32 %v1516, 16
        %v1907 = vrot.slane %v1905, 4
        %v1908 = vshll.u32 %v1516, 16
        %v1910 = vrot.slane %v1908, 5
        %v1911 = vor.u32 %v1907, %v1910
        %v1912 = vrot.slane %v1911, 4
        %v1914 = vshll.u32 %v1517, 16
        %v1916 = vrot.slane %v1914, 5
        %v1917 = vsel %vm302, %v1912, %v1916
        %v1919 = vshrl.u32 %v1518, 16
        %v1921 = vrot.slane %v1919, 4
        %v1922 = vshll.u32 %v1518, 16
        %v1924 = vrot.slane %v1922, 5
        %v1925 = vor.u32 %v1921, %v1924
        %v1926 = vrot.slane %v1925, 4
        %v1928 = vshll.u32 %v1519, 16
        %v1930 = vrot.slane %v1928, 5
        %v1931 = vsel %vm302, %v1926, %v1930
        %v1933 = vshrl.u32 %v1520, 16
        %v1935 = vrot.slane %v1933, 4
        %v1936 = vshll.u32 %v1520, 16
        %v1938 = vrot.slane %v1936, 5
        %v1939 = vor.u32 %v1935, %v1938
        %v1940 = vrot.slane %v1939, 4
        %v1942 = vshll.u32 %v1521, 16
        %v1944 = vrot.slane %v1942, 5
        %v1945 = vsel %vm302, %v1940, %v1944
        %v1947 = vshrl.u32 %v1522, 16
        %v1949 = vrot.slane %v1947, 4
        %v1950 = vshll.u32 %v1522, 16
        %v1952 = vrot.slane %v1950, 5
        %v1953 = vor.u32 %v1949, %v1952
        %v1954 = vrot.slane %v1953, 4
        %v1956 = vshll.u32 %v1523, 16
        %v1958 = vrot.slane %v1956, 5
        %v1959 = vsel %vm302, %v1954, %v1958
        %v1961 = vshrl.u32 %v1524, 16
        %v1963 = vrot.slane %v1961, 4
        %v1964 = vshll.u32 %v1524, 16
        %v1966 = vrot.slane %v1964, 5
        %v1967 = vor.u32 %v1963, %v1966
        %v1968 = vrot.slane %v1967, 4
        %v1970 = vshll.u32 %v1525, 16
        %v1972 = vrot.slane %v1970, 5
        %v1973 = vsel %vm302, %v1968, %v1972
        %1974 = vrot.lane.b32.xlu0 %v1539, 16
        %v1975 = vpop.permute.xlu0 %1974
        %1976 = vrot.lane.b32.xlu0 %v1553, 16
        %v1977 = vpop.permute.xlu0 %1976
        %1978 = vrot.lane.b32.xlu0 %v1567, 16
        %v1979 = vpop.permute.xlu0 %1978
        %1980 = vrot.lane.b32.xlu0 %v1581, 16
        %v1981 = vpop.permute.xlu0 %1980
        %1982 = vrot.lane.b32.xlu0 %v1595, 16
        %v1983 = vpop.permute.xlu0 %1982
        %1984 = vrot.lane.b32.xlu0 %v1609, 16
        %v1985 = vpop.permute.xlu0 %1984
        %1986 = vrot.lane.b32.xlu0 %v1623, 16
        %v1987 = vpop.permute.xlu0 %1986
        %1988 = vrot.lane.b32.xlu0 %v1637, 16
        %v1989 = vpop.permute.xlu0 %1988
        %1990 = vrot.lane.b32.xlu0 %v1651, 16
        %v1991 = vpop.permute.xlu0 %1990
        %1992 = vrot.lane.b32.xlu0 %v1665, 16
        %v1993 = vpop.permute.xlu0 %1992
        %1994 = vrot.lane.b32.xlu0 %v1679, 16
        %v1995 = vpop.permute.xlu0 %1994
        %1996 = vrot.lane.b32.xlu0 %v1693, 16
        %v1997 = vpop.permute.xlu0 %1996
        %1998 = vrot.lane.b32.xlu0 %v1707, 16
        %v1999 = vpop.permute.xlu0 %1998
        %2000 = vrot.lane.b32.xlu0 %v1721, 16
        %v2001 = vpop.permute.xlu0 %2000
        %2002 = vrot.lane.b32.xlu0 %v1735, 16
        %v2003 = vpop.permute.xlu0 %2002
        %2004 = vrot.lane.b32.xlu0 %v1749, 16
        %v2005 = vpop.permute.xlu0 %2004
        %2006 = vrot.lane.b32.xlu0 %v1763, 16
        %v2007 = vpop.permute.xlu0 %2006
        %2008 = vrot.lane.b32.xlu0 %v1777, 16
        %v2009 = vpop.permute.xlu0 %2008
        %2010 = vrot.lane.b32.xlu0 %v1791, 16
        %v2011 = vpop.permute.xlu0 %2010
        %2012 = vrot.lane.b32.xlu0 %v1805, 16
        %v2013 = vpop.permute.xlu0 %2012
        %2014 = vrot.lane.b32.xlu0 %v1819, 16
        %v2015 = vpop.permute.xlu0 %2014
        %2016 = vrot.lane.b32.xlu0 %v1833, 16
        %v2017 = vpop.permute.xlu0 %2016
        %2018 = vrot.lane.b32.xlu0 %v1847, 16
        %v2019 = vpop.permute.xlu0 %2018
        %2020 = vrot.lane.b32.xlu0 %v1861, 16
        %v2021 = vpop.permute.xlu0 %2020
        %2022 = vrot.lane.b32.xlu0 %v1875, 16
        %v2023 = vpop.permute.xlu0 %2022
        %2024 = vrot.lane.b32.xlu0 %v1889, 16
        %v2025 = vpop.permute.xlu0 %2024
        %2026 = vrot.lane.b32.xlu0 %v1903, 16
        %v2027 = vpop.permute.xlu0 %2026
        %2028 = vrot.lane.b32.xlu0 %v1917, 16
        %v2029 = vpop.permute.xlu0 %2028
        %2030 = vrot.lane.b32.xlu0 %v1931, 16
        %v2031 = vpop.permute.xlu0 %2030
        %2032 = vrot.lane.b32.xlu0 %v1945, 16
        %v2033 = vpop.permute.xlu0 %2032
        %2034 = vrot.lane.b32.xlu0 %v1959, 16
        %v2035 = vpop.permute.xlu0 %2034
        %2036 = vrot.lane.b32.xlu0 %v1973, 16
        %v2037 = vpop.permute.xlu0 %2036
        %vm2070 = vcmask 158848
        %2071 = vst.msk [vmem:[#allocation2] sm:$0xf] %vm2070, %v1975
        %2072 = vst.msk [vmem:[#allocation2 + $0x4] sm:$0xf] %vm2070, %v1977
        %2073 = vst.msk [vmem:[#allocation2 + $0x8] sm:$0xf] %vm2070, %v1979
        %2074 = vst.msk [vmem:[#allocation2 + $0xc] sm:$0xf] %vm2070, %v1981
        %2075 = vst.msk [vmem:[#allocation2 + $0x10] sm:$0xf] %vm2070, %v1983
        %2076 = vst.msk [vmem:[#allocation2 + $0x14] sm:$0xf] %vm2070, %v1985
        %2077 = vst.msk [vmem:[#allocation2 + $0x18] sm:$0xf] %vm2070, %v1987
        %2078 = vst.msk [vmem:[#allocation2 + $0x1c] sm:$0xf] %vm2070, %v1989
        %2079 = vst.msk [vmem:[#allocation2 + $0x20] sm:$0xf] %vm2070, %v1991
        %2080 = vst.msk [vmem:[#allocation2 + $0x24] sm:$0xf] %vm2070, %v1993
        %2081 = vst.msk [vmem:[#allocation2 + $0x28] sm:$0xf] %vm2070, %v1995
        %2082 = vst.msk [vmem:[#allocation2 + $0x2c] sm:$0xf] %vm2070, %v1997
        %2083 = vst.msk [vmem:[#allocation2 + $0x30] sm:$0xf] %vm2070, %v1999
        %2084 = vst.msk [vmem:[#allocation2 + $0x34] sm:$0xf] %vm2070, %v2001
        %2085 = vst.msk [vmem:[#allocation2 + $0x38] sm:$0xf] %vm2070, %v2003
        %2086 = vst.msk [vmem:[#allocation2 + $0x3c] sm:$0xf] %vm2070, %v2005
        %2087 = vst.msk [vmem:[#allocation2 + $0x40] sm:$0xf] %vm2070, %v2007
        %2088 = vst.msk [vmem:[#allocation2 + $0x44] sm:$0xf] %vm2070, %v2009
        %2089 = vst.msk [vmem:[#allocation2 + $0x48] sm:$0xf] %vm2070, %v2011
        %2090 = vst.msk [vmem:[#allocation2 + $0x4c] sm:$0xf] %vm2070, %v2013
        %2091 = vst.msk [vmem:[#allocation2 + $0x50] sm:$0xf] %vm2070, %v2015
        %2092 = vst.msk [vmem:[#allocation2 + $0x54] sm:$0xf] %vm2070, %v2017
        %2093 = vst.msk [vmem:[#allocation2 + $0x58] sm:$0xf] %vm2070, %v2019
        %2094 = vst.msk [vmem:[#allocation2 + $0x5c] sm:$0xf] %vm2070, %v2021
        %2095 = vst.msk [vmem:[#allocation2 + $0x60] sm:$0xf] %vm2070, %v2023
        %2096 = vst.msk [vmem:[#allocation2 + $0x64] sm:$0xf] %vm2070, %v2025
        %2097 = vst.msk [vmem:[#allocation2 + $0x68] sm:$0xf] %vm2070, %v2027
        %2098 = vst.msk [vmem:[#allocation2 + $0x6c] sm:$0xf] %vm2070, %v2029
        %2099 = vst.msk [vmem:[#allocation2 + $0x70] sm:$0xf] %vm2070, %v2031
        %2100 = vst.msk [vmem:[#allocation2 + $0x74] sm:$0xf] %vm2070, %v2033
        %2101 = vst.msk [vmem:[#allocation2 + $0x78] sm:$0xf] %vm2070, %v2035
        %2102 = vst.msk [vmem:[#allocation2 + $0x7c] sm:$0xf] %vm2070, %v2037
        %v2103 = vld [vmem:[%s1268] sm:$0xe]
        %v2104 = vld [vmem:[%s1268 + $0x4] sm:$0x1]
        %v2105 = vld [vmem:[%s1268 + $0x8] sm:$0xe]
        %v2106 = vld [vmem:[%s1268 + $0xc] sm:$0x1]
        %v2107 = vld [vmem:[%s1268 + $0x10] sm:$0xe]
        %v2108 = vld [vmem:[%s1268 + $0x14] sm:$0x1]
        %v2109 = vld [vmem:[%s1268 + $0x18] sm:$0xe]
        %v2110 = vld [vmem:[%s1268 + $0x1c] sm:$0x1]
        %v2111 = vld [vmem:[%s1268 + $0x20] sm:$0xe]
        %v2112 = vld [vmem:[%s1268 + $0x24] sm:$0x1]
        %v2113 = vld [vmem:[%s1268 + $0x28] sm:$0xe]
        %v2114 = vld [vmem:[%s1268 + $0x2c] sm:$0x1]
        %v2115 = vld [vmem:[%s1268 + $0x30] sm:$0xe]
        %v2116 = vld [vmem:[%s1268 + $0x34] sm:$0x1]
        %v2117 = vld [vmem:[%s1268 + $0x38] sm:$0xe]
        %v2118 = vld [vmem:[%s1268 + $0x3c] sm:$0x1]
        %v2119 = vld [vmem:[%s1268 + $0x50] sm:$0xe]
        %v2120 = vld [vmem:[%s1268 + $0x54] sm:$0x1]
        %v2121 = vld [vmem:[%s1268 + $0x58] sm:$0xe]
        %v2122 = vld [vmem:[%s1268 + $0x5c] sm:$0x1]
        %v2123 = vld [vmem:[%s1268 + $0x60] sm:$0xe]
        %v2124 = vld [vmem:[%s1268 + $0x64] sm:$0x1]
        %v2125 = vld [vmem:[%s1268 + $0x68] sm:$0xe]
        %v2126 = vld [vmem:[%s1268 + $0x6c] sm:$0x1]
        %v2127 = vld [vmem:[%s1268 + $0x70] sm:$0xe]
        %v2128 = vld [vmem:[%s1268 + $0x74] sm:$0x1]
        %v2129 = vld [vmem:[%s1268 + $0x78] sm:$0xe]
        %v2130 = vld [vmem:[%s1268 + $0x7c] sm:$0x1]
        %v2131 = vld [vmem:[%s1268 + $0x80] sm:$0xe]
        %v2132 = vld [vmem:[%s1268 + $0x84] sm:$0x1]
        %v2133 = vld [vmem:[%s1268 + $0x88] sm:$0xe]
        %v2134 = vld [vmem:[%s1268 + $0x8c] sm:$0x1]
        %v2135 = vld [vmem:[%s1268 + $0xa0] sm:$0xe]
        %v2136 = vld [vmem:[%s1268 + $0xa4] sm:$0x1]
        %v2137 = vld [vmem:[%s1268 + $0xa8] sm:$0xe]
        %v2138 = vld [vmem:[%s1268 + $0xac] sm:$0x1]
        %v2139 = vld [vmem:[%s1268 + $0xb0] sm:$0xe]
        %v2140 = vld [vmem:[%s1268 + $0xb4] sm:$0x1]
        %v2141 = vld [vmem:[%s1268 + $0xb8] sm:$0xe]
        %v2142 = vld [vmem:[%s1268 + $0xbc] sm:$0x1]
        %v2143 = vld [vmem:[%s1268 + $0xc0] sm:$0xe]
        %v2144 = vld [vmem:[%s1268 + $0xc4] sm:$0x1]
        %v2145 = vld [vmem:[%s1268 + $0xc8] sm:$0xe]
        %v2146 = vld [vmem:[%s1268 + $0xcc] sm:$0x1]
        %v2147 = vld [vmem:[%s1268 + $0xd0] sm:$0xe]
        %v2148 = vld [vmem:[%s1268 + $0xd4] sm:$0x1]
        %v2149 = vld [vmem:[%s1268 + $0xd8] sm:$0xe]
        %v2150 = vld [vmem:[%s1268 + $0xdc] sm:$0x1]
        %v2151 = vld [vmem:[%s1268 + $0xf0] sm:$0xe]
        %v2152 = vld [vmem:[%s1268 + $0xf4] sm:$0x1]
        %v2153 = vld [vmem:[%s1268 + $0xf8] sm:$0xe]
        %v2154 = vld [vmem:[%s1268 + $0xfc] sm:$0x1]
        %v2155 = vld [vmem:[%s1268 + $0x100] sm:$0xe]
        %v2156 = vld [vmem:[%s1268 + $0x104] sm:$0x1]
        %v2157 = vld [vmem:[%s1268 + $0x108] sm:$0xe]
        %v2158 = vld [vmem:[%s1268 + $0x10c] sm:$0x1]
        %v2159 = vld [vmem:[%s1268 + $0x110] sm:$0xe]
        %v2160 = vld [vmem:[%s1268 + $0x114] sm:$0x1]
        %v2161 = vld [vmem:[%s1268 + $0x118] sm:$0xe]
        %v2162 = vld [vmem:[%s1268 + $0x11c] sm:$0x1]
        %v2163 = vld [vmem:[%s1268 + $0x120] sm:$0xe]
        %v2164 = vld [vmem:[%s1268 + $0x124] sm:$0x1]
        %v2165 = vld [vmem:[%s1268 + $0x128] sm:$0xe]
        %v2166 = vld [vmem:[%s1268 + $0x12c] sm:$0x1]
        %v2231 = vrot.slane %v2103, 5
        %v2232 = vrot.slane %v2231, 4
        %v2233 = vrot.slane %v2104, 5
        %v2234 = vsel %vm1010, %v2232, %v2233
        %v2235 = vrot.slane %v2105, 5
        %v2236 = vrot.slane %v2235, 4
        %v2237 = vrot.slane %v2106, 5
        %v2238 = vsel %vm1010, %v2236, %v2237
        %v2239 = vrot.slane %v2107, 5
        %v2240 = vrot.slane %v2239, 4
        %v2241 = vrot.slane %v2108, 5
        %v2242 = vsel %vm1010, %v2240, %v2241
        %v2243 = vrot.slane %v2109, 5
        %v2244 = vrot.slane %v2243, 4
        %v2245 = vrot.slane %v2110, 5
        %v2246 = vsel %vm1010, %v2244, %v2245
        %v2247 = vrot.slane %v2111, 5
        %v2248 = vrot.slane %v2247, 4
        %v2249 = vrot.slane %v2112, 5
        %v2250 = vsel %vm1010, %v2248, %v2249
        %v2251 = vrot.slane %v2113, 5
        %v2252 = vrot.slane %v2251, 4
        %v2253 = vrot.slane %v2114, 5
        %v2254 = vsel %vm1010, %v2252, %v2253
        %v2255 = vrot.slane %v2115, 5
        %v2256 = vrot.slane %v2255, 4
        %v2257 = vrot.slane %v2116, 5
        %v2258 = vsel %vm1010, %v2256, %v2257
        %v2259 = vrot.slane %v2117, 5
        %v2260 = vrot.slane %v2259, 4
        %v2261 = vrot.slane %v2118, 5
        %v2262 = vsel %vm1010, %v2260, %v2261
        %v2263 = vrot.slane %v2119, 5
        %v2264 = vrot.slane %v2263, 4
        %v2265 = vrot.slane %v2120, 5
        %v2266 = vsel %vm1010, %v2264, %v2265
        %v2267 = vrot.slane %v2121, 5
        %v2268 = vrot.slane %v2267, 4
        %v2269 = vrot.slane %v2122, 5
        %v2270 = vsel %vm1010, %v2268, %v2269
        %v2271 = vrot.slane %v2123, 5
        %v2272 = vrot.slane %v2271, 4
        %v2273 = vrot.slane %v2124, 5
        %v2274 = vsel %vm1010, %v2272, %v2273
        %v2275 = vrot.slane %v2125, 5
        %v2276 = vrot.slane %v2275, 4
        %v2277 = vrot.slane %v2126, 5
        %v2278 = vsel %vm1010, %v2276, %v2277
        %v2279 = vrot.slane %v2127, 5
        %v2280 = vrot.slane %v2279, 4
        %v2281 = vrot.slane %v2128, 5
        %v2282 = vsel %vm1010, %v2280, %v2281
        %v2283 = vrot.slane %v2129, 5
        %v2284 = vrot.slane %v2283, 4
        %v2285 = vrot.slane %v2130, 5
        %v2286 = vsel %vm1010, %v2284, %v2285
        %v2287 = vrot.slane %v2131, 5
        %v2288 = vrot.slane %v2287, 4
        %v2289 = vrot.slane %v2132, 5
        %v2290 = vsel %vm1010, %v2288, %v2289
        %v2291 = vrot.slane %v2133, 5
        %v2292 = vrot.slane %v2291, 4
        %v2293 = vrot.slane %v2134, 5
        %v2294 = vsel %vm1010, %v2292, %v2293
        %v2295 = vrot.slane %v2135, 5
        %v2296 = vrot.slane %v2295, 4
        %v2297 = vrot.slane %v2136, 5
        %v2298 = vsel %vm1010, %v2296, %v2297
        %v2299 = vrot.slane %v2137, 5
        %v2300 = vrot.slane %v2299, 4
        %v2301 = vrot.slane %v2138, 5
        %v2302 = vsel %vm1010, %v2300, %v2301
        %v2303 = vrot.slane %v2139, 5
        %v2304 = vrot.slane %v2303, 4
        %v2305 = vrot.slane %v2140, 5
        %v2306 = vsel %vm1010, %v2304, %v2305
        %v2307 = vrot.slane %v2141, 5
        %v2308 = vrot.slane %v2307, 4
        %v2309 = vrot.slane %v2142, 5
        %v2310 = vsel %vm1010, %v2308, %v2309
        %v2311 = vrot.slane %v2143, 5
        %v2312 = vrot.slane %v2311, 4
        %v2313 = vrot.slane %v2144, 5
        %v2314 = vsel %vm1010, %v2312, %v2313
        %v2315 = vrot.slane %v2145, 5
        %v2316 = vrot.slane %v2315, 4
        %v2317 = vrot.slane %v2146, 5
        %v2318 = vsel %vm1010, %v2316, %v2317
        %v2319 = vrot.slane %v2147, 5
        %v2320 = vrot.slane %v2319, 4
        %v2321 = vrot.slane %v2148, 5
        %v2322 = vsel %vm1010, %v2320, %v2321
        %v2323 = vrot.slane %v2149, 5
        %v2324 = vrot.slane %v2323, 4
        %v2325 = vrot.slane %v2150, 5
        %v2326 = vsel %vm1010, %v2324, %v2325
        %v2327 = vrot.slane %v2151, 5
        %v2328 = vrot.slane %v2327, 4
        %v2329 = vrot.slane %v2152, 5
        %v2330 = vsel %vm1010, %v2328, %v2329
        %v2331 = vrot.slane %v2153, 5
        %v2332 = vrot.slane %v2331, 4
        %v2333 = vrot.slane %v2154, 5
        %v2334 = vsel %vm1010, %v2332, %v2333
        %v2335 = vrot.slane %v2155, 5
        %v2336 = vrot.slane %v2335, 4
        %v2337 = vrot.slane %v2156, 5
        %v2338 = vsel %vm1010, %v2336, %v2337
        %v2339 = vrot.slane %v2157, 5
        %v2340 = vrot.slane %v2339, 4
        %v2341 = vrot.slane %v2158, 5
        %v2342 = vsel %vm1010, %v2340, %v2341
        %v2343 = vrot.slane %v2159, 5
        %v2344 = vrot.slane %v2343, 4
        %v2345 = vrot.slane %v2160, 5
        %v2346 = vsel %vm1010, %v2344, %v2345
        %v2347 = vrot.slane %v2161, 5
        %v2348 = vrot.slane %v2347, 4
        %v2349 = vrot.slane %v2162, 5
        %v2350 = vsel %vm1010, %v2348, %v2349
        %v2351 = vrot.slane %v2163, 5
        %v2352 = vrot.slane %v2351, 4
        %v2353 = vrot.slane %v2164, 5
        %v2354 = vsel %vm1010, %v2352, %v2353
        %v2355 = vrot.slane %v2165, 5
        %v2356 = vrot.slane %v2355, 4
        %v2357 = vrot.slane %v2166, 5
        %v2358 = vsel %vm1010, %v2356, %v2357
        %2359 = vrot.lane.b32.xlu0 %v2234, 20
        %v2360 = vpop.permute.xlu0 %2359
        %2361 = vrot.lane.b32.xlu0 %v2238, 20
        %v2362 = vpop.permute.xlu0 %2361
        %2363 = vrot.lane.b32.xlu0 %v2242, 20
        %v2364 = vpop.permute.xlu0 %2363
        %2365 = vrot.lane.b32.xlu0 %v2246, 20
        %v2366 = vpop.permute.xlu0 %2365
        %2367 = vrot.lane.b32.xlu0 %v2250, 20
        %v2368 = vpop.permute.xlu0 %2367
        %2369 = vrot.lane.b32.xlu0 %v2254, 20
        %v2370 = vpop.permute.xlu0 %2369
        %2371 = vrot.lane.b32.xlu0 %v2258, 20
        %v2372 = vpop.permute.xlu0 %2371
        %2373 = vrot.lane.b32.xlu0 %v2262, 20
        %v2374 = vpop.permute.xlu0 %2373
        %2375 = vrot.lane.b32.xlu0 %v2266, 20
        %v2376 = vpop.permute.xlu0 %2375
        %2377 = vrot.lane.b32.xlu0 %v2270, 20
        %v2378 = vpop.permute.xlu0 %2377
        %2379 = vrot.lane.b32.xlu0 %v2274, 20
        %v2380 = vpop.permute.xlu0 %2379
        %2381 = vrot.lane.b32.xlu0 %v2278, 20
        %v2382 = vpop.permute.xlu0 %2381
        %2383 = vrot.lane.b32.xlu0 %v2282, 20
        %v2384 = vpop.permute.xlu0 %2383
        %2385 = vrot.lane.b32.xlu0 %v2286, 20
        %v2386 = vpop.permute.xlu0 %2385
        %2387 = vrot.lane.b32.xlu0 %v2290, 20
        %v2388 = vpop.permute.xlu0 %2387
        %2389 = vrot.lane.b32.xlu0 %v2294, 20
        %v2390 = vpop.permute.xlu0 %2389
        %2391 = vrot.lane.b32.xlu0 %v2298, 20
        %v2392 = vpop.permute.xlu0 %2391
        %2393 = vrot.lane.b32.xlu0 %v2302, 20
        %v2394 = vpop.permute.xlu0 %2393
        %2395 = vrot.lane.b32.xlu0 %v2306, 20
        %v2396 = vpop.permute.xlu0 %2395
        %2397 = vrot.lane.b32.xlu0 %v2310, 20
        %v2398 = vpop.permute.xlu0 %2397
        %2399 = vrot.lane.b32.xlu0 %v2314, 20
        %v2400 = vpop.permute.xlu0 %2399
        %2401 = vrot.lane.b32.xlu0 %v2318, 20
        %v2402 = vpop.permute.xlu0 %2401
        %2403 = vrot.lane.b32.xlu0 %v2322, 20
        %v2404 = vpop.permute.xlu0 %2403
        %2405 = vrot.lane.b32.xlu0 %v2326, 20
        %v2406 = vpop.permute.xlu0 %2405
        %2407 = vrot.lane.b32.xlu0 %v2330, 20
        %v2408 = vpop.permute.xlu0 %2407
        %2409 = vrot.lane.b32.xlu0 %v2334, 20
        %v2410 = vpop.permute.xlu0 %2409
        %2411 = vrot.lane.b32.xlu0 %v2338, 20
        %v2412 = vpop.permute.xlu0 %2411
        %2413 = vrot.lane.b32.xlu0 %v2342, 20
        %v2414 = vpop.permute.xlu0 %2413
        %2415 = vrot.lane.b32.xlu0 %v2346, 20
        %v2416 = vpop.permute.xlu0 %2415
        %2417 = vrot.lane.b32.xlu0 %v2350, 20
        %v2418 = vpop.permute.xlu0 %2417
        %2419 = vrot.lane.b32.xlu0 %v2354, 20
        %v2420 = vpop.permute.xlu0 %2419
        %2421 = vrot.lane.b32.xlu0 %v2358, 20
        %v2422 = vpop.permute.xlu0 %2421
        %vm2455 = vcmask 191648
        %2456 = vst.msk [vmem:[#allocation2] sm:$0xf] %vm2455, %v2360
        %2457 = vst.msk [vmem:[#allocation2 + $0x4] sm:$0xf] %vm2455, %v2362
        %2458 = vst.msk [vmem:[#allocation2 + $0x8] sm:$0xf] %vm2455, %v2364
        %2459 = vst.msk [vmem:[#allocation2 + $0xc] sm:$0xf] %vm2455, %v2366
        %2460 = vst.msk [vmem:[#allocation2 + $0x10] sm:$0xf] %vm2455, %v2368
        %2461 = vst.msk [vmem:[#allocation2 + $0x14] sm:$0xf] %vm2455, %v2370
        %2462 = vst.msk [vmem:[#allocation2 + $0x18] sm:$0xf] %vm2455, %v2372
        %2463 = vst.msk [vmem:[#allocation2 + $0x1c] sm:$0xf] %vm2455, %v2374
        %2464 = vst.msk [vmem:[#allocation2 + $0x20] sm:$0xf] %vm2455, %v2376
        %2465 = vst.msk [vmem:[#allocation2 + $0x24] sm:$0xf] %vm2455, %v2378
        %2466 = vst.msk [vmem:[#allocation2 + $0x28] sm:$0xf] %vm2455, %v2380
        %2467 = vst.msk [vmem:[#allocation2 + $0x2c] sm:$0xf] %vm2455, %v2382
        %2468 = vst.msk [vmem:[#allocation2 + $0x30] sm:$0xf] %vm2455, %v2384
        %2469 = vst.msk [vmem:[#allocation2 + $0x34] sm:$0xf] %vm2455, %v2386
        %2470 = vst.msk [vmem:[#allocation2 + $0x38] sm:$0xf] %vm2455, %v2388
        %2471 = vst.msk [vmem:[#allocation2 + $0x3c] sm:$0xf] %vm2455, %v2390
        %2472 = vst.msk [vmem:[#allocation2 + $0x40] sm:$0xf] %vm2455, %v2392
        %2473 = vst.msk [vmem:[#allocation2 + $0x44] sm:$0xf] %vm2455, %v2394
        %2474 = vst.msk [vmem:[#allocation2 + $0x48] sm:$0xf] %vm2455, %v2396
        %2475 = vst.msk [vmem:[#allocation2 + $0x4c] sm:$0xf] %vm2455, %v2398
        %2476 = vst.msk [vmem:[#allocation2 + $0x50] sm:$0xf] %vm2455, %v2400
        %2477 = vst.msk [vmem:[#allocation2 + $0x54] sm:$0xf] %vm2455, %v2402
        %2478 = vst.msk [vmem:[#allocation2 + $0x58] sm:$0xf] %vm2455, %v2404
        %2479 = vst.msk [vmem:[#allocation2 + $0x5c] sm:$0xf] %vm2455, %v2406
        %2480 = vst.msk [vmem:[#allocation2 + $0x60] sm:$0xf] %vm2455, %v2408
        %2481 = vst.msk [vmem:[#allocation2 + $0x64] sm:$0xf] %vm2455, %v2410
        %2482 = vst.msk [vmem:[#allocation2 + $0x68] sm:$0xf] %vm2455, %v2412
        %2483 = vst.msk [vmem:[#allocation2 + $0x6c] sm:$0xf] %vm2455, %v2414
        %2484 = vst.msk [vmem:[#allocation2 + $0x70] sm:$0xf] %vm2455, %v2416
        %2485 = vst.msk [vmem:[#allocation2 + $0x74] sm:$0xf] %vm2455, %v2418
        %2486 = vst.msk [vmem:[#allocation2 + $0x78] sm:$0xf] %vm2455, %v2420
        %2487 = vst.msk [vmem:[#allocation2 + $0x7c] sm:$0xf] %vm2455, %v2422
        %s2488 = scalar_lea.vmem %s168, 16
        %v2489 = vld [vmem:[%s2488] sm:$0xf]
        %v2490 = vld [vmem:[%s2488 + $0x8] sm:$0xf]
        %v2491 = vld [vmem:[%s2488 + $0x10] sm:$0xf]
        %v2492 = vld [vmem:[%s2488 + $0x18] sm:$0xf]
        %v2493 = vld [vmem:[%s2488 + $0x20] sm:$0xf]
        %v2494 = vld [vmem:[%s2488 + $0x28] sm:$0xf]
        %v2495 = vld [vmem:[%s2488 + $0x30] sm:$0xf]
        %v2496 = vld [vmem:[%s2488 + $0x38] sm:$0xf]
        %v2497 = vld [vmem:[%s2488 + $0x50] sm:$0xf]
        %v2498 = vld [vmem:[%s2488 + $0x58] sm:$0xf]
        %v2499 = vld [vmem:[%s2488 + $0x60] sm:$0xf]
        %v2500 = vld [vmem:[%s2488 + $0x68] sm:$0xf]
        %v2501 = vld [vmem:[%s2488 + $0x70] sm:$0xf]
        %v2502 = vld [vmem:[%s2488 + $0x78] sm:$0xf]
        %v2503 = vld [vmem:[%s2488 + $0x80] sm:$0xf]
        %v2504 = vld [vmem:[%s2488 + $0x88] sm:$0xf]
        %v2505 = vld [vmem:[%s2488 + $0xa0] sm:$0xf]
        %v2506 = vld [vmem:[%s2488 + $0xa8] sm:$0xf]
        %v2507 = vld [vmem:[%s2488 + $0xb0] sm:$0xf]
        %v2508 = vld [vmem:[%s2488 + $0xb8] sm:$0xf]
        %v2509 = vld [vmem:[%s2488 + $0xc0] sm:$0xf]
        %v2510 = vld [vmem:[%s2488 + $0xc8] sm:$0xf]
        %v2511 = vld [vmem:[%s2488 + $0xd0] sm:$0xf]
        %v2512 = vld [vmem:[%s2488 + $0xd8] sm:$0xf]
        %v2513 = vld [vmem:[%s2488 + $0xf0] sm:$0xf]
        %v2514 = vld [vmem:[%s2488 + $0xf8] sm:$0xf]
        %v2515 = vld [vmem:[%s2488 + $0x100] sm:$0xf]
        %v2516 = vld [vmem:[%s2488 + $0x108] sm:$0xf]
        %v2517 = vld [vmem:[%s2488 + $0x110] sm:$0xf]
        %v2518 = vld [vmem:[%s2488 + $0x118] sm:$0xf]
        %v2519 = vld [vmem:[%s2488 + $0x120] sm:$0xf]
        %v2520 = vld [vmem:[%s2488 + $0x128] sm:$0xf]
        %2553 = vrot.lane.b32.xlu0 %v2489, 24
        %v2554 = vpop.permute.xlu0 %2553
        %2555 = vrot.lane.b32.xlu0 %v2490, 24
        %v2556 = vpop.permute.xlu0 %2555
        %2557 = vrot.lane.b32.xlu0 %v2491, 24
        %v2558 = vpop.permute.xlu0 %2557
        %2559 = vrot.lane.b32.xlu0 %v2492, 24
        %v2560 = vpop.permute.xlu0 %2559
        %2561 = vrot.lane.b32.xlu0 %v2493, 24
        %v2562 = vpop.permute.xlu0 %2561
        %2563 = vrot.lane.b32.xlu0 %v2494, 24
        %v2564 = vpop.permute.xlu0 %2563
        %2565 = vrot.lane.b32.xlu0 %v2495, 24
        %v2566 = vpop.permute.xlu0 %2565
        %2567 = vrot.lane.b32.xlu0 %v2496, 24
        %v2568 = vpop.permute.xlu0 %2567
        %2569 = vrot.lane.b32.xlu0 %v2497, 24
        %v2570 = vpop.permute.xlu0 %2569
        %2571 = vrot.lane.b32.xlu0 %v2498, 24
        %v2572 = vpop.permute.xlu0 %2571
        %2573 = vrot.lane.b32.xlu0 %v2499, 24
        %v2574 = vpop.permute.xlu0 %2573
        %2575 = vrot.lane.b32.xlu0 %v2500, 24
        %v2576 = vpop.permute.xlu0 %2575
        %2577 = vrot.lane.b32.xlu0 %v2501, 24
        %v2578 = vpop.permute.xlu0 %2577
        %2579 = vrot.lane.b32.xlu0 %v2502, 24
        %v2580 = vpop.permute.xlu0 %2579
        %2581 = vrot.lane.b32.xlu0 %v2503, 24
        %v2582 = vpop.permute.xlu0 %2581
        %2583 = vrot.lane.b32.xlu0 %v2504, 24
        %v2584 = vpop.permute.xlu0 %2583
        %2585 = vrot.lane.b32.xlu0 %v2505, 24
        %v2586 = vpop.permute.xlu0 %2585
        %2587 = vrot.lane.b32.xlu0 %v2506, 24
        %v2588 = vpop.permute.xlu0 %2587
        %2589 = vrot.lane.b32.xlu0 %v2507, 24
        %v2590 = vpop.permute.xlu0 %2589
        %2591 = vrot.lane.b32.xlu0 %v2508, 24
        %v2592 = vpop.permute.xlu0 %2591
        %2593 = vrot.lane.b32.xlu0 %v2509, 24
        %v2594 = vpop.permute.xlu0 %2593
        %2595 = vrot.lane.b32.xlu0 %v2510, 24
        %v2596 = vpop.permute.xlu0 %2595
        %2597 = vrot.lane.b32.xlu0 %v2511, 24
        %v2598 = vpop.permute.xlu0 %2597
        %2599 = vrot.lane.b32.xlu0 %v2512, 24
        %v2600 = vpop.permute.xlu0 %2599
        %2601 = vrot.lane.b32.xlu0 %v2513, 24
        %v2602 = vpop.permute.xlu0 %2601
        %2603 = vrot.lane.b32.xlu0 %v2514, 24
        %v2604 = vpop.permute.xlu0 %2603
        %2605 = vrot.lane.b32.xlu0 %v2515, 24
        %v2606 = vpop.permute.xlu0 %2605
        %2607 = vrot.lane.b32.xlu0 %v2516, 24
        %v2608 = vpop.permute.xlu0 %2607
        %2609 = vrot.lane.b32.xlu0 %v2517, 24
        %v2610 = vpop.permute.xlu0 %2609
        %2611 = vrot.lane.b32.xlu0 %v2518, 24
        %v2612 = vpop.permute.xlu0 %2611
        %2613 = vrot.lane.b32.xlu0 %v2519, 24
        %v2614 = vpop.permute.xlu0 %2613
        %2615 = vrot.lane.b32.xlu0 %v2520, 24
        %v2616 = vpop.permute.xlu0 %2615
        %vm2649 = vcmask 224448
        %2650 = vst.msk [vmem:[#allocation2] sm:$0xf] %vm2649, %v2554
        %2651 = vst.msk [vmem:[#allocation2 + $0x4] sm:$0xf] %vm2649, %v2556
        %2652 = vst.msk [vmem:[#allocation2 + $0x8] sm:$0xf] %vm2649, %v2558
        %2653 = vst.msk [vmem:[#allocation2 + $0xc] sm:$0xf] %vm2649, %v2560
        %2654 = vst.msk [vmem:[#allocation2 + $0x10] sm:$0xf] %vm2649, %v2562
        %2655 = vst.msk [vmem:[#allocation2 + $0x14] sm:$0xf] %vm2649, %v2564
        %2656 = vst.msk [vmem:[#allocation2 + $0x18] sm:$0xf] %vm2649, %v2566
        %2657 = vst.msk [vmem:[#allocation2 + $0x1c] sm:$0xf] %vm2649, %v2568
        %2658 = vst.msk [vmem:[#allocation2 + $0x20] sm:$0xf] %vm2649, %v2570
        %2659 = vst.msk [vmem:[#allocation2 + $0x24] sm:$0xf] %vm2649, %v2572
        %2660 = vst.msk [vmem:[#allocation2 + $0x28] sm:$0xf] %vm2649, %v2574
        %2661 = vst.msk [vmem:[#allocation2 + $0x2c] sm:$0xf] %vm2649, %v2576
        %2662 = vst.msk [vmem:[#allocation2 + $0x30] sm:$0xf] %vm2649, %v2578
        %2663 = vst.msk [vmem:[#allocation2 + $0x34] sm:$0xf] %vm2649, %v2580
        %2664 = vst.msk [vmem:[#allocation2 + $0x38] sm:$0xf] %vm2649, %v2582
        %2665 = vst.msk [vmem:[#allocation2 + $0x3c] sm:$0xf] %vm2649, %v2584
        %2666 = vst.msk [vmem:[#allocation2 + $0x40] sm:$0xf] %vm2649, %v2586
        %2667 = vst.msk [vmem:[#allocation2 + $0x44] sm:$0xf] %vm2649, %v2588
        %2668 = vst.msk [vmem:[#allocation2 + $0x48] sm:$0xf] %vm2649, %v2590
        %2669 = vst.msk [vmem:[#allocation2 + $0x4c] sm:$0xf] %vm2649, %v2592
        %2670 = vst.msk [vmem:[#allocation2 + $0x50] sm:$0xf] %vm2649, %v2594
        %2671 = vst.msk [vmem:[#allocation2 + $0x54] sm:$0xf] %vm2649, %v2596
        %2672 = vst.msk [vmem:[#allocation2 + $0x58] sm:$0xf] %vm2649, %v2598
        %2673 = vst.msk [vmem:[#allocation2 + $0x5c] sm:$0xf] %vm2649, %v2600
        %2674 = vst.msk [vmem:[#allocation2 + $0x60] sm:$0xf] %vm2649, %v2602
        %2675 = vst.msk [vmem:[#allocation2 + $0x64] sm:$0xf] %vm2649, %v2604
        %2676 = vst.msk [vmem:[#allocation2 + $0x68] sm:$0xf] %vm2649, %v2606
        %2677 = vst.msk [vmem:[#allocation2 + $0x6c] sm:$0xf] %vm2649, %v2608
        %2678 = vst.msk [vmem:[#allocation2 + $0x70] sm:$0xf] %vm2649, %v2610
        %2679 = vst.msk [vmem:[#allocation2 + $0x74] sm:$0xf] %vm2649, %v2612
        %2680 = vst.msk [vmem:[#allocation2 + $0x78] sm:$0xf] %vm2649, %v2614
        %2681 = vst.msk [vmem:[#allocation2 + $0x7c] sm:$0xf] %vm2649, %v2616
        %v2682 = vld [vmem:[%s2488] sm:$0xf]
        %v2683 = vld [vmem:[%s2488 + $0x4] sm:$0x1]
        %v2684 = vld [vmem:[%s2488 + $0x8] sm:$0xf]
        %v2685 = vld [vmem:[%s2488 + $0xc] sm:$0x1]
        %v2686 = vld [vmem:[%s2488 + $0x10] sm:$0xf]
        %v2687 = vld [vmem:[%s2488 + $0x14] sm:$0x1]
        %v2688 = vld [vmem:[%s2488 + $0x18] sm:$0xf]
        %v2689 = vld [vmem:[%s2488 + $0x1c] sm:$0x1]
        %v2690 = vld [vmem:[%s2488 + $0x20] sm:$0xf]
        %v2691 = vld [vmem:[%s2488 + $0x24] sm:$0x1]
        %v2692 = vld [vmem:[%s2488 + $0x28] sm:$0xf]
        %v2693 = vld [vmem:[%s2488 + $0x2c] sm:$0x1]
        %v2694 = vld [vmem:[%s2488 + $0x30] sm:$0xf]
        %v2695 = vld [vmem:[%s2488 + $0x34] sm:$0x1]
        %v2696 = vld [vmem:[%s2488 + $0x38] sm:$0xf]
        %v2697 = vld [vmem:[%s2488 + $0x3c] sm:$0x1]
        %v2698 = vld [vmem:[%s2488 + $0x50] sm:$0xf]
        %v2699 = vld [vmem:[%s2488 + $0x54] sm:$0x1]
        %v2700 = vld [vmem:[%s2488 + $0x58] sm:$0xf]
        %v2701 = vld [vmem:[%s2488 + $0x5c] sm:$0x1]
        %v2702 = vld [vmem:[%s2488 + $0x60] sm:$0xf]
        %v2703 = vld [vmem:[%s2488 + $0x64] sm:$0x1]
        %v2704 = vld [vmem:[%s2488 + $0x68] sm:$0xf]
        %v2705 = vld [vmem:[%s2488 + $0x6c] sm:$0x1]
        %v2706 = vld [vmem:[%s2488 + $0x70] sm:$0xf]
        %v2707 = vld [vmem:[%s2488 + $0x74] sm:$0x1]
        %v2708 = vld [vmem:[%s2488 + $0x78] sm:$0xf]
        %v2709 = vld [vmem:[%s2488 + $0x7c] sm:$0x1]
        %v2710 = vld [vmem:[%s2488 + $0x80] sm:$0xf]
        %v2711 = vld [vmem:[%s2488 + $0x84] sm:$0x1]
        %v2712 = vld [vmem:[%s2488 + $0x88] sm:$0xf]
        %v2713 = vld [vmem:[%s2488 + $0x8c] sm:$0x1]
        %v2714 = vld [vmem:[%s2488 + $0xa0] sm:$0xf]
        %v2715 = vld [vmem:[%s2488 + $0xa4] sm:$0x1]
        %v2716 = vld [vmem:[%s2488 + $0xa8] sm:$0xf]
        %v2717 = vld [vmem:[%s2488 + $0xac] sm:$0x1]
        %v2718 = vld [vmem:[%s2488 + $0xb0] sm:$0xf]
        %v2719 = vld [vmem:[%s2488 + $0xb4] sm:$0x1]
        %v2720 = vld [vmem:[%s2488 + $0xb8] sm:$0xf]
        %v2721 = vld [vmem:[%s2488 + $0xbc] sm:$0x1]
        %v2722 = vld [vmem:[%s2488 + $0xc0] sm:$0xf]
        %v2723 = vld [vmem:[%s2488 + $0xc4] sm:$0x1]
        %v2724 = vld [vmem:[%s2488 + $0xc8] sm:$0xf]
        %v2725 = vld [vmem:[%s2488 + $0xcc] sm:$0x1]
        %v2726 = vld [vmem:[%s2488 + $0xd0] sm:$0xf]
        %v2727 = vld [vmem:[%s2488 + $0xd4] sm:$0x1]
        %v2728 = vld [vmem:[%s2488 + $0xd8] sm:$0xf]
        %v2729 = vld [vmem:[%s2488 + $0xdc] sm:$0x1]
        %v2730 = vld [vmem:[%s2488 + $0xf0] sm:$0xf]
        %v2731 = vld [vmem:[%s2488 + $0xf4] sm:$0x1]
        %v2732 = vld [vmem:[%s2488 + $0xf8] sm:$0xf]
        %v2733 = vld [vmem:[%s2488 + $0xfc] sm:$0x1]
        %v2734 = vld [vmem:[%s2488 + $0x100] sm:$0xf]
        %v2735 = vld [vmem:[%s2488 + $0x104] sm:$0x1]
        %v2736 = vld [vmem:[%s2488 + $0x108] sm:$0xf]
        %v2737 = vld [vmem:[%s2488 + $0x10c] sm:$0x1]
        %v2738 = vld [vmem:[%s2488 + $0x110] sm:$0xf]
        %v2739 = vld [vmem:[%s2488 + $0x114] sm:$0x1]
        %v2740 = vld [vmem:[%s2488 + $0x118] sm:$0xf]
        %v2741 = vld [vmem:[%s2488 + $0x11c] sm:$0x1]
        %v2742 = vld [vmem:[%s2488 + $0x120] sm:$0xf]
        %v2743 = vld [vmem:[%s2488 + $0x124] sm:$0x1]
        %v2744 = vld [vmem:[%s2488 + $0x128] sm:$0xf]
        %v2745 = vld [vmem:[%s2488 + $0x12c] sm:$0x1]
        %v2747 = vshrl.u32 %v2682, 16
        %v2749 = vrot.slane %v2747, 4
        %v2750 = vshll.u32 %v2682, 16
        %v2752 = vrot.slane %v2750, 5
        %v2753 = vor.u32 %v2749, %v2752
        %v2754 = vrot.slane %v2753, 4
        %v2756 = vshll.u32 %v2683, 16
        %v2758 = vrot.slane %v2756, 5
        %v2759 = vsel %vm302, %v2754, %v2758
        %v2761 = vshrl.u32 %v2684, 16
        %v2763 = vrot.slane %v2761, 4
        %v2764 = vshll.u32 %v2684, 16
        %v2766 = vrot.slane %v2764, 5
        %v2767 = vor.u32 %v2763, %v2766
        %v2768 = vrot.slane %v2767, 4
        %v2770 = vshll.u32 %v2685, 16
        %v2772 = vrot.slane %v2770, 5
        %v2773 = vsel %vm302, %v2768, %v2772
        %v2775 = vshrl.u32 %v2686, 16
        %v2777 = vrot.slane %v2775, 4
        %v2778 = vshll.u32 %v2686, 16
        %v2780 = vrot.slane %v2778, 5
        %v2781 = vor.u32 %v2777, %v2780
        %v2782 = vrot.slane %v2781, 4
        %v2784 = vshll.u32 %v2687, 16
        %v2786 = vrot.slane %v2784, 5
        %v2787 = vsel %vm302, %v2782, %v2786
        %v2789 = vshrl.u32 %v2688, 16
        %v2791 = vrot.slane %v2789, 4
        %v2792 = vshll.u32 %v2688, 16
        %v2794 = vrot.slane %v2792, 5
        %v2795 = vor.u32 %v2791, %v2794
        %v2796 = vrot.slane %v2795, 4
        %v2798 = vshll.u32 %v2689, 16
        %v2800 = vrot.slane %v2798, 5
        %v2801 = vsel %vm302, %v2796, %v2800
        %v2803 = vshrl.u32 %v2690, 16
        %v2805 = vrot.slane %v2803, 4
        %v2806 = vshll.u32 %v2690, 16
        %v2808 = vrot.slane %v2806, 5
        %v2809 = vor.u32 %v2805, %v2808
        %v2810 = vrot.slane %v2809, 4
        %v2812 = vshll.u32 %v2691, 16
        %v2814 = vrot.slane %v2812, 5
        %v2815 = vsel %vm302, %v2810, %v2814
        %v2817 = vshrl.u32 %v2692, 16
        %v2819 = vrot.slane %v2817, 4
        %v2820 = vshll.u32 %v2692, 16
        %v2822 = vrot.slane %v2820, 5
        %v2823 = vor.u32 %v2819, %v2822
        %v2824 = vrot.slane %v2823, 4
        %v2826 = vshll.u32 %v2693, 16
        %v2828 = vrot.slane %v2826, 5
        %v2829 = vsel %vm302, %v2824, %v2828
        %v2831 = vshrl.u32 %v2694, 16
        %v2833 = vrot.slane %v2831, 4
        %v2834 = vshll.u32 %v2694, 16
        %v2836 = vrot.slane %v2834, 5
        %v2837 = vor.u32 %v2833, %v2836
        %v2838 = vrot.slane %v2837, 4
        %v2840 = vshll.u32 %v2695, 16
        %v2842 = vrot.slane %v2840, 5
        %v2843 = vsel %vm302, %v2838, %v2842
        %v2845 = vshrl.u32 %v2696, 16
        %v2847 = vrot.slane %v2845, 4
        %v2848 = vshll.u32 %v2696, 16
        %v2850 = vrot.slane %v2848, 5
        %v2851 = vor.u32 %v2847, %v2850
        %v2852 = vrot.slane %v2851, 4
        %v2854 = vshll.u32 %v2697, 16
        %v2856 = vrot.slane %v2854, 5
        %v2857 = vsel %vm302, %v2852, %v2856
        %v2859 = vshrl.u32 %v2698, 16
        %v2861 = vrot.slane %v2859, 4
        %v2862 = vshll.u32 %v2698, 16
        %v2864 = vrot.slane %v2862, 5
        %v2865 = vor.u32 %v2861, %v2864
        %v2866 = vrot.slane %v2865, 4
        %v2868 = vshll.u32 %v2699, 16
        %v2870 = vrot.slane %v2868, 5
        %v2871 = vsel %vm302, %v2866, %v2870
        %v2873 = vshrl.u32 %v2700, 16
        %v2875 = vrot.slane %v2873, 4
        %v2876 = vshll.u32 %v2700, 16
        %v2878 = vrot.slane %v2876, 5
        %v2879 = vor.u32 %v2875, %v2878
        %v2880 = vrot.slane %v2879, 4
        %v2882 = vshll.u32 %v2701, 16
        %v2884 = vrot.slane %v2882, 5
        %v2885 = vsel %vm302, %v2880, %v2884
        %v2887 = vshrl.u32 %v2702, 16
        %v2889 = vrot.slane %v2887, 4
        %v2890 = vshll.u32 %v2702, 16
        %v2892 = vrot.slane %v2890, 5
        %v2893 = vor.u32 %v2889, %v2892
        %v2894 = vrot.slane %v2893, 4
        %v2896 = vshll.u32 %v2703, 16
        %v2898 = vrot.slane %v2896, 5
        %v2899 = vsel %vm302, %v2894, %v2898
        %v2901 = vshrl.u32 %v2704, 16
        %v2903 = vrot.slane %v2901, 4
        %v2904 = vshll.u32 %v2704, 16
        %v2906 = vrot.slane %v2904, 5
        %v2907 = vor.u32 %v2903, %v2906
        %v2908 = vrot.slane %v2907, 4
        %v2910 = vshll.u32 %v2705, 16
        %v2912 = vrot.slane %v2910, 5
        %v2913 = vsel %vm302, %v2908, %v2912
        %v2915 = vshrl.u32 %v2706, 16
        %v2917 = vrot.slane %v2915, 4
        %v2918 = vshll.u32 %v2706, 16
        %v2920 = vrot.slane %v2918, 5
        %v2921 = vor.u32 %v2917, %v2920
        %v2922 = vrot.slane %v2921, 4
        %v2924 = vshll.u32 %v2707, 16
        %v2926 = vrot.slane %v2924, 5
        %v2927 = vsel %vm302, %v2922, %v2926
        %v2929 = vshrl.u32 %v2708, 16
        %v2931 = vrot.slane %v2929, 4
        %v2932 = vshll.u32 %v2708, 16
        %v2934 = vrot.slane %v2932, 5
        %v2935 = vor.u32 %v2931, %v2934
        %v2936 = vrot.slane %v2935, 4
        %v2938 = vshll.u32 %v2709, 16
        %v2940 = vrot.slane %v2938, 5
        %v2941 = vsel %vm302, %v2936, %v2940
        %v2943 = vshrl.u32 %v2710, 16
        %v2945 = vrot.slane %v2943, 4
        %v2946 = vshll.u32 %v2710, 16
        %v2948 = vrot.slane %v2946, 5
        %v2949 = vor.u32 %v2945, %v2948
        %v2950 = vrot.slane %v2949, 4
        %v2952 = vshll.u32 %v2711, 16
        %v2954 = vrot.slane %v2952, 5
        %v2955 = vsel %vm302, %v2950, %v2954
        %v2957 = vshrl.u32 %v2712, 16
        %v2959 = vrot.slane %v2957, 4
        %v2960 = vshll.u32 %v2712, 16
        %v2962 = vrot.slane %v2960, 5
        %v2963 = vor.u32 %v2959, %v2962
        %v2964 = vrot.slane %v2963, 4
        %v2966 = vshll.u32 %v2713, 16
        %v2968 = vrot.slane %v2966, 5
        %v2969 = vsel %vm302, %v2964, %v2968
        %v2971 = vshrl.u32 %v2714, 16
        %v2973 = vrot.slane %v2971, 4
        %v2974 = vshll.u32 %v2714, 16
        %v2976 = vrot.slane %v2974, 5
        %v2977 = vor.u32 %v2973, %v2976
        %v2978 = vrot.slane %v2977, 4
        %v2980 = vshll.u32 %v2715, 16
        %v2982 = vrot.slane %v2980, 5
        %v2983 = vsel %vm302, %v2978, %v2982
        %v2985 = vshrl.u32 %v2716, 16
        %v2987 = vrot.slane %v2985, 4
        %v2988 = vshll.u32 %v2716, 16
        %v2990 = vrot.slane %v2988, 5
        %v2991 = vor.u32 %v2987, %v2990
        %v2992 = vrot.slane %v2991, 4
        %v2994 = vshll.u32 %v2717, 16
        %v2996 = vrot.slane %v2994, 5
        %v2997 = vsel %vm302, %v2992, %v2996
        %v2999 = vshrl.u32 %v2718, 16
        %v3001 = vrot.slane %v2999, 4
        %v3002 = vshll.u32 %v2718, 16
        %v3004 = vrot.slane %v3002, 5
        %v3005 = vor.u32 %v3001, %v3004
        %v3006 = vrot.slane %v3005, 4
        %v3008 = vshll.u32 %v2719, 16
        %v3010 = vrot.slane %v3008, 5
        %v3011 = vsel %vm302, %v3006, %v3010
        %v3013 = vshrl.u32 %v2720, 16
        %v3015 = vrot.slane %v3013, 4
        %v3016 = vshll.u32 %v2720, 16
        %v3018 = vrot.slane %v3016, 5
        %v3019 = vor.u32 %v3015, %v3018
        %v3020 = vrot.slane %v3019, 4
        %v3022 = vshll.u32 %v2721, 16
        %v3024 = vrot.slane %v3022, 5
        %v3025 = vsel %vm302, %v3020, %v3024
        %v3027 = vshrl.u32 %v2722, 16
        %v3029 = vrot.slane %v3027, 4
        %v3030 = vshll.u32 %v2722, 16
        %v3032 = vrot.slane %v3030, 5
        %v3033 = vor.u32 %v3029, %v3032
        %v3034 = vrot.slane %v3033, 4
        %v3036 = vshll.u32 %v2723, 16
        %v3038 = vrot.slane %v3036, 5
        %v3039 = vsel %vm302, %v3034, %v3038
        %v3041 = vshrl.u32 %v2724, 16
        %v3043 = vrot.slane %v3041, 4
        %v3044 = vshll.u32 %v2724, 16
        %v3046 = vrot.slane %v3044, 5
        %v3047 = vor.u32 %v3043, %v3046
        %v3048 = vrot.slane %v3047, 4
        %v3050 = vshll.u32 %v2725, 16
        %v3052 = vrot.slane %v3050, 5
        %v3053 = vsel %vm302, %v3048, %v3052
        %v3055 = vshrl.u32 %v2726, 16
        %v3057 = vrot.slane %v3055, 4
        %v3058 = vshll.u32 %v2726, 16
        %v3060 = vrot.slane %v3058, 5
        %v3061 = vor.u32 %v3057, %v3060
        %v3062 = vrot.slane %v3061, 4
        %v3064 = vshll.u32 %v2727, 16
        %v3066 = vrot.slane %v3064, 5
        %v3067 = vsel %vm302, %v3062, %v3066
        %v3069 = vshrl.u32 %v2728, 16
        %v3071 = vrot.slane %v3069, 4
        %v3072 = vshll.u32 %v2728, 16
        %v3074 = vrot.slane %v3072, 5
        %v3075 = vor.u32 %v3071, %v3074
        %v3076 = vrot.slane %v3075, 4
        %v3078 = vshll.u32 %v2729, 16
        %v3080 = vrot.slane %v3078, 5
        %v3081 = vsel %vm302, %v3076, %v3080
        %v3083 = vshrl.u32 %v2730, 16
        %v3085 = vrot.slane %v3083, 4
        %v3086 = vshll.u32 %v2730, 16
        %v3088 = vrot.slane %v3086, 5
        %v3089 = vor.u32 %v3085, %v3088
        %v3090 = vrot.slane %v3089, 4
        %v3092 = vshll.u32 %v2731, 16
        %v3094 = vrot.slane %v3092, 5
        %v3095 = vsel %vm302, %v3090, %v3094
        %v3097 = vshrl.u32 %v2732, 16
        %v3099 = vrot.slane %v3097, 4
        %v3100 = vshll.u32 %v2732, 16
        %v3102 = vrot.slane %v3100, 5
        %v3103 = vor.u32 %v3099, %v3102
        %v3104 = vrot.slane %v3103, 4
        %v3106 = vshll.u32 %v2733, 16
        %v3108 = vrot.slane %v3106, 5
        %v3109 = vsel %vm302, %v3104, %v3108
        %v3111 = vshrl.u32 %v2734, 16
        %v3113 = vrot.slane %v3111, 4
        %v3114 = vshll.u32 %v2734, 16
        %v3116 = vrot.slane %v3114, 5
        %v3117 = vor.u32 %v3113, %v3116
        %v3118 = vrot.slane %v3117, 4
        %v3120 = vshll.u32 %v2735, 16
        %v3122 = vrot.slane %v3120, 5
        %v3123 = vsel %vm302, %v3118, %v3122
        %v3125 = vshrl.u32 %v2736, 16
        %v3127 = vrot.slane %v3125, 4
        %v3128 = vshll.u32 %v2736, 16
        %v3130 = vrot.slane %v3128, 5
        %v3131 = vor.u32 %v3127, %v3130
        %v3132 = vrot.slane %v3131, 4
        %v3134 = vshll.u32 %v2737, 16
        %v3136 = vrot.slane %v3134, 5
        %v3137 = vsel %vm302, %v3132, %v3136
        %v3139 = vshrl.u32 %v2738, 16
        %v3141 = vrot.slane %v3139, 4
        %v3142 = vshll.u32 %v2738, 16
        %v3144 = vrot.slane %v3142, 5
        %v3145 = vor.u32 %v3141, %v3144
        %v3146 = vrot.slane %v3145, 4
        %v3148 = vshll.u32 %v2739, 16
        %v3150 = vrot.slane %v3148, 5
        %v3151 = vsel %vm302, %v3146, %v3150
        %v3153 = vshrl.u32 %v2740, 16
        %v3155 = vrot.slane %v3153, 4
        %v3156 = vshll.u32 %v2740, 16
        %v3158 = vrot.slane %v3156, 5
        %v3159 = vor.u32 %v3155, %v3158
        %v3160 = vrot.slane %v3159, 4
        %v3162 = vshll.u32 %v2741, 16
        %v3164 = vrot.slane %v3162, 5
        %v3165 = vsel %vm302, %v3160, %v3164
        %v3167 = vshrl.u32 %v2742, 16
        %v3169 = vrot.slane %v3167, 4
        %v3170 = vshll.u32 %v2742, 16
        %v3172 = vrot.slane %v3170, 5
        %v3173 = vor.u32 %v3169, %v3172
        %v3174 = vrot.slane %v3173, 4
        %v3176 = vshll.u32 %v2743, 16
        %v3178 = vrot.slane %v3176, 5
        %v3179 = vsel %vm302, %v3174, %v3178
        %v3181 = vshrl.u32 %v2744, 16
        %v3183 = vrot.slane %v3181, 4
        %v3184 = vshll.u32 %v2744, 16
        %v3186 = vrot.slane %v3184, 5
        %v3187 = vor.u32 %v3183, %v3186
        %v3188 = vrot.slane %v3187, 4
        %v3190 = vshll.u32 %v2745, 16
        %v3192 = vrot.slane %v3190, 5
        %v3193 = vsel %vm302, %v3188, %v3192
        %3194 = vrot.lane.b32.xlu0 %v2759, 28
        %v3195 = vpop.permute.xlu0 %3194
        %3196 = vrot.lane.b32.xlu0 %v2773, 28
        %v3197 = vpop.permute.xlu0 %3196
        %3198 = vrot.lane.b32.xlu0 %v2787, 28
        %v3199 = vpop.permute.xlu0 %3198
        %3200 = vrot.lane.b32.xlu0 %v2801, 28
        %v3201 = vpop.permute.xlu0 %3200
        %3202 = vrot.lane.b32.xlu0 %v2815, 28
        %v3203 = vpop.permute.xlu0 %3202
        %3204 = vrot.lane.b32.xlu0 %v2829, 28
        %v3205 = vpop.permute.xlu0 %3204
        %3206 = vrot.lane.b32.xlu0 %v2843, 28
        %v3207 = vpop.permute.xlu0 %3206
        %3208 = vrot.lane.b32.xlu0 %v2857, 28
        %v3209 = vpop.permute.xlu0 %3208
        %3210 = vrot.lane.b32.xlu0 %v2871, 28
        %v3211 = vpop.permute.xlu0 %3210
        %3212 = vrot.lane.b32.xlu0 %v2885, 28
        %v3213 = vpop.permute.xlu0 %3212
        %3214 = vrot.lane.b32.xlu0 %v2899, 28
        %v3215 = vpop.permute.xlu0 %3214
        %3216 = vrot.lane.b32.xlu0 %v2913, 28
        %v3217 = vpop.permute.xlu0 %3216
        %3218 = vrot.lane.b32.xlu0 %v2927, 28
        %v3219 = vpop.permute.xlu0 %3218
        %3220 = vrot.lane.b32.xlu0 %v2941, 28
        %v3221 = vpop.permute.xlu0 %3220
        %3222 = vrot.lane.b32.xlu0 %v2955, 28
        %v3223 = vpop.permute.xlu0 %3222
        %3224 = vrot.lane.b32.xlu0 %v2969, 28
        %v3225 = vpop.permute.xlu0 %3224
        %3226 = vrot.lane.b32.xlu0 %v2983, 28
        %v3227 = vpop.permute.xlu0 %3226
        %3228 = vrot.lane.b32.xlu0 %v2997, 28
        %v3229 = vpop.permute.xlu0 %3228
        %3230 = vrot.lane.b32.xlu0 %v3011, 28
        %v3231 = vpop.permute.xlu0 %3230
        %3232 = vrot.lane.b32.xlu0 %v3025, 28
        %v3233 = vpop.permute.xlu0 %3232
        %3234 = vrot.lane.b32.xlu0 %v3039, 28
        %v3235 = vpop.permute.xlu0 %3234
        %3236 = vrot.lane.b32.xlu0 %v3053, 28
        %v3237 = vpop.permute.xlu0 %3236
        %3238 = vrot.lane.b32.xlu0 %v3067, 28
        %v3239 = vpop.permute.xlu0 %3238
        %3240 = vrot.lane.b32.xlu0 %v3081, 28
        %v3241 = vpop.permute.xlu0 %3240
        %3242 = vrot.lane.b32.xlu0 %v3095, 28
        %v3243 = vpop.permute.xlu0 %3242
        %3244 = vrot.lane.b32.xlu0 %v3109, 28
        %v3245 = vpop.permute.xlu0 %3244
        %3246 = vrot.lane.b32.xlu0 %v3123, 28
        %v3247 = vpop.permute.xlu0 %3246
        %3248 = vrot.lane.b32.xlu0 %v3137, 28
        %v3249 = vpop.permute.xlu0 %3248
        %3250 = vrot.lane.b32.xlu0 %v3151, 28
        %v3251 = vpop.permute.xlu0 %3250
        %3252 = vrot.lane.b32.xlu0 %v3165, 28
        %v3253 = vpop.permute.xlu0 %3252
        %3254 = vrot.lane.b32.xlu0 %v3179, 28
        %v3255 = vpop.permute.xlu0 %3254
        %3256 = vrot.lane.b32.xlu0 %v3193, 28
        %v3257 = vpop.permute.xlu0 %3256
        %vm3290 = vcmask 257248
        %3291 = vst.msk [vmem:[#allocation2] sm:$0xf] %vm3290, %v3195
        %3292 = vst.msk [vmem:[#allocation2 + $0x4] sm:$0xf] %vm3290, %v3197
        %3293 = vst.msk [vmem:[#allocation2 + $0x8] sm:$0xf] %vm3290, %v3199
        %3294 = vst.msk [vmem:[#allocation2 + $0xc] sm:$0xf] %vm3290, %v3201
        %3295 = vst.msk [vmem:[#allocation2 + $0x10] sm:$0xf] %vm3290, %v3203
        %3296 = vst.msk [vmem:[#allocation2 + $0x14] sm:$0xf] %vm3290, %v3205
        %3297 = vst.msk [vmem:[#allocation2 + $0x18] sm:$0xf] %vm3290, %v3207
        %3298 = vst.msk [vmem:[#allocation2 + $0x1c] sm:$0xf] %vm3290, %v3209
        %3299 = vst.msk [vmem:[#allocation2 + $0x20] sm:$0xf] %vm3290, %v3211
        %3300 = vst.msk [vmem:[#allocation2 + $0x24] sm:$0xf] %vm3290, %v3213
        %3301 = vst.msk [vmem:[#allocation2 + $0x28] sm:$0xf] %vm3290, %v3215
        %3302 = vst.msk [vmem:[#allocation2 + $0x2c] sm:$0xf] %vm3290, %v3217
        %3303 = vst.msk [vmem:[#allocation2 + $0x30] sm:$0xf] %vm3290, %v3219
        %3304 = vst.msk [vmem:[#allocation2 + $0x34] sm:$0xf] %vm3290, %v3221
        %3305 = vst.msk [vmem:[#allocation2 + $0x38] sm:$0xf] %vm3290, %v3223
        %3306 = vst.msk [vmem:[#allocation2 + $0x3c] sm:$0xf] %vm3290, %v3225
        %3307 = vst.msk [vmem:[#allocation2 + $0x40] sm:$0xf] %vm3290, %v3227
        %3308 = vst.msk [vmem:[#allocation2 + $0x44] sm:$0xf] %vm3290, %v3229
        %3309 = vst.msk [vmem:[#allocation2 + $0x48] sm:$0xf] %vm3290, %v3231
        %3310 = vst.msk [vmem:[#allocation2 + $0x4c] sm:$0xf] %vm3290, %v3233
        %3311 = vst.msk [vmem:[#allocation2 + $0x50] sm:$0xf] %vm3290, %v3235
        %3312 = vst.msk [vmem:[#allocation2 + $0x54] sm:$0xf] %vm3290, %v3237
        %3313 = vst.msk [vmem:[#allocation2 + $0x58] sm:$0xf] %vm3290, %v3239
        %3314 = vst.msk [vmem:[#allocation2 + $0x5c] sm:$0xf] %vm3290, %v3241
        %3315 = vst.msk [vmem:[#allocation2 + $0x60] sm:$0xf] %vm3290, %v3243
        %3316 = vst.msk [vmem:[#allocation2 + $0x64] sm:$0xf] %vm3290, %v3245
        %3317 = vst.msk [vmem:[#allocation2 + $0x68] sm:$0xf] %vm3290, %v3247
        %3318 = vst.msk [vmem:[#allocation2 + $0x6c] sm:$0xf] %vm3290, %v3249
        %3319 = vst.msk [vmem:[#allocation2 + $0x70] sm:$0xf] %vm3290, %v3251
        %3320 = vst.msk [vmem:[#allocation2 + $0x74] sm:$0xf] %vm3290, %v3253
        %3321 = vst.msk [vmem:[#allocation2 + $0x78] sm:$0xf] %vm3290, %v3255
        %3322 = vst.msk [vmem:[#allocation2 + $0x7c] sm:$0xf] %vm3290, %v3257
        %v3323 = vld [vmem:[%s2488] sm:$0xe]
        %v3324 = vld [vmem:[%s2488 + $0x4] sm:$0x1]
        %v3325 = vld [vmem:[%s2488 + $0x8] sm:$0xe]
        %v3326 = vld [vmem:[%s2488 + $0xc] sm:$0x1]
        %v3327 = vld [vmem:[%s2488 + $0x10] sm:$0xe]
        %v3328 = vld [vmem:[%s2488 + $0x14] sm:$0x1]
        %v3329 = vld [vmem:[%s2488 + $0x18] sm:$0xe]
        %v3330 = vld [vmem:[%s2488 + $0x1c] sm:$0x1]
        %v3331 = vld [vmem:[%s2488 + $0x20] sm:$0xe]
        %v3332 = vld [vmem:[%s2488 + $0x24] sm:$0x1]
        %v3333 = vld [vmem:[%s2488 + $0x28] sm:$0xe]
        %v3334 = vld [vmem:[%s2488 + $0x2c] sm:$0x1]
        %v3335 = vld [vmem:[%s2488 + $0x30] sm:$0xe]
        %v3336 = vld [vmem:[%s2488 + $0x34] sm:$0x1]
        %v3337 = vld [vmem:[%s2488 + $0x38] sm:$0xe]
        %v3338 = vld [vmem:[%s2488 + $0x3c] sm:$0x1]
        %v3339 = vld [vmem:[%s2488 + $0x50] sm:$0xe]
        %v3340 = vld [vmem:[%s2488 + $0x54] sm:$0x1]
        %v3341 = vld [vmem:[%s2488 + $0x58] sm:$0xe]
        %v3342 = vld [vmem:[%s2488 + $0x5c] sm:$0x1]
        %v3343 = vld [vmem:[%s2488 + $0x60] sm:$0xe]
        %v3344 = vld [vmem:[%s2488 + $0x64] sm:$0x1]
        %v3345 = vld [vmem:[%s2488 + $0x68] sm:$0xe]
        %v3346 = vld [vmem:[%s2488 + $0x6c] sm:$0x1]
        %v3347 = vld [vmem:[%s2488 + $0x70] sm:$0xe]
        %v3348 = vld [vmem:[%s2488 + $0x74] sm:$0x1]
        %v3349 = vld [vmem:[%s2488 + $0x78] sm:$0xe]
        %v3350 = vld [vmem:[%s2488 + $0x7c] sm:$0x1]
        %v3351 = vld [vmem:[%s2488 + $0x80] sm:$0xe]
        %v3352 = vld [vmem:[%s2488 + $0x84] sm:$0x1]
        %v3353 = vld [vmem:[%s2488 + $0x88] sm:$0xe]
        %v3354 = vld [vmem:[%s2488 + $0x8c] sm:$0x1]
        %v3355 = vld [vmem:[%s2488 + $0xa0] sm:$0xe]
        %v3356 = vld [vmem:[%s2488 + $0xa4] sm:$0x1]
        %v3357 = vld [vmem:[%s2488 + $0xa8] sm:$0xe]
        %v3358 = vld [vmem:[%s2488 + $0xac] sm:$0x1]
        %v3359 = vld [vmem:[%s2488 + $0xb0] sm:$0xe]
        %v3360 = vld [vmem:[%s2488 + $0xb4] sm:$0x1]
        %v3361 = vld [vmem:[%s2488 + $0xb8] sm:$0xe]
        %v3362 = vld [vmem:[%s2488 + $0xbc] sm:$0x1]
        %v3363 = vld [vmem:[%s2488 + $0xc0] sm:$0xe]
        %v3364 = vld [vmem:[%s2488 + $0xc4] sm:$0x1]
        %v3365 = vld [vmem:[%s2488 + $0xc8] sm:$0xe]
        %v3366 = vld [vmem:[%s2488 + $0xcc] sm:$0x1]
        %v3367 = vld [vmem:[%s2488 + $0xd0] sm:$0xe]
        %v3368 = vld [vmem:[%s2488 + $0xd4] sm:$0x1]
        %v3369 = vld [vmem:[%s2488 + $0xd8] sm:$0xe]
        %v3370 = vld [vmem:[%s2488 + $0xdc] sm:$0x1]
        %v3371 = vld [vmem:[%s2488 + $0xf0] sm:$0xe]
        %v3372 = vld [vmem:[%s2488 + $0xf4] sm:$0x1]
        %v3373 = vld [vmem:[%s2488 + $0xf8] sm:$0xe]
        %v3374 = vld [vmem:[%s2488 + $0xfc] sm:$0x1]
        %v3375 = vld [vmem:[%s2488 + $0x100] sm:$0xe]
        %v3376 = vld [vmem:[%s2488 + $0x104] sm:$0x1]
        %v3377 = vld [vmem:[%s2488 + $0x108] sm:$0xe]
        %v3378 = vld [vmem:[%s2488 + $0x10c] sm:$0x1]
        %v3379 = vld [vmem:[%s2488 + $0x110] sm:$0xe]
        %v3380 = vld [vmem:[%s2488 + $0x114] sm:$0x1]
        %v3381 = vld [vmem:[%s2488 + $0x118] sm:$0xe]
        %v3382 = vld [vmem:[%s2488 + $0x11c] sm:$0x1]
        %v3383 = vld [vmem:[%s2488 + $0x120] sm:$0xe]
        %v3384 = vld [vmem:[%s2488 + $0x124] sm:$0x1]
        %v3385 = vld [vmem:[%s2488 + $0x128] sm:$0xe]
        %v3386 = vld [vmem:[%s2488 + $0x12c] sm:$0x1]
        %v3451 = vrot.slane %v3323, 5
        %v3452 = vrot.slane %v3451, 4
        %v3453 = vrot.slane %v3324, 5
        %v3454 = vsel %vm1010, %v3452, %v3453
        %v3455 = vrot.slane %v3325, 5
        %v3456 = vrot.slane %v3455, 4
        %v3457 = vrot.slane %v3326, 5
        %v3458 = vsel %vm1010, %v3456, %v3457
        %v3459 = vrot.slane %v3327, 5
        %v3460 = vrot.slane %v3459, 4
        %v3461 = vrot.slane %v3328, 5
        %v3462 = vsel %vm1010, %v3460, %v3461
        %v3463 = vrot.slane %v3329, 5
        %v3464 = vrot.slane %v3463, 4
        %v3465 = vrot.slane %v3330, 5
        %v3466 = vsel %vm1010, %v3464, %v3465
        %v3467 = vrot.slane %v3331, 5
        %v3468 = vrot.slane %v3467, 4
        %v3469 = vrot.slane %v3332, 5
        %v3470 = vsel %vm1010, %v3468, %v3469
        %v3471 = vrot.slane %v3333, 5
        %v3472 = vrot.slane %v3471, 4
        %v3473 = vrot.slane %v3334, 5
        %v3474 = vsel %vm1010, %v3472, %v3473
        %v3475 = vrot.slane %v3335, 5
        %v3476 = vrot.slane %v3475, 4
        %v3477 = vrot.slane %v3336, 5
        %v3478 = vsel %vm1010, %v3476, %v3477
        %v3479 = vrot.slane %v3337, 5
        %v3480 = vrot.slane %v3479, 4
        %v3481 = vrot.slane %v3338, 5
        %v3482 = vsel %vm1010, %v3480, %v3481
        %v3483 = vrot.slane %v3339, 5
        %v3484 = vrot.slane %v3483, 4
        %v3485 = vrot.slane %v3340, 5
        %v3486 = vsel %vm1010, %v3484, %v3485
        %v3487 = vrot.slane %v3341, 5
        %v3488 = vrot.slane %v3487, 4
        %v3489 = vrot.slane %v3342, 5
        %v3490 = vsel %vm1010, %v3488, %v3489
        %v3491 = vrot.slane %v3343, 5
        %v3492 = vrot.slane %v3491, 4
        %v3493 = vrot.slane %v3344, 5
        %v3494 = vsel %vm1010, %v3492, %v3493
        %v3495 = vrot.slane %v3345, 5
        %v3496 = vrot.slane %v3495, 4
        %v3497 = vrot.slane %v3346, 5
        %v3498 = vsel %vm1010, %v3496, %v3497
        %v3499 = vrot.slane %v3347, 5
        %v3500 = vrot.slane %v3499, 4
        %v3501 = vrot.slane %v3348, 5
        %v3502 = vsel %vm1010, %v3500, %v3501
        %v3503 = vrot.slane %v3349, 5
        %v3504 = vrot.slane %v3503, 4
        %v3505 = vrot.slane %v3350, 5
        %v3506 = vsel %vm1010, %v3504, %v3505
        %v3507 = vrot.slane %v3351, 5
        %v3508 = vrot.slane %v3507, 4
        %v3509 = vrot.slane %v3352, 5
        %v3510 = vsel %vm1010, %v3508, %v3509
        %v3511 = vrot.slane %v3353, 5
        %v3512 = vrot.slane %v3511, 4
        %v3513 = vrot.slane %v3354, 5
        %v3514 = vsel %vm1010, %v3512, %v3513
        %v3515 = vrot.slane %v3355, 5
        %v3516 = vrot.slane %v3515, 4
        %v3517 = vrot.slane %v3356, 5
        %v3518 = vsel %vm1010, %v3516, %v3517
        %v3519 = vrot.slane %v3357, 5
        %v3520 = vrot.slane %v3519, 4
        %v3521 = vrot.slane %v3358, 5
        %v3522 = vsel %vm1010, %v3520, %v3521
        %v3523 = vrot.slane %v3359, 5
        %v3524 = vrot.slane %v3523, 4
        %v3525 = vrot.slane %v3360, 5
        %v3526 = vsel %vm1010, %v3524, %v3525
        %v3527 = vrot.slane %v3361, 5
        %v3528 = vrot.slane %v3527, 4
        %v3529 = vrot.slane %v3362, 5
        %v3530 = vsel %vm1010, %v3528, %v3529
        %v3531 = vrot.slane %v3363, 5
        %v3532 = vrot.slane %v3531, 4
        %v3533 = vrot.slane %v3364, 5
        %v3534 = vsel %vm1010, %v3532, %v3533
        %v3535 = vrot.slane %v3365, 5
        %v3536 = vrot.slane %v3535, 4
        %v3537 = vrot.slane %v3366, 5
        %v3538 = vsel %vm1010, %v3536, %v3537
        %v3539 = vrot.slane %v3367, 5
        %v3540 = vrot.slane %v3539, 4
        %v3541 = vrot.slane %v3368, 5
        %v3542 = vsel %vm1010, %v3540, %v3541
        %v3543 = vrot.slane %v3369, 5
        %v3544 = vrot.slane %v3543, 4
        %v3545 = vrot.slane %v3370, 5
        %v3546 = vsel %vm1010, %v3544, %v3545
        %v3547 = vrot.slane %v3371, 5
        %v3548 = vrot.slane %v3547, 4
        %v3549 = vrot.slane %v3372, 5
        %v3550 = vsel %vm1010, %v3548, %v3549
        %v3551 = vrot.slane %v3373, 5
        %v3552 = vrot.slane %v3551, 4
        %v3553 = vrot.slane %v3374, 5
        %v3554 = vsel %vm1010, %v3552, %v3553
        %v3555 = vrot.slane %v3375, 5
        %v3556 = vrot.slane %v3555, 4
        %v3557 = vrot.slane %v3376, 5
        %v3558 = vsel %vm1010, %v3556, %v3557
        %v3559 = vrot.slane %v3377, 5
        %v3560 = vrot.slane %v3559, 4
        %v3561 = vrot.slane %v3378, 5
        %v3562 = vsel %vm1010, %v3560, %v3561
        %v3563 = vrot.slane %v3379, 5
        %v3564 = vrot.slane %v3563, 4
        %v3565 = vrot.slane %v3380, 5
        %v3566 = vsel %vm1010, %v3564, %v3565
        %v3567 = vrot.slane %v3381, 5
        %v3568 = vrot.slane %v3567, 4
        %v3569 = vrot.slane %v3382, 5
        %v3570 = vsel %vm1010, %v3568, %v3569
        %v3571 = vrot.slane %v3383, 5
        %v3572 = vrot.slane %v3571, 4
        %v3573 = vrot.slane %v3384, 5
        %v3574 = vsel %vm1010, %v3572, %v3573
        %v3575 = vrot.slane %v3385, 5
        %v3576 = vrot.slane %v3575, 4
        %v3577 = vrot.slane %v3386, 5
        %v3578 = vsel %vm1010, %v3576, %v3577
        %3579 = vrot.lane.b32.xlu0 %v3454, 32
        %v3580 = vpop.permute.xlu0 %3579
        %3581 = vrot.lane.b32.xlu0 %v3458, 32
        %v3582 = vpop.permute.xlu0 %3581
        %3583 = vrot.lane.b32.xlu0 %v3462, 32
        %v3584 = vpop.permute.xlu0 %3583
        %3585 = vrot.lane.b32.xlu0 %v3466, 32
        %v3586 = vpop.permute.xlu0 %3585
        %3587 = vrot.lane.b32.xlu0 %v3470, 32
        %v3588 = vpop.permute.xlu0 %3587
        %3589 = vrot.lane.b32.xlu0 %v3474, 32
        %v3590 = vpop.permute.xlu0 %3589
        %3591 = vrot.lane.b32.xlu0 %v3478, 32
        %v3592 = vpop.permute.xlu0 %3591
        %3593 = vrot.lane.b32.xlu0 %v3482, 32
        %v3594 = vpop.permute.xlu0 %3593
        %3595 = vrot.lane.b32.xlu0 %v3486, 32
        %v3596 = vpop.permute.xlu0 %3595
        %3597 = vrot.lane.b32.xlu0 %v3490, 32
        %v3598 = vpop.permute.xlu0 %3597
        %3599 = vrot.lane.b32.xlu0 %v3494, 32
        %v3600 = vpop.permute.xlu0 %3599
        %3601 = vrot.lane.b32.xlu0 %v3498, 32
        %v3602 = vpop.permute.xlu0 %3601
        %3603 = vrot.lane.b32.xlu0 %v3502, 32
        %v3604 = vpop.permute.xlu0 %3603
        %3605 = vrot.lane.b32.xlu0 %v3506, 32
        %v3606 = vpop.permute.xlu0 %3605
        %3607 = vrot.lane.b32.xlu0 %v3510, 32
        %v3608 = vpop.permute.xlu0 %3607
        %3609 = vrot.lane.b32.xlu0 %v3514, 32
        %v3610 = vpop.permute.xlu0 %3609
        %3611 = vrot.lane.b32.xlu0 %v3518, 32
        %v3612 = vpop.permute.xlu0 %3611
        %3613 = vrot.lane.b32.xlu0 %v3522, 32
        %v3614 = vpop.permute.xlu0 %3613
        %3615 = vrot.lane.b32.xlu0 %v3526, 32
        %v3616 = vpop.permute.xlu0 %3615
        %3617 = vrot.lane.b32.xlu0 %v3530, 32
        %v3618 = vpop.permute.xlu0 %3617
        %3619 = vrot.lane.b32.xlu0 %v3534, 32
        %v3620 = vpop.permute.xlu0 %3619
        %3621 = vrot.lane.b32.xlu0 %v3538, 32
        %v3622 = vpop.permute.xlu0 %3621
        %3623 = vrot.lane.b32.xlu0 %v3542, 32
        %v3624 = vpop.permute.xlu0 %3623
        %3625 = vrot.lane.b32.xlu0 %v3546, 32
        %v3626 = vpop.permute.xlu0 %3625
        %3627 = vrot.lane.b32.xlu0 %v3550, 32
        %v3628 = vpop.permute.xlu0 %3627
        %3629 = vrot.lane.b32.xlu0 %v3554, 32
        %v3630 = vpop.permute.xlu0 %3629
        %3631 = vrot.lane.b32.xlu0 %v3558, 32
        %v3632 = vpop.permute.xlu0 %3631
        %3633 = vrot.lane.b32.xlu0 %v3562, 32
        %v3634 = vpop.permute.xlu0 %3633
        %3635 = vrot.lane.b32.xlu0 %v3566, 32
        %v3636 = vpop.permute.xlu0 %3635
        %3637 = vrot.lane.b32.xlu0 %v3570, 32
        %v3638 = vpop.permute.xlu0 %3637
        %3639 = vrot.lane.b32.xlu0 %v3574, 32
        %v3640 = vpop.permute.xlu0 %3639
        %3641 = vrot.lane.b32.xlu0 %v3578, 32
        %v3642 = vpop.permute.xlu0 %3641
        %vm3675 = vcmask 290048
        %3676 = vst.msk [vmem:[#allocation2] sm:$0xf] %vm3675, %v3580
        %3677 = vst.msk [vmem:[#allocation2 + $0x4] sm:$0xf] %vm3675, %v3582
        %3678 = vst.msk [vmem:[#allocation2 + $0x8] sm:$0xf] %vm3675, %v3584
        %3679 = vst.msk [vmem:[#allocation2 + $0xc] sm:$0xf] %vm3675, %v3586
        %3680 = vst.msk [vmem:[#allocation2 + $0x10] sm:$0xf] %vm3675, %v3588
        %3681 = vst.msk [vmem:[#allocation2 + $0x14] sm:$0xf] %vm3675, %v3590
        %3682 = vst.msk [vmem:[#allocation2 + $0x18] sm:$0xf] %vm3675, %v3592
        %3683 = vst.msk [vmem:[#allocation2 + $0x1c] sm:$0xf] %vm3675, %v3594
        %3684 = vst.msk [vmem:[#allocation2 + $0x20] sm:$0xf] %vm3675, %v3596
        %3685 = vst.msk [vmem:[#allocation2 + $0x24] sm:$0xf] %vm3675, %v3598
        %3686 = vst.msk [vmem:[#allocation2 + $0x28] sm:$0xf] %vm3675, %v3600
        %3687 = vst.msk [vmem:[#allocation2 + $0x2c] sm:$0xf] %vm3675, %v3602
        %3688 = vst.msk [vmem:[#allocation2 + $0x30] sm:$0xf] %vm3675, %v3604
        %3689 = vst.msk [vmem:[#allocation2 + $0x34] sm:$0xf] %vm3675, %v3606
        %3690 = vst.msk [vmem:[#allocation2 + $0x38] sm:$0xf] %vm3675, %v3608
        %3691 = vst.msk [vmem:[#allocation2 + $0x3c] sm:$0xf] %vm3675, %v3610
        %3692 = vst.msk [vmem:[#allocation2 + $0x40] sm:$0xf] %vm3675, %v3612
        %3693 = vst.msk [vmem:[#allocation2 + $0x44] sm:$0xf] %vm3675, %v3614
        %3694 = vst.msk [vmem:[#allocation2 + $0x48] sm:$0xf] %vm3675, %v3616
        %3695 = vst.msk [vmem:[#allocation2 + $0x4c] sm:$0xf] %vm3675, %v3618
        %3696 = vst.msk [vmem:[#allocation2 + $0x50] sm:$0xf] %vm3675, %v3620
        %3697 = vst.msk [vmem:[#allocation2 + $0x54] sm:$0xf] %vm3675, %v3622
        %3698 = vst.msk [vmem:[#allocation2 + $0x58] sm:$0xf] %vm3675, %v3624
        %3699 = vst.msk [vmem:[#allocation2 + $0x5c] sm:$0xf] %vm3675, %v3626
        %3700 = vst.msk [vmem:[#allocation2 + $0x60] sm:$0xf] %vm3675, %v3628
        %3701 = vst.msk [vmem:[#allocation2 + $0x64] sm:$0xf] %vm3675, %v3630
        %3702 = vst.msk [vmem:[#allocation2 + $0x68] sm:$0xf] %vm3675, %v3632
        %3703 = vst.msk [vmem:[#allocation2 + $0x6c] sm:$0xf] %vm3675, %v3634
        %3704 = vst.msk [vmem:[#allocation2 + $0x70] sm:$0xf] %vm3675, %v3636
        %3705 = vst.msk [vmem:[#allocation2 + $0x74] sm:$0xf] %vm3675, %v3638
        %3706 = vst.msk [vmem:[#allocation2 + $0x78] sm:$0xf] %vm3675, %v3640
        %3707 = vst.msk [vmem:[#allocation2 + $0x7c] sm:$0xf] %vm3675, %v3642
        %s3708 = scalar_lea.vmem %s168, 80
        %v3709 = vld [vmem:[%s3708] sm:$0xf]
        %v3710 = vld [vmem:[%s3708 + $0x8] sm:$0xf]
        %v3711 = vld [vmem:[%s3708 + $0x10] sm:$0xf]
        %v3712 = vld [vmem:[%s3708 + $0x18] sm:$0xf]
        %v3713 = vld [vmem:[%s3708 + $0x20] sm:$0xf]
        %v3714 = vld [vmem:[%s3708 + $0x28] sm:$0xf]
        %v3715 = vld [vmem:[%s3708 + $0x30] sm:$0xf]
        %v3716 = vld [vmem:[%s3708 + $0x38] sm:$0xf]
        %v3717 = vld [vmem:[%s3708 + $0x50] sm:$0xf]
        %v3718 = vld [vmem:[%s3708 + $0x58] sm:$0xf]
        %v3719 = vld [vmem:[%s3708 + $0x60] sm:$0xf]
        %v3720 = vld [vmem:[%s3708 + $0x68] sm:$0xf]
        %v3721 = vld [vmem:[%s3708 + $0x70] sm:$0xf]
        %v3722 = vld [vmem:[%s3708 + $0x78] sm:$0xf]
        %v3723 = vld [vmem:[%s3708 + $0x80] sm:$0xf]
        %v3724 = vld [vmem:[%s3708 + $0x88] sm:$0xf]
        %v3725 = vld [vmem:[%s3708 + $0xa0] sm:$0xf]
        %v3726 = vld [vmem:[%s3708 + $0xa8] sm:$0xf]
        %v3727 = vld [vmem:[%s3708 + $0xb0] sm:$0xf]
        %v3728 = vld [vmem:[%s3708 + $0xb8] sm:$0xf]
        %v3729 = vld [vmem:[%s3708 + $0xc0] sm:$0xf]
        %v3730 = vld [vmem:[%s3708 + $0xc8] sm:$0xf]
        %v3731 = vld [vmem:[%s3708 + $0xd0] sm:$0xf]
        %v3732 = vld [vmem:[%s3708 + $0xd8] sm:$0xf]
        %v3733 = vld [vmem:[%s3708 + $0xf0] sm:$0xf]
        %v3734 = vld [vmem:[%s3708 + $0xf8] sm:$0xf]
        %v3735 = vld [vmem:[%s3708 + $0x100] sm:$0xf]
        %v3736 = vld [vmem:[%s3708 + $0x108] sm:$0xf]
        %v3737 = vld [vmem:[%s3708 + $0x110] sm:$0xf]
        %v3738 = vld [vmem:[%s3708 + $0x118] sm:$0xf]
        %v3739 = vld [vmem:[%s3708 + $0x120] sm:$0xf]
        %v3740 = vld [vmem:[%s3708 + $0x128] sm:$0xf]
        %3773 = vrot.lane.b32.xlu0 %v3709, 36
        %v3774 = vpop.permute.xlu0 %3773
        %3775 = vrot.lane.b32.xlu0 %v3710, 36
        %v3776 = vpop.permute.xlu0 %3775
        %3777 = vrot.lane.b32.xlu0 %v3711, 36
        %v3778 = vpop.permute.xlu0 %3777
        %3779 = vrot.lane.b32.xlu0 %v3712, 36
        %v3780 = vpop.permute.xlu0 %3779
        %3781 = vrot.lane.b32.xlu0 %v3713, 36
        %v3782 = vpop.permute.xlu0 %3781
        %3783 = vrot.lane.b32.xlu0 %v3714, 36
        %v3784 = vpop.permute.xlu0 %3783
        %3785 = vrot.lane.b32.xlu0 %v3715, 36
        %v3786 = vpop.permute.xlu0 %3785
        %3787 = vrot.lane.b32.xlu0 %v3716, 36
        %v3788 = vpop.permute.xlu0 %3787
        %3789 = vrot.lane.b32.xlu0 %v3717, 36
        %v3790 = vpop.permute.xlu0 %3789
        %3791 = vrot.lane.b32.xlu0 %v3718, 36
        %v3792 = vpop.permute.xlu0 %3791
        %3793 = vrot.lane.b32.xlu0 %v3719, 36
        %v3794 = vpop.permute.xlu0 %3793
        %3795 = vrot.lane.b32.xlu0 %v3720, 36
        %v3796 = vpop.permute.xlu0 %3795
        %3797 = vrot.lane.b32.xlu0 %v3721, 36
        %v3798 = vpop.permute.xlu0 %3797
        %3799 = vrot.lane.b32.xlu0 %v3722, 36
        %v3800 = vpop.permute.xlu0 %3799
        %3801 = vrot.lane.b32.xlu0 %v3723, 36
        %v3802 = vpop.permute.xlu0 %3801
        %3803 = vrot.lane.b32.xlu0 %v3724, 36
        %v3804 = vpop.permute.xlu0 %3803
        %3805 = vrot.lane.b32.xlu0 %v3725, 36
        %v3806 = vpop.permute.xlu0 %3805
        %3807 = vrot.lane.b32.xlu0 %v3726, 36
        %v3808 = vpop.permute.xlu0 %3807
        %3809 = vrot.lane.b32.xlu0 %v3727, 36
        %v3810 = vpop.permute.xlu0 %3809
        %3811 = vrot.lane.b32.xlu0 %v3728, 36
        %v3812 = vpop.permute.xlu0 %3811
        %3813 = vrot.lane.b32.xlu0 %v3729, 36
        %v3814 = vpop.permute.xlu0 %3813
        %3815 = vrot.lane.b32.xlu0 %v3730, 36
        %v3816 = vpop.permute.xlu0 %3815
        %3817 = vrot.lane.b32.xlu0 %v3731, 36
        %v3818 = vpop.permute.xlu0 %3817
        %3819 = vrot.lane.b32.xlu0 %v3732, 36
        %v3820 = vpop.permute.xlu0 %3819
        %3821 = vrot.lane.b32.xlu0 %v3733, 36
        %v3822 = vpop.permute.xlu0 %3821
        %3823 = vrot.lane.b32.xlu0 %v3734, 36
        %v3824 = vpop.permute.xlu0 %3823
        %3825 = vrot.lane.b32.xlu0 %v3735, 36
        %v3826 = vpop.permute.xlu0 %3825
        %3827 = vrot.lane.b32.xlu0 %v3736, 36
        %v3828 = vpop.permute.xlu0 %3827
        %3829 = vrot.lane.b32.xlu0 %v3737, 36
        %v3830 = vpop.permute.xlu0 %3829
        %3831 = vrot.lane.b32.xlu0 %v3738, 36
        %v3832 = vpop.permute.xlu0 %3831
        %3833 = vrot.lane.b32.xlu0 %v3739, 36
        %v3834 = vpop.permute.xlu0 %3833
        %3835 = vrot.lane.b32.xlu0 %v3740, 36
        %v3836 = vpop.permute.xlu0 %3835
        %vm3869 = vcmask 322848
        %3870 = vst.msk [vmem:[#allocation2] sm:$0xf] %vm3869, %v3774
        %3871 = vst.msk [vmem:[#allocation2 + $0x4] sm:$0xf] %vm3869, %v3776
        %3872 = vst.msk [vmem:[#allocation2 + $0x8] sm:$0xf] %vm3869, %v3778
        %3873 = vst.msk [vmem:[#allocation2 + $0xc] sm:$0xf] %vm3869, %v3780
        %3874 = vst.msk [vmem:[#allocation2 + $0x10] sm:$0xf] %vm3869, %v3782
        %3875 = vst.msk [vmem:[#allocation2 + $0x14] sm:$0xf] %vm3869, %v3784
        %3876 = vst.msk [vmem:[#allocation2 + $0x18] sm:$0xf] %vm3869, %v3786
        %3877 = vst.msk [vmem:[#allocation2 + $0x1c] sm:$0xf] %vm3869, %v3788
        %3878 = vst.msk [vmem:[#allocation2 + $0x20] sm:$0xf] %vm3869, %v3790
        %3879 = vst.msk [vmem:[#allocation2 + $0x24] sm:$0xf] %vm3869, %v3792
        %3880 = vst.msk [vmem:[#allocation2 + $0x28] sm:$0xf] %vm3869, %v3794
        %3881 = vst.msk [vmem:[#allocation2 + $0x2c] sm:$0xf] %vm3869, %v3796
        %3882 = vst.msk [vmem:[#allocation2 + $0x30] sm:$0xf] %vm3869, %v3798
        %3883 = vst.msk [vmem:[#allocation2 + $0x34] sm:$0xf] %vm3869, %v3800
        %3884 = vst.msk [vmem:[#allocation2 + $0x38] sm:$0xf] %vm3869, %v3802
        %3885 = vst.msk [vmem:[#allocation2 + $0x3c] sm:$0xf] %vm3869, %v3804
        %3886 = vst.msk [vmem:[#allocation2 + $0x40] sm:$0xf] %vm3869, %v3806
        %3887 = vst.msk [vmem:[#allocation2 + $0x44] sm:$0xf] %vm3869, %v3808
        %3888 = vst.msk [vmem:[#allocation2 + $0x48] sm:$0xf] %vm3869, %v3810
        %3889 = vst.msk [vmem:[#allocation2 + $0x4c] sm:$0xf] %vm3869, %v3812
        %3890 = vst.msk [vmem:[#allocation2 + $0x50] sm:$0xf] %vm3869, %v3814
        %3891 = vst.msk [vmem:[#allocation2 + $0x54] sm:$0xf] %vm3869, %v3816
        %3892 = vst.msk [vmem:[#allocation2 + $0x58] sm:$0xf] %vm3869, %v3818
        %3893 = vst.msk [vmem:[#allocation2 + $0x5c] sm:$0xf] %vm3869, %v3820
        %3894 = vst.msk [vmem:[#allocation2 + $0x60] sm:$0xf] %vm3869, %v3822
        %3895 = vst.msk [vmem:[#allocation2 + $0x64] sm:$0xf] %vm3869, %v3824
        %3896 = vst.msk [vmem:[#allocation2 + $0x68] sm:$0xf] %vm3869, %v3826
        %3897 = vst.msk [vmem:[#allocation2 + $0x6c] sm:$0xf] %vm3869, %v3828
        %3898 = vst.msk [vmem:[#allocation2 + $0x70] sm:$0xf] %vm3869, %v3830
        %3899 = vst.msk [vmem:[#allocation2 + $0x74] sm:$0xf] %vm3869, %v3832
        %3900 = vst.msk [vmem:[#allocation2 + $0x78] sm:$0xf] %vm3869, %v3834
        %3901 = vst.msk [vmem:[#allocation2 + $0x7c] sm:$0xf] %vm3869, %v3836
        %v3902 = vld [vmem:[%s3708] sm:$0xf]
        %v3903 = vld [vmem:[%s3708 + $0x4] sm:$0x1]
        %v3904 = vld [vmem:[%s3708 + $0x8] sm:$0xf]
        %v3905 = vld [vmem:[%s3708 + $0xc] sm:$0x1]
        %v3906 = vld [vmem:[%s3708 + $0x10] sm:$0xf]
        %v3907 = vld [vmem:[%s3708 + $0x14] sm:$0x1]
        %v3908 = vld [vmem:[%s3708 + $0x18] sm:$0xf]
        %v3909 = vld [vmem:[%s3708 + $0x1c] sm:$0x1]
        %v3910 = vld [vmem:[%s3708 + $0x20] sm:$0xf]
        %v3911 = vld [vmem:[%s3708 + $0x24] sm:$0x1]
        %v3912 = vld [vmem:[%s3708 + $0x28] sm:$0xf]
        %v3913 = vld [vmem:[%s3708 + $0x2c] sm:$0x1]
        %v3914 = vld [vmem:[%s3708 + $0x30] sm:$0xf]
        %v3915 = vld [vmem:[%s3708 + $0x34] sm:$0x1]
        %v3916 = vld [vmem:[%s3708 + $0x38] sm:$0xf]
        %v3917 = vld [vmem:[%s3708 + $0x3c] sm:$0x1]
        %v3918 = vld [vmem:[%s3708 + $0x50] sm:$0xf]
        %v3919 = vld [vmem:[%s3708 + $0x54] sm:$0x1]
        %v3920 = vld [vmem:[%s3708 + $0x58] sm:$0xf]
        %v3921 = vld [vmem:[%s3708 + $0x5c] sm:$0x1]
        %v3922 = vld [vmem:[%s3708 + $0x60] sm:$0xf]
        %v3923 = vld [vmem:[%s3708 + $0x64] sm:$0x1]
        %v3924 = vld [vmem:[%s3708 + $0x68] sm:$0xf]
        %v3925 = vld [vmem:[%s3708 + $0x6c] sm:$0x1]
        %v3926 = vld [vmem:[%s3708 + $0x70] sm:$0xf]
        %v3927 = vld [vmem:[%s3708 + $0x74] sm:$0x1]
        %v3928 = vld [vmem:[%s3708 + $0x78] sm:$0xf]
        %v3929 = vld [vmem:[%s3708 + $0x7c] sm:$0x1]
        %v3930 = vld [vmem:[%s3708 + $0x80] sm:$0xf]
        %v3931 = vld [vmem:[%s3708 + $0x84] sm:$0x1]
        %v3932 = vld [vmem:[%s3708 + $0x88] sm:$0xf]
        %v3933 = vld [vmem:[%s3708 + $0x8c] sm:$0x1]
        %v3934 = vld [vmem:[%s3708 + $0xa0] sm:$0xf]
        %v3935 = vld [vmem:[%s3708 + $0xa4] sm:$0x1]
        %v3936 = vld [vmem:[%s3708 + $0xa8] sm:$0xf]
        %v3937 = vld [vmem:[%s3708 + $0xac] sm:$0x1]
        %v3938 = vld [vmem:[%s3708 + $0xb0] sm:$0xf]
        %v3939 = vld [vmem:[%s3708 + $0xb4] sm:$0x1]
        %v3940 = vld [vmem:[%s3708 + $0xb8] sm:$0xf]
        %v3941 = vld [vmem:[%s3708 + $0xbc] sm:$0x1]
        %v3942 = vld [vmem:[%s3708 + $0xc0] sm:$0xf]
        %v3943 = vld [vmem:[%s3708 + $0xc4] sm:$0x1]
        %v3944 = vld [vmem:[%s3708 + $0xc8] sm:$0xf]
        %v3945 = vld [vmem:[%s3708 + $0xcc] sm:$0x1]
        %v3946 = vld [vmem:[%s3708 + $0xd0] sm:$0xf]
        %v3947 = vld [vmem:[%s3708 + $0xd4] sm:$0x1]
        %v3948 = vld [vmem:[%s3708 + $0xd8] sm:$0xf]
        %v3949 = vld [vmem:[%s3708 + $0xdc] sm:$0x1]
        %v3950 = vld [vmem:[%s3708 + $0xf0] sm:$0xf]
        %v3951 = vld [vmem:[%s3708 + $0xf4] sm:$0x1]
        %v3952 = vld [vmem:[%s3708 + $0xf8] sm:$0xf]
        %v3953 = vld [vmem:[%s3708 + $0xfc] sm:$0x1]
        %v3954 = vld [vmem:[%s3708 + $0x100] sm:$0xf]
        %v3955 = vld [vmem:[%s3708 + $0x104] sm:$0x1]
        %v3956 = vld [vmem:[%s3708 + $0x108] sm:$0xf]
        %v3957 = vld [vmem:[%s3708 + $0x10c] sm:$0x1]
        %v3958 = vld [vmem:[%s3708 + $0x110] sm:$0xf]
        %v3959 = vld [vmem:[%s3708 + $0x114] sm:$0x1]
        %v3960 = vld [vmem:[%s3708 + $0x118] sm:$0xf]
        %v3961 = vld [vmem:[%s3708 + $0x11c] sm:$0x1]
        %v3962 = vld [vmem:[%s3708 + $0x120] sm:$0xf]
        %v3963 = vld [vmem:[%s3708 + $0x124] sm:$0x1]
        %v3964 = vld [vmem:[%s3708 + $0x128] sm:$0xf]
        %v3965 = vld [vmem:[%s3708 + $0x12c] sm:$0x1]
        %v3967 = vshrl.u32 %v3902, 16
        %v3969 = vrot.slane %v3967, 4
        %v3970 = vshll.u32 %v3902, 16
        %v3972 = vrot.slane %v3970, 5
        %v3973 = vor.u32 %v3969, %v3972
        %v3974 = vrot.slane %v3973, 4
        %v3976 = vshll.u32 %v3903, 16
        %v3978 = vrot.slane %v3976, 5
        %v3979 = vsel %vm302, %v3974, %v3978
        %v3981 = vshrl.u32 %v3904, 16
        %v3983 = vrot.slane %v3981, 4
        %v3984 = vshll.u32 %v3904, 16
        %v3986 = vrot.slane %v3984, 5
        %v3987 = vor.u32 %v3983, %v3986
        %v3988 = vrot.slane %v3987, 4
        %v3990 = vshll.u32 %v3905, 16
        %v3992 = vrot.slane %v3990, 5
        %v3993 = vsel %vm302, %v3988, %v3992
        %v3995 = vshrl.u32 %v3906, 16
        %v3997 = vrot.slane %v3995, 4
        %v3998 = vshll.u32 %v3906, 16
        %v4000 = vrot.slane %v3998, 5
        %v4001 = vor.u32 %v3997, %v4000
        %v4002 = vrot.slane %v4001, 4
        %v4004 = vshll.u32 %v3907, 16
        %v4006 = vrot.slane %v4004, 5
        %v4007 = vsel %vm302, %v4002, %v4006
        %v4009 = vshrl.u32 %v3908, 16
        %v4011 = vrot.slane %v4009, 4
        %v4012 = vshll.u32 %v3908, 16
        %v4014 = vrot.slane %v4012, 5
        %v4015 = vor.u32 %v4011, %v4014
        %v4016 = vrot.slane %v4015, 4
        %v4018 = vshll.u32 %v3909, 16
        %v4020 = vrot.slane %v4018, 5
        %v4021 = vsel %vm302, %v4016, %v4020
        %v4023 = vshrl.u32 %v3910, 16
        %v4025 = vrot.slane %v4023, 4
        %v4026 = vshll.u32 %v3910, 16
        %v4028 = vrot.slane %v4026, 5
        %v4029 = vor.u32 %v4025, %v4028
        %v4030 = vrot.slane %v4029, 4
        %v4032 = vshll.u32 %v3911, 16
        %v4034 = vrot.slane %v4032, 5
        %v4035 = vsel %vm302, %v4030, %v4034
        %v4037 = vshrl.u32 %v3912, 16
        %v4039 = vrot.slane %v4037, 4
        %v4040 = vshll.u32 %v3912, 16
        %v4042 = vrot.slane %v4040, 5
        %v4043 = vor.u32 %v4039, %v4042
        %v4044 = vrot.slane %v4043, 4
        %v4046 = vshll.u32 %v3913, 16
        %v4048 = vrot.slane %v4046, 5
        %v4049 = vsel %vm302, %v4044, %v4048
        %v4051 = vshrl.u32 %v3914, 16
        %v4053 = vrot.slane %v4051, 4
        %v4054 = vshll.u32 %v3914, 16
        %v4056 = vrot.slane %v4054, 5
        %v4057 = vor.u32 %v4053, %v4056
        %v4058 = vrot.slane %v4057, 4
        %v4060 = vshll.u32 %v3915, 16
        %v4062 = vrot.slane %v4060, 5
        %v4063 = vsel %vm302, %v4058, %v4062
        %v4065 = vshrl.u32 %v3916, 16
        %v4067 = vrot.slane %v4065, 4
        %v4068 = vshll.u32 %v3916, 16
        %v4070 = vrot.slane %v4068, 5
        %v4071 = vor.u32 %v4067, %v4070
        %v4072 = vrot.slane %v4071, 4
        %v4074 = vshll.u32 %v3917, 16
        %v4076 = vrot.slane %v4074, 5
        %v4077 = vsel %vm302, %v4072, %v4076
        %v4079 = vshrl.u32 %v3918, 16
        %v4081 = vrot.slane %v4079, 4
        %v4082 = vshll.u32 %v3918, 16
        %v4084 = vrot.slane %v4082, 5
        %v4085 = vor.u32 %v4081, %v4084
        %v4086 = vrot.slane %v4085, 4
        %v4088 = vshll.u32 %v3919, 16
        %v4090 = vrot.slane %v4088, 5
        %v4091 = vsel %vm302, %v4086, %v4090
        %v4093 = vshrl.u32 %v3920, 16
        %v4095 = vrot.slane %v4093, 4
        %v4096 = vshll.u32 %v3920, 16
        %v4098 = vrot.slane %v4096, 5
        %v4099 = vor.u32 %v4095, %v4098
        %v4100 = vrot.slane %v4099, 4
        %v4102 = vshll.u32 %v3921, 16
        %v4104 = vrot.slane %v4102, 5
        %v4105 = vsel %vm302, %v4100, %v4104
        %v4107 = vshrl.u32 %v3922, 16
        %v4109 = vrot.slane %v4107, 4
        %v4110 = vshll.u32 %v3922, 16
        %v4112 = vrot.slane %v4110, 5
        %v4113 = vor.u32 %v4109, %v4112
        %v4114 = vrot.slane %v4113, 4
        %v4116 = vshll.u32 %v3923, 16
        %v4118 = vrot.slane %v4116, 5
        %v4119 = vsel %vm302, %v4114, %v4118
        %v4121 = vshrl.u32 %v3924, 16
        %v4123 = vrot.slane %v4121, 4
        %v4124 = vshll.u32 %v3924, 16
        %v4126 = vrot.slane %v4124, 5
        %v4127 = vor.u32 %v4123, %v4126
        %v4128 = vrot.slane %v4127, 4
        %v4130 = vshll.u32 %v3925, 16
        %v4132 = vrot.slane %v4130, 5
        %v4133 = vsel %vm302, %v4128, %v4132
        %v4135 = vshrl.u32 %v3926, 16
        %v4137 = vrot.slane %v4135, 4
        %v4138 = vshll.u32 %v3926, 16
        %v4140 = vrot.slane %v4138, 5
        %v4141 = vor.u32 %v4137, %v4140
        %v4142 = vrot.slane %v4141, 4
        %v4144 = vshll.u32 %v3927, 16
        %v4146 = vrot.slane %v4144, 5
        %v4147 = vsel %vm302, %v4142, %v4146
        %v4149 = vshrl.u32 %v3928, 16
        %v4151 = vrot.slane %v4149, 4
        %v4152 = vshll.u32 %v3928, 16
        %v4154 = vrot.slane %v4152, 5
        %v4155 = vor.u32 %v4151, %v4154
        %v4156 = vrot.slane %v4155, 4
        %v4158 = vshll.u32 %v3929, 16
        %v4160 = vrot.slane %v4158, 5
        %v4161 = vsel %vm302, %v4156, %v4160
        %v4163 = vshrl.u32 %v3930, 16
        %v4165 = vrot.slane %v4163, 4
        %v4166 = vshll.u32 %v3930, 16
        %v4168 = vrot.slane %v4166, 5
        %v4169 = vor.u32 %v4165, %v4168
        %v4170 = vrot.slane %v4169, 4
        %v4172 = vshll.u32 %v3931, 16
        %v4174 = vrot.slane %v4172, 5
        %v4175 = vsel %vm302, %v4170, %v4174
        %v4177 = vshrl.u32 %v3932, 16
        %v4179 = vrot.slane %v4177, 4
        %v4180 = vshll.u32 %v3932, 16
        %v4182 = vrot.slane %v4180, 5
        %v4183 = vor.u32 %v4179, %v4182
        %v4184 = vrot.slane %v4183, 4
        %v4186 = vshll.u32 %v3933, 16
        %v4188 = vrot.slane %v4186, 5
        %v4189 = vsel %vm302, %v4184, %v4188
        %v4191 = vshrl.u32 %v3934, 16
        %v4193 = vrot.slane %v4191, 4
        %v4194 = vshll.u32 %v3934, 16
        %v4196 = vrot.slane %v4194, 5
        %v4197 = vor.u32 %v4193, %v4196
        %v4198 = vrot.slane %v4197, 4
        %v4200 = vshll.u32 %v3935, 16
        %v4202 = vrot.slane %v4200, 5
        %v4203 = vsel %vm302, %v4198, %v4202
        %v4205 = vshrl.u32 %v3936, 16
        %v4207 = vrot.slane %v4205, 4
        %v4208 = vshll.u32 %v3936, 16
        %v4210 = vrot.slane %v4208, 5
        %v4211 = vor.u32 %v4207, %v4210
        %v4212 = vrot.slane %v4211, 4
        %v4214 = vshll.u32 %v3937, 16
        %v4216 = vrot.slane %v4214, 5
        %v4217 = vsel %vm302, %v4212, %v4216
        %v4219 = vshrl.u32 %v3938, 16
        %v4221 = vrot.slane %v4219, 4
        %v4222 = vshll.u32 %v3938, 16
        %v4224 = vrot.slane %v4222, 5
        %v4225 = vor.u32 %v4221, %v4224
        %v4226 = vrot.slane %v4225, 4
        %v4228 = vshll.u32 %v3939, 16
        %v4230 = vrot.slane %v4228, 5
        %v4231 = vsel %vm302, %v4226, %v4230
        %v4233 = vshrl.u32 %v3940, 16
        %v4235 = vrot.slane %v4233, 4
        %v4236 = vshll.u32 %v3940, 16
        %v4238 = vrot.slane %v4236, 5
        %v4239 = vor.u32 %v4235, %v4238
        %v4240 = vrot.slane %v4239, 4
        %v4242 = vshll.u32 %v3941, 16
        %v4244 = vrot.slane %v4242, 5
        %v4245 = vsel %vm302, %v4240, %v4244
        %v4247 = vshrl.u32 %v3942, 16
        %v4249 = vrot.slane %v4247, 4
        %v4250 = vshll.u32 %v3942, 16
        %v4252 = vrot.slane %v4250, 5
        %v4253 = vor.u32 %v4249, %v4252
        %v4254 = vrot.slane %v4253, 4
        %v4256 = vshll.u32 %v3943, 16
        %v4258 = vrot.slane %v4256, 5
        %v4259 = vsel %vm302, %v4254, %v4258
        %v4261 = vshrl.u32 %v3944, 16
        %v4263 = vrot.slane %v4261, 4
        %v4264 = vshll.u32 %v3944, 16
        %v4266 = vrot.slane %v4264, 5
        %v4267 = vor.u32 %v4263, %v4266
        %v4268 = vrot.slane %v4267, 4
        %v4270 = vshll.u32 %v3945, 16
        %v4272 = vrot.slane %v4270, 5
        %v4273 = vsel %vm302, %v4268, %v4272
        %v4275 = vshrl.u32 %v3946, 16
        %v4277 = vrot.slane %v4275, 4
        %v4278 = vshll.u32 %v3946, 16
        %v4280 = vrot.slane %v4278, 5
        %v4281 = vor.u32 %v4277, %v4280
        %v4282 = vrot.slane %v4281, 4
        %v4284 = vshll.u32 %v3947, 16
        %v4286 = vrot.slane %v4284, 5
        %v4287 = vsel %vm302, %v4282, %v4286
        %v4289 = vshrl.u32 %v3948, 16
        %v4291 = vrot.slane %v4289, 4
        %v4292 = vshll.u32 %v3948, 16
        %v4294 = vrot.slane %v4292, 5
        %v4295 = vor.u32 %v4291, %v4294
        %v4296 = vrot.slane %v4295, 4
        %v4298 = vshll.u32 %v3949, 16
        %v4300 = vrot.slane %v4298, 5
        %v4301 = vsel %vm302, %v4296, %v4300
        %v4303 = vshrl.u32 %v3950, 16
        %v4305 = vrot.slane %v4303, 4
        %v4306 = vshll.u32 %v3950, 16
        %v4308 = vrot.slane %v4306, 5
        %v4309 = vor.u32 %v4305, %v4308
        %v4310 = vrot.slane %v4309, 4
        %v4312 = vshll.u32 %v3951, 16
        %v4314 = vrot.slane %v4312, 5
        %v4315 = vsel %vm302, %v4310, %v4314
        %v4317 = vshrl.u32 %v3952, 16
        %v4319 = vrot.slane %v4317, 4
        %v4320 = vshll.u32 %v3952, 16
        %v4322 = vrot.slane %v4320, 5
        %v4323 = vor.u32 %v4319, %v4322
        %v4324 = vrot.slane %v4323, 4
        %v4326 = vshll.u32 %v3953, 16
        %v4328 = vrot.slane %v4326, 5
        %v4329 = vsel %vm302, %v4324, %v4328
        %v4331 = vshrl.u32 %v3954, 16
        %v4333 = vrot.slane %v4331, 4
        %v4334 = vshll.u32 %v3954, 16
        %v4336 = vrot.slane %v4334, 5
        %v4337 = vor.u32 %v4333, %v4336
        %v4338 = vrot.slane %v4337, 4
        %v4340 = vshll.u32 %v3955, 16
        %v4342 = vrot.slane %v4340, 5
        %v4343 = vsel %vm302, %v4338, %v4342
        %v4345 = vshrl.u32 %v3956, 16
        %v4347 = vrot.slane %v4345, 4
        %v4348 = vshll.u32 %v3956, 16
        %v4350 = vrot.slane %v4348, 5
        %v4351 = vor.u32 %v4347, %v4350
        %v4352 = vrot.slane %v4351, 4
        %v4354 = vshll.u32 %v3957, 16
        %v4356 = vrot.slane %v4354, 5
        %v4357 = vsel %vm302, %v4352, %v4356
        %v4359 = vshrl.u32 %v3958, 16
        %v4361 = vrot.slane %v4359, 4
        %v4362 = vshll.u32 %v3958, 16
        %v4364 = vrot.slane %v4362, 5
        %v4365 = vor.u32 %v4361, %v4364
        %v4366 = vrot.slane %v4365, 4
        %v4368 = vshll.u32 %v3959, 16
        %v4370 = vrot.slane %v4368, 5
        %v4371 = vsel %vm302, %v4366, %v4370
        %v4373 = vshrl.u32 %v3960, 16
        %v4375 = vrot.slane %v4373, 4
        %v4376 = vshll.u32 %v3960, 16
        %v4378 = vrot.slane %v4376, 5
        %v4379 = vor.u32 %v4375, %v4378
        %v4380 = vrot.slane %v4379, 4
        %v4382 = vshll.u32 %v3961, 16
        %v4384 = vrot.slane %v4382, 5
        %v4385 = vsel %vm302, %v4380, %v4384
        %v4387 = vshrl.u32 %v3962, 16
        %v4389 = vrot.slane %v4387, 4
        %v4390 = vshll.u32 %v3962, 16
        %v4392 = vrot.slane %v4390, 5
        %v4393 = vor.u32 %v4389, %v4392
        %v4394 = vrot.slane %v4393, 4
        %v4396 = vshll.u32 %v3963, 16
        %v4398 = vrot.slane %v4396, 5
        %v4399 = vsel %vm302, %v4394, %v4398
        %v4401 = vshrl.u32 %v3964, 16
        %v4403 = vrot.slane %v4401, 4
        %v4404 = vshll.u32 %v3964, 16
        %v4406 = vrot.slane %v4404, 5
        %v4407 = vor.u32 %v4403, %v4406
        %v4408 = vrot.slane %v4407, 4
        %v4410 = vshll.u32 %v3965, 16
        %v4412 = vrot.slane %v4410, 5
        %v4413 = vsel %vm302, %v4408, %v4412
        %4414 = vrot.lane.b32.xlu0 %v3979, 40
        %v4415 = vpop.permute.xlu0 %4414
        %4416 = vrot.lane.b32.xlu0 %v3993, 40
        %v4417 = vpop.permute.xlu0 %4416
        %4418 = vrot.lane.b32.xlu0 %v4007, 40
        %v4419 = vpop.permute.xlu0 %4418
        %4420 = vrot.lane.b32.xlu0 %v4021, 40
        %v4421 = vpop.permute.xlu0 %4420
        %4422 = vrot.lane.b32.xlu0 %v4035, 40
        %v4423 = vpop.permute.xlu0 %4422
        %4424 = vrot.lane.b32.xlu0 %v4049, 40
        %v4425 = vpop.permute.xlu0 %4424
        %4426 = vrot.lane.b32.xlu0 %v4063, 40
        %v4427 = vpop.permute.xlu0 %4426
        %4428 = vrot.lane.b32.xlu0 %v4077, 40
        %v4429 = vpop.permute.xlu0 %4428
        %4430 = vrot.lane.b32.xlu0 %v4091, 40
        %v4431 = vpop.permute.xlu0 %4430
        %4432 = vrot.lane.b32.xlu0 %v4105, 40
        %v4433 = vpop.permute.xlu0 %4432
        %4434 = vrot.lane.b32.xlu0 %v4119, 40
        %v4435 = vpop.permute.xlu0 %4434
        %4436 = vrot.lane.b32.xlu0 %v4133, 40
        %v4437 = vpop.permute.xlu0 %4436
        %4438 = vrot.lane.b32.xlu0 %v4147, 40
        %v4439 = vpop.permute.xlu0 %4438
        %4440 = vrot.lane.b32.xlu0 %v4161, 40
        %v4441 = vpop.permute.xlu0 %4440
        %4442 = vrot.lane.b32.xlu0 %v4175, 40
        %v4443 = vpop.permute.xlu0 %4442
        %4444 = vrot.lane.b32.xlu0 %v4189, 40
        %v4445 = vpop.permute.xlu0 %4444
        %4446 = vrot.lane.b32.xlu0 %v4203, 40
        %v4447 = vpop.permute.xlu0 %4446
        %4448 = vrot.lane.b32.xlu0 %v4217, 40
        %v4449 = vpop.permute.xlu0 %4448
        %4450 = vrot.lane.b32.xlu0 %v4231, 40
        %v4451 = vpop.permute.xlu0 %4450
        %4452 = vrot.lane.b32.xlu0 %v4245, 40
        %v4453 = vpop.permute.xlu0 %4452
        %4454 = vrot.lane.b32.xlu0 %v4259, 40
        %v4455 = vpop.permute.xlu0 %4454
        %4456 = vrot.lane.b32.xlu0 %v4273, 40
        %v4457 = vpop.permute.xlu0 %4456
        %4458 = vrot.lane.b32.xlu0 %v4287, 40
        %v4459 = vpop.permute.xlu0 %4458
        %4460 = vrot.lane.b32.xlu0 %v4301, 40
        %v4461 = vpop.permute.xlu0 %4460
        %4462 = vrot.lane.b32.xlu0 %v4315, 40
        %v4463 = vpop.permute.xlu0 %4462
        %4464 = vrot.lane.b32.xlu0 %v4329, 40
        %v4465 = vpop.permute.xlu0 %4464
        %4466 = vrot.lane.b32.xlu0 %v4343, 40
        %v4467 = vpop.permute.xlu0 %4466
        %4468 = vrot.lane.b32.xlu0 %v4357, 40
        %v4469 = vpop.permute.xlu0 %4468
        %4470 = vrot.lane.b32.xlu0 %v4371, 40
        %v4471 = vpop.permute.xlu0 %4470
        %4472 = vrot.lane.b32.xlu0 %v4385, 40
        %v4473 = vpop.permute.xlu0 %4472
        %4474 = vrot.lane.b32.xlu0 %v4399, 40
        %v4475 = vpop.permute.xlu0 %4474
        %4476 = vrot.lane.b32.xlu0 %v4413, 40
        %v4477 = vpop.permute.xlu0 %4476
        %vm4510 = vcmask 355648
        %4511 = vst.msk [vmem:[#allocation2] sm:$0xf] %vm4510, %v4415
        %4512 = vst.msk [vmem:[#allocation2 + $0x4] sm:$0xf] %vm4510, %v4417
        %4513 = vst.msk [vmem:[#allocation2 + $0x8] sm:$0xf] %vm4510, %v4419
        %4514 = vst.msk [vmem:[#allocation2 + $0xc] sm:$0xf] %vm4510, %v4421
        %4515 = vst.msk [vmem:[#allocation2 + $0x10] sm:$0xf] %vm4510, %v4423
        %4516 = vst.msk [vmem:[#allocation2 + $0x14] sm:$0xf] %vm4510, %v4425
        %4517 = vst.msk [vmem:[#allocation2 + $0x18] sm:$0xf] %vm4510, %v4427
        %4518 = vst.msk [vmem:[#allocation2 + $0x1c] sm:$0xf] %vm4510, %v4429
        %4519 = vst.msk [vmem:[#allocation2 + $0x20] sm:$0xf] %vm4510, %v4431
        %4520 = vst.msk [vmem:[#allocation2 + $0x24] sm:$0xf] %vm4510, %v4433
        %4521 = vst.msk [vmem:[#allocation2 + $0x28] sm:$0xf] %vm4510, %v4435
        %4522 = vst.msk [vmem:[#allocation2 + $0x2c] sm:$0xf] %vm4510, %v4437
        %4523 = vst.msk [vmem:[#allocation2 + $0x30] sm:$0xf] %vm4510, %v4439
        %4524 = vst.msk [vmem:[#allocation2 + $0x34] sm:$0xf] %vm4510, %v4441
        %4525 = vst.msk [vmem:[#allocation2 + $0x38] sm:$0xf] %vm4510, %v4443
        %4526 = vst.msk [vmem:[#allocation2 + $0x3c] sm:$0xf] %vm4510, %v4445
        %4527 = vst.msk [vmem:[#allocation2 + $0x40] sm:$0xf] %vm4510, %v4447
        %4528 = vst.msk [vmem:[#allocation2 + $0x44] sm:$0xf] %vm4510, %v4449
        %4529 = vst.msk [vmem:[#allocation2 + $0x48] sm:$0xf] %vm4510, %v4451
        %4530 = vst.msk [vmem:[#allocation2 + $0x4c] sm:$0xf] %vm4510, %v4453
        %4531 = vst.msk [vmem:[#allocation2 + $0x50] sm:$0xf] %vm4510, %v4455
        %4532 = vst.msk [vmem:[#allocation2 + $0x54] sm:$0xf] %vm4510, %v4457
        %4533 = vst.msk [vmem:[#allocation2 + $0x58] sm:$0xf] %vm4510, %v4459
        %4534 = vst.msk [vmem:[#allocation2 + $0x5c] sm:$0xf] %vm4510, %v4461
        %4535 = vst.msk [vmem:[#allocation2 + $0x60] sm:$0xf] %vm4510, %v4463
        %4536 = vst.msk [vmem:[#allocation2 + $0x64] sm:$0xf] %vm4510, %v4465
        %4537 = vst.msk [vmem:[#allocation2 + $0x68] sm:$0xf] %vm4510, %v4467
        %4538 = vst.msk [vmem:[#allocation2 + $0x6c] sm:$0xf] %vm4510, %v4469
        %4539 = vst.msk [vmem:[#allocation2 + $0x70] sm:$0xf] %vm4510, %v4471
        %4540 = vst.msk [vmem:[#allocation2 + $0x74] sm:$0xf] %vm4510, %v4473
        %4541 = vst.msk [vmem:[#allocation2 + $0x78] sm:$0xf] %vm4510, %v4475
        %4542 = vst.msk [vmem:[#allocation2 + $0x7c] sm:$0xf] %vm4510, %v4477
        %v4543 = vld [vmem:[%s3708] sm:$0xe]
        %v4544 = vld [vmem:[%s3708 + $0x4] sm:$0x1]
        %v4545 = vld [vmem:[%s3708 + $0x8] sm:$0xe]
        %v4546 = vld [vmem:[%s3708 + $0xc] sm:$0x1]
        %v4547 = vld [vmem:[%s3708 + $0x10] sm:$0xe]
        %v4548 = vld [vmem:[%s3708 + $0x14] sm:$0x1]
        %v4549 = vld [vmem:[%s3708 + $0x18] sm:$0xe]
        %v4550 = vld [vmem:[%s3708 + $0x1c] sm:$0x1]
        %v4551 = vld [vmem:[%s3708 + $0x20] sm:$0xe]
        %v4552 = vld [vmem:[%s3708 + $0x24] sm:$0x1]
        %v4553 = vld [vmem:[%s3708 + $0x28] sm:$0xe]
        %v4554 = vld [vmem:[%s3708 + $0x2c] sm:$0x1]
        %v4555 = vld [vmem:[%s3708 + $0x30] sm:$0xe]
        %v4556 = vld [vmem:[%s3708 + $0x34] sm:$0x1]
        %v4557 = vld [vmem:[%s3708 + $0x38] sm:$0xe]
        %v4558 = vld [vmem:[%s3708 + $0x3c] sm:$0x1]
        %v4559 = vld [vmem:[%s3708 + $0x50] sm:$0xe]
        %v4560 = vld [vmem:[%s3708 + $0x54] sm:$0x1]
        %v4561 = vld [vmem:[%s3708 + $0x58] sm:$0xe]
        %v4562 = vld [vmem:[%s3708 + $0x5c] sm:$0x1]
        %v4563 = vld [vmem:[%s3708 + $0x60] sm:$0xe]
        %v4564 = vld [vmem:[%s3708 + $0x64] sm:$0x1]
        %v4565 = vld [vmem:[%s3708 + $0x68] sm:$0xe]
        %v4566 = vld [vmem:[%s3708 + $0x6c] sm:$0x1]
        %v4567 = vld [vmem:[%s3708 + $0x70] sm:$0xe]
        %v4568 = vld [vmem:[%s3708 + $0x74] sm:$0x1]
        %v4569 = vld [vmem:[%s3708 + $0x78] sm:$0xe]
        %v4570 = vld [vmem:[%s3708 + $0x7c] sm:$0x1]
        %v4571 = vld [vmem:[%s3708 + $0x80] sm:$0xe]
        %v4572 = vld [vmem:[%s3708 + $0x84] sm:$0x1]
        %v4573 = vld [vmem:[%s3708 + $0x88] sm:$0xe]
        %v4574 = vld [vmem:[%s3708 + $0x8c] sm:$0x1]
        %v4575 = vld [vmem:[%s3708 + $0xa0] sm:$0xe]
        %v4576 = vld [vmem:[%s3708 + $0xa4] sm:$0x1]
        %v4577 = vld [vmem:[%s3708 + $0xa8] sm:$0xe]
        %v4578 = vld [vmem:[%s3708 + $0xac] sm:$0x1]
        %v4579 = vld [vmem:[%s3708 + $0xb0] sm:$0xe]
        %v4580 = vld [vmem:[%s3708 + $0xb4] sm:$0x1]
        %v4581 = vld [vmem:[%s3708 + $0xb8] sm:$0xe]
        %v4582 = vld [vmem:[%s3708 + $0xbc] sm:$0x1]
        %v4583 = vld [vmem:[%s3708 + $0xc0] sm:$0xe]
        %v4584 = vld [vmem:[%s3708 + $0xc4] sm:$0x1]
        %v4585 = vld [vmem:[%s3708 + $0xc8] sm:$0xe]
        %v4586 = vld [vmem:[%s3708 + $0xcc] sm:$0x1]
        %v4587 = vld [vmem:[%s3708 + $0xd0] sm:$0xe]
        %v4588 = vld [vmem:[%s3708 + $0xd4] sm:$0x1]
        %v4589 = vld [vmem:[%s3708 + $0xd8] sm:$0xe]
        %v4590 = vld [vmem:[%s3708 + $0xdc] sm:$0x1]
        %v4591 = vld [vmem:[%s3708 + $0xf0] sm:$0xe]
        %v4592 = vld [vmem:[%s3708 + $0xf4] sm:$0x1]
        %v4593 = vld [vmem:[%s3708 + $0xf8] sm:$0xe]
        %v4594 = vld [vmem:[%s3708 + $0xfc] sm:$0x1]
        %v4595 = vld [vmem:[%s3708 + $0x100] sm:$0xe]
        %v4596 = vld [vmem:[%s3708 + $0x104] sm:$0x1]
        %v4597 = vld [vmem:[%s3708 + $0x108] sm:$0xe]
        %v4598 = vld [vmem:[%s3708 + $0x10c] sm:$0x1]
        %v4599 = vld [vmem:[%s3708 + $0x110] sm:$0xe]
        %v4600 = vld [vmem:[%s3708 + $0x114] sm:$0x1]
        %v4601 = vld [vmem:[%s3708 + $0x118] sm:$0xe]
        %v4602 = vld [vmem:[%s3708 + $0x11c] sm:$0x1]
        %v4603 = vld [vmem:[%s3708 + $0x120] sm:$0xe]
        %v4604 = vld [vmem:[%s3708 + $0x124] sm:$0x1]
        %v4605 = vld [vmem:[%s3708 + $0x128] sm:$0xe]
        %v4606 = vld [vmem:[%s3708 + $0x12c] sm:$0x1]
        %v4671 = vrot.slane %v4543, 5
        %v4672 = vrot.slane %v4671, 4
        %v4673 = vrot.slane %v4544, 5
        %v4674 = vsel %vm1010, %v4672, %v4673
        %v4675 = vrot.slane %v4545, 5
        %v4676 = vrot.slane %v4675, 4
        %v4677 = vrot.slane %v4546, 5
        %v4678 = vsel %vm1010, %v4676, %v4677
        %v4679 = vrot.slane %v4547, 5
        %v4680 = vrot.slane %v4679, 4
        %v4681 = vrot.slane %v4548, 5
        %v4682 = vsel %vm1010, %v4680, %v4681
        %v4683 = vrot.slane %v4549, 5
        %v4684 = vrot.slane %v4683, 4
        %v4685 = vrot.slane %v4550, 5
        %v4686 = vsel %vm1010, %v4684, %v4685
        %v4687 = vrot.slane %v4551, 5
        %v4688 = vrot.slane %v4687, 4
        %v4689 = vrot.slane %v4552, 5
        %v4690 = vsel %vm1010, %v4688, %v4689
        %v4691 = vrot.slane %v4553, 5
        %v4692 = vrot.slane %v4691, 4
        %v4693 = vrot.slane %v4554, 5
        %v4694 = vsel %vm1010, %v4692, %v4693
        %v4695 = vrot.slane %v4555, 5
        %v4696 = vrot.slane %v4695, 4
        %v4697 = vrot.slane %v4556, 5
        %v4698 = vsel %vm1010, %v4696, %v4697
        %v4699 = vrot.slane %v4557, 5
        %v4700 = vrot.slane %v4699, 4
        %v4701 = vrot.slane %v4558, 5
        %v4702 = vsel %vm1010, %v4700, %v4701
        %v4703 = vrot.slane %v4559, 5
        %v4704 = vrot.slane %v4703, 4
        %v4705 = vrot.slane %v4560, 5
        %v4706 = vsel %vm1010, %v4704, %v4705
        %v4707 = vrot.slane %v4561, 5
        %v4708 = vrot.slane %v4707, 4
        %v4709 = vrot.slane %v4562, 5
        %v4710 = vsel %vm1010, %v4708, %v4709
        %v4711 = vrot.slane %v4563, 5
        %v4712 = vrot.slane %v4711, 4
        %v4713 = vrot.slane %v4564, 5
        %v4714 = vsel %vm1010, %v4712, %v4713
        %v4715 = vrot.slane %v4565, 5
        %v4716 = vrot.slane %v4715, 4
        %v4717 = vrot.slane %v4566, 5
        %v4718 = vsel %vm1010, %v4716, %v4717
        %v4719 = vrot.slane %v4567, 5
        %v4720 = vrot.slane %v4719, 4
        %v4721 = vrot.slane %v4568, 5
        %v4722 = vsel %vm1010, %v4720, %v4721
        %v4723 = vrot.slane %v4569, 5
        %v4724 = vrot.slane %v4723, 4
        %v4725 = vrot.slane %v4570, 5
        %v4726 = vsel %vm1010, %v4724, %v4725
        %v4727 = vrot.slane %v4571, 5
        %v4728 = vrot.slane %v4727, 4
        %v4729 = vrot.slane %v4572, 5
        %v4730 = vsel %vm1010, %v4728, %v4729
        %v4731 = vrot.slane %v4573, 5
        %v4732 = vrot.slane %v4731, 4
        %v4733 = vrot.slane %v4574, 5
        %v4734 = vsel %vm1010, %v4732, %v4733
        %v4735 = vrot.slane %v4575, 5
        %v4736 = vrot.slane %v4735, 4
        %v4737 = vrot.slane %v4576, 5
        %v4738 = vsel %vm1010, %v4736, %v4737
        %v4739 = vrot.slane %v4577, 5
        %v4740 = vrot.slane %v4739, 4
        %v4741 = vrot.slane %v4578, 5
        %v4742 = vsel %vm1010, %v4740, %v4741
        %v4743 = vrot.slane %v4579, 5
        %v4744 = vrot.slane %v4743, 4
        %v4745 = vrot.slane %v4580, 5
        %v4746 = vsel %vm1010, %v4744, %v4745
        %v4747 = vrot.slane %v4581, 5
        %v4748 = vrot.slane %v4747, 4
        %v4749 = vrot.slane %v4582, 5
        %v4750 = vsel %vm1010, %v4748, %v4749
        %v4751 = vrot.slane %v4583, 5
        %v4752 = vrot.slane %v4751, 4
        %v4753 = vrot.slane %v4584, 5
        %v4754 = vsel %vm1010, %v4752, %v4753
        %v4755 = vrot.slane %v4585, 5
        %v4756 = vrot.slane %v4755, 4
        %v4757 = vrot.slane %v4586, 5
        %v4758 = vsel %vm1010, %v4756, %v4757
        %v4759 = vrot.slane %v4587, 5
        %v4760 = vrot.slane %v4759, 4
        %v4761 = vrot.slane %v4588, 5
        %v4762 = vsel %vm1010, %v4760, %v4761
        %v4763 = vrot.slane %v4589, 5
        %v4764 = vrot.slane %v4763, 4
        %v4765 = vrot.slane %v4590, 5
        %v4766 = vsel %vm1010, %v4764, %v4765
        %v4767 = vrot.slane %v4591, 5
        %v4768 = vrot.slane %v4767, 4
        %v4769 = vrot.slane %v4592, 5
        %v4770 = vsel %vm1010, %v4768, %v4769
        %v4771 = vrot.slane %v4593, 5
        %v4772 = vrot.slane %v4771, 4
        %v4773 = vrot.slane %v4594, 5
        %v4774 = vsel %vm1010, %v4772, %v4773
        %v4775 = vrot.slane %v4595, 5
        %v4776 = vrot.slane %v4775, 4
        %v4777 = vrot.slane %v4596, 5
        %v4778 = vsel %vm1010, %v4776, %v4777
        %v4779 = vrot.slane %v4597, 5
        %v4780 = vrot.slane %v4779, 4
        %v4781 = vrot.slane %v4598, 5
        %v4782 = vsel %vm1010, %v4780, %v4781
        %v4783 = vrot.slane %v4599, 5
        %v4784 = vrot.slane %v4783, 4
        %v4785 = vrot.slane %v4600, 5
        %v4786 = vsel %vm1010, %v4784, %v4785
        %v4787 = vrot.slane %v4601, 5
        %v4788 = vrot.slane %v4787, 4
        %v4789 = vrot.slane %v4602, 5
        %v4790 = vsel %vm1010, %v4788, %v4789
        %v4791 = vrot.slane %v4603, 5
        %v4792 = vrot.slane %v4791, 4
        %v4793 = vrot.slane %v4604, 5
        %v4794 = vsel %vm1010, %v4792, %v4793
        %v4795 = vrot.slane %v4605, 5
        %v4796 = vrot.slane %v4795, 4
        %v4797 = vrot.slane %v4606, 5
        %v4798 = vsel %vm1010, %v4796, %v4797
        %4799 = vrot.lane.b32.xlu0 %v4674, 44
        %v4800 = vpop.permute.xlu0 %4799
        %4801 = vrot.lane.b32.xlu0 %v4678, 44
        %v4802 = vpop.permute.xlu0 %4801
        %4803 = vrot.lane.b32.xlu0 %v4682, 44
        %v4804 = vpop.permute.xlu0 %4803
        %4805 = vrot.lane.b32.xlu0 %v4686, 44
        %v4806 = vpop.permute.xlu0 %4805
        %4807 = vrot.lane.b32.xlu0 %v4690, 44
        %v4808 = vpop.permute.xlu0 %4807
        %4809 = vrot.lane.b32.xlu0 %v4694, 44
        %v4810 = vpop.permute.xlu0 %4809
        %4811 = vrot.lane.b32.xlu0 %v4698, 44
        %v4812 = vpop.permute.xlu0 %4811
        %4813 = vrot.lane.b32.xlu0 %v4702, 44
        %v4814 = vpop.permute.xlu0 %4813
        %4815 = vrot.lane.b32.xlu0 %v4706, 44
        %v4816 = vpop.permute.xlu0 %4815
        %4817 = vrot.lane.b32.xlu0 %v4710, 44
        %v4818 = vpop.permute.xlu0 %4817
        %4819 = vrot.lane.b32.xlu0 %v4714, 44
        %v4820 = vpop.permute.xlu0 %4819
        %4821 = vrot.lane.b32.xlu0 %v4718, 44
        %v4822 = vpop.permute.xlu0 %4821
        %4823 = vrot.lane.b32.xlu0 %v4722, 44
        %v4824 = vpop.permute.xlu0 %4823
        %4825 = vrot.lane.b32.xlu0 %v4726, 44
        %v4826 = vpop.permute.xlu0 %4825
        %4827 = vrot.lane.b32.xlu0 %v4730, 44
        %v4828 = vpop.permute.xlu0 %4827
        %4829 = vrot.lane.b32.xlu0 %v4734, 44
        %v4830 = vpop.permute.xlu0 %4829
        %4831 = vrot.lane.b32.xlu0 %v4738, 44
        %v4832 = vpop.permute.xlu0 %4831
        %4833 = vrot.lane.b32.xlu0 %v4742, 44
        %v4834 = vpop.permute.xlu0 %4833
        %4835 = vrot.lane.b32.xlu0 %v4746, 44
        %v4836 = vpop.permute.xlu0 %4835
        %4837 = vrot.lane.b32.xlu0 %v4750, 44
        %v4838 = vpop.permute.xlu0 %4837
        %4839 = vrot.lane.b32.xlu0 %v4754, 44
        %v4840 = vpop.permute.xlu0 %4839
        %4841 = vrot.lane.b32.xlu0 %v4758, 44
        %v4842 = vpop.permute.xlu0 %4841
        %4843 = vrot.lane.b32.xlu0 %v4762, 44
        %v4844 = vpop.permute.xlu0 %4843
        %4845 = vrot.lane.b32.xlu0 %v4766, 44
        %v4846 = vpop.permute.xlu0 %4845
        %4847 = vrot.lane.b32.xlu0 %v4770, 44
        %v4848 = vpop.permute.xlu0 %4847
        %4849 = vrot.lane.b32.xlu0 %v4774, 44
        %v4850 = vpop.permute.xlu0 %4849
        %4851 = vrot.lane.b32.xlu0 %v4778, 44
        %v4852 = vpop.permute.xlu0 %4851
        %4853 = vrot.lane.b32.xlu0 %v4782, 44
        %v4854 = vpop.permute.xlu0 %4853
        %4855 = vrot.lane.b32.xlu0 %v4786, 44
        %v4856 = vpop.permute.xlu0 %4855
        %4857 = vrot.lane.b32.xlu0 %v4790, 44
        %v4858 = vpop.permute.xlu0 %4857
        %4859 = vrot.lane.b32.xlu0 %v4794, 44
        %v4860 = vpop.permute.xlu0 %4859
        %4861 = vrot.lane.b32.xlu0 %v4798, 44
        %v4862 = vpop.permute.xlu0 %4861
        %vm4895 = vcmask 388448
        %4896 = vst.msk [vmem:[#allocation2] sm:$0xf] %vm4895, %v4800
        %4897 = vst.msk [vmem:[#allocation2 + $0x4] sm:$0xf] %vm4895, %v4802
        %4898 = vst.msk [vmem:[#allocation2 + $0x8] sm:$0xf] %vm4895, %v4804
        %4899 = vst.msk [vmem:[#allocation2 + $0xc] sm:$0xf] %vm4895, %v4806
        %4900 = vst.msk [vmem:[#allocation2 + $0x10] sm:$0xf] %vm4895, %v4808
        %4901 = vst.msk [vmem:[#allocation2 + $0x14] sm:$0xf] %vm4895, %v4810
        %4902 = vst.msk [vmem:[#allocation2 + $0x18] sm:$0xf] %vm4895, %v4812
        %4903 = vst.msk [vmem:[#allocation2 + $0x1c] sm:$0xf] %vm4895, %v4814
        %4904 = vst.msk [vmem:[#allocation2 + $0x20] sm:$0xf] %vm4895, %v4816
        %4905 = vst.msk [vmem:[#allocation2 + $0x24] sm:$0xf] %vm4895, %v4818
        %4906 = vst.msk [vmem:[#allocation2 + $0x28] sm:$0xf] %vm4895, %v4820
        %4907 = vst.msk [vmem:[#allocation2 + $0x2c] sm:$0xf] %vm4895, %v4822
        %4908 = vst.msk [vmem:[#allocation2 + $0x30] sm:$0xf] %vm4895, %v4824
        %4909 = vst.msk [vmem:[#allocation2 + $0x34] sm:$0xf] %vm4895, %v4826
        %4910 = vst.msk [vmem:[#allocation2 + $0x38] sm:$0xf] %vm4895, %v4828
        %4911 = vst.msk [vmem:[#allocation2 + $0x3c] sm:$0xf] %vm4895, %v4830
        %4912 = vst.msk [vmem:[#allocation2 + $0x40] sm:$0xf] %vm4895, %v4832
        %4913 = vst.msk [vmem:[#allocation2 + $0x44] sm:$0xf] %vm4895, %v4834
        %4914 = vst.msk [vmem:[#allocation2 + $0x48] sm:$0xf] %vm4895, %v4836
        %4915 = vst.msk [vmem:[#allocation2 + $0x4c] sm:$0xf] %vm4895, %v4838
        %4916 = vst.msk [vmem:[#allocation2 + $0x50] sm:$0xf] %vm4895, %v4840
        %4917 = vst.msk [vmem:[#allocation2 + $0x54] sm:$0xf] %vm4895, %v4842
        %4918 = vst.msk [vmem:[#allocation2 + $0x58] sm:$0xf] %vm4895, %v4844
        %4919 = vst.msk [vmem:[#allocation2 + $0x5c] sm:$0xf] %vm4895, %v4846
        %4920 = vst.msk [vmem:[#allocation2 + $0x60] sm:$0xf] %vm4895, %v4848
        %4921 = vst.msk [vmem:[#allocation2 + $0x64] sm:$0xf] %vm4895, %v4850
        %4922 = vst.msk [vmem:[#allocation2 + $0x68] sm:$0xf] %vm4895, %v4852
        %4923 = vst.msk [vmem:[#allocation2 + $0x6c] sm:$0xf] %vm4895, %v4854
        %4924 = vst.msk [vmem:[#allocation2 + $0x70] sm:$0xf] %vm4895, %v4856
        %4925 = vst.msk [vmem:[#allocation2 + $0x74] sm:$0xf] %vm4895, %v4858
        %4926 = vst.msk [vmem:[#allocation2 + $0x78] sm:$0xf] %vm4895, %v4860
        %4927 = vst.msk [vmem:[#allocation2 + $0x7c] sm:$0xf] %vm4895, %v4862
        %s4928 = scalar_lea.vmem %s168, 88
        %v4929 = vld [vmem:[%s4928] sm:$0xf]
        %v4930 = vld [vmem:[%s4928 + $0x8] sm:$0xf]
        %v4931 = vld [vmem:[%s4928 + $0x10] sm:$0xf]
        %v4932 = vld [vmem:[%s4928 + $0x18] sm:$0xf]
        %v4933 = vld [vmem:[%s4928 + $0x20] sm:$0xf]
        %v4934 = vld [vmem:[%s4928 + $0x28] sm:$0xf]
        %v4935 = vld [vmem:[%s4928 + $0x30] sm:$0xf]
        %v4936 = vld [vmem:[%s4928 + $0x38] sm:$0xf]
        %v4937 = vld [vmem:[%s4928 + $0x50] sm:$0xf]
        %v4938 = vld [vmem:[%s4928 + $0x58] sm:$0xf]
        %v4939 = vld [vmem:[%s4928 + $0x60] sm:$0xf]
        %v4940 = vld [vmem:[%s4928 + $0x68] sm:$0xf]
        %v4941 = vld [vmem:[%s4928 + $0x70] sm:$0xf]
        %v4942 = vld [vmem:[%s4928 + $0x78] sm:$0xf]
        %v4943 = vld [vmem:[%s4928 + $0x80] sm:$0xf]
        %v4944 = vld [vmem:[%s4928 + $0x88] sm:$0xf]
        %v4945 = vld [vmem:[%s4928 + $0xa0] sm:$0xf]
        %v4946 = vld [vmem:[%s4928 + $0xa8] sm:$0xf]
        %v4947 = vld [vmem:[%s4928 + $0xb0] sm:$0xf]
        %v4948 = vld [vmem:[%s4928 + $0xb8] sm:$0xf]
        %v4949 = vld [vmem:[%s4928 + $0xc0] sm:$0xf]
        %v4950 = vld [vmem:[%s4928 + $0xc8] sm:$0xf]
        %v4951 = vld [vmem:[%s4928 + $0xd0] sm:$0xf]
        %v4952 = vld [vmem:[%s4928 + $0xd8] sm:$0xf]
        %v4953 = vld [vmem:[%s4928 + $0xf0] sm:$0xf]
        %v4954 = vld [vmem:[%s4928 + $0xf8] sm:$0xf]
        %v4955 = vld [vmem:[%s4928 + $0x100] sm:$0xf]
        %v4956 = vld [vmem:[%s4928 + $0x108] sm:$0xf]
        %v4957 = vld [vmem:[%s4928 + $0x110] sm:$0xf]
        %v4958 = vld [vmem:[%s4928 + $0x118] sm:$0xf]
        %v4959 = vld [vmem:[%s4928 + $0x120] sm:$0xf]
        %v4960 = vld [vmem:[%s4928 + $0x128] sm:$0xf]
        %4993 = vrot.lane.b32.xlu0 %v4929, 48
        %v4994 = vpop.permute.xlu0 %4993
        %4995 = vrot.lane.b32.xlu0 %v4930, 48
        %v4996 = vpop.permute.xlu0 %4995
        %4997 = vrot.lane.b32.xlu0 %v4931, 48
        %v4998 = vpop.permute.xlu0 %4997
        %4999 = vrot.lane.b32.xlu0 %v4932, 48
        %v5000 = vpop.permute.xlu0 %4999
        %5001 = vrot.lane.b32.xlu0 %v4933, 48
        %v5002 = vpop.permute.xlu0 %5001
        %5003 = vrot.lane.b32.xlu0 %v4934, 48
        %v5004 = vpop.permute.xlu0 %5003
        %5005 = vrot.lane.b32.xlu0 %v4935, 48
        %v5006 = vpop.permute.xlu0 %5005
        %5007 = vrot.lane.b32.xlu0 %v4936, 48
        %v5008 = vpop.permute.xlu0 %5007
        %5009 = vrot.lane.b32.xlu0 %v4937, 48
        %v5010 = vpop.permute.xlu0 %5009
        %5011 = vrot.lane.b32.xlu0 %v4938, 48
        %v5012 = vpop.permute.xlu0 %5011
        %5013 = vrot.lane.b32.xlu0 %v4939, 48
        %v5014 = vpop.permute.xlu0 %5013
        %5015 = vrot.lane.b32.xlu0 %v4940, 48
        %v5016 = vpop.permute.xlu0 %5015
        %5017 = vrot.lane.b32.xlu0 %v4941, 48
        %v5018 = vpop.permute.xlu0 %5017
        %5019 = vrot.lane.b32.xlu0 %v4942, 48
        %v5020 = vpop.permute.xlu0 %5019
        %5021 = vrot.lane.b32.xlu0 %v4943, 48
        %v5022 = vpop.permute.xlu0 %5021
        %5023 = vrot.lane.b32.xlu0 %v4944, 48
        %v5024 = vpop.permute.xlu0 %5023
        %5025 = vrot.lane.b32.xlu0 %v4945, 48
        %v5026 = vpop.permute.xlu0 %5025
        %5027 = vrot.lane.b32.xlu0 %v4946, 48
        %v5028 = vpop.permute.xlu0 %5027
        %5029 = vrot.lane.b32.xlu0 %v4947, 48
        %v5030 = vpop.permute.xlu0 %5029
        %5031 = vrot.lane.b32.xlu0 %v4948, 48
        %v5032 = vpop.permute.xlu0 %5031
        %5033 = vrot.lane.b32.xlu0 %v4949, 48
        %v5034 = vpop.permute.xlu0 %5033
        %5035 = vrot.lane.b32.xlu0 %v4950, 48
        %v5036 = vpop.permute.xlu0 %5035
        %5037 = vrot.lane.b32.xlu0 %v4951, 48
        %v5038 = vpop.permute.xlu0 %5037
        %5039 = vrot.lane.b32.xlu0 %v4952, 48
        %v5040 = vpop.permute.xlu0 %5039
        %5041 = vrot.lane.b32.xlu0 %v4953, 48
        %v5042 = vpop.permute.xlu0 %5041
        %5043 = vrot.lane.b32.xlu0 %v4954, 48
        %v5044 = vpop.permute.xlu0 %5043
        %5045 = vrot.lane.b32.xlu0 %v4955, 48
        %v5046 = vpop.permute.xlu0 %5045
        %5047 = vrot.lane.b32.xlu0 %v4956, 48
        %v5048 = vpop.permute.xlu0 %5047
        %5049 = vrot.lane.b32.xlu0 %v4957, 48
        %v5050 = vpop.permute.xlu0 %5049
        %5051 = vrot.lane.b32.xlu0 %v4958, 48
        %v5052 = vpop.permute.xlu0 %5051
        %5053 = vrot.lane.b32.xlu0 %v4959, 48
        %v5054 = vpop.permute.xlu0 %5053
        %5055 = vrot.lane.b32.xlu0 %v4960, 48
        %v5056 = vpop.permute.xlu0 %5055
        %vm5089 = vcmask 421248
        %5090 = vst.msk [vmem:[#allocation2] sm:$0xf] %vm5089, %v4994
        %5091 = vst.msk [vmem:[#allocation2 + $0x4] sm:$0xf] %vm5089, %v4996
        %5092 = vst.msk [vmem:[#allocation2 + $0x8] sm:$0xf] %vm5089, %v4998
        %5093 = vst.msk [vmem:[#allocation2 + $0xc] sm:$0xf] %vm5089, %v5000
        %5094 = vst.msk [vmem:[#allocation2 + $0x10] sm:$0xf] %vm5089, %v5002
        %5095 = vst.msk [vmem:[#allocation2 + $0x14] sm:$0xf] %vm5089, %v5004
        %5096 = vst.msk [vmem:[#allocation2 + $0x18] sm:$0xf] %vm5089, %v5006
        %5097 = vst.msk [vmem:[#allocation2 + $0x1c] sm:$0xf] %vm5089, %v5008
        %5098 = vst.msk [vmem:[#allocation2 + $0x20] sm:$0xf] %vm5089, %v5010
        %5099 = vst.msk [vmem:[#allocation2 + $0x24] sm:$0xf] %vm5089, %v5012
        %5100 = vst.msk [vmem:[#allocation2 + $0x28] sm:$0xf] %vm5089, %v5014
        %5101 = vst.msk [vmem:[#allocation2 + $0x2c] sm:$0xf] %vm5089, %v5016
        %5102 = vst.msk [vmem:[#allocation2 + $0x30] sm:$0xf] %vm5089, %v5018
        %5103 = vst.msk [vmem:[#allocation2 + $0x34] sm:$0xf] %vm5089, %v5020
        %5104 = vst.msk [vmem:[#allocation2 + $0x38] sm:$0xf] %vm5089, %v5022
        %5105 = vst.msk [vmem:[#allocation2 + $0x3c] sm:$0xf] %vm5089, %v5024
        %5106 = vst.msk [vmem:[#allocation2 + $0x40] sm:$0xf] %vm5089, %v5026
        %5107 = vst.msk [vmem:[#allocation2 + $0x44] sm:$0xf] %vm5089, %v5028
        %5108 = vst.msk [vmem:[#allocation2 + $0x48] sm:$0xf] %vm5089, %v5030
        %5109 = vst.msk [vmem:[#allocation2 + $0x4c] sm:$0xf] %vm5089, %v5032
        %5110 = vst.msk [vmem:[#allocation2 + $0x50] sm:$0xf] %vm5089, %v5034
        %5111 = vst.msk [vmem:[#allocation2 + $0x54] sm:$0xf] %vm5089, %v5036
        %5112 = vst.msk [vmem:[#allocation2 + $0x58] sm:$0xf] %vm5089, %v5038
        %5113 = vst.msk [vmem:[#allocation2 + $0x5c] sm:$0xf] %vm5089, %v5040
        %5114 = vst.msk [vmem:[#allocation2 + $0x60] sm:$0xf] %vm5089, %v5042
        %5115 = vst.msk [vmem:[#allocation2 + $0x64] sm:$0xf] %vm5089, %v5044
        %5116 = vst.msk [vmem:[#allocation2 + $0x68] sm:$0xf] %vm5089, %v5046
        %5117 = vst.msk [vmem:[#allocation2 + $0x6c] sm:$0xf] %vm5089, %v5048
        %5118 = vst.msk [vmem:[#allocation2 + $0x70] sm:$0xf] %vm5089, %v5050
        %5119 = vst.msk [vmem:[#allocation2 + $0x74] sm:$0xf] %vm5089, %v5052
        %5120 = vst.msk [vmem:[#allocation2 + $0x78] sm:$0xf] %vm5089, %v5054
        %5121 = vst.msk [vmem:[#allocation2 + $0x7c] sm:$0xf] %vm5089, %v5056
        %v5122 = vld [vmem:[%s4928] sm:$0xf]
        %v5123 = vld [vmem:[%s4928 + $0x4] sm:$0x1]
        %v5124 = vld [vmem:[%s4928 + $0x8] sm:$0xf]
        %v5125 = vld [vmem:[%s4928 + $0xc] sm:$0x1]
        %v5126 = vld [vmem:[%s4928 + $0x10] sm:$0xf]
        %v5127 = vld [vmem:[%s4928 + $0x14] sm:$0x1]
        %v5128 = vld [vmem:[%s4928 + $0x18] sm:$0xf]
        %v5129 = vld [vmem:[%s4928 + $0x1c] sm:$0x1]
        %v5130 = vld [vmem:[%s4928 + $0x20] sm:$0xf]
        %v5131 = vld [vmem:[%s4928 + $0x24] sm:$0x1]
        %v5132 = vld [vmem:[%s4928 + $0x28] sm:$0xf]
        %v5133 = vld [vmem:[%s4928 + $0x2c] sm:$0x1]
        %v5134 = vld [vmem:[%s4928 + $0x30] sm:$0xf]
        %v5135 = vld [vmem:[%s4928 + $0x34] sm:$0x1]
        %v5136 = vld [vmem:[%s4928 + $0x38] sm:$0xf]
        %v5137 = vld [vmem:[%s4928 + $0x3c] sm:$0x1]
        %v5138 = vld [vmem:[%s4928 + $0x50] sm:$0xf]
        %v5139 = vld [vmem:[%s4928 + $0x54] sm:$0x1]
        %v5140 = vld [vmem:[%s4928 + $0x58] sm:$0xf]
        %v5141 = vld [vmem:[%s4928 + $0x5c] sm:$0x1]
        %v5142 = vld [vmem:[%s4928 + $0x60] sm:$0xf]
        %v5143 = vld [vmem:[%s4928 + $0x64] sm:$0x1]
        %v5144 = vld [vmem:[%s4928 + $0x68] sm:$0xf]
        %v5145 = vld [vmem:[%s4928 + $0x6c] sm:$0x1]
        %v5146 = vld [vmem:[%s4928 + $0x70] sm:$0xf]
        %v5147 = vld [vmem:[%s4928 + $0x74] sm:$0x1]
        %v5148 = vld [vmem:[%s4928 + $0x78] sm:$0xf]
        %v5149 = vld [vmem:[%s4928 + $0x7c] sm:$0x1]
        %v5150 = vld [vmem:[%s4928 + $0x80] sm:$0xf]
        %v5151 = vld [vmem:[%s4928 + $0x84] sm:$0x1]
        %v5152 = vld [vmem:[%s4928 + $0x88] sm:$0xf]
        %v5153 = vld [vmem:[%s4928 + $0x8c] sm:$0x1]
        %v5154 = vld [vmem:[%s4928 + $0xa0] sm:$0xf]
        %v5155 = vld [vmem:[%s4928 + $0xa4] sm:$0x1]
        %v5156 = vld [vmem:[%s4928 + $0xa8] sm:$0xf]
        %v5157 = vld [vmem:[%s4928 + $0xac] sm:$0x1]
        %v5158 = vld [vmem:[%s4928 + $0xb0] sm:$0xf]
        %v5159 = vld [vmem:[%s4928 + $0xb4] sm:$0x1]
        %v5160 = vld [vmem:[%s4928 + $0xb8] sm:$0xf]
        %v5161 = vld [vmem:[%s4928 + $0xbc] sm:$0x1]
        %v5162 = vld [vmem:[%s4928 + $0xc0] sm:$0xf]
        %v5163 = vld [vmem:[%s4928 + $0xc4] sm:$0x1]
        %v5164 = vld [vmem:[%s4928 + $0xc8] sm:$0xf]
        %v5165 = vld [vmem:[%s4928 + $0xcc] sm:$0x1]
        %v5166 = vld [vmem:[%s4928 + $0xd0] sm:$0xf]
        %v5167 = vld [vmem:[%s4928 + $0xd4] sm:$0x1]
        %v5168 = vld [vmem:[%s4928 + $0xd8] sm:$0xf]
        %v5169 = vld [vmem:[%s4928 + $0xdc] sm:$0x1]
        %v5170 = vld [vmem:[%s4928 + $0xf0] sm:$0xf]
        %v5171 = vld [vmem:[%s4928 + $0xf4] sm:$0x1]
        %v5172 = vld [vmem:[%s4928 + $0xf8] sm:$0xf]
        %v5173 = vld [vmem:[%s4928 + $0xfc] sm:$0x1]
        %v5174 = vld [vmem:[%s4928 + $0x100] sm:$0xf]
        %v5175 = vld [vmem:[%s4928 + $0x104] sm:$0x1]
        %v5176 = vld [vmem:[%s4928 + $0x108] sm:$0xf]
        %v5177 = vld [vmem:[%s4928 + $0x10c] sm:$0x1]
        %v5178 = vld [vmem:[%s4928 + $0x110] sm:$0xf]
        %v5179 = vld [vmem:[%s4928 + $0x114] sm:$0x1]
        %v5180 = vld [vmem:[%s4928 + $0x118] sm:$0xf]
        %v5181 = vld [vmem:[%s4928 + $0x11c] sm:$0x1]
        %v5182 = vld [vmem:[%s4928 + $0x120] sm:$0xf]
        %v5183 = vld [vmem:[%s4928 + $0x124] sm:$0x1]
        %v5184 = vld [vmem:[%s4928 + $0x128] sm:$0xf]
        %v5185 = vld [vmem:[%s4928 + $0x12c] sm:$0x1]
        %v5187 = vshrl.u32 %v5122, 16
        %v5189 = vrot.slane %v5187, 4
        %v5190 = vshll.u32 %v5122, 16
        %v5192 = vrot.slane %v5190, 5
        %v5193 = vor.u32 %v5189, %v5192
        %v5194 = vrot.slane %v5193, 4
        %v5196 = vshll.u32 %v5123, 16
        %v5198 = vrot.slane %v5196, 5
        %v5199 = vsel %vm302, %v5194, %v5198
        %v5201 = vshrl.u32 %v5124, 16
        %v5203 = vrot.slane %v5201, 4
        %v5204 = vshll.u32 %v5124, 16
        %v5206 = vrot.slane %v5204, 5
        %v5207 = vor.u32 %v5203, %v5206
        %v5208 = vrot.slane %v5207, 4
        %v5210 = vshll.u32 %v5125, 16
        %v5212 = vrot.slane %v5210, 5
        %v5213 = vsel %vm302, %v5208, %v5212
        %v5215 = vshrl.u32 %v5126, 16
        %v5217 = vrot.slane %v5215, 4
        %v5218 = vshll.u32 %v5126, 16
        %v5220 = vrot.slane %v5218, 5
        %v5221 = vor.u32 %v5217, %v5220
        %v5222 = vrot.slane %v5221, 4
        %v5224 = vshll.u32 %v5127, 16
        %v5226 = vrot.slane %v5224, 5
        %v5227 = vsel %vm302, %v5222, %v5226
        %v5229 = vshrl.u32 %v5128, 16
        %v5231 = vrot.slane %v5229, 4
        %v5232 = vshll.u32 %v5128, 16
        %v5234 = vrot.slane %v5232, 5
        %v5235 = vor.u32 %v5231, %v5234
        %v5236 = vrot.slane %v5235, 4
        %v5238 = vshll.u32 %v5129, 16
        %v5240 = vrot.slane %v5238, 5
        %v5241 = vsel %vm302, %v5236, %v5240
        %v5243 = vshrl.u32 %v5130, 16
        %v5245 = vrot.slane %v5243, 4
        %v5246 = vshll.u32 %v5130, 16
        %v5248 = vrot.slane %v5246, 5
        %v5249 = vor.u32 %v5245, %v5248
        %v5250 = vrot.slane %v5249, 4
        %v5252 = vshll.u32 %v5131, 16
        %v5254 = vrot.slane %v5252, 5
        %v5255 = vsel %vm302, %v5250, %v5254
        %v5257 = vshrl.u32 %v5132, 16
        %v5259 = vrot.slane %v5257, 4
        %v5260 = vshll.u32 %v5132, 16
        %v5262 = vrot.slane %v5260, 5
        %v5263 = vor.u32 %v5259, %v5262
        %v5264 = vrot.slane %v5263, 4
        %v5266 = vshll.u32 %v5133, 16
        %v5268 = vrot.slane %v5266, 5
        %v5269 = vsel %vm302, %v5264, %v5268
        %v5271 = vshrl.u32 %v5134, 16
        %v5273 = vrot.slane %v5271, 4
        %v5274 = vshll.u32 %v5134, 16
        %v5276 = vrot.slane %v5274, 5
        %v5277 = vor.u32 %v5273, %v5276
        %v5278 = vrot.slane %v5277, 4
        %v5280 = vshll.u32 %v5135, 16
        %v5282 = vrot.slane %v5280, 5
        %v5283 = vsel %vm302, %v5278, %v5282
        %v5285 = vshrl.u32 %v5136, 16
        %v5287 = vrot.slane %v5285, 4
        %v5288 = vshll.u32 %v5136, 16
        %v5290 = vrot.slane %v5288, 5
        %v5291 = vor.u32 %v5287, %v5290
        %v5292 = vrot.slane %v5291, 4
        %v5294 = vshll.u32 %v5137, 16
        %v5296 = vrot.slane %v5294, 5
        %v5297 = vsel %vm302, %v5292, %v5296
        %v5299 = vshrl.u32 %v5138, 16
        %v5301 = vrot.slane %v5299, 4
        %v5302 = vshll.u32 %v5138, 16
        %v5304 = vrot.slane %v5302, 5
        %v5305 = vor.u32 %v5301, %v5304
        %v5306 = vrot.slane %v5305, 4
        %v5308 = vshll.u32 %v5139, 16
        %v5310 = vrot.slane %v5308, 5
        %v5311 = vsel %vm302, %v5306, %v5310
        %v5313 = vshrl.u32 %v5140, 16
        %v5315 = vrot.slane %v5313, 4
        %v5316 = vshll.u32 %v5140, 16
        %v5318 = vrot.slane %v5316, 5
        %v5319 = vor.u32 %v5315, %v5318
        %v5320 = vrot.slane %v5319, 4
        %v5322 = vshll.u32 %v5141, 16
        %v5324 = vrot.slane %v5322, 5
        %v5325 = vsel %vm302, %v5320, %v5324
        %v5327 = vshrl.u32 %v5142, 16
        %v5329 = vrot.slane %v5327, 4
        %v5330 = vshll.u32 %v5142, 16
        %v5332 = vrot.slane %v5330, 5
        %v5333 = vor.u32 %v5329, %v5332
        %v5334 = vrot.slane %v5333, 4
        %v5336 = vshll.u32 %v5143, 16
        %v5338 = vrot.slane %v5336, 5
        %v5339 = vsel %vm302, %v5334, %v5338
        %v5341 = vshrl.u32 %v5144, 16
        %v5343 = vrot.slane %v5341, 4
        %v5344 = vshll.u32 %v5144, 16
        %v5346 = vrot.slane %v5344, 5
        %v5347 = vor.u32 %v5343, %v5346
        %v5348 = vrot.slane %v5347, 4
        %v5350 = vshll.u32 %v5145, 16
        %v5352 = vrot.slane %v5350, 5
        %v5353 = vsel %vm302, %v5348, %v5352
        %v5355 = vshrl.u32 %v5146, 16
        %v5357 = vrot.slane %v5355, 4
        %v5358 = vshll.u32 %v5146, 16
        %v5360 = vrot.slane %v5358, 5
        %v5361 = vor.u32 %v5357, %v5360
        %v5362 = vrot.slane %v5361, 4
        %v5364 = vshll.u32 %v5147, 16
        %v5366 = vrot.slane %v5364, 5
        %v5367 = vsel %vm302, %v5362, %v5366
        %v5369 = vshrl.u32 %v5148, 16
        %v5371 = vrot.slane %v5369, 4
        %v5372 = vshll.u32 %v5148, 16
        %v5374 = vrot.slane %v5372, 5
        %v5375 = vor.u32 %v5371, %v5374
        %v5376 = vrot.slane %v5375, 4
        %v5378 = vshll.u32 %v5149, 16
        %v5380 = vrot.slane %v5378, 5
        %v5381 = vsel %vm302, %v5376, %v5380
        %v5383 = vshrl.u32 %v5150, 16
        %v5385 = vrot.slane %v5383, 4
        %v5386 = vshll.u32 %v5150, 16
        %v5388 = vrot.slane %v5386, 5
        %v5389 = vor.u32 %v5385, %v5388
        %v5390 = vrot.slane %v5389, 4
        %v5392 = vshll.u32 %v5151, 16
        %v5394 = vrot.slane %v5392, 5
        %v5395 = vsel %vm302, %v5390, %v5394
        %v5397 = vshrl.u32 %v5152, 16
        %v5399 = vrot.slane %v5397, 4
        %v5400 = vshll.u32 %v5152, 16
        %v5402 = vrot.slane %v5400, 5
        %v5403 = vor.u32 %v5399, %v5402
        %v5404 = vrot.slane %v5403, 4
        %v5406 = vshll.u32 %v5153, 16
        %v5408 = vrot.slane %v5406, 5
        %v5409 = vsel %vm302, %v5404, %v5408
        %v5411 = vshrl.u32 %v5154, 16
        %v5413 = vrot.slane %v5411, 4
        %v5414 = vshll.u32 %v5154, 16
        %v5416 = vrot.slane %v5414, 5
        %v5417 = vor.u32 %v5413, %v5416
        %v5418 = vrot.slane %v5417, 4
        %v5420 = vshll.u32 %v5155, 16
        %v5422 = vrot.slane %v5420, 5
        %v5423 = vsel %vm302, %v5418, %v5422
        %v5425 = vshrl.u32 %v5156, 16
        %v5427 = vrot.slane %v5425, 4
        %v5428 = vshll.u32 %v5156, 16
        %v5430 = vrot.slane %v5428, 5
        %v5431 = vor.u32 %v5427, %v5430
        %v5432 = vrot.slane %v5431, 4
        %v5434 = vshll.u32 %v5157, 16
        %v5436 = vrot.slane %v5434, 5
        %v5437 = vsel %vm302, %v5432, %v5436
        %v5439 = vshrl.u32 %v5158, 16
        %v5441 = vrot.slane %v5439, 4
        %v5442 = vshll.u32 %v5158, 16
        %v5444 = vrot.slane %v5442, 5
        %v5445 = vor.u32 %v5441, %v5444
        %v5446 = vrot.slane %v5445, 4
        %v5448 = vshll.u32 %v5159, 16
        %v5450 = vrot.slane %v5448, 5
        %v5451 = vsel %vm302, %v5446, %v5450
        %v5453 = vshrl.u32 %v5160, 16
        %v5455 = vrot.slane %v5453, 4
        %v5456 = vshll.u32 %v5160, 16
        %v5458 = vrot.slane %v5456, 5
        %v5459 = vor.u32 %v5455, %v5458
        %v5460 = vrot.slane %v5459, 4
        %v5462 = vshll.u32 %v5161, 16
        %v5464 = vrot.slane %v5462, 5
        %v5465 = vsel %vm302, %v5460, %v5464
        %v5467 = vshrl.u32 %v5162, 16
        %v5469 = vrot.slane %v5467, 4
        %v5470 = vshll.u32 %v5162, 16
        %v5472 = vrot.slane %v5470, 5
        %v5473 = vor.u32 %v5469, %v5472
        %v5474 = vrot.slane %v5473, 4
        %v5476 = vshll.u32 %v5163, 16
        %v5478 = vrot.slane %v5476, 5
        %v5479 = vsel %vm302, %v5474, %v5478
        %v5481 = vshrl.u32 %v5164, 16
        %v5483 = vrot.slane %v5481, 4
        %v5484 = vshll.u32 %v5164, 16
        %v5486 = vrot.slane %v5484, 5
        %v5487 = vor.u32 %v5483, %v5486
        %v5488 = vrot.slane %v5487, 4
        %v5490 = vshll.u32 %v5165, 16
        %v5492 = vrot.slane %v5490, 5
        %v5493 = vsel %vm302, %v5488, %v5492
        %v5495 = vshrl.u32 %v5166, 16
        %v5497 = vrot.slane %v5495, 4
        %v5498 = vshll.u32 %v5166, 16
        %v5500 = vrot.slane %v5498, 5
        %v5501 = vor.u32 %v5497, %v5500
        %v5502 = vrot.slane %v5501, 4
        %v5504 = vshll.u32 %v5167, 16
        %v5506 = vrot.slane %v5504, 5
        %v5507 = vsel %vm302, %v5502, %v5506
        %v5509 = vshrl.u32 %v5168, 16
        %v5511 = vrot.slane %v5509, 4
        %v5512 = vshll.u32 %v5168, 16
        %v5514 = vrot.slane %v5512, 5
        %v5515 = vor.u32 %v5511, %v5514
        %v5516 = vrot.slane %v5515, 4
        %v5518 = vshll.u32 %v5169, 16
        %v5520 = vrot.slane %v5518, 5
        %v5521 = vsel %vm302, %v5516, %v5520
        %v5523 = vshrl.u32 %v5170, 16
        %v5525 = vrot.slane %v5523, 4
        %v5526 = vshll.u32 %v5170, 16
        %v5528 = vrot.slane %v5526, 5
        %v5529 = vor.u32 %v5525, %v5528
        %v5530 = vrot.slane %v5529, 4
        %v5532 = vshll.u32 %v5171, 16
        %v5534 = vrot.slane %v5532, 5
        %v5535 = vsel %vm302, %v5530, %v5534
        %v5537 = vshrl.u32 %v5172, 16
        %v5539 = vrot.slane %v5537, 4
        %v5540 = vshll.u32 %v5172, 16
        %v5542 = vrot.slane %v5540, 5
        %v5543 = vor.u32 %v5539, %v5542
        %v5544 = vrot.slane %v5543, 4
        %v5546 = vshll.u32 %v5173, 16
        %v5548 = vrot.slane %v5546, 5
        %v5549 = vsel %vm302, %v5544, %v5548
        %v5551 = vshrl.u32 %v5174, 16
        %v5553 = vrot.slane %v5551, 4
        %v5554 = vshll.u32 %v5174, 16
        %v5556 = vrot.slane %v5554, 5
        %v5557 = vor.u32 %v5553, %v5556
        %v5558 = vrot.slane %v5557, 4
        %v5560 = vshll.u32 %v5175, 16
        %v5562 = vrot.slane %v5560, 5
        %v5563 = vsel %vm302, %v5558, %v5562
        %v5565 = vshrl.u32 %v5176, 16
        %v5567 = vrot.slane %v5565, 4
        %v5568 = vshll.u32 %v5176, 16
        %v5570 = vrot.slane %v5568, 5
        %v5571 = vor.u32 %v5567, %v5570
        %v5572 = vrot.slane %v5571, 4
        %v5574 = vshll.u32 %v5177, 16
        %v5576 = vrot.slane %v5574, 5
        %v5577 = vsel %vm302, %v5572, %v5576
        %v5579 = vshrl.u32 %v5178, 16
        %v5581 = vrot.slane %v5579, 4
        %v5582 = vshll.u32 %v5178, 16
        %v5584 = vrot.slane %v5582, 5
        %v5585 = vor.u32 %v5581, %v5584
        %v5586 = vrot.slane %v5585, 4
        %v5588 = vshll.u32 %v5179, 16
        %v5590 = vrot.slane %v5588, 5
        %v5591 = vsel %vm302, %v5586, %v5590
        %v5593 = vshrl.u32 %v5180, 16
        %v5595 = vrot.slane %v5593, 4
        %v5596 = vshll.u32 %v5180, 16
        %v5598 = vrot.slane %v5596, 5
        %v5599 = vor.u32 %v5595, %v5598
        %v5600 = vrot.slane %v5599, 4
        %v5602 = vshll.u32 %v5181, 16
        %v5604 = vrot.slane %v5602, 5
        %v5605 = vsel %vm302, %v5600, %v5604
        %v5607 = vshrl.u32 %v5182, 16
        %v5609 = vrot.slane %v5607, 4
        %v5610 = vshll.u32 %v5182, 16
        %v5612 = vrot.slane %v5610, 5
        %v5613 = vor.u32 %v5609, %v5612
        %v5614 = vrot.slane %v5613, 4
        %v5616 = vshll.u32 %v5183, 16
        %v5618 = vrot.slane %v5616, 5
        %v5619 = vsel %vm302, %v5614, %v5618
        %v5621 = vshrl.u32 %v5184, 16
        %v5623 = vrot.slane %v5621, 4
        %v5624 = vshll.u32 %v5184, 16
        %v5626 = vrot.slane %v5624, 5
        %v5627 = vor.u32 %v5623, %v5626
        %v5628 = vrot.slane %v5627, 4
        %v5630 = vshll.u32 %v5185, 16
        %v5632 = vrot.slane %v5630, 5
        %v5633 = vsel %vm302, %v5628, %v5632
        %5634 = vrot.lane.b32.xlu0 %v5199, 52
        %v5635 = vpop.permute.xlu0 %5634
        %5636 = vrot.lane.b32.xlu0 %v5213, 52
        %v5637 = vpop.permute.xlu0 %5636
        %5638 = vrot.lane.b32.xlu0 %v5227, 52
        %v5639 = vpop.permute.xlu0 %5638
        %5640 = vrot.lane.b32.xlu0 %v5241, 52
        %v5641 = vpop.permute.xlu0 %5640
        %5642 = vrot.lane.b32.xlu0 %v5255, 52
        %v5643 = vpop.permute.xlu0 %5642
        %5644 = vrot.lane.b32.xlu0 %v5269, 52
        %v5645 = vpop.permute.xlu0 %5644
        %5646 = vrot.lane.b32.xlu0 %v5283, 52
        %v5647 = vpop.permute.xlu0 %5646
        %5648 = vrot.lane.b32.xlu0 %v5297, 52
        %v5649 = vpop.permute.xlu0 %5648
        %5650 = vrot.lane.b32.xlu0 %v5311, 52
        %v5651 = vpop.permute.xlu0 %5650
        %5652 = vrot.lane.b32.xlu0 %v5325, 52
        %v5653 = vpop.permute.xlu0 %5652
        %5654 = vrot.lane.b32.xlu0 %v5339, 52
        %v5655 = vpop.permute.xlu0 %5654
        %5656 = vrot.lane.b32.xlu0 %v5353, 52
        %v5657 = vpop.permute.xlu0 %5656
        %5658 = vrot.lane.b32.xlu0 %v5367, 52
        %v5659 = vpop.permute.xlu0 %5658
        %5660 = vrot.lane.b32.xlu0 %v5381, 52
        %v5661 = vpop.permute.xlu0 %5660
        %5662 = vrot.lane.b32.xlu0 %v5395, 52
        %v5663 = vpop.permute.xlu0 %5662
        %5664 = vrot.lane.b32.xlu0 %v5409, 52
        %v5665 = vpop.permute.xlu0 %5664
        %5666 = vrot.lane.b32.xlu0 %v5423, 52
        %v5667 = vpop.permute.xlu0 %5666
        %5668 = vrot.lane.b32.xlu0 %v5437, 52
        %v5669 = vpop.permute.xlu0 %5668
        %5670 = vrot.lane.b32.xlu0 %v5451, 52
        %v5671 = vpop.permute.xlu0 %5670
        %5672 = vrot.lane.b32.xlu0 %v5465, 52
        %v5673 = vpop.permute.xlu0 %5672
        %5674 = vrot.lane.b32.xlu0 %v5479, 52
        %v5675 = vpop.permute.xlu0 %5674
        %5676 = vrot.lane.b32.xlu0 %v5493, 52
        %v5677 = vpop.permute.xlu0 %5676
        %5678 = vrot.lane.b32.xlu0 %v5507, 52
        %v5679 = vpop.permute.xlu0 %5678
        %5680 = vrot.lane.b32.xlu0 %v5521, 52
        %v5681 = vpop.permute.xlu0 %5680
        %5682 = vrot.lane.b32.xlu0 %v5535, 52
        %v5683 = vpop.permute.xlu0 %5682
        %5684 = vrot.lane.b32.xlu0 %v5549, 52
        %v5685 = vpop.permute.xlu0 %5684
        %5686 = vrot.lane.b32.xlu0 %v5563, 52
        %v5687 = vpop.permute.xlu0 %5686
        %5688 = vrot.lane.b32.xlu0 %v5577, 52
        %v5689 = vpop.permute.xlu0 %5688
        %5690 = vrot.lane.b32.xlu0 %v5591, 52
        %v5691 = vpop.permute.xlu0 %5690
        %5692 = vrot.lane.b32.xlu0 %v5605, 52
        %v5693 = vpop.permute.xlu0 %5692
        %5694 = vrot.lane.b32.xlu0 %v5619, 52
        %v5695 = vpop.permute.xlu0 %5694
        %5696 = vrot.lane.b32.xlu0 %v5633, 52
        %v5697 = vpop.permute.xlu0 %5696
        %vm5730 = vcmask 454048
        %5731 = vst.msk [vmem:[#allocation2] sm:$0xf] %vm5730, %v5635
        %5732 = vst.msk [vmem:[#allocation2 + $0x4] sm:$0xf] %vm5730, %v5637
        %5733 = vst.msk [vmem:[#allocation2 + $0x8] sm:$0xf] %vm5730, %v5639
        %5734 = vst.msk [vmem:[#allocation2 + $0xc] sm:$0xf] %vm5730, %v5641
        %5735 = vst.msk [vmem:[#allocation2 + $0x10] sm:$0xf] %vm5730, %v5643
        %5736 = vst.msk [vmem:[#allocation2 + $0x14] sm:$0xf] %vm5730, %v5645
        %5737 = vst.msk [vmem:[#allocation2 + $0x18] sm:$0xf] %vm5730, %v5647
        %5738 = vst.msk [vmem:[#allocation2 + $0x1c] sm:$0xf] %vm5730, %v5649
        %5739 = vst.msk [vmem:[#allocation2 + $0x20] sm:$0xf] %vm5730, %v5651
        %5740 = vst.msk [vmem:[#allocation2 + $0x24] sm:$0xf] %vm5730, %v5653
        %5741 = vst.msk [vmem:[#allocation2 + $0x28] sm:$0xf] %vm5730, %v5655
        %5742 = vst.msk [vmem:[#allocation2 + $0x2c] sm:$0xf] %vm5730, %v5657
        %5743 = vst.msk [vmem:[#allocation2 + $0x30] sm:$0xf] %vm5730, %v5659
        %5744 = vst.msk [vmem:[#allocation2 + $0x34] sm:$0xf] %vm5730, %v5661
        %5745 = vst.msk [vmem:[#allocation2 + $0x38] sm:$0xf] %vm5730, %v5663
        %5746 = vst.msk [vmem:[#allocation2 + $0x3c] sm:$0xf] %vm5730, %v5665
        %5747 = vst.msk [vmem:[#allocation2 + $0x40] sm:$0xf] %vm5730, %v5667
        %5748 = vst.msk [vmem:[#allocation2 + $0x44] sm:$0xf] %vm5730, %v5669
        %5749 = vst.msk [vmem:[#allocation2 + $0x48] sm:$0xf] %vm5730, %v5671
        %5750 = vst.msk [vmem:[#allocation2 + $0x4c] sm:$0xf] %vm5730, %v5673
        %5751 = vst.msk [vmem:[#allocation2 + $0x50] sm:$0xf] %vm5730, %v5675
        %5752 = vst.msk [vmem:[#allocation2 + $0x54] sm:$0xf] %vm5730, %v5677
        %5753 = vst.msk [vmem:[#allocation2 + $0x58] sm:$0xf] %vm5730, %v5679
        %5754 = vst.msk [vmem:[#allocation2 + $0x5c] sm:$0xf] %vm5730, %v5681
        %5755 = vst.msk [vmem:[#allocation2 + $0x60] sm:$0xf] %vm5730, %v5683
        %5756 = vst.msk [vmem:[#allocation2 + $0x64] sm:$0xf] %vm5730, %v5685
        %5757 = vst.msk [vmem:[#allocation2 + $0x68] sm:$0xf] %vm5730, %v5687
        %5758 = vst.msk [vmem:[#allocation2 + $0x6c] sm:$0xf] %vm5730, %v5689
        %5759 = vst.msk [vmem:[#allocation2 + $0x70] sm:$0xf] %vm5730, %v5691
        %5760 = vst.msk [vmem:[#allocation2 + $0x74] sm:$0xf] %vm5730, %v5693
        %5761 = vst.msk [vmem:[#allocation2 + $0x78] sm:$0xf] %vm5730, %v5695
        %5762 = vst.msk [vmem:[#allocation2 + $0x7c] sm:$0xf] %vm5730, %v5697
        %v5763 = vld [vmem:[%s4928] sm:$0xe]
        %v5764 = vld [vmem:[%s4928 + $0x4] sm:$0x1]
        %v5765 = vld [vmem:[%s4928 + $0x8] sm:$0xe]
        %v5766 = vld [vmem:[%s4928 + $0xc] sm:$0x1]
        %v5767 = vld [vmem:[%s4928 + $0x10] sm:$0xe]
        %v5768 = vld [vmem:[%s4928 + $0x14] sm:$0x1]
        %v5769 = vld [vmem:[%s4928 + $0x18] sm:$0xe]
        %v5770 = vld [vmem:[%s4928 + $0x1c] sm:$0x1]
        %v5771 = vld [vmem:[%s4928 + $0x20] sm:$0xe]
        %v5772 = vld [vmem:[%s4928 + $0x24] sm:$0x1]
        %v5773 = vld [vmem:[%s4928 + $0x28] sm:$0xe]
        %v5774 = vld [vmem:[%s4928 + $0x2c] sm:$0x1]
        %v5775 = vld [vmem:[%s4928 + $0x30] sm:$0xe]
        %v5776 = vld [vmem:[%s4928 + $0x34] sm:$0x1]
        %v5777 = vld [vmem:[%s4928 + $0x38] sm:$0xe]
        %v5778 = vld [vmem:[%s4928 + $0x3c] sm:$0x1]
        %v5779 = vld [vmem:[%s4928 + $0x50] sm:$0xe]
        %v5780 = vld [vmem:[%s4928 + $0x54] sm:$0x1]
        %v5781 = vld [vmem:[%s4928 + $0x58] sm:$0xe]
        %v5782 = vld [vmem:[%s4928 + $0x5c] sm:$0x1]
        %v5783 = vld [vmem:[%s4928 + $0x60] sm:$0xe]
        %v5784 = vld [vmem:[%s4928 + $0x64] sm:$0x1]
        %v5785 = vld [vmem:[%s4928 + $0x68] sm:$0xe]
        %v5786 = vld [vmem:[%s4928 + $0x6c] sm:$0x1]
        %v5787 = vld [vmem:[%s4928 + $0x70] sm:$0xe]
        %v5788 = vld [vmem:[%s4928 + $0x74] sm:$0x1]
        %v5789 = vld [vmem:[%s4928 + $0x78] sm:$0xe]
        %v5790 = vld [vmem:[%s4928 + $0x7c] sm:$0x1]
        %v5791 = vld [vmem:[%s4928 + $0x80] sm:$0xe]
        %v5792 = vld [vmem:[%s4928 + $0x84] sm:$0x1]
        %v5793 = vld [vmem:[%s4928 + $0x88] sm:$0xe]
        %v5794 = vld [vmem:[%s4928 + $0x8c] sm:$0x1]
        %v5795 = vld [vmem:[%s4928 + $0xa0] sm:$0xe]
        %v5796 = vld [vmem:[%s4928 + $0xa4] sm:$0x1]
        %v5797 = vld [vmem:[%s4928 + $0xa8] sm:$0xe]
        %v5798 = vld [vmem:[%s4928 + $0xac] sm:$0x1]
        %v5799 = vld [vmem:[%s4928 + $0xb0] sm:$0xe]
        %v5800 = vld [vmem:[%s4928 + $0xb4] sm:$0x1]
        %v5801 = vld [vmem:[%s4928 + $0xb8] sm:$0xe]
        %v5802 = vld [vmem:[%s4928 + $0xbc] sm:$0x1]
        %v5803 = vld [vmem:[%s4928 + $0xc0] sm:$0xe]
        %v5804 = vld [vmem:[%s4928 + $0xc4] sm:$0x1]
        %v5805 = vld [vmem:[%s4928 + $0xc8] sm:$0xe]
        %v5806 = vld [vmem:[%s4928 + $0xcc] sm:$0x1]
        %v5807 = vld [vmem:[%s4928 + $0xd0] sm:$0xe]
        %v5808 = vld [vmem:[%s4928 + $0xd4] sm:$0x1]
        %v5809 = vld [vmem:[%s4928 + $0xd8] sm:$0xe]
        %v5810 = vld [vmem:[%s4928 + $0xdc] sm:$0x1]
        %v5811 = vld [vmem:[%s4928 + $0xf0] sm:$0xe]
        %v5812 = vld [vmem:[%s4928 + $0xf4] sm:$0x1]
        %v5813 = vld [vmem:[%s4928 + $0xf8] sm:$0xe]
        %v5814 = vld [vmem:[%s4928 + $0xfc] sm:$0x1]
        %v5815 = vld [vmem:[%s4928 + $0x100] sm:$0xe]
        %v5816 = vld [vmem:[%s4928 + $0x104] sm:$0x1]
        %v5817 = vld [vmem:[%s4928 + $0x108] sm:$0xe]
        %v5818 = vld [vmem:[%s4928 + $0x10c] sm:$0x1]
        %v5819 = vld [vmem:[%s4928 + $0x110] sm:$0xe]
        %v5820 = vld [vmem:[%s4928 + $0x114] sm:$0x1]
        %v5821 = vld [vmem:[%s4928 + $0x118] sm:$0xe]
        %v5822 = vld [vmem:[%s4928 + $0x11c] sm:$0x1]
        %v5823 = vld [vmem:[%s4928 + $0x120] sm:$0xe]
        %v5824 = vld [vmem:[%s4928 + $0x124] sm:$0x1]
        %v5825 = vld [vmem:[%s4928 + $0x128] sm:$0xe]
        %v5826 = vld [vmem:[%s4928 + $0x12c] sm:$0x1]
        %v5891 = vrot.slane %v5763, 5
        %v5892 = vrot.slane %v5891, 4
        %v5893 = vrot.slane %v5764, 5
        %v5894 = vsel %vm1010, %v5892, %v5893
        %v5895 = vrot.slane %v5765, 5
        %v5896 = vrot.slane %v5895, 4
        %v5897 = vrot.slane %v5766, 5
        %v5898 = vsel %vm1010, %v5896, %v5897
        %v5899 = vrot.slane %v5767, 5
        %v5900 = vrot.slane %v5899, 4
        %v5901 = vrot.slane %v5768, 5
        %v5902 = vsel %vm1010, %v5900, %v5901
        %v5903 = vrot.slane %v5769, 5
        %v5904 = vrot.slane %v5903, 4
        %v5905 = vrot.slane %v5770, 5
        %v5906 = vsel %vm1010, %v5904, %v5905
        %v5907 = vrot.slane %v5771, 5
        %v5908 = vrot.slane %v5907, 4
        %v5909 = vrot.slane %v5772, 5
        %v5910 = vsel %vm1010, %v5908, %v5909
        %v5911 = vrot.slane %v5773, 5
        %v5912 = vrot.slane %v5911, 4
        %v5913 = vrot.slane %v5774, 5
        %v5914 = vsel %vm1010, %v5912, %v5913
        %v5915 = vrot.slane %v5775, 5
        %v5916 = vrot.slane %v5915, 4
        %v5917 = vrot.slane %v5776, 5
        %v5918 = vsel %vm1010, %v5916, %v5917
        %v5919 = vrot.slane %v5777, 5
        %v5920 = vrot.slane %v5919, 4
        %v5921 = vrot.slane %v5778, 5
        %v5922 = vsel %vm1010, %v5920, %v5921
        %v5923 = vrot.slane %v5779, 5
        %v5924 = vrot.slane %v5923, 4
        %v5925 = vrot.slane %v5780, 5
        %v5926 = vsel %vm1010, %v5924, %v5925
        %v5927 = vrot.slane %v5781, 5
        %v5928 = vrot.slane %v5927, 4
        %v5929 = vrot.slane %v5782, 5
        %v5930 = vsel %vm1010, %v5928, %v5929
        %v5931 = vrot.slane %v5783, 5
        %v5932 = vrot.slane %v5931, 4
        %v5933 = vrot.slane %v5784, 5
        %v5934 = vsel %vm1010, %v5932, %v5933
        %v5935 = vrot.slane %v5785, 5
        %v5936 = vrot.slane %v5935, 4
        %v5937 = vrot.slane %v5786, 5
        %v5938 = vsel %vm1010, %v5936, %v5937
        %v5939 = vrot.slane %v5787, 5
        %v5940 = vrot.slane %v5939, 4
        %v5941 = vrot.slane %v5788, 5
        %v5942 = vsel %vm1010, %v5940, %v5941
        %v5943 = vrot.slane %v5789, 5
        %v5944 = vrot.slane %v5943, 4
        %v5945 = vrot.slane %v5790, 5
        %v5946 = vsel %vm1010, %v5944, %v5945
        %v5947 = vrot.slane %v5791, 5
        %v5948 = vrot.slane %v5947, 4
        %v5949 = vrot.slane %v5792, 5
        %v5950 = vsel %vm1010, %v5948, %v5949
        %v5951 = vrot.slane %v5793, 5
        %v5952 = vrot.slane %v5951, 4
        %v5953 = vrot.slane %v5794, 5
        %v5954 = vsel %vm1010, %v5952, %v5953
        %v5955 = vrot.slane %v5795, 5
        %v5956 = vrot.slane %v5955, 4
        %v5957 = vrot.slane %v5796, 5
        %v5958 = vsel %vm1010, %v5956, %v5957
        %v5959 = vrot.slane %v5797, 5
        %v5960 = vrot.slane %v5959, 4
        %v5961 = vrot.slane %v5798, 5
        %v5962 = vsel %vm1010, %v5960, %v5961
        %v5963 = vrot.slane %v5799, 5
        %v5964 = vrot.slane %v5963, 4
        %v5965 = vrot.slane %v5800, 5
        %v5966 = vsel %vm1010, %v5964, %v5965
        %v5967 = vrot.slane %v5801, 5
        %v5968 = vrot.slane %v5967, 4
        %v5969 = vrot.slane %v5802, 5
        %v5970 = vsel %vm1010, %v5968, %v5969
        %v5971 = vrot.slane %v5803, 5
        %v5972 = vrot.slane %v5971, 4
        %v5973 = vrot.slane %v5804, 5
        %v5974 = vsel %vm1010, %v5972, %v5973
        %v5975 = vrot.slane %v5805, 5
        %v5976 = vrot.slane %v5975, 4
        %v5977 = vrot.slane %v5806, 5
        %v5978 = vsel %vm1010, %v5976, %v5977
        %v5979 = vrot.slane %v5807, 5
        %v5980 = vrot.slane %v5979, 4
        %v5981 = vrot.slane %v5808, 5
        %v5982 = vsel %vm1010, %v5980, %v5981
        %v5983 = vrot.slane %v5809, 5
        %v5984 = vrot.slane %v5983, 4
        %v5985 = vrot.slane %v5810, 5
        %v5986 = vsel %vm1010, %v5984, %v5985
        %v5987 = vrot.slane %v5811, 5
        %v5988 = vrot.slane %v5987, 4
        %v5989 = vrot.slane %v5812, 5
        %v5990 = vsel %vm1010, %v5988, %v5989
        %v5991 = vrot.slane %v5813, 5
        %v5992 = vrot.slane %v5991, 4
        %v5993 = vrot.slane %v5814, 5
        %v5994 = vsel %vm1010, %v5992, %v5993
        %v5995 = vrot.slane %v5815, 5
        %v5996 = vrot.slane %v5995, 4
        %v5997 = vrot.slane %v5816, 5
        %v5998 = vsel %vm1010, %v5996, %v5997
        %v5999 = vrot.slane %v5817, 5
        %v6000 = vrot.slane %v5999, 4
        %v6001 = vrot.slane %v5818, 5
        %v6002 = vsel %vm1010, %v6000, %v6001
        %v6003 = vrot.slane %v5819, 5
        %v6004 = vrot.slane %v6003, 4
        %v6005 = vrot.slane %v5820, 5
        %v6006 = vsel %vm1010, %v6004, %v6005
        %v6007 = vrot.slane %v5821, 5
        %v6008 = vrot.slane %v6007, 4
        %v6009 = vrot.slane %v5822, 5
        %v6010 = vsel %vm1010, %v6008, %v6009
        %v6011 = vrot.slane %v5823, 5
        %v6012 = vrot.slane %v6011, 4
        %v6013 = vrot.slane %v5824, 5
        %v6014 = vsel %vm1010, %v6012, %v6013
        %v6015 = vrot.slane %v5825, 5
        %v6016 = vrot.slane %v6015, 4
        %v6017 = vrot.slane %v5826, 5
        %v6018 = vsel %vm1010, %v6016, %v6017
        %6019 = vrot.lane.b32.xlu0 %v5894, 56
        %v6020 = vpop.permute.xlu0 %6019
        %6021 = vrot.lane.b32.xlu0 %v5898, 56
        %v6022 = vpop.permute.xlu0 %6021
        %6023 = vrot.lane.b32.xlu0 %v5902, 56
        %v6024 = vpop.permute.xlu0 %6023
        %6025 = vrot.lane.b32.xlu0 %v5906, 56
        %v6026 = vpop.permute.xlu0 %6025
        %6027 = vrot.lane.b32.xlu0 %v5910, 56
        %v6028 = vpop.permute.xlu0 %6027
        %6029 = vrot.lane.b32.xlu0 %v5914, 56
        %v6030 = vpop.permute.xlu0 %6029
        %6031 = vrot.lane.b32.xlu0 %v5918, 56
        %v6032 = vpop.permute.xlu0 %6031
        %6033 = vrot.lane.b32.xlu0 %v5922, 56
        %v6034 = vpop.permute.xlu0 %6033
        %6035 = vrot.lane.b32.xlu0 %v5926, 56
        %v6036 = vpop.permute.xlu0 %6035
        %6037 = vrot.lane.b32.xlu0 %v5930, 56
        %v6038 = vpop.permute.xlu0 %6037
        %6039 = vrot.lane.b32.xlu0 %v5934, 56
        %v6040 = vpop.permute.xlu0 %6039
        %6041 = vrot.lane.b32.xlu0 %v5938, 56
        %v6042 = vpop.permute.xlu0 %6041
        %6043 = vrot.lane.b32.xlu0 %v5942, 56
        %v6044 = vpop.permute.xlu0 %6043
        %6045 = vrot.lane.b32.xlu0 %v5946, 56
        %v6046 = vpop.permute.xlu0 %6045
        %6047 = vrot.lane.b32.xlu0 %v5950, 56
        %v6048 = vpop.permute.xlu0 %6047
        %6049 = vrot.lane.b32.xlu0 %v5954, 56
        %v6050 = vpop.permute.xlu0 %6049
        %6051 = vrot.lane.b32.xlu0 %v5958, 56
        %v6052 = vpop.permute.xlu0 %6051
        %6053 = vrot.lane.b32.xlu0 %v5962, 56
        %v6054 = vpop.permute.xlu0 %6053
        %6055 = vrot.lane.b32.xlu0 %v5966, 56
        %v6056 = vpop.permute.xlu0 %6055
        %6057 = vrot.lane.b32.xlu0 %v5970, 56
        %v6058 = vpop.permute.xlu0 %6057
        %6059 = vrot.lane.b32.xlu0 %v5974, 56
        %v6060 = vpop.permute.xlu0 %6059
        %6061 = vrot.lane.b32.xlu0 %v5978, 56
        %v6062 = vpop.permute.xlu0 %6061
        %6063 = vrot.lane.b32.xlu0 %v5982, 56
        %v6064 = vpop.permute.xlu0 %6063
        %6065 = vrot.lane.b32.xlu0 %v5986, 56
        %v6066 = vpop.permute.xlu0 %6065
        %6067 = vrot.lane.b32.xlu0 %v5990, 56
        %v6068 = vpop.permute.xlu0 %6067
        %6069 = vrot.lane.b32.xlu0 %v5994, 56
        %v6070 = vpop.permute.xlu0 %6069
        %6071 = vrot.lane.b32.xlu0 %v5998, 56
        %v6072 = vpop.permute.xlu0 %6071
        %6073 = vrot.lane.b32.xlu0 %v6002, 56
        %v6074 = vpop.permute.xlu0 %6073
        %6075 = vrot.lane.b32.xlu0 %v6006, 56
        %v6076 = vpop.permute.xlu0 %6075
        %6077 = vrot.lane.b32.xlu0 %v6010, 56
        %v6078 = vpop.permute.xlu0 %6077
        %6079 = vrot.lane.b32.xlu0 %v6014, 56
        %v6080 = vpop.permute.xlu0 %6079
        %6081 = vrot.lane.b32.xlu0 %v6018, 56
        %v6082 = vpop.permute.xlu0 %6081
        %vm6115 = vcmask 486848
        %6116 = vst.msk [vmem:[#allocation2] sm:$0xf] %vm6115, %v6020
        %6117 = vst.msk [vmem:[#allocation2 + $0x4] sm:$0xf] %vm6115, %v6022
        %6118 = vst.msk [vmem:[#allocation2 + $0x8] sm:$0xf] %vm6115, %v6024
        %6119 = vst.msk [vmem:[#allocation2 + $0xc] sm:$0xf] %vm6115, %v6026
        %6120 = vst.msk [vmem:[#allocation2 + $0x10] sm:$0xf] %vm6115, %v6028
        %6121 = vst.msk [vmem:[#allocation2 + $0x14] sm:$0xf] %vm6115, %v6030
        %6122 = vst.msk [vmem:[#allocation2 + $0x18] sm:$0xf] %vm6115, %v6032
        %6123 = vst.msk [vmem:[#allocation2 + $0x1c] sm:$0xf] %vm6115, %v6034
        %6124 = vst.msk [vmem:[#allocation2 + $0x20] sm:$0xf] %vm6115, %v6036
        %6125 = vst.msk [vmem:[#allocation2 + $0x24] sm:$0xf] %vm6115, %v6038
        %6126 = vst.msk [vmem:[#allocation2 + $0x28] sm:$0xf] %vm6115, %v6040
        %6127 = vst.msk [vmem:[#allocation2 + $0x2c] sm:$0xf] %vm6115, %v6042
        %6128 = vst.msk [vmem:[#allocation2 + $0x30] sm:$0xf] %vm6115, %v6044
        %6129 = vst.msk [vmem:[#allocation2 + $0x34] sm:$0xf] %vm6115, %v6046
        %6130 = vst.msk [vmem:[#allocation2 + $0x38] sm:$0xf] %vm6115, %v6048
        %6131 = vst.msk [vmem:[#allocation2 + $0x3c] sm:$0xf] %vm6115, %v6050
        %6132 = vst.msk [vmem:[#allocation2 + $0x40] sm:$0xf] %vm6115, %v6052
        %6133 = vst.msk [vmem:[#allocation2 + $0x44] sm:$0xf] %vm6115, %v6054
        %6134 = vst.msk [vmem:[#allocation2 + $0x48] sm:$0xf] %vm6115, %v6056
        %6135 = vst.msk [vmem:[#allocation2 + $0x4c] sm:$0xf] %vm6115, %v6058
        %6136 = vst.msk [vmem:[#allocation2 + $0x50] sm:$0xf] %vm6115, %v6060
        %6137 = vst.msk [vmem:[#allocation2 + $0x54] sm:$0xf] %vm6115, %v6062
        %6138 = vst.msk [vmem:[#allocation2 + $0x58] sm:$0xf] %vm6115, %v6064
        %6139 = vst.msk [vmem:[#allocation2 + $0x5c] sm:$0xf] %vm6115, %v6066
        %6140 = vst.msk [vmem:[#allocation2 + $0x60] sm:$0xf] %vm6115, %v6068
        %6141 = vst.msk [vmem:[#allocation2 + $0x64] sm:$0xf] %vm6115, %v6070
        %6142 = vst.msk [vmem:[#allocation2 + $0x68] sm:$0xf] %vm6115, %v6072
        %6143 = vst.msk [vmem:[#allocation2 + $0x6c] sm:$0xf] %vm6115, %v6074
        %6144 = vst.msk [vmem:[#allocation2 + $0x70] sm:$0xf] %vm6115, %v6076
        %6145 = vst.msk [vmem:[#allocation2 + $0x74] sm:$0xf] %vm6115, %v6078
        %6146 = vst.msk [vmem:[#allocation2 + $0x78] sm:$0xf] %vm6115, %v6080
        %6147 = vst.msk [vmem:[#allocation2 + $0x7c] sm:$0xf] %vm6115, %v6082
        %s6148 = scalar_lea.vmem %s168, 96
        %v6149 = vld [vmem:[%s6148] sm:$0xf]
        %v6150 = vld [vmem:[%s6148 + $0x8] sm:$0xf]
        %v6151 = vld [vmem:[%s6148 + $0x10] sm:$0xf]
        %v6152 = vld [vmem:[%s6148 + $0x18] sm:$0xf]
        %v6153 = vld [vmem:[%s6148 + $0x20] sm:$0xf]
        %v6154 = vld [vmem:[%s6148 + $0x28] sm:$0xf]
        %v6155 = vld [vmem:[%s6148 + $0x30] sm:$0xf]
        %v6156 = vld [vmem:[%s6148 + $0x38] sm:$0xf]
        %v6157 = vld [vmem:[%s6148 + $0x50] sm:$0xf]
        %v6158 = vld [vmem:[%s6148 + $0x58] sm:$0xf]
        %v6159 = vld [vmem:[%s6148 + $0x60] sm:$0xf]
        %v6160 = vld [vmem:[%s6148 + $0x68] sm:$0xf]
        %v6161 = vld [vmem:[%s6148 + $0x70] sm:$0xf]
        %v6162 = vld [vmem:[%s6148 + $0x78] sm:$0xf]
        %v6163 = vld [vmem:[%s6148 + $0x80] sm:$0xf]
        %v6164 = vld [vmem:[%s6148 + $0x88] sm:$0xf]
        %v6165 = vld [vmem:[%s6148 + $0xa0] sm:$0xf]
        %v6166 = vld [vmem:[%s6148 + $0xa8] sm:$0xf]
        %v6167 = vld [vmem:[%s6148 + $0xb0] sm:$0xf]
        %v6168 = vld [vmem:[%s6148 + $0xb8] sm:$0xf]
        %v6169 = vld [vmem:[%s6148 + $0xc0] sm:$0xf]
        %v6170 = vld [vmem:[%s6148 + $0xc8] sm:$0xf]
        %v6171 = vld [vmem:[%s6148 + $0xd0] sm:$0xf]
        %v6172 = vld [vmem:[%s6148 + $0xd8] sm:$0xf]
        %v6173 = vld [vmem:[%s6148 + $0xf0] sm:$0xf]
        %v6174 = vld [vmem:[%s6148 + $0xf8] sm:$0xf]
        %v6175 = vld [vmem:[%s6148 + $0x100] sm:$0xf]
        %v6176 = vld [vmem:[%s6148 + $0x108] sm:$0xf]
        %v6177 = vld [vmem:[%s6148 + $0x110] sm:$0xf]
        %v6178 = vld [vmem:[%s6148 + $0x118] sm:$0xf]
        %v6179 = vld [vmem:[%s6148 + $0x120] sm:$0xf]
        %v6180 = vld [vmem:[%s6148 + $0x128] sm:$0xf]
        %6213 = vrot.lane.b32.xlu0 %v6149, 60
        %v6214 = vpop.permute.xlu0 %6213
        %6215 = vrot.lane.b32.xlu0 %v6150, 60
        %v6216 = vpop.permute.xlu0 %6215
        %6217 = vrot.lane.b32.xlu0 %v6151, 60
        %v6218 = vpop.permute.xlu0 %6217
        %6219 = vrot.lane.b32.xlu0 %v6152, 60
        %v6220 = vpop.permute.xlu0 %6219
        %6221 = vrot.lane.b32.xlu0 %v6153, 60
        %v6222 = vpop.permute.xlu0 %6221
        %6223 = vrot.lane.b32.xlu0 %v6154, 60
        %v6224 = vpop.permute.xlu0 %6223
        %6225 = vrot.lane.b32.xlu0 %v6155, 60
        %v6226 = vpop.permute.xlu0 %6225
        %6227 = vrot.lane.b32.xlu0 %v6156, 60
        %v6228 = vpop.permute.xlu0 %6227
        %6229 = vrot.lane.b32.xlu0 %v6157, 60
        %v6230 = vpop.permute.xlu0 %6229
        %6231 = vrot.lane.b32.xlu0 %v6158, 60
        %v6232 = vpop.permute.xlu0 %6231
        %6233 = vrot.lane.b32.xlu0 %v6159, 60
        %v6234 = vpop.permute.xlu0 %6233
        %6235 = vrot.lane.b32.xlu0 %v6160, 60
        %v6236 = vpop.permute.xlu0 %6235
        %6237 = vrot.lane.b32.xlu0 %v6161, 60
        %v6238 = vpop.permute.xlu0 %6237
        %6239 = vrot.lane.b32.xlu0 %v6162, 60
        %v6240 = vpop.permute.xlu0 %6239
        %6241 = vrot.lane.b32.xlu0 %v6163, 60
        %v6242 = vpop.permute.xlu0 %6241
        %6243 = vrot.lane.b32.xlu0 %v6164, 60
        %v6244 = vpop.permute.xlu0 %6243
        %6245 = vrot.lane.b32.xlu0 %v6165, 60
        %v6246 = vpop.permute.xlu0 %6245
        %6247 = vrot.lane.b32.xlu0 %v6166, 60
        %v6248 = vpop.permute.xlu0 %6247
        %6249 = vrot.lane.b32.xlu0 %v6167, 60
        %v6250 = vpop.permute.xlu0 %6249
        %6251 = vrot.lane.b32.xlu0 %v6168, 60
        %v6252 = vpop.permute.xlu0 %6251
        %6253 = vrot.lane.b32.xlu0 %v6169, 60
        %v6254 = vpop.permute.xlu0 %6253
        %6255 = vrot.lane.b32.xlu0 %v6170, 60
        %v6256 = vpop.permute.xlu0 %6255
        %6257 = vrot.lane.b32.xlu0 %v6171, 60
        %v6258 = vpop.permute.xlu0 %6257
        %6259 = vrot.lane.b32.xlu0 %v6172, 60
        %v6260 = vpop.permute.xlu0 %6259
        %6261 = vrot.lane.b32.xlu0 %v6173, 60
        %v6262 = vpop.permute.xlu0 %6261
        %6263 = vrot.lane.b32.xlu0 %v6174, 60
        %v6264 = vpop.permute.xlu0 %6263
        %6265 = vrot.lane.b32.xlu0 %v6175, 60
        %v6266 = vpop.permute.xlu0 %6265
        %6267 = vrot.lane.b32.xlu0 %v6176, 60
        %v6268 = vpop.permute.xlu0 %6267
        %6269 = vrot.lane.b32.xlu0 %v6177, 60
        %v6270 = vpop.permute.xlu0 %6269
        %6271 = vrot.lane.b32.xlu0 %v6178, 60
        %v6272 = vpop.permute.xlu0 %6271
        %6273 = vrot.lane.b32.xlu0 %v6179, 60
        %v6274 = vpop.permute.xlu0 %6273
        %6275 = vrot.lane.b32.xlu0 %v6180, 60
        %v6276 = vpop.permute.xlu0 %6275
        %vm6309 = vcmask 519648
        %6310 = vst.msk [vmem:[#allocation2] sm:$0xf] %vm6309, %v6214
        %6311 = vst.msk [vmem:[#allocation2 + $0x4] sm:$0xf] %vm6309, %v6216
        %6312 = vst.msk [vmem:[#allocation2 + $0x8] sm:$0xf] %vm6309, %v6218
        %6313 = vst.msk [vmem:[#allocation2 + $0xc] sm:$0xf] %vm6309, %v6220
        %6314 = vst.msk [vmem:[#allocation2 + $0x10] sm:$0xf] %vm6309, %v6222
        %6315 = vst.msk [vmem:[#allocation2 + $0x14] sm:$0xf] %vm6309, %v6224
        %6316 = vst.msk [vmem:[#allocation2 + $0x18] sm:$0xf] %vm6309, %v6226
        %6317 = vst.msk [vmem:[#allocation2 + $0x1c] sm:$0xf] %vm6309, %v6228
        %6318 = vst.msk [vmem:[#allocation2 + $0x20] sm:$0xf] %vm6309, %v6230
        %6319 = vst.msk [vmem:[#allocation2 + $0x24] sm:$0xf] %vm6309, %v6232
        %6320 = vst.msk [vmem:[#allocation2 + $0x28] sm:$0xf] %vm6309, %v6234
        %6321 = vst.msk [vmem:[#allocation2 + $0x2c] sm:$0xf] %vm6309, %v6236
        %6322 = vst.msk [vmem:[#allocation2 + $0x30] sm:$0xf] %vm6309, %v6238
        %6323 = vst.msk [vmem:[#allocation2 + $0x34] sm:$0xf] %vm6309, %v6240
        %6324 = vst.msk [vmem:[#allocation2 + $0x38] sm:$0xf] %vm6309, %v6242
        %6325 = vst.msk [vmem:[#allocation2 + $0x3c] sm:$0xf] %vm6309, %v6244
        %6326 = vst.msk [vmem:[#allocation2 + $0x40] sm:$0xf] %vm6309, %v6246
        %6327 = vst.msk [vmem:[#allocation2 + $0x44] sm:$0xf] %vm6309, %v6248
        %6328 = vst.msk [vmem:[#allocation2 + $0x48] sm:$0xf] %vm6309, %v6250
        %6329 = vst.msk [vmem:[#allocation2 + $0x4c] sm:$0xf] %vm6309, %v6252
        %6330 = vst.msk [vmem:[#allocation2 + $0x50] sm:$0xf] %vm6309, %v6254
        %6331 = vst.msk [vmem:[#allocation2 + $0x54] sm:$0xf] %vm6309, %v6256
        %6332 = vst.msk [vmem:[#allocation2 + $0x58] sm:$0xf] %vm6309, %v6258
        %6333 = vst.msk [vmem:[#allocation2 + $0x5c] sm:$0xf] %vm6309, %v6260
        %6334 = vst.msk [vmem:[#allocation2 + $0x60] sm:$0xf] %vm6309, %v6262
        %6335 = vst.msk [vmem:[#allocation2 + $0x64] sm:$0xf] %vm6309, %v6264
        %6336 = vst.msk [vmem:[#allocation2 + $0x68] sm:$0xf] %vm6309, %v6266
        %6337 = vst.msk [vmem:[#allocation2 + $0x6c] sm:$0xf] %vm6309, %v6268
        %6338 = vst.msk [vmem:[#allocation2 + $0x70] sm:$0xf] %vm6309, %v6270
        %6339 = vst.msk [vmem:[#allocation2 + $0x74] sm:$0xf] %vm6309, %v6272
        %6340 = vst.msk [vmem:[#allocation2 + $0x78] sm:$0xf] %vm6309, %v6274
        %6341 = vst.msk [vmem:[#allocation2 + $0x7c] sm:$0xf] %vm6309, %v6276
        %v6342 = vld [vmem:[%s6148] sm:$0xf]
        %v6343 = vld [vmem:[%s6148 + $0x4] sm:$0x1]
        %v6344 = vld [vmem:[%s6148 + $0x8] sm:$0xf]
        %v6345 = vld [vmem:[%s6148 + $0xc] sm:$0x1]
        %v6346 = vld [vmem:[%s6148 + $0x10] sm:$0xf]
        %v6347 = vld [vmem:[%s6148 + $0x14] sm:$0x1]
        %v6348 = vld [vmem:[%s6148 + $0x18] sm:$0xf]
        %v6349 = vld [vmem:[%s6148 + $0x1c] sm:$0x1]
        %v6350 = vld [vmem:[%s6148 + $0x20] sm:$0xf]
        %v6351 = vld [vmem:[%s6148 + $0x24] sm:$0x1]
        %v6352 = vld [vmem:[%s6148 + $0x28] sm:$0xf]
        %v6353 = vld [vmem:[%s6148 + $0x2c] sm:$0x1]
        %v6354 = vld [vmem:[%s6148 + $0x30] sm:$0xf]
        %v6355 = vld [vmem:[%s6148 + $0x34] sm:$0x1]
        %v6356 = vld [vmem:[%s6148 + $0x38] sm:$0xf]
        %v6357 = vld [vmem:[%s6148 + $0x3c] sm:$0x1]
        %v6358 = vld [vmem:[%s6148 + $0x50] sm:$0xf]
        %v6359 = vld [vmem:[%s6148 + $0x54] sm:$0x1]
        %v6360 = vld [vmem:[%s6148 + $0x58] sm:$0xf]
        %v6361 = vld [vmem:[%s6148 + $0x5c] sm:$0x1]
        %v6362 = vld [vmem:[%s6148 + $0x60] sm:$0xf]
        %v6363 = vld [vmem:[%s6148 + $0x64] sm:$0x1]
        %v6364 = vld [vmem:[%s6148 + $0x68] sm:$0xf]
        %v6365 = vld [vmem:[%s6148 + $0x6c] sm:$0x1]
        %v6366 = vld [vmem:[%s6148 + $0x70] sm:$0xf]
        %v6367 = vld [vmem:[%s6148 + $0x74] sm:$0x1]
        %v6368 = vld [vmem:[%s6148 + $0x78] sm:$0xf]
        %v6369 = vld [vmem:[%s6148 + $0x7c] sm:$0x1]
        %v6370 = vld [vmem:[%s6148 + $0x80] sm:$0xf]
        %v6371 = vld [vmem:[%s6148 + $0x84] sm:$0x1]
        %v6372 = vld [vmem:[%s6148 + $0x88] sm:$0xf]
        %v6373 = vld [vmem:[%s6148 + $0x8c] sm:$0x1]
        %v6374 = vld [vmem:[%s6148 + $0xa0] sm:$0xf]
        %v6375 = vld [vmem:[%s6148 + $0xa4] sm:$0x1]
        %v6376 = vld [vmem:[%s6148 + $0xa8] sm:$0xf]
        %v6377 = vld [vmem:[%s6148 + $0xac] sm:$0x1]
        %v6378 = vld [vmem:[%s6148 + $0xb0] sm:$0xf]
        %v6379 = vld [vmem:[%s6148 + $0xb4] sm:$0x1]
        %v6380 = vld [vmem:[%s6148 + $0xb8] sm:$0xf]
        %v6381 = vld [vmem:[%s6148 + $0xbc] sm:$0x1]
        %v6382 = vld [vmem:[%s6148 + $0xc0] sm:$0xf]
        %v6383 = vld [vmem:[%s6148 + $0xc4] sm:$0x1]
        %v6384 = vld [vmem:[%s6148 + $0xc8] sm:$0xf]
        %v6385 = vld [vmem:[%s6148 + $0xcc] sm:$0x1]
        %v6386 = vld [vmem:[%s6148 + $0xd0] sm:$0xf]
        %v6387 = vld [vmem:[%s6148 + $0xd4] sm:$0x1]
        %v6388 = vld [vmem:[%s6148 + $0xd8] sm:$0xf]
        %v6389 = vld [vmem:[%s6148 + $0xdc] sm:$0x1]
        %v6390 = vld [vmem:[%s6148 + $0xf0] sm:$0xf]
        %v6391 = vld [vmem:[%s6148 + $0xf4] sm:$0x1]
        %v6392 = vld [vmem:[%s6148 + $0xf8] sm:$0xf]
        %v6393 = vld [vmem:[%s6148 + $0xfc] sm:$0x1]
        %v6394 = vld [vmem:[%s6148 + $0x100] sm:$0xf]
        %v6395 = vld [vmem:[%s6148 + $0x104] sm:$0x1]
        %v6396 = vld [vmem:[%s6148 + $0x108] sm:$0xf]
        %v6397 = vld [vmem:[%s6148 + $0x10c] sm:$0x1]
        %v6398 = vld [vmem:[%s6148 + $0x110] sm:$0xf]
        %v6399 = vld [vmem:[%s6148 + $0x114] sm:$0x1]
        %v6400 = vld [vmem:[%s6148 + $0x118] sm:$0xf]
        %v6401 = vld [vmem:[%s6148 + $0x11c] sm:$0x1]
        %v6402 = vld [vmem:[%s6148 + $0x120] sm:$0xf]
        %v6403 = vld [vmem:[%s6148 + $0x124] sm:$0x1]
        %v6404 = vld [vmem:[%s6148 + $0x128] sm:$0xf]
        %v6405 = vld [vmem:[%s6148 + $0x12c] sm:$0x1]
        %v6407 = vshrl.u32 %v6342, 16
        %v6409 = vrot.slane %v6407, 4
        %v6410 = vshll.u32 %v6342, 16
        %v6412 = vrot.slane %v6410, 5
        %v6413 = vor.u32 %v6409, %v6412
        %v6414 = vrot.slane %v6413, 4
        %v6416 = vshll.u32 %v6343, 16
        %v6418 = vrot.slane %v6416, 5
        %v6419 = vsel %vm302, %v6414, %v6418
        %v6421 = vshrl.u32 %v6344, 16
        %v6423 = vrot.slane %v6421, 4
        %v6424 = vshll.u32 %v6344, 16
        %v6426 = vrot.slane %v6424, 5
        %v6427 = vor.u32 %v6423, %v6426
        %v6428 = vrot.slane %v6427, 4
        %v6430 = vshll.u32 %v6345, 16
        %v6432 = vrot.slane %v6430, 5
        %v6433 = vsel %vm302, %v6428, %v6432
        %v6435 = vshrl.u32 %v6346, 16
        %v6437 = vrot.slane %v6435, 4
        %v6438 = vshll.u32 %v6346, 16
        %v6440 = vrot.slane %v6438, 5
        %v6441 = vor.u32 %v6437, %v6440
        %v6442 = vrot.slane %v6441, 4
        %v6444 = vshll.u32 %v6347, 16
        %v6446 = vrot.slane %v6444, 5
        %v6447 = vsel %vm302, %v6442, %v6446
        %v6449 = vshrl.u32 %v6348, 16
        %v6451 = vrot.slane %v6449, 4
        %v6452 = vshll.u32 %v6348, 16
        %v6454 = vrot.slane %v6452, 5
        %v6455 = vor.u32 %v6451, %v6454
        %v6456 = vrot.slane %v6455, 4
        %v6458 = vshll.u32 %v6349, 16
        %v6460 = vrot.slane %v6458, 5
        %v6461 = vsel %vm302, %v6456, %v6460
        %v6463 = vshrl.u32 %v6350, 16
        %v6465 = vrot.slane %v6463, 4
        %v6466 = vshll.u32 %v6350, 16
        %v6468 = vrot.slane %v6466, 5
        %v6469 = vor.u32 %v6465, %v6468
        %v6470 = vrot.slane %v6469, 4
        %v6472 = vshll.u32 %v6351, 16
        %v6474 = vrot.slane %v6472, 5
        %v6475 = vsel %vm302, %v6470, %v6474
        %v6477 = vshrl.u32 %v6352, 16
        %v6479 = vrot.slane %v6477, 4
        %v6480 = vshll.u32 %v6352, 16
        %v6482 = vrot.slane %v6480, 5
        %v6483 = vor.u32 %v6479, %v6482
        %v6484 = vrot.slane %v6483, 4
        %v6486 = vshll.u32 %v6353, 16
        %v6488 = vrot.slane %v6486, 5
        %v6489 = vsel %vm302, %v6484, %v6488
        %v6491 = vshrl.u32 %v6354, 16
        %v6493 = vrot.slane %v6491, 4
        %v6494 = vshll.u32 %v6354, 16
        %v6496 = vrot.slane %v6494, 5
        %v6497 = vor.u32 %v6493, %v6496
        %v6498 = vrot.slane %v6497, 4
        %v6500 = vshll.u32 %v6355, 16
        %v6502 = vrot.slane %v6500, 5
        %v6503 = vsel %vm302, %v6498, %v6502
        %v6505 = vshrl.u32 %v6356, 16
        %v6507 = vrot.slane %v6505, 4
        %v6508 = vshll.u32 %v6356, 16
        %v6510 = vrot.slane %v6508, 5
        %v6511 = vor.u32 %v6507, %v6510
        %v6512 = vrot.slane %v6511, 4
        %v6514 = vshll.u32 %v6357, 16
        %v6516 = vrot.slane %v6514, 5
        %v6517 = vsel %vm302, %v6512, %v6516
        %v6519 = vshrl.u32 %v6358, 16
        %v6521 = vrot.slane %v6519, 4
        %v6522 = vshll.u32 %v6358, 16
        %v6524 = vrot.slane %v6522, 5
        %v6525 = vor.u32 %v6521, %v6524
        %v6526 = vrot.slane %v6525, 4
        %v6528 = vshll.u32 %v6359, 16
        %v6530 = vrot.slane %v6528, 5
        %v6531 = vsel %vm302, %v6526, %v6530
        %v6533 = vshrl.u32 %v6360, 16
        %v6535 = vrot.slane %v6533, 4
        %v6536 = vshll.u32 %v6360, 16
        %v6538 = vrot.slane %v6536, 5
        %v6539 = vor.u32 %v6535, %v6538
        %v6540 = vrot.slane %v6539, 4
        %v6542 = vshll.u32 %v6361, 16
        %v6544 = vrot.slane %v6542, 5
        %v6545 = vsel %vm302, %v6540, %v6544
        %v6547 = vshrl.u32 %v6362, 16
        %v6549 = vrot.slane %v6547, 4
        %v6550 = vshll.u32 %v6362, 16
        %v6552 = vrot.slane %v6550, 5
        %v6553 = vor.u32 %v6549, %v6552
        %v6554 = vrot.slane %v6553, 4
        %v6556 = vshll.u32 %v6363, 16
        %v6558 = vrot.slane %v6556, 5
        %v6559 = vsel %vm302, %v6554, %v6558
        %v6561 = vshrl.u32 %v6364, 16
        %v6563 = vrot.slane %v6561, 4
        %v6564 = vshll.u32 %v6364, 16
        %v6566 = vrot.slane %v6564, 5
        %v6567 = vor.u32 %v6563, %v6566
        %v6568 = vrot.slane %v6567, 4
        %v6570 = vshll.u32 %v6365, 16
        %v6572 = vrot.slane %v6570, 5
        %v6573 = vsel %vm302, %v6568, %v6572
        %v6575 = vshrl.u32 %v6366, 16
        %v6577 = vrot.slane %v6575, 4
        %v6578 = vshll.u32 %v6366, 16
        %v6580 = vrot.slane %v6578, 5
        %v6581 = vor.u32 %v6577, %v6580
        %v6582 = vrot.slane %v6581, 4
        %v6584 = vshll.u32 %v6367, 16
        %v6586 = vrot.slane %v6584, 5
        %v6587 = vsel %vm302, %v6582, %v6586
        %v6589 = vshrl.u32 %v6368, 16
        %v6591 = vrot.slane %v6589, 4
        %v6592 = vshll.u32 %v6368, 16
        %v6594 = vrot.slane %v6592, 5
        %v6595 = vor.u32 %v6591, %v6594
        %v6596 = vrot.slane %v6595, 4
        %v6598 = vshll.u32 %v6369, 16
        %v6600 = vrot.slane %v6598, 5
        %v6601 = vsel %vm302, %v6596, %v6600
        %v6603 = vshrl.u32 %v6370, 16
        %v6605 = vrot.slane %v6603, 4
        %v6606 = vshll.u32 %v6370, 16
        %v6608 = vrot.slane %v6606, 5
        %v6609 = vor.u32 %v6605, %v6608
        %v6610 = vrot.slane %v6609, 4
        %v6612 = vshll.u32 %v6371, 16
        %v6614 = vrot.slane %v6612, 5
        %v6615 = vsel %vm302, %v6610, %v6614
        %v6617 = vshrl.u32 %v6372, 16
        %v6619 = vrot.slane %v6617, 4
        %v6620 = vshll.u32 %v6372, 16
        %v6622 = vrot.slane %v6620, 5
        %v6623 = vor.u32 %v6619, %v6622
        %v6624 = vrot.slane %v6623, 4
        %v6626 = vshll.u32 %v6373, 16
        %v6628 = vrot.slane %v6626, 5
        %v6629 = vsel %vm302, %v6624, %v6628
        %v6631 = vshrl.u32 %v6374, 16
        %v6633 = vrot.slane %v6631, 4
        %v6634 = vshll.u32 %v6374, 16
        %v6636 = vrot.slane %v6634, 5
        %v6637 = vor.u32 %v6633, %v6636
        %v6638 = vrot.slane %v6637, 4
        %v6640 = vshll.u32 %v6375, 16
        %v6642 = vrot.slane %v6640, 5
        %v6643 = vsel %vm302, %v6638, %v6642
        %v6645 = vshrl.u32 %v6376, 16
        %v6647 = vrot.slane %v6645, 4
        %v6648 = vshll.u32 %v6376, 16
        %v6650 = vrot.slane %v6648, 5
        %v6651 = vor.u32 %v6647, %v6650
        %v6652 = vrot.slane %v6651, 4
        %v6654 = vshll.u32 %v6377, 16
        %v6656 = vrot.slane %v6654, 5
        %v6657 = vsel %vm302, %v6652, %v6656
        %v6659 = vshrl.u32 %v6378, 16
        %v6661 = vrot.slane %v6659, 4
        %v6662 = vshll.u32 %v6378, 16
        %v6664 = vrot.slane %v6662, 5
        %v6665 = vor.u32 %v6661, %v6664
        %v6666 = vrot.slane %v6665, 4
        %v6668 = vshll.u32 %v6379, 16
        %v6670 = vrot.slane %v6668, 5
        %v6671 = vsel %vm302, %v6666, %v6670
        %v6673 = vshrl.u32 %v6380, 16
        %v6675 = vrot.slane %v6673, 4
        %v6676 = vshll.u32 %v6380, 16
        %v6678 = vrot.slane %v6676, 5
        %v6679 = vor.u32 %v6675, %v6678
        %v6680 = vrot.slane %v6679, 4
        %v6682 = vshll.u32 %v6381, 16
        %v6684 = vrot.slane %v6682, 5
        %v6685 = vsel %vm302, %v6680, %v6684
        %v6687 = vshrl.u32 %v6382, 16
        %v6689 = vrot.slane %v6687, 4
        %v6690 = vshll.u32 %v6382, 16
        %v6692 = vrot.slane %v6690, 5
        %v6693 = vor.u32 %v6689, %v6692
        %v6694 = vrot.slane %v6693, 4
        %v6696 = vshll.u32 %v6383, 16
        %v6698 = vrot.slane %v6696, 5
        %v6699 = vsel %vm302, %v6694, %v6698
        %v6701 = vshrl.u32 %v6384, 16
        %v6703 = vrot.slane %v6701, 4
        %v6704 = vshll.u32 %v6384, 16
        %v6706 = vrot.slane %v6704, 5
        %v6707 = vor.u32 %v6703, %v6706
        %v6708 = vrot.slane %v6707, 4
        %v6710 = vshll.u32 %v6385, 16
        %v6712 = vrot.slane %v6710, 5
        %v6713 = vsel %vm302, %v6708, %v6712
        %v6715 = vshrl.u32 %v6386, 16
        %v6717 = vrot.slane %v6715, 4
        %v6718 = vshll.u32 %v6386, 16
        %v6720 = vrot.slane %v6718, 5
        %v6721 = vor.u32 %v6717, %v6720
        %v6722 = vrot.slane %v6721, 4
        %v6724 = vshll.u32 %v6387, 16
        %v6726 = vrot.slane %v6724, 5
        %v6727 = vsel %vm302, %v6722, %v6726
        %v6729 = vshrl.u32 %v6388, 16
        %v6731 = vrot.slane %v6729, 4
        %v6732 = vshll.u32 %v6388, 16
        %v6734 = vrot.slane %v6732, 5
        %v6735 = vor.u32 %v6731, %v6734
        %v6736 = vrot.slane %v6735, 4
        %v6738 = vshll.u32 %v6389, 16
        %v6740 = vrot.slane %v6738, 5
        %v6741 = vsel %vm302, %v6736, %v6740
        %v6743 = vshrl.u32 %v6390, 16
        %v6745 = vrot.slane %v6743, 4
        %v6746 = vshll.u32 %v6390, 16
        %v6748 = vrot.slane %v6746, 5
        %v6749 = vor.u32 %v6745, %v6748
        %v6750 = vrot.slane %v6749, 4
        %v6752 = vshll.u32 %v6391, 16
        %v6754 = vrot.slane %v6752, 5
        %v6755 = vsel %vm302, %v6750, %v6754
        %v6757 = vshrl.u32 %v6392, 16
        %v6759 = vrot.slane %v6757, 4
        %v6760 = vshll.u32 %v6392, 16
        %v6762 = vrot.slane %v6760, 5
        %v6763 = vor.u32 %v6759, %v6762
        %v6764 = vrot.slane %v6763, 4
        %v6766 = vshll.u32 %v6393, 16
        %v6768 = vrot.slane %v6766, 5
        %v6769 = vsel %vm302, %v6764, %v6768
        %v6771 = vshrl.u32 %v6394, 16
        %v6773 = vrot.slane %v6771, 4
        %v6774 = vshll.u32 %v6394, 16
        %v6776 = vrot.slane %v6774, 5
        %v6777 = vor.u32 %v6773, %v6776
        %v6778 = vrot.slane %v6777, 4
        %v6780 = vshll.u32 %v6395, 16
        %v6782 = vrot.slane %v6780, 5
        %v6783 = vsel %vm302, %v6778, %v6782
        %v6785 = vshrl.u32 %v6396, 16
        %v6787 = vrot.slane %v6785, 4
        %v6788 = vshll.u32 %v6396, 16
        %v6790 = vrot.slane %v6788, 5
        %v6791 = vor.u32 %v6787, %v6790
        %v6792 = vrot.slane %v6791, 4
        %v6794 = vshll.u32 %v6397, 16
        %v6796 = vrot.slane %v6794, 5
        %v6797 = vsel %vm302, %v6792, %v6796
        %v6799 = vshrl.u32 %v6398, 16
        %v6801 = vrot.slane %v6799, 4
        %v6802 = vshll.u32 %v6398, 16
        %v6804 = vrot.slane %v6802, 5
        %v6805 = vor.u32 %v6801, %v6804
        %v6806 = vrot.slane %v6805, 4
        %v6808 = vshll.u32 %v6399, 16
        %v6810 = vrot.slane %v6808, 5
        %v6811 = vsel %vm302, %v6806, %v6810
        %v6813 = vshrl.u32 %v6400, 16
        %v6815 = vrot.slane %v6813, 4
        %v6816 = vshll.u32 %v6400, 16
        %v6818 = vrot.slane %v6816, 5
        %v6819 = vor.u32 %v6815, %v6818
        %v6820 = vrot.slane %v6819, 4
        %v6822 = vshll.u32 %v6401, 16
        %v6824 = vrot.slane %v6822, 5
        %v6825 = vsel %vm302, %v6820, %v6824
        %v6827 = vshrl.u32 %v6402, 16
        %v6829 = vrot.slane %v6827, 4
        %v6830 = vshll.u32 %v6402, 16
        %v6832 = vrot.slane %v6830, 5
        %v6833 = vor.u32 %v6829, %v6832
        %v6834 = vrot.slane %v6833, 4
        %v6836 = vshll.u32 %v6403, 16
        %v6838 = vrot.slane %v6836, 5
        %v6839 = vsel %vm302, %v6834, %v6838
        %v6841 = vshrl.u32 %v6404, 16
        %v6843 = vrot.slane %v6841, 4
        %v6844 = vshll.u32 %v6404, 16
        %v6846 = vrot.slane %v6844, 5
        %v6847 = vor.u32 %v6843, %v6846
        %v6848 = vrot.slane %v6847, 4
        %v6850 = vshll.u32 %v6405, 16
        %v6852 = vrot.slane %v6850, 5
        %v6853 = vsel %vm302, %v6848, %v6852
        %6854 = vrot.lane.b32.xlu0 %v6419, 64
        %v6855 = vpop.permute.xlu0 %6854
        %6856 = vrot.lane.b32.xlu0 %v6433, 64
        %v6857 = vpop.permute.xlu0 %6856
        %6858 = vrot.lane.b32.xlu0 %v6447, 64
        %v6859 = vpop.permute.xlu0 %6858
        %6860 = vrot.lane.b32.xlu0 %v6461, 64
        %v6861 = vpop.permute.xlu0 %6860
        %6862 = vrot.lane.b32.xlu0 %v6475, 64
        %v6863 = vpop.permute.xlu0 %6862
        %6864 = vrot.lane.b32.xlu0 %v6489, 64
        %v6865 = vpop.permute.xlu0 %6864
        %6866 = vrot.lane.b32.xlu0 %v6503, 64
        %v6867 = vpop.permute.xlu0 %6866
        %6868 = vrot.lane.b32.xlu0 %v6517, 64
        %v6869 = vpop.permute.xlu0 %6868
        %6870 = vrot.lane.b32.xlu0 %v6531, 64
        %v6871 = vpop.permute.xlu0 %6870
        %6872 = vrot.lane.b32.xlu0 %v6545, 64
        %v6873 = vpop.permute.xlu0 %6872
        %6874 = vrot.lane.b32.xlu0 %v6559, 64
        %v6875 = vpop.permute.xlu0 %6874
        %6876 = vrot.lane.b32.xlu0 %v6573, 64
        %v6877 = vpop.permute.xlu0 %6876
        %6878 = vrot.lane.b32.xlu0 %v6587, 64
        %v6879 = vpop.permute.xlu0 %6878
        %6880 = vrot.lane.b32.xlu0 %v6601, 64
        %v6881 = vpop.permute.xlu0 %6880
        %6882 = vrot.lane.b32.xlu0 %v6615, 64
        %v6883 = vpop.permute.xlu0 %6882
        %6884 = vrot.lane.b32.xlu0 %v6629, 64
        %v6885 = vpop.permute.xlu0 %6884
        %6886 = vrot.lane.b32.xlu0 %v6643, 64
        %v6887 = vpop.permute.xlu0 %6886
        %6888 = vrot.lane.b32.xlu0 %v6657, 64
        %v6889 = vpop.permute.xlu0 %6888
        %6890 = vrot.lane.b32.xlu0 %v6671, 64
        %v6891 = vpop.permute.xlu0 %6890
        %6892 = vrot.lane.b32.xlu0 %v6685, 64
        %v6893 = vpop.permute.xlu0 %6892
        %6894 = vrot.lane.b32.xlu0 %v6699, 64
        %v6895 = vpop.permute.xlu0 %6894
        %6896 = vrot.lane.b32.xlu0 %v6713, 64
        %v6897 = vpop.permute.xlu0 %6896
        %6898 = vrot.lane.b32.xlu0 %v6727, 64
        %v6899 = vpop.permute.xlu0 %6898
        %6900 = vrot.lane.b32.xlu0 %v6741, 64
        %v6901 = vpop.permute.xlu0 %6900
        %6902 = vrot.lane.b32.xlu0 %v6755, 64
        %v6903 = vpop.permute.xlu0 %6902
        %6904 = vrot.lane.b32.xlu0 %v6769, 64
        %v6905 = vpop.permute.xlu0 %6904
        %6906 = vrot.lane.b32.xlu0 %v6783, 64
        %v6907 = vpop.permute.xlu0 %6906
        %6908 = vrot.lane.b32.xlu0 %v6797, 64
        %v6909 = vpop.permute.xlu0 %6908
        %6910 = vrot.lane.b32.xlu0 %v6811, 64
        %v6911 = vpop.permute.xlu0 %6910
        %6912 = vrot.lane.b32.xlu0 %v6825, 64
        %v6913 = vpop.permute.xlu0 %6912
        %6914 = vrot.lane.b32.xlu0 %v6839, 64
        %v6915 = vpop.permute.xlu0 %6914
        %6916 = vrot.lane.b32.xlu0 %v6853, 64
        %v6917 = vpop.permute.xlu0 %6916
        %vm6950 = vcmask 552448
        %6951 = vst.msk [vmem:[#allocation2] sm:$0xf] %vm6950, %v6855
        %6952 = vst.msk [vmem:[#allocation2 + $0x4] sm:$0xf] %vm6950, %v6857
        %6953 = vst.msk [vmem:[#allocation2 + $0x8] sm:$0xf] %vm6950, %v6859
        %6954 = vst.msk [vmem:[#allocation2 + $0xc] sm:$0xf] %vm6950, %v6861
        %6955 = vst.msk [vmem:[#allocation2 + $0x10] sm:$0xf] %vm6950, %v6863
        %6956 = vst.msk [vmem:[#allocation2 + $0x14] sm:$0xf] %vm6950, %v6865
        %6957 = vst.msk [vmem:[#allocation2 + $0x18] sm:$0xf] %vm6950, %v6867
        %6958 = vst.msk [vmem:[#allocation2 + $0x1c] sm:$0xf] %vm6950, %v6869
        %6959 = vst.msk [vmem:[#allocation2 + $0x20] sm:$0xf] %vm6950, %v6871
        %6960 = vst.msk [vmem:[#allocation2 + $0x24] sm:$0xf] %vm6950, %v6873
        %6961 = vst.msk [vmem:[#allocation2 + $0x28] sm:$0xf] %vm6950, %v6875
        %6962 = vst.msk [vmem:[#allocation2 + $0x2c] sm:$0xf] %vm6950, %v6877
        %6963 = vst.msk [vmem:[#allocation2 + $0x30] sm:$0xf] %vm6950, %v6879
        %6964 = vst.msk [vmem:[#allocation2 + $0x34] sm:$0xf] %vm6950, %v6881
        %6965 = vst.msk [vmem:[#allocation2 + $0x38] sm:$0xf] %vm6950, %v6883
        %6966 = vst.msk [vmem:[#allocation2 + $0x3c] sm:$0xf] %vm6950, %v6885
        %6967 = vst.msk [vmem:[#allocation2 + $0x40] sm:$0xf] %vm6950, %v6887
        %6968 = vst.msk [vmem:[#allocation2 + $0x44] sm:$0xf] %vm6950, %v6889
        %6969 = vst.msk [vmem:[#allocation2 + $0x48] sm:$0xf] %vm6950, %v6891
        %6970 = vst.msk [vmem:[#allocation2 + $0x4c] sm:$0xf] %vm6950, %v6893
        %6971 = vst.msk [vmem:[#allocation2 + $0x50] sm:$0xf] %vm6950, %v6895
        %6972 = vst.msk [vmem:[#allocation2 + $0x54] sm:$0xf] %vm6950, %v6897
        %6973 = vst.msk [vmem:[#allocation2 + $0x58] sm:$0xf] %vm6950, %v6899
        %6974 = vst.msk [vmem:[#allocation2 + $0x5c] sm:$0xf] %vm6950, %v6901
        %6975 = vst.msk [vmem:[#allocation2 + $0x60] sm:$0xf] %vm6950, %v6903
        %6976 = vst.msk [vmem:[#allocation2 + $0x64] sm:$0xf] %vm6950, %v6905
        %6977 = vst.msk [vmem:[#allocation2 + $0x68] sm:$0xf] %vm6950, %v6907
        %6978 = vst.msk [vmem:[#allocation2 + $0x6c] sm:$0xf] %vm6950, %v6909
        %6979 = vst.msk [vmem:[#allocation2 + $0x70] sm:$0xf] %vm6950, %v6911
        %6980 = vst.msk [vmem:[#allocation2 + $0x74] sm:$0xf] %vm6950, %v6913
        %6981 = vst.msk [vmem:[#allocation2 + $0x78] sm:$0xf] %vm6950, %v6915
        %6982 = vst.msk [vmem:[#allocation2 + $0x7c] sm:$0xf] %vm6950, %v6917
        %v6983 = vld [vmem:[%s6148] sm:$0xe]
        %v6984 = vld [vmem:[%s6148 + $0x4] sm:$0x1]
        %v6985 = vld [vmem:[%s6148 + $0x8] sm:$0xe]
        %v6986 = vld [vmem:[%s6148 + $0xc] sm:$0x1]
        %v6987 = vld [vmem:[%s6148 + $0x10] sm:$0xe]
        %v6988 = vld [vmem:[%s6148 + $0x14] sm:$0x1]
        %v6989 = vld [vmem:[%s6148 + $0x18] sm:$0xe]
        %v6990 = vld [vmem:[%s6148 + $0x1c] sm:$0x1]
        %v6991 = vld [vmem:[%s6148 + $0x20] sm:$0xe]
        %v6992 = vld [vmem:[%s6148 + $0x24] sm:$0x1]
        %v6993 = vld [vmem:[%s6148 + $0x28] sm:$0xe]
        %v6994 = vld [vmem:[%s6148 + $0x2c] sm:$0x1]
        %v6995 = vld [vmem:[%s6148 + $0x30] sm:$0xe]
        %v6996 = vld [vmem:[%s6148 + $0x34] sm:$0x1]
        %v6997 = vld [vmem:[%s6148 + $0x38] sm:$0xe]
        %v6998 = vld [vmem:[%s6148 + $0x3c] sm:$0x1]
        %v6999 = vld [vmem:[%s6148 + $0x50] sm:$0xe]
        %v7000 = vld [vmem:[%s6148 + $0x54] sm:$0x1]
        %v7001 = vld [vmem:[%s6148 + $0x58] sm:$0xe]
        %v7002 = vld [vmem:[%s6148 + $0x5c] sm:$0x1]
        %v7003 = vld [vmem:[%s6148 + $0x60] sm:$0xe]
        %v7004 = vld [vmem:[%s6148 + $0x64] sm:$0x1]
        %v7005 = vld [vmem:[%s6148 + $0x68] sm:$0xe]
        %v7006 = vld [vmem:[%s6148 + $0x6c] sm:$0x1]
        %v7007 = vld [vmem:[%s6148 + $0x70] sm:$0xe]
        %v7008 = vld [vmem:[%s6148 + $0x74] sm:$0x1]
        %v7009 = vld [vmem:[%s6148 + $0x78] sm:$0xe]
        %v7010 = vld [vmem:[%s6148 + $0x7c] sm:$0x1]
        %v7011 = vld [vmem:[%s6148 + $0x80] sm:$0xe]
        %v7012 = vld [vmem:[%s6148 + $0x84] sm:$0x1]
        %v7013 = vld [vmem:[%s6148 + $0x88] sm:$0xe]
        %v7014 = vld [vmem:[%s6148 + $0x8c] sm:$0x1]
        %v7015 = vld [vmem:[%s6148 + $0xa0] sm:$0xe]
        %v7016 = vld [vmem:[%s6148 + $0xa4] sm:$0x1]
        %v7017 = vld [vmem:[%s6148 + $0xa8] sm:$0xe]
        %v7018 = vld [vmem:[%s6148 + $0xac] sm:$0x1]
        %v7019 = vld [vmem:[%s6148 + $0xb0] sm:$0xe]
        %v7020 = vld [vmem:[%s6148 + $0xb4] sm:$0x1]
        %v7021 = vld [vmem:[%s6148 + $0xb8] sm:$0xe]
        %v7022 = vld [vmem:[%s6148 + $0xbc] sm:$0x1]
        %v7023 = vld [vmem:[%s6148 + $0xc0] sm:$0xe]
        %v7024 = vld [vmem:[%s6148 + $0xc4] sm:$0x1]
        %v7025 = vld [vmem:[%s6148 + $0xc8] sm:$0xe]
        %v7026 = vld [vmem:[%s6148 + $0xcc] sm:$0x1]
        %v7027 = vld [vmem:[%s6148 + $0xd0] sm:$0xe]
        %v7028 = vld [vmem:[%s6148 + $0xd4] sm:$0x1]
        %v7029 = vld [vmem:[%s6148 + $0xd8] sm:$0xe]
        %v7030 = vld [vmem:[%s6148 + $0xdc] sm:$0x1]
        %v7031 = vld [vmem:[%s6148 + $0xf0] sm:$0xe]
        %v7032 = vld [vmem:[%s6148 + $0xf4] sm:$0x1]
        %v7033 = vld [vmem:[%s6148 + $0xf8] sm:$0xe]
        %v7034 = vld [vmem:[%s6148 + $0xfc] sm:$0x1]
        %v7035 = vld [vmem:[%s6148 + $0x100] sm:$0xe]
        %v7036 = vld [vmem:[%s6148 + $0x104] sm:$0x1]
        %v7037 = vld [vmem:[%s6148 + $0x108] sm:$0xe]
        %v7038 = vld [vmem:[%s6148 + $0x10c] sm:$0x1]
        %v7039 = vld [vmem:[%s6148 + $0x110] sm:$0xe]
        %v7040 = vld [vmem:[%s6148 + $0x114] sm:$0x1]
        %v7041 = vld [vmem:[%s6148 + $0x118] sm:$0xe]
        %v7042 = vld [vmem:[%s6148 + $0x11c] sm:$0x1]
        %v7043 = vld [vmem:[%s6148 + $0x120] sm:$0xe]
        %v7044 = vld [vmem:[%s6148 + $0x124] sm:$0x1]
        %v7045 = vld [vmem:[%s6148 + $0x128] sm:$0xe]
        %v7046 = vld [vmem:[%s6148 + $0x12c] sm:$0x1]
        %v7111 = vrot.slane %v6983, 5
        %v7112 = vrot.slane %v7111, 4
        %v7113 = vrot.slane %v6984, 5
        %v7114 = vsel %vm1010, %v7112, %v7113
        %v7115 = vrot.slane %v6985, 5
        %v7116 = vrot.slane %v7115, 4
        %v7117 = vrot.slane %v6986, 5
        %v7118 = vsel %vm1010, %v7116, %v7117
        %v7119 = vrot.slane %v6987, 5
        %v7120 = vrot.slane %v7119, 4
        %v7121 = vrot.slane %v6988, 5
        %v7122 = vsel %vm1010, %v7120, %v7121
        %v7123 = vrot.slane %v6989, 5
        %v7124 = vrot.slane %v7123, 4
        %v7125 = vrot.slane %v6990, 5
        %v7126 = vsel %vm1010, %v7124, %v7125
        %v7127 = vrot.slane %v6991, 5
        %v7128 = vrot.slane %v7127, 4
        %v7129 = vrot.slane %v6992, 5
        %v7130 = vsel %vm1010, %v7128, %v7129
        %v7131 = vrot.slane %v6993, 5
        %v7132 = vrot.slane %v7131, 4
        %v7133 = vrot.slane %v6994, 5
        %v7134 = vsel %vm1010, %v7132, %v7133
        %v7135 = vrot.slane %v6995, 5
        %v7136 = vrot.slane %v7135, 4
        %v7137 = vrot.slane %v6996, 5
        %v7138 = vsel %vm1010, %v7136, %v7137
        %v7139 = vrot.slane %v6997, 5
        %v7140 = vrot.slane %v7139, 4
        %v7141 = vrot.slane %v6998, 5
        %v7142 = vsel %vm1010, %v7140, %v7141
        %v7143 = vrot.slane %v6999, 5
        %v7144 = vrot.slane %v7143, 4
        %v7145 = vrot.slane %v7000, 5
        %v7146 = vsel %vm1010, %v7144, %v7145
        %v7147 = vrot.slane %v7001, 5
        %v7148 = vrot.slane %v7147, 4
        %v7149 = vrot.slane %v7002, 5
        %v7150 = vsel %vm1010, %v7148, %v7149
        %v7151 = vrot.slane %v7003, 5
        %v7152 = vrot.slane %v7151, 4
        %v7153 = vrot.slane %v7004, 5
        %v7154 = vsel %vm1010, %v7152, %v7153
        %v7155 = vrot.slane %v7005, 5
        %v7156 = vrot.slane %v7155, 4
        %v7157 = vrot.slane %v7006, 5
        %v7158 = vsel %vm1010, %v7156, %v7157
        %v7159 = vrot.slane %v7007, 5
        %v7160 = vrot.slane %v7159, 4
        %v7161 = vrot.slane %v7008, 5
        %v7162 = vsel %vm1010, %v7160, %v7161
        %v7163 = vrot.slane %v7009, 5
        %v7164 = vrot.slane %v7163, 4
        %v7165 = vrot.slane %v7010, 5
        %v7166 = vsel %vm1010, %v7164, %v7165
        %v7167 = vrot.slane %v7011, 5
        %v7168 = vrot.slane %v7167, 4
        %v7169 = vrot.slane %v7012, 5
        %v7170 = vsel %vm1010, %v7168, %v7169
        %v7171 = vrot.slane %v7013, 5
        %v7172 = vrot.slane %v7171, 4
        %v7173 = vrot.slane %v7014, 5
        %v7174 = vsel %vm1010, %v7172, %v7173
        %v7175 = vrot.slane %v7015, 5
        %v7176 = vrot.slane %v7175, 4
        %v7177 = vrot.slane %v7016, 5
        %v7178 = vsel %vm1010, %v7176, %v7177
        %v7179 = vrot.slane %v7017, 5
        %v7180 = vrot.slane %v7179, 4
        %v7181 = vrot.slane %v7018, 5
        %v7182 = vsel %vm1010, %v7180, %v7181
        %v7183 = vrot.slane %v7019, 5
        %v7184 = vrot.slane %v7183, 4
        %v7185 = vrot.slane %v7020, 5
        %v7186 = vsel %vm1010, %v7184, %v7185
        %v7187 = vrot.slane %v7021, 5
        %v7188 = vrot.slane %v7187, 4
        %v7189 = vrot.slane %v7022, 5
        %v7190 = vsel %vm1010, %v7188, %v7189
        %v7191 = vrot.slane %v7023, 5
        %v7192 = vrot.slane %v7191, 4
        %v7193 = vrot.slane %v7024, 5
        %v7194 = vsel %vm1010, %v7192, %v7193
        %v7195 = vrot.slane %v7025, 5
        %v7196 = vrot.slane %v7195, 4
        %v7197 = vrot.slane %v7026, 5
        %v7198 = vsel %vm1010, %v7196, %v7197
        %v7199 = vrot.slane %v7027, 5
        %v7200 = vrot.slane %v7199, 4
        %v7201 = vrot.slane %v7028, 5
        %v7202 = vsel %vm1010, %v7200, %v7201
        %v7203 = vrot.slane %v7029, 5
        %v7204 = vrot.slane %v7203, 4
        %v7205 = vrot.slane %v7030, 5
        %v7206 = vsel %vm1010, %v7204, %v7205
        %v7207 = vrot.slane %v7031, 5
        %v7208 = vrot.slane %v7207, 4
        %v7209 = vrot.slane %v7032, 5
        %v7210 = vsel %vm1010, %v7208, %v7209
        %v7211 = vrot.slane %v7033, 5
        %v7212 = vrot.slane %v7211, 4
        %v7213 = vrot.slane %v7034, 5
        %v7214 = vsel %vm1010, %v7212, %v7213
        %v7215 = vrot.slane %v7035, 5
        %v7216 = vrot.slane %v7215, 4
        %v7217 = vrot.slane %v7036, 5
        %v7218 = vsel %vm1010, %v7216, %v7217
        %v7219 = vrot.slane %v7037, 5
        %v7220 = vrot.slane %v7219, 4
        %v7221 = vrot.slane %v7038, 5
        %v7222 = vsel %vm1010, %v7220, %v7221
        %v7223 = vrot.slane %v7039, 5
        %v7224 = vrot.slane %v7223, 4
        %v7225 = vrot.slane %v7040, 5
        %v7226 = vsel %vm1010, %v7224, %v7225
        %v7227 = vrot.slane %v7041, 5
        %v7228 = vrot.slane %v7227, 4
        %v7229 = vrot.slane %v7042, 5
        %v7230 = vsel %vm1010, %v7228, %v7229
        %v7231 = vrot.slane %v7043, 5
        %v7232 = vrot.slane %v7231, 4
        %v7233 = vrot.slane %v7044, 5
        %v7234 = vsel %vm1010, %v7232, %v7233
        %v7235 = vrot.slane %v7045, 5
        %v7236 = vrot.slane %v7235, 4
        %v7237 = vrot.slane %v7046, 5
        %v7238 = vsel %vm1010, %v7236, %v7237
        %7239 = vrot.lane.b32.xlu0 %v7114, 68
        %v7240 = vpop.permute.xlu0 %7239
        %7241 = vrot.lane.b32.xlu0 %v7118, 68
        %v7242 = vpop.permute.xlu0 %7241
        %7243 = vrot.lane.b32.xlu0 %v7122, 68
        %v7244 = vpop.permute.xlu0 %7243
        %7245 = vrot.lane.b32.xlu0 %v7126, 68
        %v7246 = vpop.permute.xlu0 %7245
        %7247 = vrot.lane.b32.xlu0 %v7130, 68
        %v7248 = vpop.permute.xlu0 %7247
        %7249 = vrot.lane.b32.xlu0 %v7134, 68
        %v7250 = vpop.permute.xlu0 %7249
        %7251 = vrot.lane.b32.xlu0 %v7138, 68
        %v7252 = vpop.permute.xlu0 %7251
        %7253 = vrot.lane.b32.xlu0 %v7142, 68
        %v7254 = vpop.permute.xlu0 %7253
        %7255 = vrot.lane.b32.xlu0 %v7146, 68
        %v7256 = vpop.permute.xlu0 %7255
        %7257 = vrot.lane.b32.xlu0 %v7150, 68
        %v7258 = vpop.permute.xlu0 %7257
        %7259 = vrot.lane.b32.xlu0 %v7154, 68
        %v7260 = vpop.permute.xlu0 %7259
        %7261 = vrot.lane.b32.xlu0 %v7158, 68
        %v7262 = vpop.permute.xlu0 %7261
        %7263 = vrot.lane.b32.xlu0 %v7162, 68
        %v7264 = vpop.permute.xlu0 %7263
        %7265 = vrot.lane.b32.xlu0 %v7166, 68
        %v7266 = vpop.permute.xlu0 %7265
        %7267 = vrot.lane.b32.xlu0 %v7170, 68
        %v7268 = vpop.permute.xlu0 %7267
        %7269 = vrot.lane.b32.xlu0 %v7174, 68
        %v7270 = vpop.permute.xlu0 %7269
        %7271 = vrot.lane.b32.xlu0 %v7178, 68
        %v7272 = vpop.permute.xlu0 %7271
        %7273 = vrot.lane.b32.xlu0 %v7182, 68
        %v7274 = vpop.permute.xlu0 %7273
        %7275 = vrot.lane.b32.xlu0 %v7186, 68
        %v7276 = vpop.permute.xlu0 %7275
        %7277 = vrot.lane.b32.xlu0 %v7190, 68
        %v7278 = vpop.permute.xlu0 %7277
        %7279 = vrot.lane.b32.xlu0 %v7194, 68
        %v7280 = vpop.permute.xlu0 %7279
        %7281 = vrot.lane.b32.xlu0 %v7198, 68
        %v7282 = vpop.permute.xlu0 %7281
        %7283 = vrot.lane.b32.xlu0 %v7202, 68
        %v7284 = vpop.permute.xlu0 %7283
        %7285 = vrot.lane.b32.xlu0 %v7206, 68
        %v7286 = vpop.permute.xlu0 %7285
        %7287 = vrot.lane.b32.xlu0 %v7210, 68
        %v7288 = vpop.permute.xlu0 %7287
        %7289 = vrot.lane.b32.xlu0 %v7214, 68
        %v7290 = vpop.permute.xlu0 %7289
        %7291 = vrot.lane.b32.xlu0 %v7218, 68
        %v7292 = vpop.permute.xlu0 %7291
        %7293 = vrot.lane.b32.xlu0 %v7222, 68
        %v7294 = vpop.permute.xlu0 %7293
        %7295 = vrot.lane.b32.xlu0 %v7226, 68
        %v7296 = vpop.permute.xlu0 %7295
        %7297 = vrot.lane.b32.xlu0 %v7230, 68
        %v7298 = vpop.permute.xlu0 %7297
        %7299 = vrot.lane.b32.xlu0 %v7234, 68
        %v7300 = vpop.permute.xlu0 %7299
        %7301 = vrot.lane.b32.xlu0 %v7238, 68
        %v7302 = vpop.permute.xlu0 %7301
        %vm7335 = vcmask 585248
        %7336 = vst.msk [vmem:[#allocation2] sm:$0xf] %vm7335, %v7240
        %7337 = vst.msk [vmem:[#allocation2 + $0x4] sm:$0xf] %vm7335, %v7242
        %7338 = vst.msk [vmem:[#allocation2 + $0x8] sm:$0xf] %vm7335, %v7244
        %7339 = vst.msk [vmem:[#allocation2 + $0xc] sm:$0xf] %vm7335, %v7246
        %7340 = vst.msk [vmem:[#allocation2 + $0x10] sm:$0xf] %vm7335, %v7248
        %7341 = vst.msk [vmem:[#allocation2 + $0x14] sm:$0xf] %vm7335, %v7250
        %7342 = vst.msk [vmem:[#allocation2 + $0x18] sm:$0xf] %vm7335, %v7252
        %7343 = vst.msk [vmem:[#allocation2 + $0x1c] sm:$0xf] %vm7335, %v7254
        %7344 = vst.msk [vmem:[#allocation2 + $0x20] sm:$0xf] %vm7335, %v7256
        %7345 = vst.msk [vmem:[#allocation2 + $0x24] sm:$0xf] %vm7335, %v7258
        %7346 = vst.msk [vmem:[#allocation2 + $0x28] sm:$0xf] %vm7335, %v7260
        %7347 = vst.msk [vmem:[#allocation2 + $0x2c] sm:$0xf] %vm7335, %v7262
        %7348 = vst.msk [vmem:[#allocation2 + $0x30] sm:$0xf] %vm7335, %v7264
        %7349 = vst.msk [vmem:[#allocation2 + $0x34] sm:$0xf] %vm7335, %v7266
        %7350 = vst.msk [vmem:[#allocation2 + $0x38] sm:$0xf] %vm7335, %v7268
        %7351 = vst.msk [vmem:[#allocation2 + $0x3c] sm:$0xf] %vm7335, %v7270
        %7352 = vst.msk [vmem:[#allocation2 + $0x40] sm:$0xf] %vm7335, %v7272
        %7353 = vst.msk [vmem:[#allocation2 + $0x44] sm:$0xf] %vm7335, %v7274
        %7354 = vst.msk [vmem:[#allocation2 + $0x48] sm:$0xf] %vm7335, %v7276
        %7355 = vst.msk [vmem:[#allocation2 + $0x4c] sm:$0xf] %vm7335, %v7278
        %7356 = vst.msk [vmem:[#allocation2 + $0x50] sm:$0xf] %vm7335, %v7280
        %7357 = vst.msk [vmem:[#allocation2 + $0x54] sm:$0xf] %vm7335, %v7282
        %7358 = vst.msk [vmem:[#allocation2 + $0x58] sm:$0xf] %vm7335, %v7284
        %7359 = vst.msk [vmem:[#allocation2 + $0x5c] sm:$0xf] %vm7335, %v7286
        %7360 = vst.msk [vmem:[#allocation2 + $0x60] sm:$0xf] %vm7335, %v7288
        %7361 = vst.msk [vmem:[#allocation2 + $0x64] sm:$0xf] %vm7335, %v7290
        %7362 = vst.msk [vmem:[#allocation2 + $0x68] sm:$0xf] %vm7335, %v7292
        %7363 = vst.msk [vmem:[#allocation2 + $0x6c] sm:$0xf] %vm7335, %v7294
        %7364 = vst.msk [vmem:[#allocation2 + $0x70] sm:$0xf] %vm7335, %v7296
        %7365 = vst.msk [vmem:[#allocation2 + $0x74] sm:$0xf] %vm7335, %v7298
        %7366 = vst.msk [vmem:[#allocation2 + $0x78] sm:$0xf] %vm7335, %v7300
        %7367 = vst.msk [vmem:[#allocation2 + $0x7c] sm:$0xf] %vm7335, %v7302
        %s7368 = scalar_lea.vmem %s168, 160
        %v7369 = vld [vmem:[%s7368] sm:$0xf]
        %v7370 = vld [vmem:[%s7368 + $0x8] sm:$0xf]
        %v7371 = vld [vmem:[%s7368 + $0x10] sm:$0xf]
        %v7372 = vld [vmem:[%s7368 + $0x18] sm:$0xf]
        %v7373 = vld [vmem:[%s7368 + $0x20] sm:$0xf]
        %v7374 = vld [vmem:[%s7368 + $0x28] sm:$0xf]
        %v7375 = vld [vmem:[%s7368 + $0x30] sm:$0xf]
        %v7376 = vld [vmem:[%s7368 + $0x38] sm:$0xf]
        %v7377 = vld [vmem:[%s7368 + $0x50] sm:$0xf]
        %v7378 = vld [vmem:[%s7368 + $0x58] sm:$0xf]
        %v7379 = vld [vmem:[%s7368 + $0x60] sm:$0xf]
        %v7380 = vld [vmem:[%s7368 + $0x68] sm:$0xf]
        %v7381 = vld [vmem:[%s7368 + $0x70] sm:$0xf]
        %v7382 = vld [vmem:[%s7368 + $0x78] sm:$0xf]
        %v7383 = vld [vmem:[%s7368 + $0x80] sm:$0xf]
        %v7384 = vld [vmem:[%s7368 + $0x88] sm:$0xf]
        %v7385 = vld [vmem:[%s7368 + $0xa0] sm:$0xf]
        %v7386 = vld [vmem:[%s7368 + $0xa8] sm:$0xf]
        %v7387 = vld [vmem:[%s7368 + $0xb0] sm:$0xf]
        %v7388 = vld [vmem:[%s7368 + $0xb8] sm:$0xf]
        %v7389 = vld [vmem:[%s7368 + $0xc0] sm:$0xf]
        %v7390 = vld [vmem:[%s7368 + $0xc8] sm:$0xf]
        %v7391 = vld [vmem:[%s7368 + $0xd0] sm:$0xf]
        %v7392 = vld [vmem:[%s7368 + $0xd8] sm:$0xf]
        %v7393 = vld [vmem:[%s7368 + $0xf0] sm:$0xf]
        %v7394 = vld [vmem:[%s7368 + $0xf8] sm:$0xf]
        %v7395 = vld [vmem:[%s7368 + $0x100] sm:$0xf]
        %v7396 = vld [vmem:[%s7368 + $0x108] sm:$0xf]
        %v7397 = vld [vmem:[%s7368 + $0x110] sm:$0xf]
        %v7398 = vld [vmem:[%s7368 + $0x118] sm:$0xf]
        %v7399 = vld [vmem:[%s7368 + $0x120] sm:$0xf]
        %v7400 = vld [vmem:[%s7368 + $0x128] sm:$0xf]
        %7433 = vrot.lane.b32.xlu0 %v7369, 72
        %v7434 = vpop.permute.xlu0 %7433
        %7435 = vrot.lane.b32.xlu0 %v7370, 72
        %v7436 = vpop.permute.xlu0 %7435
        %7437 = vrot.lane.b32.xlu0 %v7371, 72
        %v7438 = vpop.permute.xlu0 %7437
        %7439 = vrot.lane.b32.xlu0 %v7372, 72
        %v7440 = vpop.permute.xlu0 %7439
        %7441 = vrot.lane.b32.xlu0 %v7373, 72
        %v7442 = vpop.permute.xlu0 %7441
        %7443 = vrot.lane.b32.xlu0 %v7374, 72
        %v7444 = vpop.permute.xlu0 %7443
        %7445 = vrot.lane.b32.xlu0 %v7375, 72
        %v7446 = vpop.permute.xlu0 %7445
        %7447 = vrot.lane.b32.xlu0 %v7376, 72
        %v7448 = vpop.permute.xlu0 %7447
        %7449 = vrot.lane.b32.xlu0 %v7377, 72
        %v7450 = vpop.permute.xlu0 %7449
        %7451 = vrot.lane.b32.xlu0 %v7378, 72
        %v7452 = vpop.permute.xlu0 %7451
        %7453 = vrot.lane.b32.xlu0 %v7379, 72
        %v7454 = vpop.permute.xlu0 %7453
        %7455 = vrot.lane.b32.xlu0 %v7380, 72
        %v7456 = vpop.permute.xlu0 %7455
        %7457 = vrot.lane.b32.xlu0 %v7381, 72
        %v7458 = vpop.permute.xlu0 %7457
        %7459 = vrot.lane.b32.xlu0 %v7382, 72
        %v7460 = vpop.permute.xlu0 %7459
        %7461 = vrot.lane.b32.xlu0 %v7383, 72
        %v7462 = vpop.permute.xlu0 %7461
        %7463 = vrot.lane.b32.xlu0 %v7384, 72
        %v7464 = vpop.permute.xlu0 %7463
        %7465 = vrot.lane.b32.xlu0 %v7385, 72
        %v7466 = vpop.permute.xlu0 %7465
        %7467 = vrot.lane.b32.xlu0 %v7386, 72
        %v7468 = vpop.permute.xlu0 %7467
        %7469 = vrot.lane.b32.xlu0 %v7387, 72
        %v7470 = vpop.permute.xlu0 %7469
        %7471 = vrot.lane.b32.xlu0 %v7388, 72
        %v7472 = vpop.permute.xlu0 %7471
        %7473 = vrot.lane.b32.xlu0 %v7389, 72
        %v7474 = vpop.permute.xlu0 %7473
        %7475 = vrot.lane.b32.xlu0 %v7390, 72
        %v7476 = vpop.permute.xlu0 %7475
        %7477 = vrot.lane.b32.xlu0 %v7391, 72
        %v7478 = vpop.permute.xlu0 %7477
        %7479 = vrot.lane.b32.xlu0 %v7392, 72
        %v7480 = vpop.permute.xlu0 %7479
        %7481 = vrot.lane.b32.xlu0 %v7393, 72
        %v7482 = vpop.permute.xlu0 %7481
        %7483 = vrot.lane.b32.xlu0 %v7394, 72
        %v7484 = vpop.permute.xlu0 %7483
        %7485 = vrot.lane.b32.xlu0 %v7395, 72
        %v7486 = vpop.permute.xlu0 %7485
        %7487 = vrot.lane.b32.xlu0 %v7396, 72
        %v7488 = vpop.permute.xlu0 %7487
        %7489 = vrot.lane.b32.xlu0 %v7397, 72
        %v7490 = vpop.permute.xlu0 %7489
        %7491 = vrot.lane.b32.xlu0 %v7398, 72
        %v7492 = vpop.permute.xlu0 %7491
        %7493 = vrot.lane.b32.xlu0 %v7399, 72
        %v7494 = vpop.permute.xlu0 %7493
        %7495 = vrot.lane.b32.xlu0 %v7400, 72
        %v7496 = vpop.permute.xlu0 %7495
        %vm7529 = vcmask 618048
        %7530 = vst.msk [vmem:[#allocation2] sm:$0xf] %vm7529, %v7434
        %7531 = vst.msk [vmem:[#allocation2 + $0x4] sm:$0xf] %vm7529, %v7436
        %7532 = vst.msk [vmem:[#allocation2 + $0x8] sm:$0xf] %vm7529, %v7438
        %7533 = vst.msk [vmem:[#allocation2 + $0xc] sm:$0xf] %vm7529, %v7440
        %7534 = vst.msk [vmem:[#allocation2 + $0x10] sm:$0xf] %vm7529, %v7442
        %7535 = vst.msk [vmem:[#allocation2 + $0x14] sm:$0xf] %vm7529, %v7444
        %7536 = vst.msk [vmem:[#allocation2 + $0x18] sm:$0xf] %vm7529, %v7446
        %7537 = vst.msk [vmem:[#allocation2 + $0x1c] sm:$0xf] %vm7529, %v7448
        %7538 = vst.msk [vmem:[#allocation2 + $0x20] sm:$0xf] %vm7529, %v7450
        %7539 = vst.msk [vmem:[#allocation2 + $0x24] sm:$0xf] %vm7529, %v7452
        %7540 = vst.msk [vmem:[#allocation2 + $0x28] sm:$0xf] %vm7529, %v7454
        %7541 = vst.msk [vmem:[#allocation2 + $0x2c] sm:$0xf] %vm7529, %v7456
        %7542 = vst.msk [vmem:[#allocation2 + $0x30] sm:$0xf] %vm7529, %v7458
        %7543 = vst.msk [vmem:[#allocation2 + $0x34] sm:$0xf] %vm7529, %v7460
        %7544 = vst.msk [vmem:[#allocation2 + $0x38] sm:$0xf] %vm7529, %v7462
        %7545 = vst.msk [vmem:[#allocation2 + $0x3c] sm:$0xf] %vm7529, %v7464
        %7546 = vst.msk [vmem:[#allocation2 + $0x40] sm:$0xf] %vm7529, %v7466
        %7547 = vst.msk [vmem:[#allocation2 + $0x44] sm:$0xf] %vm7529, %v7468
        %7548 = vst.msk [vmem:[#allocation2 + $0x48] sm:$0xf] %vm7529, %v7470
        %7549 = vst.msk [vmem:[#allocation2 + $0x4c] sm:$0xf] %vm7529, %v7472
        %7550 = vst.msk [vmem:[#allocation2 + $0x50] sm:$0xf] %vm7529, %v7474
        %7551 = vst.msk [vmem:[#allocation2 + $0x54] sm:$0xf] %vm7529, %v7476
        %7552 = vst.msk [vmem:[#allocation2 + $0x58] sm:$0xf] %vm7529, %v7478
        %7553 = vst.msk [vmem:[#allocation2 + $0x5c] sm:$0xf] %vm7529, %v7480
        %7554 = vst.msk [vmem:[#allocation2 + $0x60] sm:$0xf] %vm7529, %v7482
        %7555 = vst.msk [vmem:[#allocation2 + $0x64] sm:$0xf] %vm7529, %v7484
        %7556 = vst.msk [vmem:[#allocation2 + $0x68] sm:$0xf] %vm7529, %v7486
        %7557 = vst.msk [vmem:[#allocation2 + $0x6c] sm:$0xf] %vm7529, %v7488
        %7558 = vst.msk [vmem:[#allocation2 + $0x70] sm:$0xf] %vm7529, %v7490
        %7559 = vst.msk [vmem:[#allocation2 + $0x74] sm:$0xf] %vm7529, %v7492
        %7560 = vst.msk [vmem:[#allocation2 + $0x78] sm:$0xf] %vm7529, %v7494
        %7561 = vst.msk [vmem:[#allocation2 + $0x7c] sm:$0xf] %vm7529, %v7496
        %v7562 = vld [vmem:[%s7368] sm:$0xf]
        %v7563 = vld [vmem:[%s7368 + $0x4] sm:$0x1]
        %v7564 = vld [vmem:[%s7368 + $0x8] sm:$0xf]
        %v7565 = vld [vmem:[%s7368 + $0xc] sm:$0x1]
        %v7566 = vld [vmem:[%s7368 + $0x10] sm:$0xf]
        %v7567 = vld [vmem:[%s7368 + $0x14] sm:$0x1]
        %v7568 = vld [vmem:[%s7368 + $0x18] sm:$0xf]
        %v7569 = vld [vmem:[%s7368 + $0x1c] sm:$0x1]
        %v7570 = vld [vmem:[%s7368 + $0x20] sm:$0xf]
        %v7571 = vld [vmem:[%s7368 + $0x24] sm:$0x1]
        %v7572 = vld [vmem:[%s7368 + $0x28] sm:$0xf]
        %v7573 = vld [vmem:[%s7368 + $0x2c] sm:$0x1]
        %v7574 = vld [vmem:[%s7368 + $0x30] sm:$0xf]
        %v7575 = vld [vmem:[%s7368 + $0x34] sm:$0x1]
        %v7576 = vld [vmem:[%s7368 + $0x38] sm:$0xf]
        %v7577 = vld [vmem:[%s7368 + $0x3c] sm:$0x1]
        %v7578 = vld [vmem:[%s7368 + $0x50] sm:$0xf]
        %v7579 = vld [vmem:[%s7368 + $0x54] sm:$0x1]
        %v7580 = vld [vmem:[%s7368 + $0x58] sm:$0xf]
        %v7581 = vld [vmem:[%s7368 + $0x5c] sm:$0x1]
        %v7582 = vld [vmem:[%s7368 + $0x60] sm:$0xf]
        %v7583 = vld [vmem:[%s7368 + $0x64] sm:$0x1]
        %v7584 = vld [vmem:[%s7368 + $0x68] sm:$0xf]
        %v7585 = vld [vmem:[%s7368 + $0x6c] sm:$0x1]
        %v7586 = vld [vmem:[%s7368 + $0x70] sm:$0xf]
        %v7587 = vld [vmem:[%s7368 + $0x74] sm:$0x1]
        %v7588 = vld [vmem:[%s7368 + $0x78] sm:$0xf]
        %v7589 = vld [vmem:[%s7368 + $0x7c] sm:$0x1]
        %v7590 = vld [vmem:[%s7368 + $0x80] sm:$0xf]
        %v7591 = vld [vmem:[%s7368 + $0x84] sm:$0x1]
        %v7592 = vld [vmem:[%s7368 + $0x88] sm:$0xf]
        %v7593 = vld [vmem:[%s7368 + $0x8c] sm:$0x1]
        %v7594 = vld [vmem:[%s7368 + $0xa0] sm:$0xf]
        %v7595 = vld [vmem:[%s7368 + $0xa4] sm:$0x1]
        %v7596 = vld [vmem:[%s7368 + $0xa8] sm:$0xf]
        %v7597 = vld [vmem:[%s7368 + $0xac] sm:$0x1]
        %v7598 = vld [vmem:[%s7368 + $0xb0] sm:$0xf]
        %v7599 = vld [vmem:[%s7368 + $0xb4] sm:$0x1]
        %v7600 = vld [vmem:[%s7368 + $0xb8] sm:$0xf]
        %v7601 = vld [vmem:[%s7368 + $0xbc] sm:$0x1]
        %v7602 = vld [vmem:[%s7368 + $0xc0] sm:$0xf]
        %v7603 = vld [vmem:[%s7368 + $0xc4] sm:$0x1]
        %v7604 = vld [vmem:[%s7368 + $0xc8] sm:$0xf]
        %v7605 = vld [vmem:[%s7368 + $0xcc] sm:$0x1]
        %v7606 = vld [vmem:[%s7368 + $0xd0] sm:$0xf]
        %v7607 = vld [vmem:[%s7368 + $0xd4] sm:$0x1]
        %v7608 = vld [vmem:[%s7368 + $0xd8] sm:$0xf]
        %v7609 = vld [vmem:[%s7368 + $0xdc] sm:$0x1]
        %v7610 = vld [vmem:[%s7368 + $0xf0] sm:$0xf]
        %v7611 = vld [vmem:[%s7368 + $0xf4] sm:$0x1]
        %v7612 = vld [vmem:[%s7368 + $0xf8] sm:$0xf]
        %v7613 = vld [vmem:[%s7368 + $0xfc] sm:$0x1]
        %v7614 = vld [vmem:[%s7368 + $0x100] sm:$0xf]
        %v7615 = vld [vmem:[%s7368 + $0x104] sm:$0x1]
        %v7616 = vld [vmem:[%s7368 + $0x108] sm:$0xf]
        %v7617 = vld [vmem:[%s7368 + $0x10c] sm:$0x1]
        %v7618 = vld [vmem:[%s7368 + $0x110] sm:$0xf]
        %v7619 = vld [vmem:[%s7368 + $0x114] sm:$0x1]
        %v7620 = vld [vmem:[%s7368 + $0x118] sm:$0xf]
        %v7621 = vld [vmem:[%s7368 + $0x11c] sm:$0x1]
        %v7622 = vld [vmem:[%s7368 + $0x120] sm:$0xf]
        %v7623 = vld [vmem:[%s7368 + $0x124] sm:$0x1]
        %v7624 = vld [vmem:[%s7368 + $0x128] sm:$0xf]
        %v7625 = vld [vmem:[%s7368 + $0x12c] sm:$0x1]
        %v7627 = vshrl.u32 %v7562, 16
        %v7629 = vrot.slane %v7627, 4
        %v7630 = vshll.u32 %v7562, 16
        %v7632 = vrot.slane %v7630, 5
        %v7633 = vor.u32 %v7629, %v7632
        %v7634 = vrot.slane %v7633, 4
        %v7636 = vshll.u32 %v7563, 16
        %v7638 = vrot.slane %v7636, 5
        %v7639 = vsel %vm302, %v7634, %v7638
        %v7641 = vshrl.u32 %v7564, 16
        %v7643 = vrot.slane %v7641, 4
        %v7644 = vshll.u32 %v7564, 16
        %v7646 = vrot.slane %v7644, 5
        %v7647 = vor.u32 %v7643, %v7646
        %v7648 = vrot.slane %v7647, 4
        %v7650 = vshll.u32 %v7565, 16
        %v7652 = vrot.slane %v7650, 5
        %v7653 = vsel %vm302, %v7648, %v7652
        %v7655 = vshrl.u32 %v7566, 16
        %v7657 = vrot.slane %v7655, 4
        %v7658 = vshll.u32 %v7566, 16
        %v7660 = vrot.slane %v7658, 5
        %v7661 = vor.u32 %v7657, %v7660
        %v7662 = vrot.slane %v7661, 4
        %v7664 = vshll.u32 %v7567, 16
        %v7666 = vrot.slane %v7664, 5
        %v7667 = vsel %vm302, %v7662, %v7666
        %v7669 = vshrl.u32 %v7568, 16
        %v7671 = vrot.slane %v7669, 4
        %v7672 = vshll.u32 %v7568, 16
        %v7674 = vrot.slane %v7672, 5
        %v7675 = vor.u32 %v7671, %v7674
        %v7676 = vrot.slane %v7675, 4
        %v7678 = vshll.u32 %v7569, 16
        %v7680 = vrot.slane %v7678, 5
        %v7681 = vsel %vm302, %v7676, %v7680
        %v7683 = vshrl.u32 %v7570, 16
        %v7685 = vrot.slane %v7683, 4
        %v7686 = vshll.u32 %v7570, 16
        %v7688 = vrot.slane %v7686, 5
        %v7689 = vor.u32 %v7685, %v7688
        %v7690 = vrot.slane %v7689, 4
        %v7692 = vshll.u32 %v7571, 16
        %v7694 = vrot.slane %v7692, 5
        %v7695 = vsel %vm302, %v7690, %v7694
        %v7697 = vshrl.u32 %v7572, 16
        %v7699 = vrot.slane %v7697, 4
        %v7700 = vshll.u32 %v7572, 16
        %v7702 = vrot.slane %v7700, 5
        %v7703 = vor.u32 %v7699, %v7702
        %v7704 = vrot.slane %v7703, 4
        %v7706 = vshll.u32 %v7573, 16
        %v7708 = vrot.slane %v7706, 5
        %v7709 = vsel %vm302, %v7704, %v7708
        %v7711 = vshrl.u32 %v7574, 16
        %v7713 = vrot.slane %v7711, 4
        %v7714 = vshll.u32 %v7574, 16
        %v7716 = vrot.slane %v7714, 5
        %v7717 = vor.u32 %v7713, %v7716
        %v7718 = vrot.slane %v7717, 4
        %v7720 = vshll.u32 %v7575, 16
        %v7722 = vrot.slane %v7720, 5
        %v7723 = vsel %vm302, %v7718, %v7722
        %v7725 = vshrl.u32 %v7576, 16
        %v7727 = vrot.slane %v7725, 4
        %v7728 = vshll.u32 %v7576, 16
        %v7730 = vrot.slane %v7728, 5
        %v7731 = vor.u32 %v7727, %v7730
        %v7732 = vrot.slane %v7731, 4
        %v7734 = vshll.u32 %v7577, 16
        %v7736 = vrot.slane %v7734, 5
        %v7737 = vsel %vm302, %v7732, %v7736
        %v7739 = vshrl.u32 %v7578, 16
        %v7741 = vrot.slane %v7739, 4
        %v7742 = vshll.u32 %v7578, 16
        %v7744 = vrot.slane %v7742, 5
        %v7745 = vor.u32 %v7741, %v7744
        %v7746 = vrot.slane %v7745, 4
        %v7748 = vshll.u32 %v7579, 16
        %v7750 = vrot.slane %v7748, 5
        %v7751 = vsel %vm302, %v7746, %v7750
        %v7753 = vshrl.u32 %v7580, 16
        %v7755 = vrot.slane %v7753, 4
        %v7756 = vshll.u32 %v7580, 16
        %v7758 = vrot.slane %v7756, 5
        %v7759 = vor.u32 %v7755, %v7758
        %v7760 = vrot.slane %v7759, 4
        %v7762 = vshll.u32 %v7581, 16
        %v7764 = vrot.slane %v7762, 5
        %v7765 = vsel %vm302, %v7760, %v7764
        %v7767 = vshrl.u32 %v7582, 16
        %v7769 = vrot.slane %v7767, 4
        %v7770 = vshll.u32 %v7582, 16
        %v7772 = vrot.slane %v7770, 5
        %v7773 = vor.u32 %v7769, %v7772
        %v7774 = vrot.slane %v7773, 4
        %v7776 = vshll.u32 %v7583, 16
        %v7778 = vrot.slane %v7776, 5
        %v7779 = vsel %vm302, %v7774, %v7778
        %v7781 = vshrl.u32 %v7584, 16
        %v7783 = vrot.slane %v7781, 4
        %v7784 = vshll.u32 %v7584, 16
        %v7786 = vrot.slane %v7784, 5
        %v7787 = vor.u32 %v7783, %v7786
        %v7788 = vrot.slane %v7787, 4
        %v7790 = vshll.u32 %v7585, 16
        %v7792 = vrot.slane %v7790, 5
        %v7793 = vsel %vm302, %v7788, %v7792
        %v7795 = vshrl.u32 %v7586, 16
        %v7797 = vrot.slane %v7795, 4
        %v7798 = vshll.u32 %v7586, 16
        %v7800 = vrot.slane %v7798, 5
        %v7801 = vor.u32 %v7797, %v7800
        %v7802 = vrot.slane %v7801, 4
        %v7804 = vshll.u32 %v7587, 16
        %v7806 = vrot.slane %v7804, 5
        %v7807 = vsel %vm302, %v7802, %v7806
        %v7809 = vshrl.u32 %v7588, 16
        %v7811 = vrot.slane %v7809, 4
        %v7812 = vshll.u32 %v7588, 16
        %v7814 = vrot.slane %v7812, 5
        %v7815 = vor.u32 %v7811, %v7814
        %v7816 = vrot.slane %v7815, 4
        %v7818 = vshll.u32 %v7589, 16
        %v7820 = vrot.slane %v7818, 5
        %v7821 = vsel %vm302, %v7816, %v7820
        %v7823 = vshrl.u32 %v7590, 16
        %v7825 = vrot.slane %v7823, 4
        %v7826 = vshll.u32 %v7590, 16
        %v7828 = vrot.slane %v7826, 5
        %v7829 = vor.u32 %v7825, %v7828
        %v7830 = vrot.slane %v7829, 4
        %v7832 = vshll.u32 %v7591, 16
        %v7834 = vrot.slane %v7832, 5
        %v7835 = vsel %vm302, %v7830, %v7834
        %v7837 = vshrl.u32 %v7592, 16
        %v7839 = vrot.slane %v7837, 4
        %v7840 = vshll.u32 %v7592, 16
        %v7842 = vrot.slane %v7840, 5
        %v7843 = vor.u32 %v7839, %v7842
        %v7844 = vrot.slane %v7843, 4
        %v7846 = vshll.u32 %v7593, 16
        %v7848 = vrot.slane %v7846, 5
        %v7849 = vsel %vm302, %v7844, %v7848
        %v7851 = vshrl.u32 %v7594, 16
        %v7853 = vrot.slane %v7851, 4
        %v7854 = vshll.u32 %v7594, 16
        %v7856 = vrot.slane %v7854, 5
        %v7857 = vor.u32 %v7853, %v7856
        %v7858 = vrot.slane %v7857, 4
        %v7860 = vshll.u32 %v7595, 16
        %v7862 = vrot.slane %v7860, 5
        %v7863 = vsel %vm302, %v7858, %v7862
        %v7865 = vshrl.u32 %v7596, 16
        %v7867 = vrot.slane %v7865, 4
        %v7868 = vshll.u32 %v7596, 16
        %v7870 = vrot.slane %v7868, 5
        %v7871 = vor.u32 %v7867, %v7870
        %v7872 = vrot.slane %v7871, 4
        %v7874 = vshll.u32 %v7597, 16
        %v7876 = vrot.slane %v7874, 5
        %v7877 = vsel %vm302, %v7872, %v7876
        %v7879 = vshrl.u32 %v7598, 16
        %v7881 = vrot.slane %v7879, 4
        %v7882 = vshll.u32 %v7598, 16
        %v7884 = vrot.slane %v7882, 5
        %v7885 = vor.u32 %v7881, %v7884
        %v7886 = vrot.slane %v7885, 4
        %v7888 = vshll.u32 %v7599, 16
        %v7890 = vrot.slane %v7888, 5
        %v7891 = vsel %vm302, %v7886, %v7890
        %v7893 = vshrl.u32 %v7600, 16
        %v7895 = vrot.slane %v7893, 4
        %v7896 = vshll.u32 %v7600, 16
        %v7898 = vrot.slane %v7896, 5
        %v7899 = vor.u32 %v7895, %v7898
        %v7900 = vrot.slane %v7899, 4
        %v7902 = vshll.u32 %v7601, 16
        %v7904 = vrot.slane %v7902, 5
        %v7905 = vsel %vm302, %v7900, %v7904
        %v7907 = vshrl.u32 %v7602, 16
        %v7909 = vrot.slane %v7907, 4
        %v7910 = vshll.u32 %v7602, 16
        %v7912 = vrot.slane %v7910, 5
        %v7913 = vor.u32 %v7909, %v7912
        %v7914 = vrot.slane %v7913, 4
        %v7916 = vshll.u32 %v7603, 16
        %v7918 = vrot.slane %v7916, 5
        %v7919 = vsel %vm302, %v7914, %v7918
        %v7921 = vshrl.u32 %v7604, 16
        %v7923 = vrot.slane %v7921, 4
        %v7924 = vshll.u32 %v7604, 16
        %v7926 = vrot.slane %v7924, 5
        %v7927 = vor.u32 %v7923, %v7926
        %v7928 = vrot.slane %v7927, 4
        %v7930 = vshll.u32 %v7605, 16
        %v7932 = vrot.slane %v7930, 5
        %v7933 = vsel %vm302, %v7928, %v7932
        %v7935 = vshrl.u32 %v7606, 16
        %v7937 = vrot.slane %v7935, 4
        %v7938 = vshll.u32 %v7606, 16
        %v7940 = vrot.slane %v7938, 5
        %v7941 = vor.u32 %v7937, %v7940
        %v7942 = vrot.slane %v7941, 4
        %v7944 = vshll.u32 %v7607, 16
        %v7946 = vrot.slane %v7944, 5
        %v7947 = vsel %vm302, %v7942, %v7946
        %v7949 = vshrl.u32 %v7608, 16
        %v7951 = vrot.slane %v7949, 4
        %v7952 = vshll.u32 %v7608, 16
        %v7954 = vrot.slane %v7952, 5
        %v7955 = vor.u32 %v7951, %v7954
        %v7956 = vrot.slane %v7955, 4
        %v7958 = vshll.u32 %v7609, 16
        %v7960 = vrot.slane %v7958, 5
        %v7961 = vsel %vm302, %v7956, %v7960
        %v7963 = vshrl.u32 %v7610, 16
        %v7965 = vrot.slane %v7963, 4
        %v7966 = vshll.u32 %v7610, 16
        %v7968 = vrot.slane %v7966, 5
        %v7969 = vor.u32 %v7965, %v7968
        %v7970 = vrot.slane %v7969, 4
        %v7972 = vshll.u32 %v7611, 16
        %v7974 = vrot.slane %v7972, 5
        %v7975 = vsel %vm302, %v7970, %v7974
        %v7977 = vshrl.u32 %v7612, 16
        %v7979 = vrot.slane %v7977, 4
        %v7980 = vshll.u32 %v7612, 16
        %v7982 = vrot.slane %v7980, 5
        %v7983 = vor.u32 %v7979, %v7982
        %v7984 = vrot.slane %v7983, 4
        %v7986 = vshll.u32 %v7613, 16
        %v7988 = vrot.slane %v7986, 5
        %v7989 = vsel %vm302, %v7984, %v7988
        %v7991 = vshrl.u32 %v7614, 16
        %v7993 = vrot.slane %v7991, 4
        %v7994 = vshll.u32 %v7614, 16
        %v7996 = vrot.slane %v7994, 5
        %v7997 = vor.u32 %v7993, %v7996
        %v7998 = vrot.slane %v7997, 4
        %v8000 = vshll.u32 %v7615, 16
        %v8002 = vrot.slane %v8000, 5
        %v8003 = vsel %vm302, %v7998, %v8002
        %v8005 = vshrl.u32 %v7616, 16
        %v8007 = vrot.slane %v8005, 4
        %v8008 = vshll.u32 %v7616, 16
        %v8010 = vrot.slane %v8008, 5
        %v8011 = vor.u32 %v8007, %v8010
        %v8012 = vrot.slane %v8011, 4
        %v8014 = vshll.u32 %v7617, 16
        %v8016 = vrot.slane %v8014, 5
        %v8017 = vsel %vm302, %v8012, %v8016
        %v8019 = vshrl.u32 %v7618, 16
        %v8021 = vrot.slane %v8019, 4
        %v8022 = vshll.u32 %v7618, 16
        %v8024 = vrot.slane %v8022, 5
        %v8025 = vor.u32 %v8021, %v8024
        %v8026 = vrot.slane %v8025, 4
        %v8028 = vshll.u32 %v7619, 16
        %v8030 = vrot.slane %v8028, 5
        %v8031 = vsel %vm302, %v8026, %v8030
        %v8033 = vshrl.u32 %v7620, 16
        %v8035 = vrot.slane %v8033, 4
        %v8036 = vshll.u32 %v7620, 16
        %v8038 = vrot.slane %v8036, 5
        %v8039 = vor.u32 %v8035, %v8038
        %v8040 = vrot.slane %v8039, 4
        %v8042 = vshll.u32 %v7621, 16
        %v8044 = vrot.slane %v8042, 5
        %v8045 = vsel %vm302, %v8040, %v8044
        %v8047 = vshrl.u32 %v7622, 16
        %v8049 = vrot.slane %v8047, 4
        %v8050 = vshll.u32 %v7622, 16
        %v8052 = vrot.slane %v8050, 5
        %v8053 = vor.u32 %v8049, %v8052
        %v8054 = vrot.slane %v8053, 4
        %v8056 = vshll.u32 %v7623, 16
        %v8058 = vrot.slane %v8056, 5
        %v8059 = vsel %vm302, %v8054, %v8058
        %v8061 = vshrl.u32 %v7624, 16
        %v8063 = vrot.slane %v8061, 4
        %v8064 = vshll.u32 %v7624, 16
        %v8066 = vrot.slane %v8064, 5
        %v8067 = vor.u32 %v8063, %v8066
        %v8068 = vrot.slane %v8067, 4
        %v8070 = vshll.u32 %v7625, 16
        %v8072 = vrot.slane %v8070, 5
        %v8073 = vsel %vm302, %v8068, %v8072
        %8074 = vrot.lane.b32.xlu0 %v7639, 76
        %v8075 = vpop.permute.xlu0 %8074
        %8076 = vrot.lane.b32.xlu0 %v7653, 76
        %v8077 = vpop.permute.xlu0 %8076
        %8078 = vrot.lane.b32.xlu0 %v7667, 76
        %v8079 = vpop.permute.xlu0 %8078
        %8080 = vrot.lane.b32.xlu0 %v7681, 76
        %v8081 = vpop.permute.xlu0 %8080
        %8082 = vrot.lane.b32.xlu0 %v7695, 76
        %v8083 = vpop.permute.xlu0 %8082
        %8084 = vrot.lane.b32.xlu0 %v7709, 76
        %v8085 = vpop.permute.xlu0 %8084
        %8086 = vrot.lane.b32.xlu0 %v7723, 76
        %v8087 = vpop.permute.xlu0 %8086
        %8088 = vrot.lane.b32.xlu0 %v7737, 76
        %v8089 = vpop.permute.xlu0 %8088
        %8090 = vrot.lane.b32.xlu0 %v7751, 76
        %v8091 = vpop.permute.xlu0 %8090
        %8092 = vrot.lane.b32.xlu0 %v7765, 76
        %v8093 = vpop.permute.xlu0 %8092
        %8094 = vrot.lane.b32.xlu0 %v7779, 76
        %v8095 = vpop.permute.xlu0 %8094
        %8096 = vrot.lane.b32.xlu0 %v7793, 76
        %v8097 = vpop.permute.xlu0 %8096
        %8098 = vrot.lane.b32.xlu0 %v7807, 76
        %v8099 = vpop.permute.xlu0 %8098
        %8100 = vrot.lane.b32.xlu0 %v7821, 76
        %v8101 = vpop.permute.xlu0 %8100
        %8102 = vrot.lane.b32.xlu0 %v7835, 76
        %v8103 = vpop.permute.xlu0 %8102
        %8104 = vrot.lane.b32.xlu0 %v7849, 76
        %v8105 = vpop.permute.xlu0 %8104
        %8106 = vrot.lane.b32.xlu0 %v7863, 76
        %v8107 = vpop.permute.xlu0 %8106
        %8108 = vrot.lane.b32.xlu0 %v7877, 76
        %v8109 = vpop.permute.xlu0 %8108
        %8110 = vrot.lane.b32.xlu0 %v7891, 76
        %v8111 = vpop.permute.xlu0 %8110
        %8112 = vrot.lane.b32.xlu0 %v7905, 76
        %v8113 = vpop.permute.xlu0 %8112
        %8114 = vrot.lane.b32.xlu0 %v7919, 76
        %v8115 = vpop.permute.xlu0 %8114
        %8116 = vrot.lane.b32.xlu0 %v7933, 76
        %v8117 = vpop.permute.xlu0 %8116
        %8118 = vrot.lane.b32.xlu0 %v7947, 76
        %v8119 = vpop.permute.xlu0 %8118
        %8120 = vrot.lane.b32.xlu0 %v7961, 76
        %v8121 = vpop.permute.xlu0 %8120
        %8122 = vrot.lane.b32.xlu0 %v7975, 76
        %v8123 = vpop.permute.xlu0 %8122
        %8124 = vrot.lane.b32.xlu0 %v7989, 76
        %v8125 = vpop.permute.xlu0 %8124
        %8126 = vrot.lane.b32.xlu0 %v8003, 76
        %v8127 = vpop.permute.xlu0 %8126
        %8128 = vrot.lane.b32.xlu0 %v8017, 76
        %v8129 = vpop.permute.xlu0 %8128
        %8130 = vrot.lane.b32.xlu0 %v8031, 76
        %v8131 = vpop.permute.xlu0 %8130
        %8132 = vrot.lane.b32.xlu0 %v8045, 76
        %v8133 = vpop.permute.xlu0 %8132
        %8134 = vrot.lane.b32.xlu0 %v8059, 76
        %v8135 = vpop.permute.xlu0 %8134
        %8136 = vrot.lane.b32.xlu0 %v8073, 76
        %v8137 = vpop.permute.xlu0 %8136
        %vm8170 = vcmask 650848
        %8171 = vst.msk [vmem:[#allocation2] sm:$0xf] %vm8170, %v8075
        %8172 = vst.msk [vmem:[#allocation2 + $0x4] sm:$0xf] %vm8170, %v8077
        %8173 = vst.msk [vmem:[#allocation2 + $0x8] sm:$0xf] %vm8170, %v8079
        %8174 = vst.msk [vmem:[#allocation2 + $0xc] sm:$0xf] %vm8170, %v8081
        %8175 = vst.msk [vmem:[#allocation2 + $0x10] sm:$0xf] %vm8170, %v8083
        %8176 = vst.msk [vmem:[#allocation2 + $0x14] sm:$0xf] %vm8170, %v8085
        %8177 = vst.msk [vmem:[#allocation2 + $0x18] sm:$0xf] %vm8170, %v8087
        %8178 = vst.msk [vmem:[#allocation2 + $0x1c] sm:$0xf] %vm8170, %v8089
        %8179 = vst.msk [vmem:[#allocation2 + $0x20] sm:$0xf] %vm8170, %v8091
        %8180 = vst.msk [vmem:[#allocation2 + $0x24] sm:$0xf] %vm8170, %v8093
        %8181 = vst.msk [vmem:[#allocation2 + $0x28] sm:$0xf] %vm8170, %v8095
        %8182 = vst.msk [vmem:[#allocation2 + $0x2c] sm:$0xf] %vm8170, %v8097
        %8183 = vst.msk [vmem:[#allocation2 + $0x30] sm:$0xf] %vm8170, %v8099
        %8184 = vst.msk [vmem:[#allocation2 + $0x34] sm:$0xf] %vm8170, %v8101
        %8185 = vst.msk [vmem:[#allocation2 + $0x38] sm:$0xf] %vm8170, %v8103
        %8186 = vst.msk [vmem:[#allocation2 + $0x3c] sm:$0xf] %vm8170, %v8105
        %8187 = vst.msk [vmem:[#allocation2 + $0x40] sm:$0xf] %vm8170, %v8107
        %8188 = vst.msk [vmem:[#allocation2 + $0x44] sm:$0xf] %vm8170, %v8109
        %8189 = vst.msk [vmem:[#allocation2 + $0x48] sm:$0xf] %vm8170, %v8111
        %8190 = vst.msk [vmem:[#allocation2 + $0x4c] sm:$0xf] %vm8170, %v8113
        %8191 = vst.msk [vmem:[#allocation2 + $0x50] sm:$0xf] %vm8170, %v8115
        %8192 = vst.msk [vmem:[#allocation2 + $0x54] sm:$0xf] %vm8170, %v8117
        %8193 = vst.msk [vmem:[#allocation2 + $0x58] sm:$0xf] %vm8170, %v8119
        %8194 = vst.msk [vmem:[#allocation2 + $0x5c] sm:$0xf] %vm8170, %v8121
        %8195 = vst.msk [vmem:[#allocation2 + $0x60] sm:$0xf] %vm8170, %v8123
        %8196 = vst.msk [vmem:[#allocation2 + $0x64] sm:$0xf] %vm8170, %v8125
        %8197 = vst.msk [vmem:[#allocation2 + $0x68] sm:$0xf] %vm8170, %v8127
        %8198 = vst.msk [vmem:[#allocation2 + $0x6c] sm:$0xf] %vm8170, %v8129
        %8199 = vst.msk [vmem:[#allocation2 + $0x70] sm:$0xf] %vm8170, %v8131
        %8200 = vst.msk [vmem:[#allocation2 + $0x74] sm:$0xf] %vm8170, %v8133
        %8201 = vst.msk [vmem:[#allocation2 + $0x78] sm:$0xf] %vm8170, %v8135
        %8202 = vst.msk [vmem:[#allocation2 + $0x7c] sm:$0xf] %vm8170, %v8137
        %v8203 = vld [vmem:[%s7368] sm:$0xe]
        %v8204 = vld [vmem:[%s7368 + $0x4] sm:$0x1]
        %v8205 = vld [vmem:[%s7368 + $0x8] sm:$0xe]
        %v8206 = vld [vmem:[%s7368 + $0xc] sm:$0x1]
        %v8207 = vld [vmem:[%s7368 + $0x10] sm:$0xe]
        %v8208 = vld [vmem:[%s7368 + $0x14] sm:$0x1]
        %v8209 = vld [vmem:[%s7368 + $0x18] sm:$0xe]
        %v8210 = vld [vmem:[%s7368 + $0x1c] sm:$0x1]
        %v8211 = vld [vmem:[%s7368 + $0x20] sm:$0xe]
        %v8212 = vld [vmem:[%s7368 + $0x24] sm:$0x1]
        %v8213 = vld [vmem:[%s7368 + $0x28] sm:$0xe]
        %v8214 = vld [vmem:[%s7368 + $0x2c] sm:$0x1]
        %v8215 = vld [vmem:[%s7368 + $0x30] sm:$0xe]
        %v8216 = vld [vmem:[%s7368 + $0x34] sm:$0x1]
        %v8217 = vld [vmem:[%s7368 + $0x38] sm:$0xe]
        %v8218 = vld [vmem:[%s7368 + $0x3c] sm:$0x1]
        %v8219 = vld [vmem:[%s7368 + $0x50] sm:$0xe]
        %v8220 = vld [vmem:[%s7368 + $0x54] sm:$0x1]
        %v8221 = vld [vmem:[%s7368 + $0x58] sm:$0xe]
        %v8222 = vld [vmem:[%s7368 + $0x5c] sm:$0x1]
        %v8223 = vld [vmem:[%s7368 + $0x60] sm:$0xe]
        %v8224 = vld [vmem:[%s7368 + $0x64] sm:$0x1]
        %v8225 = vld [vmem:[%s7368 + $0x68] sm:$0xe]
        %v8226 = vld [vmem:[%s7368 + $0x6c] sm:$0x1]
        %v8227 = vld [vmem:[%s7368 + $0x70] sm:$0xe]
        %v8228 = vld [vmem:[%s7368 + $0x74] sm:$0x1]
        %v8229 = vld [vmem:[%s7368 + $0x78] sm:$0xe]
        %v8230 = vld [vmem:[%s7368 + $0x7c] sm:$0x1]
        %v8231 = vld [vmem:[%s7368 + $0x80] sm:$0xe]
        %v8232 = vld [vmem:[%s7368 + $0x84] sm:$0x1]
        %v8233 = vld [vmem:[%s7368 + $0x88] sm:$0xe]
        %v8234 = vld [vmem:[%s7368 + $0x8c] sm:$0x1]
        %v8235 = vld [vmem:[%s7368 + $0xa0] sm:$0xe]
        %v8236 = vld [vmem:[%s7368 + $0xa4] sm:$0x1]
        %v8237 = vld [vmem:[%s7368 + $0xa8] sm:$0xe]
        %v8238 = vld [vmem:[%s7368 + $0xac] sm:$0x1]
        %v8239 = vld [vmem:[%s7368 + $0xb0] sm:$0xe]
        %v8240 = vld [vmem:[%s7368 + $0xb4] sm:$0x1]
        %v8241 = vld [vmem:[%s7368 + $0xb8] sm:$0xe]
        %v8242 = vld [vmem:[%s7368 + $0xbc] sm:$0x1]
        %v8243 = vld [vmem:[%s7368 + $0xc0] sm:$0xe]
        %v8244 = vld [vmem:[%s7368 + $0xc4] sm:$0x1]
        %v8245 = vld [vmem:[%s7368 + $0xc8] sm:$0xe]
        %v8246 = vld [vmem:[%s7368 + $0xcc] sm:$0x1]
        %v8247 = vld [vmem:[%s7368 + $0xd0] sm:$0xe]
        %v8248 = vld [vmem:[%s7368 + $0xd4] sm:$0x1]
        %v8249 = vld [vmem:[%s7368 + $0xd8] sm:$0xe]
        %v8250 = vld [vmem:[%s7368 + $0xdc] sm:$0x1]
        %v8251 = vld [vmem:[%s7368 + $0xf0] sm:$0xe]
        %v8252 = vld [vmem:[%s7368 + $0xf4] sm:$0x1]
        %v8253 = vld [vmem:[%s7368 + $0xf8] sm:$0xe]
        %v8254 = vld [vmem:[%s7368 + $0xfc] sm:$0x1]
        %v8255 = vld [vmem:[%s7368 + $0x100] sm:$0xe]
        %v8256 = vld [vmem:[%s7368 + $0x104] sm:$0x1]
        %v8257 = vld [vmem:[%s7368 + $0x108] sm:$0xe]
        %v8258 = vld [vmem:[%s7368 + $0x10c] sm:$0x1]
        %v8259 = vld [vmem:[%s7368 + $0x110] sm:$0xe]
        %v8260 = vld [vmem:[%s7368 + $0x114] sm:$0x1]
        %v8261 = vld [vmem:[%s7368 + $0x118] sm:$0xe]
        %v8262 = vld [vmem:[%s7368 + $0x11c] sm:$0x1]
        %v8263 = vld [vmem:[%s7368 + $0x120] sm:$0xe]
        %v8264 = vld [vmem:[%s7368 + $0x124] sm:$0x1]
        %v8265 = vld [vmem:[%s7368 + $0x128] sm:$0xe]
        %v8266 = vld [vmem:[%s7368 + $0x12c] sm:$0x1]
        %v8331 = vrot.slane %v8203, 5
        %v8332 = vrot.slane %v8331, 4
        %v8333 = vrot.slane %v8204, 5
        %v8334 = vsel %vm1010, %v8332, %v8333
        %v8335 = vrot.slane %v8205, 5
        %v8336 = vrot.slane %v8335, 4
        %v8337 = vrot.slane %v8206, 5
        %v8338 = vsel %vm1010, %v8336, %v8337
        %v8339 = vrot.slane %v8207, 5
        %v8340 = vrot.slane %v8339, 4
        %v8341 = vrot.slane %v8208, 5
        %v8342 = vsel %vm1010, %v8340, %v8341
        %v8343 = vrot.slane %v8209, 5
        %v8344 = vrot.slane %v8343, 4
        %v8345 = vrot.slane %v8210, 5
        %v8346 = vsel %vm1010, %v8344, %v8345
        %v8347 = vrot.slane %v8211, 5
        %v8348 = vrot.slane %v8347, 4
        %v8349 = vrot.slane %v8212, 5
        %v8350 = vsel %vm1010, %v8348, %v8349
        %v8351 = vrot.slane %v8213, 5
        %v8352 = vrot.slane %v8351, 4
        %v8353 = vrot.slane %v8214, 5
        %v8354 = vsel %vm1010, %v8352, %v8353
        %v8355 = vrot.slane %v8215, 5
        %v8356 = vrot.slane %v8355, 4
        %v8357 = vrot.slane %v8216, 5
        %v8358 = vsel %vm1010, %v8356, %v8357
        %v8359 = vrot.slane %v8217, 5
        %v8360 = vrot.slane %v8359, 4
        %v8361 = vrot.slane %v8218, 5
        %v8362 = vsel %vm1010, %v8360, %v8361
        %v8363 = vrot.slane %v8219, 5
        %v8364 = vrot.slane %v8363, 4
        %v8365 = vrot.slane %v8220, 5
        %v8366 = vsel %vm1010, %v8364, %v8365
        %v8367 = vrot.slane %v8221, 5
        %v8368 = vrot.slane %v8367, 4
        %v8369 = vrot.slane %v8222, 5
        %v8370 = vsel %vm1010, %v8368, %v8369
        %v8371 = vrot.slane %v8223, 5
        %v8372 = vrot.slane %v8371, 4
        %v8373 = vrot.slane %v8224, 5
        %v8374 = vsel %vm1010, %v8372, %v8373
        %v8375 = vrot.slane %v8225, 5
        %v8376 = vrot.slane %v8375, 4
        %v8377 = vrot.slane %v8226, 5
        %v8378 = vsel %vm1010, %v8376, %v8377
        %v8379 = vrot.slane %v8227, 5
        %v8380 = vrot.slane %v8379, 4
        %v8381 = vrot.slane %v8228, 5
        %v8382 = vsel %vm1010, %v8380, %v8381
        %v8383 = vrot.slane %v8229, 5
        %v8384 = vrot.slane %v8383, 4
        %v8385 = vrot.slane %v8230, 5
        %v8386 = vsel %vm1010, %v8384, %v8385
        %v8387 = vrot.slane %v8231, 5
        %v8388 = vrot.slane %v8387, 4
        %v8389 = vrot.slane %v8232, 5
        %v8390 = vsel %vm1010, %v8388, %v8389
        %v8391 = vrot.slane %v8233, 5
        %v8392 = vrot.slane %v8391, 4
        %v8393 = vrot.slane %v8234, 5
        %v8394 = vsel %vm1010, %v8392, %v8393
        %v8395 = vrot.slane %v8235, 5
        %v8396 = vrot.slane %v8395, 4
        %v8397 = vrot.slane %v8236, 5
        %v8398 = vsel %vm1010, %v8396, %v8397
        %v8399 = vrot.slane %v8237, 5
        %v8400 = vrot.slane %v8399, 4
        %v8401 = vrot.slane %v8238, 5
        %v8402 = vsel %vm1010, %v8400, %v8401
        %v8403 = vrot.slane %v8239, 5
        %v8404 = vrot.slane %v8403, 4
        %v8405 = vrot.slane %v8240, 5
        %v8406 = vsel %vm1010, %v8404, %v8405
        %v8407 = vrot.slane %v8241, 5
        %v8408 = vrot.slane %v8407, 4
        %v8409 = vrot.slane %v8242, 5
        %v8410 = vsel %vm1010, %v8408, %v8409
        %v8411 = vrot.slane %v8243, 5
        %v8412 = vrot.slane %v8411, 4
        %v8413 = vrot.slane %v8244, 5
        %v8414 = vsel %vm1010, %v8412, %v8413
        %v8415 = vrot.slane %v8245, 5
        %v8416 = vrot.slane %v8415, 4
        %v8417 = vrot.slane %v8246, 5
        %v8418 = vsel %vm1010, %v8416, %v8417
        %v8419 = vrot.slane %v8247, 5
        %v8420 = vrot.slane %v8419, 4
        %v8421 = vrot.slane %v8248, 5
        %v8422 = vsel %vm1010, %v8420, %v8421
        %v8423 = vrot.slane %v8249, 5
        %v8424 = vrot.slane %v8423, 4
        %v8425 = vrot.slane %v8250, 5
        %v8426 = vsel %vm1010, %v8424, %v8425
        %v8427 = vrot.slane %v8251, 5
        %v8428 = vrot.slane %v8427, 4
        %v8429 = vrot.slane %v8252, 5
        %v8430 = vsel %vm1010, %v8428, %v8429
        %v8431 = vrot.slane %v8253, 5
        %v8432 = vrot.slane %v8431, 4
        %v8433 = vrot.slane %v8254, 5
        %v8434 = vsel %vm1010, %v8432, %v8433
        %v8435 = vrot.slane %v8255, 5
        %v8436 = vrot.slane %v8435, 4
        %v8437 = vrot.slane %v8256, 5
        %v8438 = vsel %vm1010, %v8436, %v8437
        %v8439 = vrot.slane %v8257, 5
        %v8440 = vrot.slane %v8439, 4
        %v8441 = vrot.slane %v8258, 5
        %v8442 = vsel %vm1010, %v8440, %v8441
        %v8443 = vrot.slane %v8259, 5
        %v8444 = vrot.slane %v8443, 4
        %v8445 = vrot.slane %v8260, 5
        %v8446 = vsel %vm1010, %v8444, %v8445
        %v8447 = vrot.slane %v8261, 5
        %v8448 = vrot.slane %v8447, 4
        %v8449 = vrot.slane %v8262, 5
        %v8450 = vsel %vm1010, %v8448, %v8449
        %v8451 = vrot.slane %v8263, 5
        %v8452 = vrot.slane %v8451, 4
        %v8453 = vrot.slane %v8264, 5
        %v8454 = vsel %vm1010, %v8452, %v8453
        %v8455 = vrot.slane %v8265, 5
        %v8456 = vrot.slane %v8455, 4
        %v8457 = vrot.slane %v8266, 5
        %v8458 = vsel %vm1010, %v8456, %v8457
        %8459 = vrot.lane.b32.xlu0 %v8334, 80
        %v8460 = vpop.permute.xlu0 %8459
        %8461 = vrot.lane.b32.xlu0 %v8338, 80
        %v8462 = vpop.permute.xlu0 %8461
        %8463 = vrot.lane.b32.xlu0 %v8342, 80
        %v8464 = vpop.permute.xlu0 %8463
        %8465 = vrot.lane.b32.xlu0 %v8346, 80
        %v8466 = vpop.permute.xlu0 %8465
        %8467 = vrot.lane.b32.xlu0 %v8350, 80
        %v8468 = vpop.permute.xlu0 %8467
        %8469 = vrot.lane.b32.xlu0 %v8354, 80
        %v8470 = vpop.permute.xlu0 %8469
        %8471 = vrot.lane.b32.xlu0 %v8358, 80
        %v8472 = vpop.permute.xlu0 %8471
        %8473 = vrot.lane.b32.xlu0 %v8362, 80
        %v8474 = vpop.permute.xlu0 %8473
        %8475 = vrot.lane.b32.xlu0 %v8366, 80
        %v8476 = vpop.permute.xlu0 %8475
        %8477 = vrot.lane.b32.xlu0 %v8370, 80
        %v8478 = vpop.permute.xlu0 %8477
        %8479 = vrot.lane.b32.xlu0 %v8374, 80
        %v8480 = vpop.permute.xlu0 %8479
        %8481 = vrot.lane.b32.xlu0 %v8378, 80
        %v8482 = vpop.permute.xlu0 %8481
        %8483 = vrot.lane.b32.xlu0 %v8382, 80
        %v8484 = vpop.permute.xlu0 %8483
        %8485 = vrot.lane.b32.xlu0 %v8386, 80
        %v8486 = vpop.permute.xlu0 %8485
        %8487 = vrot.lane.b32.xlu0 %v8390, 80
        %v8488 = vpop.permute.xlu0 %8487
        %8489 = vrot.lane.b32.xlu0 %v8394, 80
        %v8490 = vpop.permute.xlu0 %8489
        %8491 = vrot.lane.b32.xlu0 %v8398, 80
        %v8492 = vpop.permute.xlu0 %8491
        %8493 = vrot.lane.b32.xlu0 %v8402, 80
        %v8494 = vpop.permute.xlu0 %8493
        %8495 = vrot.lane.b32.xlu0 %v8406, 80
        %v8496 = vpop.permute.xlu0 %8495
        %8497 = vrot.lane.b32.xlu0 %v8410, 80
        %v8498 = vpop.permute.xlu0 %8497
        %8499 = vrot.lane.b32.xlu0 %v8414, 80
        %v8500 = vpop.permute.xlu0 %8499
        %8501 = vrot.lane.b32.xlu0 %v8418, 80
        %v8502 = vpop.permute.xlu0 %8501
        %8503 = vrot.lane.b32.xlu0 %v8422, 80
        %v8504 = vpop.permute.xlu0 %8503
        %8505 = vrot.lane.b32.xlu0 %v8426, 80
        %v8506 = vpop.permute.xlu0 %8505
        %8507 = vrot.lane.b32.xlu0 %v8430, 80
        %v8508 = vpop.permute.xlu0 %8507
        %8509 = vrot.lane.b32.xlu0 %v8434, 80
        %v8510 = vpop.permute.xlu0 %8509
        %8511 = vrot.lane.b32.xlu0 %v8438, 80
        %v8512 = vpop.permute.xlu0 %8511
        %8513 = vrot.lane.b32.xlu0 %v8442, 80
        %v8514 = vpop.permute.xlu0 %8513
        %8515 = vrot.lane.b32.xlu0 %v8446, 80
        %v8516 = vpop.permute.xlu0 %8515
        %8517 = vrot.lane.b32.xlu0 %v8450, 80
        %v8518 = vpop.permute.xlu0 %8517
        %8519 = vrot.lane.b32.xlu0 %v8454, 80
        %v8520 = vpop.permute.xlu0 %8519
        %8521 = vrot.lane.b32.xlu0 %v8458, 80
        %v8522 = vpop.permute.xlu0 %8521
        %vm8555 = vcmask 683648
        %8556 = vst.msk [vmem:[#allocation2] sm:$0xf] %vm8555, %v8460
        %8557 = vst.msk [vmem:[#allocation2 + $0x4] sm:$0xf] %vm8555, %v8462
        %8558 = vst.msk [vmem:[#allocation2 + $0x8] sm:$0xf] %vm8555, %v8464
        %8559 = vst.msk [vmem:[#allocation2 + $0xc] sm:$0xf] %vm8555, %v8466
        %8560 = vst.msk [vmem:[#allocation2 + $0x10] sm:$0xf] %vm8555, %v8468
        %8561 = vst.msk [vmem:[#allocation2 + $0x14] sm:$0xf] %vm8555, %v8470
        %8562 = vst.msk [vmem:[#allocation2 + $0x18] sm:$0xf] %vm8555, %v8472
        %8563 = vst.msk [vmem:[#allocation2 + $0x1c] sm:$0xf] %vm8555, %v8474
        %8564 = vst.msk [vmem:[#allocation2 + $0x20] sm:$0xf] %vm8555, %v8476
        %8565 = vst.msk [vmem:[#allocation2 + $0x24] sm:$0xf] %vm8555, %v8478
        %8566 = vst.msk [vmem:[#allocation2 + $0x28] sm:$0xf] %vm8555, %v8480
        %8567 = vst.msk [vmem:[#allocation2 + $0x2c] sm:$0xf] %vm8555, %v8482
        %8568 = vst.msk [vmem:[#allocation2 + $0x30] sm:$0xf] %vm8555, %v8484
        %8569 = vst.msk [vmem:[#allocation2 + $0x34] sm:$0xf] %vm8555, %v8486
        %8570 = vst.msk [vmem:[#allocation2 + $0x38] sm:$0xf] %vm8555, %v8488
        %8571 = vst.msk [vmem:[#allocation2 + $0x3c] sm:$0xf] %vm8555, %v8490
        %8572 = vst.msk [vmem:[#allocation2 + $0x40] sm:$0xf] %vm8555, %v8492
        %8573 = vst.msk [vmem:[#allocation2 + $0x44] sm:$0xf] %vm8555, %v8494
        %8574 = vst.msk [vmem:[#allocation2 + $0x48] sm:$0xf] %vm8555, %v8496
        %8575 = vst.msk [vmem:[#allocation2 + $0x4c] sm:$0xf] %vm8555, %v8498
        %8576 = vst.msk [vmem:[#allocation2 + $0x50] sm:$0xf] %vm8555, %v8500
        %8577 = vst.msk [vmem:[#allocation2 + $0x54] sm:$0xf] %vm8555, %v8502
        %8578 = vst.msk [vmem:[#allocation2 + $0x58] sm:$0xf] %vm8555, %v8504
        %8579 = vst.msk [vmem:[#allocation2 + $0x5c] sm:$0xf] %vm8555, %v8506
        %8580 = vst.msk [vmem:[#allocation2 + $0x60] sm:$0xf] %vm8555, %v8508
        %8581 = vst.msk [vmem:[#allocation2 + $0x64] sm:$0xf] %vm8555, %v8510
        %8582 = vst.msk [vmem:[#allocation2 + $0x68] sm:$0xf] %vm8555, %v8512
        %8583 = vst.msk [vmem:[#allocation2 + $0x6c] sm:$0xf] %vm8555, %v8514
        %8584 = vst.msk [vmem:[#allocation2 + $0x70] sm:$0xf] %vm8555, %v8516
        %8585 = vst.msk [vmem:[#allocation2 + $0x74] sm:$0xf] %vm8555, %v8518
        %8586 = vst.msk [vmem:[#allocation2 + $0x78] sm:$0xf] %vm8555, %v8520
        %8587 = vst.msk [vmem:[#allocation2 + $0x7c] sm:$0xf] %vm8555, %v8522
        %s8588 = scalar_lea.vmem %s168, 168
        %v8589 = vld [vmem:[%s8588] sm:$0xf]
        %v8590 = vld [vmem:[%s8588 + $0x8] sm:$0xf]
        %v8591 = vld [vmem:[%s8588 + $0x10] sm:$0xf]
        %v8592 = vld [vmem:[%s8588 + $0x18] sm:$0xf]
        %v8593 = vld [vmem:[%s8588 + $0x20] sm:$0xf]
        %v8594 = vld [vmem:[%s8588 + $0x28] sm:$0xf]
        %v8595 = vld [vmem:[%s8588 + $0x30] sm:$0xf]
        %v8596 = vld [vmem:[%s8588 + $0x38] sm:$0xf]
        %v8597 = vld [vmem:[%s8588 + $0x50] sm:$0xf]
        %v8598 = vld [vmem:[%s8588 + $0x58] sm:$0xf]
        %v8599 = vld [vmem:[%s8588 + $0x60] sm:$0xf]
        %v8600 = vld [vmem:[%s8588 + $0x68] sm:$0xf]
        %v8601 = vld [vmem:[%s8588 + $0x70] sm:$0xf]
        %v8602 = vld [vmem:[%s8588 + $0x78] sm:$0xf]
        %v8603 = vld [vmem:[%s8588 + $0x80] sm:$0xf]
        %v8604 = vld [vmem:[%s8588 + $0x88] sm:$0xf]
        %v8605 = vld [vmem:[%s8588 + $0xa0] sm:$0xf]
        %v8606 = vld [vmem:[%s8588 + $0xa8] sm:$0xf]
        %v8607 = vld [vmem:[%s8588 + $0xb0] sm:$0xf]
        %v8608 = vld [vmem:[%s8588 + $0xb8] sm:$0xf]
        %v8609 = vld [vmem:[%s8588 + $0xc0] sm:$0xf]
        %v8610 = vld [vmem:[%s8588 + $0xc8] sm:$0xf]
        %v8611 = vld [vmem:[%s8588 + $0xd0] sm:$0xf]
        %v8612 = vld [vmem:[%s8588 + $0xd8] sm:$0xf]
        %v8613 = vld [vmem:[%s8588 + $0xf0] sm:$0xf]
        %v8614 = vld [vmem:[%s8588 + $0xf8] sm:$0xf]
        %v8615 = vld [vmem:[%s8588 + $0x100] sm:$0xf]
        %v8616 = vld [vmem:[%s8588 + $0x108] sm:$0xf]
        %v8617 = vld [vmem:[%s8588 + $0x110] sm:$0xf]
        %v8618 = vld [vmem:[%s8588 + $0x118] sm:$0xf]
        %v8619 = vld [vmem:[%s8588 + $0x120] sm:$0xf]
        %v8620 = vld [vmem:[%s8588 + $0x128] sm:$0xf]
        %8653 = vrot.lane.b32.xlu0 %v8589, 84
        %v8654 = vpop.permute.xlu0 %8653
        %8655 = vrot.lane.b32.xlu0 %v8590, 84
        %v8656 = vpop.permute.xlu0 %8655
        %8657 = vrot.lane.b32.xlu0 %v8591, 84
        %v8658 = vpop.permute.xlu0 %8657
        %8659 = vrot.lane.b32.xlu0 %v8592, 84
        %v8660 = vpop.permute.xlu0 %8659
        %8661 = vrot.lane.b32.xlu0 %v8593, 84
        %v8662 = vpop.permute.xlu0 %8661
        %8663 = vrot.lane.b32.xlu0 %v8594, 84
        %v8664 = vpop.permute.xlu0 %8663
        %8665 = vrot.lane.b32.xlu0 %v8595, 84
        %v8666 = vpop.permute.xlu0 %8665
        %8667 = vrot.lane.b32.xlu0 %v8596, 84
        %v8668 = vpop.permute.xlu0 %8667
        %8669 = vrot.lane.b32.xlu0 %v8597, 84
        %v8670 = vpop.permute.xlu0 %8669
        %8671 = vrot.lane.b32.xlu0 %v8598, 84
        %v8672 = vpop.permute.xlu0 %8671
        %8673 = vrot.lane.b32.xlu0 %v8599, 84
        %v8674 = vpop.permute.xlu0 %8673
        %8675 = vrot.lane.b32.xlu0 %v8600, 84
        %v8676 = vpop.permute.xlu0 %8675
        %8677 = vrot.lane.b32.xlu0 %v8601, 84
        %v8678 = vpop.permute.xlu0 %8677
        %8679 = vrot.lane.b32.xlu0 %v8602, 84
        %v8680 = vpop.permute.xlu0 %8679
        %8681 = vrot.lane.b32.xlu0 %v8603, 84
        %v8682 = vpop.permute.xlu0 %8681
        %8683 = vrot.lane.b32.xlu0 %v8604, 84
        %v8684 = vpop.permute.xlu0 %8683
        %8685 = vrot.lane.b32.xlu0 %v8605, 84
        %v8686 = vpop.permute.xlu0 %8685
        %8687 = vrot.lane.b32.xlu0 %v8606, 84
        %v8688 = vpop.permute.xlu0 %8687
        %8689 = vrot.lane.b32.xlu0 %v8607, 84
        %v8690 = vpop.permute.xlu0 %8689
        %8691 = vrot.lane.b32.xlu0 %v8608, 84
        %v8692 = vpop.permute.xlu0 %8691
        %8693 = vrot.lane.b32.xlu0 %v8609, 84
        %v8694 = vpop.permute.xlu0 %8693
        %8695 = vrot.lane.b32.xlu0 %v8610, 84
        %v8696 = vpop.permute.xlu0 %8695
        %8697 = vrot.lane.b32.xlu0 %v8611, 84
        %v8698 = vpop.permute.xlu0 %8697
        %8699 = vrot.lane.b32.xlu0 %v8612, 84
        %v8700 = vpop.permute.xlu0 %8699
        %8701 = vrot.lane.b32.xlu0 %v8613, 84
        %v8702 = vpop.permute.xlu0 %8701
        %8703 = vrot.lane.b32.xlu0 %v8614, 84
        %v8704 = vpop.permute.xlu0 %8703
        %8705 = vrot.lane.b32.xlu0 %v8615, 84
        %v8706 = vpop.permute.xlu0 %8705
        %8707 = vrot.lane.b32.xlu0 %v8616, 84
        %v8708 = vpop.permute.xlu0 %8707
        %8709 = vrot.lane.b32.xlu0 %v8617, 84
        %v8710 = vpop.permute.xlu0 %8709
        %8711 = vrot.lane.b32.xlu0 %v8618, 84
        %v8712 = vpop.permute.xlu0 %8711
        %8713 = vrot.lane.b32.xlu0 %v8619, 84
        %v8714 = vpop.permute.xlu0 %8713
        %8715 = vrot.lane.b32.xlu0 %v8620, 84
        %v8716 = vpop.permute.xlu0 %8715
        %vm8749 = vcmask 716448
        %8750 = vst.msk [vmem:[#allocation2] sm:$0xf] %vm8749, %v8654
        %8751 = vst.msk [vmem:[#allocation2 + $0x4] sm:$0xf] %vm8749, %v8656
        %8752 = vst.msk [vmem:[#allocation2 + $0x8] sm:$0xf] %vm8749, %v8658
        %8753 = vst.msk [vmem:[#allocation2 + $0xc] sm:$0xf] %vm8749, %v8660
        %8754 = vst.msk [vmem:[#allocation2 + $0x10] sm:$0xf] %vm8749, %v8662
        %8755 = vst.msk [vmem:[#allocation2 + $0x14] sm:$0xf] %vm8749, %v8664
        %8756 = vst.msk [vmem:[#allocation2 + $0x18] sm:$0xf] %vm8749, %v8666
        %8757 = vst.msk [vmem:[#allocation2 + $0x1c] sm:$0xf] %vm8749, %v8668
        %8758 = vst.msk [vmem:[#allocation2 + $0x20] sm:$0xf] %vm8749, %v8670
        %8759 = vst.msk [vmem:[#allocation2 + $0x24] sm:$0xf] %vm8749, %v8672
        %8760 = vst.msk [vmem:[#allocation2 + $0x28] sm:$0xf] %vm8749, %v8674
        %8761 = vst.msk [vmem:[#allocation2 + $0x2c] sm:$0xf] %vm8749, %v8676
        %8762 = vst.msk [vmem:[#allocation2 + $0x30] sm:$0xf] %vm8749, %v8678
        %8763 = vst.msk [vmem:[#allocation2 + $0x34] sm:$0xf] %vm8749, %v8680
        %8764 = vst.msk [vmem:[#allocation2 + $0x38] sm:$0xf] %vm8749, %v8682
        %8765 = vst.msk [vmem:[#allocation2 + $0x3c] sm:$0xf] %vm8749, %v8684
        %8766 = vst.msk [vmem:[#allocation2 + $0x40] sm:$0xf] %vm8749, %v8686
        %8767 = vst.msk [vmem:[#allocation2 + $0x44] sm:$0xf] %vm8749, %v8688
        %8768 = vst.msk [vmem:[#allocation2 + $0x48] sm:$0xf] %vm8749, %v8690
        %8769 = vst.msk [vmem:[#allocation2 + $0x4c] sm:$0xf] %vm8749, %v8692
        %8770 = vst.msk [vmem:[#allocation2 + $0x50] sm:$0xf] %vm8749, %v8694
        %8771 = vst.msk [vmem:[#allocation2 + $0x54] sm:$0xf] %vm8749, %v8696
        %8772 = vst.msk [vmem:[#allocation2 + $0x58] sm:$0xf] %vm8749, %v8698
        %8773 = vst.msk [vmem:[#allocation2 + $0x5c] sm:$0xf] %vm8749, %v8700
        %8774 = vst.msk [vmem:[#allocation2 + $0x60] sm:$0xf] %vm8749, %v8702
        %8775 = vst.msk [vmem:[#allocation2 + $0x64] sm:$0xf] %vm8749, %v8704
        %8776 = vst.msk [vmem:[#allocation2 + $0x68] sm:$0xf] %vm8749, %v8706
        %8777 = vst.msk [vmem:[#allocation2 + $0x6c] sm:$0xf] %vm8749, %v8708
        %8778 = vst.msk [vmem:[#allocation2 + $0x70] sm:$0xf] %vm8749, %v8710
        %8779 = vst.msk [vmem:[#allocation2 + $0x74] sm:$0xf] %vm8749, %v8712
        %8780 = vst.msk [vmem:[#allocation2 + $0x78] sm:$0xf] %vm8749, %v8714
        %8781 = vst.msk [vmem:[#allocation2 + $0x7c] sm:$0xf] %vm8749, %v8716
        %v8782 = vld [vmem:[%s8588] sm:$0xf]
        %v8783 = vld [vmem:[%s8588 + $0x4] sm:$0x1]
        %v8784 = vld [vmem:[%s8588 + $0x8] sm:$0xf]
        %v8785 = vld [vmem:[%s8588 + $0xc] sm:$0x1]
        %v8786 = vld [vmem:[%s8588 + $0x10] sm:$0xf]
        %v8787 = vld [vmem:[%s8588 + $0x14] sm:$0x1]
        %v8788 = vld [vmem:[%s8588 + $0x18] sm:$0xf]
        %v8789 = vld [vmem:[%s8588 + $0x1c] sm:$0x1]
        %v8790 = vld [vmem:[%s8588 + $0x20] sm:$0xf]
        %v8791 = vld [vmem:[%s8588 + $0x24] sm:$0x1]
        %v8792 = vld [vmem:[%s8588 + $0x28] sm:$0xf]
        %v8793 = vld [vmem:[%s8588 + $0x2c] sm:$0x1]
        %v8794 = vld [vmem:[%s8588 + $0x30] sm:$0xf]
        %v8795 = vld [vmem:[%s8588 + $0x34] sm:$0x1]
        %v8796 = vld [vmem:[%s8588 + $0x38] sm:$0xf]
        %v8797 = vld [vmem:[%s8588 + $0x3c] sm:$0x1]
        %v8798 = vld [vmem:[%s8588 + $0x50] sm:$0xf]
        %v8799 = vld [vmem:[%s8588 + $0x54] sm:$0x1]
        %v8800 = vld [vmem:[%s8588 + $0x58] sm:$0xf]
        %v8801 = vld [vmem:[%s8588 + $0x5c] sm:$0x1]
        %v8802 = vld [vmem:[%s8588 + $0x60] sm:$0xf]
        %v8803 = vld [vmem:[%s8588 + $0x64] sm:$0x1]
        %v8804 = vld [vmem:[%s8588 + $0x68] sm:$0xf]
        %v8805 = vld [vmem:[%s8588 + $0x6c] sm:$0x1]
        %v8806 = vld [vmem:[%s8588 + $0x70] sm:$0xf]
        %v8807 = vld [vmem:[%s8588 + $0x74] sm:$0x1]
        %v8808 = vld [vmem:[%s8588 + $0x78] sm:$0xf]
        %v8809 = vld [vmem:[%s8588 + $0x7c] sm:$0x1]
        %v8810 = vld [vmem:[%s8588 + $0x80] sm:$0xf]
        %v8811 = vld [vmem:[%s8588 + $0x84] sm:$0x1]
        %v8812 = vld [vmem:[%s8588 + $0x88] sm:$0xf]
        %v8813 = vld [vmem:[%s8588 + $0x8c] sm:$0x1]
        %v8814 = vld [vmem:[%s8588 + $0xa0] sm:$0xf]
        %v8815 = vld [vmem:[%s8588 + $0xa4] sm:$0x1]
        %v8816 = vld [vmem:[%s8588 + $0xa8] sm:$0xf]
        %v8817 = vld [vmem:[%s8588 + $0xac] sm:$0x1]
        %v8818 = vld [vmem:[%s8588 + $0xb0] sm:$0xf]
        %v8819 = vld [vmem:[%s8588 + $0xb4] sm:$0x1]
        %v8820 = vld [vmem:[%s8588 + $0xb8] sm:$0xf]
        %v8821 = vld [vmem:[%s8588 + $0xbc] sm:$0x1]
        %v8822 = vld [vmem:[%s8588 + $0xc0] sm:$0xf]
        %v8823 = vld [vmem:[%s8588 + $0xc4] sm:$0x1]
        %v8824 = vld [vmem:[%s8588 + $0xc8] sm:$0xf]
        %v8825 = vld [vmem:[%s8588 + $0xcc] sm:$0x1]
        %v8826 = vld [vmem:[%s8588 + $0xd0] sm:$0xf]
        %v8827 = vld [vmem:[%s8588 + $0xd4] sm:$0x1]
        %v8828 = vld [vmem:[%s8588 + $0xd8] sm:$0xf]
        %v8829 = vld [vmem:[%s8588 + $0xdc] sm:$0x1]
        %v8830 = vld [vmem:[%s8588 + $0xf0] sm:$0xf]
        %v8831 = vld [vmem:[%s8588 + $0xf4] sm:$0x1]
        %v8832 = vld [vmem:[%s8588 + $0xf8] sm:$0xf]
        %v8833 = vld [vmem:[%s8588 + $0xfc] sm:$0x1]
        %v8834 = vld [vmem:[%s8588 + $0x100] sm:$0xf]
        %v8835 = vld [vmem:[%s8588 + $0x104] sm:$0x1]
        %v8836 = vld [vmem:[%s8588 + $0x108] sm:$0xf]
        %v8837 = vld [vmem:[%s8588 + $0x10c] sm:$0x1]
        %v8838 = vld [vmem:[%s8588 + $0x110] sm:$0xf]
        %v8839 = vld [vmem:[%s8588 + $0x114] sm:$0x1]
        %v8840 = vld [vmem:[%s8588 + $0x118] sm:$0xf]
        %v8841 = vld [vmem:[%s8588 + $0x11c] sm:$0x1]
        %v8842 = vld [vmem:[%s8588 + $0x120] sm:$0xf]
        %v8843 = vld [vmem:[%s8588 + $0x124] sm:$0x1]
        %v8844 = vld [vmem:[%s8588 + $0x128] sm:$0xf]
        %v8845 = vld [vmem:[%s8588 + $0x12c] sm:$0x1]
        %v8847 = vshrl.u32 %v8782, 16
        %v8849 = vrot.slane %v8847, 4
        %v8850 = vshll.u32 %v8782, 16
        %v8852 = vrot.slane %v8850, 5
        %v8853 = vor.u32 %v8849, %v8852
        %v8854 = vrot.slane %v8853, 4
        %v8856 = vshll.u32 %v8783, 16
        %v8858 = vrot.slane %v8856, 5
        %v8859 = vsel %vm302, %v8854, %v8858
        %v8861 = vshrl.u32 %v8784, 16
        %v8863 = vrot.slane %v8861, 4
        %v8864 = vshll.u32 %v8784, 16
        %v8866 = vrot.slane %v8864, 5
        %v8867 = vor.u32 %v8863, %v8866
        %v8868 = vrot.slane %v8867, 4
        %v8870 = vshll.u32 %v8785, 16
        %v8872 = vrot.slane %v8870, 5
        %v8873 = vsel %vm302, %v8868, %v8872
        %v8875 = vshrl.u32 %v8786, 16
        %v8877 = vrot.slane %v8875, 4
        %v8878 = vshll.u32 %v8786, 16
        %v8880 = vrot.slane %v8878, 5
        %v8881 = vor.u32 %v8877, %v8880
        %v8882 = vrot.slane %v8881, 4
        %v8884 = vshll.u32 %v8787, 16
        %v8886 = vrot.slane %v8884, 5
        %v8887 = vsel %vm302, %v8882, %v8886
        %v8889 = vshrl.u32 %v8788, 16
        %v8891 = vrot.slane %v8889, 4
        %v8892 = vshll.u32 %v8788, 16
        %v8894 = vrot.slane %v8892, 5
        %v8895 = vor.u32 %v8891, %v8894
        %v8896 = vrot.slane %v8895, 4
        %v8898 = vshll.u32 %v8789, 16
        %v8900 = vrot.slane %v8898, 5
        %v8901 = vsel %vm302, %v8896, %v8900
        %v8903 = vshrl.u32 %v8790, 16
        %v8905 = vrot.slane %v8903, 4
        %v8906 = vshll.u32 %v8790, 16
        %v8908 = vrot.slane %v8906, 5
        %v8909 = vor.u32 %v8905, %v8908
        %v8910 = vrot.slane %v8909, 4
        %v8912 = vshll.u32 %v8791, 16
        %v8914 = vrot.slane %v8912, 5
        %v8915 = vsel %vm302, %v8910, %v8914
        %v8917 = vshrl.u32 %v8792, 16
        %v8919 = vrot.slane %v8917, 4
        %v8920 = vshll.u32 %v8792, 16
        %v8922 = vrot.slane %v8920, 5
        %v8923 = vor.u32 %v8919, %v8922
        %v8924 = vrot.slane %v8923, 4
        %v8926 = vshll.u32 %v8793, 16
        %v8928 = vrot.slane %v8926, 5
        %v8929 = vsel %vm302, %v8924, %v8928
        %v8931 = vshrl.u32 %v8794, 16
        %v8933 = vrot.slane %v8931, 4
        %v8934 = vshll.u32 %v8794, 16
        %v8936 = vrot.slane %v8934, 5
        %v8937 = vor.u32 %v8933, %v8936
        %v8938 = vrot.slane %v8937, 4
        %v8940 = vshll.u32 %v8795, 16
        %v8942 = vrot.slane %v8940, 5
        %v8943 = vsel %vm302, %v8938, %v8942
        %v8945 = vshrl.u32 %v8796, 16
        %v8947 = vrot.slane %v8945, 4
        %v8948 = vshll.u32 %v8796, 16
        %v8950 = vrot.slane %v8948, 5
        %v8951 = vor.u32 %v8947, %v8950
        %v8952 = vrot.slane %v8951, 4
        %v8954 = vshll.u32 %v8797, 16
        %v8956 = vrot.slane %v8954, 5
        %v8957 = vsel %vm302, %v8952, %v8956
        %v8959 = vshrl.u32 %v8798, 16
        %v8961 = vrot.slane %v8959, 4
        %v8962 = vshll.u32 %v8798, 16
        %v8964 = vrot.slane %v8962, 5
        %v8965 = vor.u32 %v8961, %v8964
        %v8966 = vrot.slane %v8965, 4
        %v8968 = vshll.u32 %v8799, 16
        %v8970 = vrot.slane %v8968, 5
        %v8971 = vsel %vm302, %v8966, %v8970
        %v8973 = vshrl.u32 %v8800, 16
        %v8975 = vrot.slane %v8973, 4
        %v8976 = vshll.u32 %v8800, 16
        %v8978 = vrot.slane %v8976, 5
        %v8979 = vor.u32 %v8975, %v8978
        %v8980 = vrot.slane %v8979, 4
        %v8982 = vshll.u32 %v8801, 16
        %v8984 = vrot.slane %v8982, 5
        %v8985 = vsel %vm302, %v8980, %v8984
        %v8987 = vshrl.u32 %v8802, 16
        %v8989 = vrot.slane %v8987, 4
        %v8990 = vshll.u32 %v8802, 16
        %v8992 = vrot.slane %v8990, 5
        %v8993 = vor.u32 %v8989, %v8992
        %v8994 = vrot.slane %v8993, 4
        %v8996 = vshll.u32 %v8803, 16
        %v8998 = vrot.slane %v8996, 5
        %v8999 = vsel %vm302, %v8994, %v8998
        %v9001 = vshrl.u32 %v8804, 16
        %v9003 = vrot.slane %v9001, 4
        %v9004 = vshll.u32 %v8804, 16
        %v9006 = vrot.slane %v9004, 5
        %v9007 = vor.u32 %v9003, %v9006
        %v9008 = vrot.slane %v9007, 4
        %v9010 = vshll.u32 %v8805, 16
        %v9012 = vrot.slane %v9010, 5
        %v9013 = vsel %vm302, %v9008, %v9012
        %v9015 = vshrl.u32 %v8806, 16
        %v9017 = vrot.slane %v9015, 4
        %v9018 = vshll.u32 %v8806, 16
        %v9020 = vrot.slane %v9018, 5
        %v9021 = vor.u32 %v9017, %v9020
        %v9022 = vrot.slane %v9021, 4
        %v9024 = vshll.u32 %v8807, 16
        %v9026 = vrot.slane %v9024, 5
        %v9027 = vsel %vm302, %v9022, %v9026
        %v9029 = vshrl.u32 %v8808, 16
        %v9031 = vrot.slane %v9029, 4
        %v9032 = vshll.u32 %v8808, 16
        %v9034 = vrot.slane %v9032, 5
        %v9035 = vor.u32 %v9031, %v9034
        %v9036 = vrot.slane %v9035, 4
        %v9038 = vshll.u32 %v8809, 16
        %v9040 = vrot.slane %v9038, 5
        %v9041 = vsel %vm302, %v9036, %v9040
        %v9043 = vshrl.u32 %v8810, 16
        %v9045 = vrot.slane %v9043, 4
        %v9046 = vshll.u32 %v8810, 16
        %v9048 = vrot.slane %v9046, 5
        %v9049 = vor.u32 %v9045, %v9048
        %v9050 = vrot.slane %v9049, 4
        %v9052 = vshll.u32 %v8811, 16
        %v9054 = vrot.slane %v9052, 5
        %v9055 = vsel %vm302, %v9050, %v9054
        %v9057 = vshrl.u32 %v8812, 16
        %v9059 = vrot.slane %v9057, 4
        %v9060 = vshll.u32 %v8812, 16
        %v9062 = vrot.slane %v9060, 5
        %v9063 = vor.u32 %v9059, %v9062
        %v9064 = vrot.slane %v9063, 4
        %v9066 = vshll.u32 %v8813, 16
        %v9068 = vrot.slane %v9066, 5
        %v9069 = vsel %vm302, %v9064, %v9068
        %v9071 = vshrl.u32 %v8814, 16
        %v9073 = vrot.slane %v9071, 4
        %v9074 = vshll.u32 %v8814, 16
        %v9076 = vrot.slane %v9074, 5
        %v9077 = vor.u32 %v9073, %v9076
        %v9078 = vrot.slane %v9077, 4
        %v9080 = vshll.u32 %v8815, 16
        %v9082 = vrot.slane %v9080, 5
        %v9083 = vsel %vm302, %v9078, %v9082
        %v9085 = vshrl.u32 %v8816, 16
        %v9087 = vrot.slane %v9085, 4
        %v9088 = vshll.u32 %v8816, 16
        %v9090 = vrot.slane %v9088, 5
        %v9091 = vor.u32 %v9087, %v9090
        %v9092 = vrot.slane %v9091, 4
        %v9094 = vshll.u32 %v8817, 16
        %v9096 = vrot.slane %v9094, 5
        %v9097 = vsel %vm302, %v9092, %v9096
        %v9099 = vshrl.u32 %v8818, 16
        %v9101 = vrot.slane %v9099, 4
        %v9102 = vshll.u32 %v8818, 16
        %v9104 = vrot.slane %v9102, 5
        %v9105 = vor.u32 %v9101, %v9104
        %v9106 = vrot.slane %v9105, 4
        %v9108 = vshll.u32 %v8819, 16
        %v9110 = vrot.slane %v9108, 5
        %v9111 = vsel %vm302, %v9106, %v9110
        %v9113 = vshrl.u32 %v8820, 16
        %v9115 = vrot.slane %v9113, 4
        %v9116 = vshll.u32 %v8820, 16
        %v9118 = vrot.slane %v9116, 5
        %v9119 = vor.u32 %v9115, %v9118
        %v9120 = vrot.slane %v9119, 4
        %v9122 = vshll.u32 %v8821, 16
        %v9124 = vrot.slane %v9122, 5
        %v9125 = vsel %vm302, %v9120, %v9124
        %v9127 = vshrl.u32 %v8822, 16
        %v9129 = vrot.slane %v9127, 4
        %v9130 = vshll.u32 %v8822, 16
        %v9132 = vrot.slane %v9130, 5
        %v9133 = vor.u32 %v9129, %v9132
        %v9134 = vrot.slane %v9133, 4
        %v9136 = vshll.u32 %v8823, 16
        %v9138 = vrot.slane %v9136, 5
        %v9139 = vsel %vm302, %v9134, %v9138
        %v9141 = vshrl.u32 %v8824, 16
        %v9143 = vrot.slane %v9141, 4
        %v9144 = vshll.u32 %v8824, 16
        %v9146 = vrot.slane %v9144, 5
        %v9147 = vor.u32 %v9143, %v9146
        %v9148 = vrot.slane %v9147, 4
        %v9150 = vshll.u32 %v8825, 16
        %v9152 = vrot.slane %v9150, 5
        %v9153 = vsel %vm302, %v9148, %v9152
        %v9155 = vshrl.u32 %v8826, 16
        %v9157 = vrot.slane %v9155, 4
        %v9158 = vshll.u32 %v8826, 16
        %v9160 = vrot.slane %v9158, 5
        %v9161 = vor.u32 %v9157, %v9160
        %v9162 = vrot.slane %v9161, 4
        %v9164 = vshll.u32 %v8827, 16
        %v9166 = vrot.slane %v9164, 5
        %v9167 = vsel %vm302, %v9162, %v9166
        %v9169 = vshrl.u32 %v8828, 16
        %v9171 = vrot.slane %v9169, 4
        %v9172 = vshll.u32 %v8828, 16
        %v9174 = vrot.slane %v9172, 5
        %v9175 = vor.u32 %v9171, %v9174
        %v9176 = vrot.slane %v9175, 4
        %v9178 = vshll.u32 %v8829, 16
        %v9180 = vrot.slane %v9178, 5
        %v9181 = vsel %vm302, %v9176, %v9180
        %v9183 = vshrl.u32 %v8830, 16
        %v9185 = vrot.slane %v9183, 4
        %v9186 = vshll.u32 %v8830, 16
        %v9188 = vrot.slane %v9186, 5
        %v9189 = vor.u32 %v9185, %v9188
        %v9190 = vrot.slane %v9189, 4
        %v9192 = vshll.u32 %v8831, 16
        %v9194 = vrot.slane %v9192, 5
        %v9195 = vsel %vm302, %v9190, %v9194
        %v9197 = vshrl.u32 %v8832, 16
        %v9199 = vrot.slane %v9197, 4
        %v9200 = vshll.u32 %v8832, 16
        %v9202 = vrot.slane %v9200, 5
        %v9203 = vor.u32 %v9199, %v9202
        %v9204 = vrot.slane %v9203, 4
        %v9206 = vshll.u32 %v8833, 16
        %v9208 = vrot.slane %v9206, 5
        %v9209 = vsel %vm302, %v9204, %v9208
        %v9211 = vshrl.u32 %v8834, 16
        %v9213 = vrot.slane %v9211, 4
        %v9214 = vshll.u32 %v8834, 16
        %v9216 = vrot.slane %v9214, 5
        %v9217 = vor.u32 %v9213, %v9216
        %v9218 = vrot.slane %v9217, 4
        %v9220 = vshll.u32 %v8835, 16
        %v9222 = vrot.slane %v9220, 5
        %v9223 = vsel %vm302, %v9218, %v9222
        %v9225 = vshrl.u32 %v8836, 16
        %v9227 = vrot.slane %v9225, 4
        %v9228 = vshll.u32 %v8836, 16
        %v9230 = vrot.slane %v9228, 5
        %v9231 = vor.u32 %v9227, %v9230
        %v9232 = vrot.slane %v9231, 4
        %v9234 = vshll.u32 %v8837, 16
        %v9236 = vrot.slane %v9234, 5
        %v9237 = vsel %vm302, %v9232, %v9236
        %v9239 = vshrl.u32 %v8838, 16
        %v9241 = vrot.slane %v9239, 4
        %v9242 = vshll.u32 %v8838, 16
        %v9244 = vrot.slane %v9242, 5
        %v9245 = vor.u32 %v9241, %v9244
        %v9246 = vrot.slane %v9245, 4
        %v9248 = vshll.u32 %v8839, 16
        %v9250 = vrot.slane %v9248, 5
        %v9251 = vsel %vm302, %v9246, %v9250
        %v9253 = vshrl.u32 %v8840, 16
        %v9255 = vrot.slane %v9253, 4
        %v9256 = vshll.u32 %v8840, 16
        %v9258 = vrot.slane %v9256, 5
        %v9259 = vor.u32 %v9255, %v9258
        %v9260 = vrot.slane %v9259, 4
        %v9262 = vshll.u32 %v8841, 16
        %v9264 = vrot.slane %v9262, 5
        %v9265 = vsel %vm302, %v9260, %v9264
        %v9267 = vshrl.u32 %v8842, 16
        %v9269 = vrot.slane %v9267, 4
        %v9270 = vshll.u32 %v8842, 16
        %v9272 = vrot.slane %v9270, 5
        %v9273 = vor.u32 %v9269, %v9272
        %v9274 = vrot.slane %v9273, 4
        %v9276 = vshll.u32 %v8843, 16
        %v9278 = vrot.slane %v9276, 5
        %v9279 = vsel %vm302, %v9274, %v9278
        %v9281 = vshrl.u32 %v8844, 16
        %v9283 = vrot.slane %v9281, 4
        %v9284 = vshll.u32 %v8844, 16
        %v9286 = vrot.slane %v9284, 5
        %v9287 = vor.u32 %v9283, %v9286
        %v9288 = vrot.slane %v9287, 4
        %v9290 = vshll.u32 %v8845, 16
        %v9292 = vrot.slane %v9290, 5
        %v9293 = vsel %vm302, %v9288, %v9292
        %9294 = vrot.lane.b32.xlu0 %v8859, 88
        %v9295 = vpop.permute.xlu0 %9294
        %9296 = vrot.lane.b32.xlu0 %v8873, 88
        %v9297 = vpop.permute.xlu0 %9296
        %9298 = vrot.lane.b32.xlu0 %v8887, 88
        %v9299 = vpop.permute.xlu0 %9298
        %9300 = vrot.lane.b32.xlu0 %v8901, 88
        %v9301 = vpop.permute.xlu0 %9300
        %9302 = vrot.lane.b32.xlu0 %v8915, 88
        %v9303 = vpop.permute.xlu0 %9302
        %9304 = vrot.lane.b32.xlu0 %v8929, 88
        %v9305 = vpop.permute.xlu0 %9304
        %9306 = vrot.lane.b32.xlu0 %v8943, 88
        %v9307 = vpop.permute.xlu0 %9306
        %9308 = vrot.lane.b32.xlu0 %v8957, 88
        %v9309 = vpop.permute.xlu0 %9308
        %9310 = vrot.lane.b32.xlu0 %v8971, 88
        %v9311 = vpop.permute.xlu0 %9310
        %9312 = vrot.lane.b32.xlu0 %v8985, 88
        %v9313 = vpop.permute.xlu0 %9312
        %9314 = vrot.lane.b32.xlu0 %v8999, 88
        %v9315 = vpop.permute.xlu0 %9314
        %9316 = vrot.lane.b32.xlu0 %v9013, 88
        %v9317 = vpop.permute.xlu0 %9316
        %9318 = vrot.lane.b32.xlu0 %v9027, 88
        %v9319 = vpop.permute.xlu0 %9318
        %9320 = vrot.lane.b32.xlu0 %v9041, 88
        %v9321 = vpop.permute.xlu0 %9320
        %9322 = vrot.lane.b32.xlu0 %v9055, 88
        %v9323 = vpop.permute.xlu0 %9322
        %9324 = vrot.lane.b32.xlu0 %v9069, 88
        %v9325 = vpop.permute.xlu0 %9324
        %9326 = vrot.lane.b32.xlu0 %v9083, 88
        %v9327 = vpop.permute.xlu0 %9326
        %9328 = vrot.lane.b32.xlu0 %v9097, 88
        %v9329 = vpop.permute.xlu0 %9328
        %9330 = vrot.lane.b32.xlu0 %v9111, 88
        %v9331 = vpop.permute.xlu0 %9330
        %9332 = vrot.lane.b32.xlu0 %v9125, 88
        %v9333 = vpop.permute.xlu0 %9332
        %9334 = vrot.lane.b32.xlu0 %v9139, 88
        %v9335 = vpop.permute.xlu0 %9334
        %9336 = vrot.lane.b32.xlu0 %v9153, 88
        %v9337 = vpop.permute.xlu0 %9336
        %9338 = vrot.lane.b32.xlu0 %v9167, 88
        %v9339 = vpop.permute.xlu0 %9338
        %9340 = vrot.lane.b32.xlu0 %v9181, 88
        %v9341 = vpop.permute.xlu0 %9340
        %9342 = vrot.lane.b32.xlu0 %v9195, 88
        %v9343 = vpop.permute.xlu0 %9342
        %9344 = vrot.lane.b32.xlu0 %v9209, 88
        %v9345 = vpop.permute.xlu0 %9344
        %9346 = vrot.lane.b32.xlu0 %v9223, 88
        %v9347 = vpop.permute.xlu0 %9346
        %9348 = vrot.lane.b32.xlu0 %v9237, 88
        %v9349 = vpop.permute.xlu0 %9348
        %9350 = vrot.lane.b32.xlu0 %v9251, 88
        %v9351 = vpop.permute.xlu0 %9350
        %9352 = vrot.lane.b32.xlu0 %v9265, 88
        %v9353 = vpop.permute.xlu0 %9352
        %9354 = vrot.lane.b32.xlu0 %v9279, 88
        %v9355 = vpop.permute.xlu0 %9354
        %9356 = vrot.lane.b32.xlu0 %v9293, 88
        %v9357 = vpop.permute.xlu0 %9356
        %vm9390 = vcmask 749248
        %9391 = vst.msk [vmem:[#allocation2] sm:$0xf] %vm9390, %v9295
        %9392 = vst.msk [vmem:[#allocation2 + $0x4] sm:$0xf] %vm9390, %v9297
        %9393 = vst.msk [vmem:[#allocation2 + $0x8] sm:$0xf] %vm9390, %v9299
        %9394 = vst.msk [vmem:[#allocation2 + $0xc] sm:$0xf] %vm9390, %v9301
        %9395 = vst.msk [vmem:[#allocation2 + $0x10] sm:$0xf] %vm9390, %v9303
        %9396 = vst.msk [vmem:[#allocation2 + $0x14] sm:$0xf] %vm9390, %v9305
        %9397 = vst.msk [vmem:[#allocation2 + $0x18] sm:$0xf] %vm9390, %v9307
        %9398 = vst.msk [vmem:[#allocation2 + $0x1c] sm:$0xf] %vm9390, %v9309
        %9399 = vst.msk [vmem:[#allocation2 + $0x20] sm:$0xf] %vm9390, %v9311
        %9400 = vst.msk [vmem:[#allocation2 + $0x24] sm:$0xf] %vm9390, %v9313
        %9401 = vst.msk [vmem:[#allocation2 + $0x28] sm:$0xf] %vm9390, %v9315
        %9402 = vst.msk [vmem:[#allocation2 + $0x2c] sm:$0xf] %vm9390, %v9317
        %9403 = vst.msk [vmem:[#allocation2 + $0x30] sm:$0xf] %vm9390, %v9319
        %9404 = vst.msk [vmem:[#allocation2 + $0x34] sm:$0xf] %vm9390, %v9321
        %9405 = vst.msk [vmem:[#allocation2 + $0x38] sm:$0xf] %vm9390, %v9323
        %9406 = vst.msk [vmem:[#allocation2 + $0x3c] sm:$0xf] %vm9390, %v9325
        %9407 = vst.msk [vmem:[#allocation2 + $0x40] sm:$0xf] %vm9390, %v9327
        %9408 = vst.msk [vmem:[#allocation2 + $0x44] sm:$0xf] %vm9390, %v9329
        %9409 = vst.msk [vmem:[#allocation2 + $0x48] sm:$0xf] %vm9390, %v9331
        %9410 = vst.msk [vmem:[#allocation2 + $0x4c] sm:$0xf] %vm9390, %v9333
        %9411 = vst.msk [vmem:[#allocation2 + $0x50] sm:$0xf] %vm9390, %v9335
        %9412 = vst.msk [vmem:[#allocation2 + $0x54] sm:$0xf] %vm9390, %v9337
        %9413 = vst.msk [vmem:[#allocation2 + $0x58] sm:$0xf] %vm9390, %v9339
        %9414 = vst.msk [vmem:[#allocation2 + $0x5c] sm:$0xf] %vm9390, %v9341
        %9415 = vst.msk [vmem:[#allocation2 + $0x60] sm:$0xf] %vm9390, %v9343
        %9416 = vst.msk [vmem:[#allocation2 + $0x64] sm:$0xf] %vm9390, %v9345
        %9417 = vst.msk [vmem:[#allocation2 + $0x68] sm:$0xf] %vm9390, %v9347
        %9418 = vst.msk [vmem:[#allocation2 + $0x6c] sm:$0xf] %vm9390, %v9349
        %9419 = vst.msk [vmem:[#allocation2 + $0x70] sm:$0xf] %vm9390, %v9351
        %9420 = vst.msk [vmem:[#allocation2 + $0x74] sm:$0xf] %vm9390, %v9353
        %9421 = vst.msk [vmem:[#allocation2 + $0x78] sm:$0xf] %vm9390, %v9355
        %9422 = vst.msk [vmem:[#allocation2 + $0x7c] sm:$0xf] %vm9390, %v9357
        %v9423 = vld [vmem:[%s8588] sm:$0xe]
        %v9424 = vld [vmem:[%s8588 + $0x4] sm:$0x1]
        %v9425 = vld [vmem:[%s8588 + $0x8] sm:$0xe]
        %v9426 = vld [vmem:[%s8588 + $0xc] sm:$0x1]
        %v9427 = vld [vmem:[%s8588 + $0x10] sm:$0xe]
        %v9428 = vld [vmem:[%s8588 + $0x14] sm:$0x1]
        %v9429 = vld [vmem:[%s8588 + $0x18] sm:$0xe]
        %v9430 = vld [vmem:[%s8588 + $0x1c] sm:$0x1]
        %v9431 = vld [vmem:[%s8588 + $0x20] sm:$0xe]
        %v9432 = vld [vmem:[%s8588 + $0x24] sm:$0x1]
        %v9433 = vld [vmem:[%s8588 + $0x28] sm:$0xe]
        %v9434 = vld [vmem:[%s8588 + $0x2c] sm:$0x1]
        %v9435 = vld [vmem:[%s8588 + $0x30] sm:$0xe]
        %v9436 = vld [vmem:[%s8588 + $0x34] sm:$0x1]
        %v9437 = vld [vmem:[%s8588 + $0x38] sm:$0xe]
        %v9438 = vld [vmem:[%s8588 + $0x3c] sm:$0x1]
        %v9439 = vld [vmem:[%s8588 + $0x50] sm:$0xe]
        %v9440 = vld [vmem:[%s8588 + $0x54] sm:$0x1]
        %v9441 = vld [vmem:[%s8588 + $0x58] sm:$0xe]
        %v9442 = vld [vmem:[%s8588 + $0x5c] sm:$0x1]
        %v9443 = vld [vmem:[%s8588 + $0x60] sm:$0xe]
        %v9444 = vld [vmem:[%s8588 + $0x64] sm:$0x1]
        %v9445 = vld [vmem:[%s8588 + $0x68] sm:$0xe]
        %v9446 = vld [vmem:[%s8588 + $0x6c] sm:$0x1]
        %v9447 = vld [vmem:[%s8588 + $0x70] sm:$0xe]
        %v9448 = vld [vmem:[%s8588 + $0x74] sm:$0x1]
        %v9449 = vld [vmem:[%s8588 + $0x78] sm:$0xe]
        %v9450 = vld [vmem:[%s8588 + $0x7c] sm:$0x1]
        %v9451 = vld [vmem:[%s8588 + $0x80] sm:$0xe]
        %v9452 = vld [vmem:[%s8588 + $0x84] sm:$0x1]
        %v9453 = vld [vmem:[%s8588 + $0x88] sm:$0xe]
        %v9454 = vld [vmem:[%s8588 + $0x8c] sm:$0x1]
        %v9455 = vld [vmem:[%s8588 + $0xa0] sm:$0xe]
        %v9456 = vld [vmem:[%s8588 + $0xa4] sm:$0x1]
        %v9457 = vld [vmem:[%s8588 + $0xa8] sm:$0xe]
        %v9458 = vld [vmem:[%s8588 + $0xac] sm:$0x1]
        %v9459 = vld [vmem:[%s8588 + $0xb0] sm:$0xe]
        %v9460 = vld [vmem:[%s8588 + $0xb4] sm:$0x1]
        %v9461 = vld [vmem:[%s8588 + $0xb8] sm:$0xe]
        %v9462 = vld [vmem:[%s8588 + $0xbc] sm:$0x1]
        %v9463 = vld [vmem:[%s8588 + $0xc0] sm:$0xe]
        %v9464 = vld [vmem:[%s8588 + $0xc4] sm:$0x1]
        %v9465 = vld [vmem:[%s8588 + $0xc8] sm:$0xe]
        %v9466 = vld [vmem:[%s8588 + $0xcc] sm:$0x1]
        %v9467 = vld [vmem:[%s8588 + $0xd0] sm:$0xe]
        %v9468 = vld [vmem:[%s8588 + $0xd4] sm:$0x1]
        %v9469 = vld [vmem:[%s8588 + $0xd8] sm:$0xe]
        %v9470 = vld [vmem:[%s8588 + $0xdc] sm:$0x1]
        %v9471 = vld [vmem:[%s8588 + $0xf0] sm:$0xe]
        %v9472 = vld [vmem:[%s8588 + $0xf4] sm:$0x1]
        %v9473 = vld [vmem:[%s8588 + $0xf8] sm:$0xe]
        %v9474 = vld [vmem:[%s8588 + $0xfc] sm:$0x1]
        %v9475 = vld [vmem:[%s8588 + $0x100] sm:$0xe]
        %v9476 = vld [vmem:[%s8588 + $0x104] sm:$0x1]
        %v9477 = vld [vmem:[%s8588 + $0x108] sm:$0xe]
        %v9478 = vld [vmem:[%s8588 + $0x10c] sm:$0x1]
        %v9479 = vld [vmem:[%s8588 + $0x110] sm:$0xe]
        %v9480 = vld [vmem:[%s8588 + $0x114] sm:$0x1]
        %v9481 = vld [vmem:[%s8588 + $0x118] sm:$0xe]
        %v9482 = vld [vmem:[%s8588 + $0x11c] sm:$0x1]
        %v9483 = vld [vmem:[%s8588 + $0x120] sm:$0xe]
        %v9484 = vld [vmem:[%s8588 + $0x124] sm:$0x1]
        %v9485 = vld [vmem:[%s8588 + $0x128] sm:$0xe]
        %v9486 = vld [vmem:[%s8588 + $0x12c] sm:$0x1]
        %v9551 = vrot.slane %v9423, 5
        %v9552 = vrot.slane %v9551, 4
        %v9553 = vrot.slane %v9424, 5
        %v9554 = vsel %vm1010, %v9552, %v9553
        %v9555 = vrot.slane %v9425, 5
        %v9556 = vrot.slane %v9555, 4
        %v9557 = vrot.slane %v9426, 5
        %v9558 = vsel %vm1010, %v9556, %v9557
        %v9559 = vrot.slane %v9427, 5
        %v9560 = vrot.slane %v9559, 4
        %v9561 = vrot.slane %v9428, 5
        %v9562 = vsel %vm1010, %v9560, %v9561
        %v9563 = vrot.slane %v9429, 5
        %v9564 = vrot.slane %v9563, 4
        %v9565 = vrot.slane %v9430, 5
        %v9566 = vsel %vm1010, %v9564, %v9565
        %v9567 = vrot.slane %v9431, 5
        %v9568 = vrot.slane %v9567, 4
        %v9569 = vrot.slane %v9432, 5
        %v9570 = vsel %vm1010, %v9568, %v9569
        %v9571 = vrot.slane %v9433, 5
        %v9572 = vrot.slane %v9571, 4
        %v9573 = vrot.slane %v9434, 5
        %v9574 = vsel %vm1010, %v9572, %v9573
        %v9575 = vrot.slane %v9435, 5
        %v9576 = vrot.slane %v9575, 4
        %v9577 = vrot.slane %v9436, 5
        %v9578 = vsel %vm1010, %v9576, %v9577
        %v9579 = vrot.slane %v9437, 5
        %v9580 = vrot.slane %v9579, 4
        %v9581 = vrot.slane %v9438, 5
        %v9582 = vsel %vm1010, %v9580, %v9581
        %v9583 = vrot.slane %v9439, 5
        %v9584 = vrot.slane %v9583, 4
        %v9585 = vrot.slane %v9440, 5
        %v9586 = vsel %vm1010, %v9584, %v9585
        %v9587 = vrot.slane %v9441, 5
        %v9588 = vrot.slane %v9587, 4
        %v9589 = vrot.slane %v9442, 5
        %v9590 = vsel %vm1010, %v9588, %v9589
        %v9591 = vrot.slane %v9443, 5
        %v9592 = vrot.slane %v9591, 4
        %v9593 = vrot.slane %v9444, 5
        %v9594 = vsel %vm1010, %v9592, %v9593
        %v9595 = vrot.slane %v9445, 5
        %v9596 = vrot.slane %v9595, 4
        %v9597 = vrot.slane %v9446, 5
        %v9598 = vsel %vm1010, %v9596, %v9597
        %v9599 = vrot.slane %v9447, 5
        %v9600 = vrot.slane %v9599, 4
        %v9601 = vrot.slane %v9448, 5
        %v9602 = vsel %vm1010, %v9600, %v9601
        %v9603 = vrot.slane %v9449, 5
        %v9604 = vrot.slane %v9603, 4
        %v9605 = vrot.slane %v9450, 5
        %v9606 = vsel %vm1010, %v9604, %v9605
        %v9607 = vrot.slane %v9451, 5
        %v9608 = vrot.slane %v9607, 4
        %v9609 = vrot.slane %v9452, 5
        %v9610 = vsel %vm1010, %v9608, %v9609
        %v9611 = vrot.slane %v9453, 5
        %v9612 = vrot.slane %v9611, 4
        %v9613 = vrot.slane %v9454, 5
        %v9614 = vsel %vm1010, %v9612, %v9613
        %v9615 = vrot.slane %v9455, 5
        %v9616 = vrot.slane %v9615, 4
        %v9617 = vrot.slane %v9456, 5
        %v9618 = vsel %vm1010, %v9616, %v9617
        %v9619 = vrot.slane %v9457, 5
        %v9620 = vrot.slane %v9619, 4
        %v9621 = vrot.slane %v9458, 5
        %v9622 = vsel %vm1010, %v9620, %v9621
        %v9623 = vrot.slane %v9459, 5
        %v9624 = vrot.slane %v9623, 4
        %v9625 = vrot.slane %v9460, 5
        %v9626 = vsel %vm1010, %v9624, %v9625
        %v9627 = vrot.slane %v9461, 5
        %v9628 = vrot.slane %v9627, 4
        %v9629 = vrot.slane %v9462, 5
        %v9630 = vsel %vm1010, %v9628, %v9629
        %v9631 = vrot.slane %v9463, 5
        %v9632 = vrot.slane %v9631, 4
        %v9633 = vrot.slane %v9464, 5
        %v9634 = vsel %vm1010, %v9632, %v9633
        %v9635 = vrot.slane %v9465, 5
        %v9636 = vrot.slane %v9635, 4
        %v9637 = vrot.slane %v9466, 5
        %v9638 = vsel %vm1010, %v9636, %v9637
        %v9639 = vrot.slane %v9467, 5
        %v9640 = vrot.slane %v9639, 4
        %v9641 = vrot.slane %v9468, 5
        %v9642 = vsel %vm1010, %v9640, %v9641
        %v9643 = vrot.slane %v9469, 5
        %v9644 = vrot.slane %v9643, 4
        %v9645 = vrot.slane %v9470, 5
        %v9646 = vsel %vm1010, %v9644, %v9645
        %v9647 = vrot.slane %v9471, 5
        %v9648 = vrot.slane %v9647, 4
        %v9649 = vrot.slane %v9472, 5
        %v9650 = vsel %vm1010, %v9648, %v9649
        %v9651 = vrot.slane %v9473, 5
        %v9652 = vrot.slane %v9651, 4
        %v9653 = vrot.slane %v9474, 5
        %v9654 = vsel %vm1010, %v9652, %v9653
        %v9655 = vrot.slane %v9475, 5
        %v9656 = vrot.slane %v9655, 4
        %v9657 = vrot.slane %v9476, 5
        %v9658 = vsel %vm1010, %v9656, %v9657
        %v9659 = vrot.slane %v9477, 5
        %v9660 = vrot.slane %v9659, 4
        %v9661 = vrot.slane %v9478, 5
        %v9662 = vsel %vm1010, %v9660, %v9661
        %v9663 = vrot.slane %v9479, 5
        %v9664 = vrot.slane %v9663, 4
        %v9665 = vrot.slane %v9480, 5
        %v9666 = vsel %vm1010, %v9664, %v9665
        %v9667 = vrot.slane %v9481, 5
        %v9668 = vrot.slane %v9667, 4
        %v9669 = vrot.slane %v9482, 5
        %v9670 = vsel %vm1010, %v9668, %v9669
        %v9671 = vrot.slane %v9483, 5
        %v9672 = vrot.slane %v9671, 4
        %v9673 = vrot.slane %v9484, 5
        %v9674 = vsel %vm1010, %v9672, %v9673
        %v9675 = vrot.slane %v9485, 5
        %v9676 = vrot.slane %v9675, 4
        %v9677 = vrot.slane %v9486, 5
        %v9678 = vsel %vm1010, %v9676, %v9677
        %9679 = vrot.lane.b32.xlu0 %v9554, 92
        %v9680 = vpop.permute.xlu0 %9679
        %9681 = vrot.lane.b32.xlu0 %v9558, 92
        %v9682 = vpop.permute.xlu0 %9681
        %9683 = vrot.lane.b32.xlu0 %v9562, 92
        %v9684 = vpop.permute.xlu0 %9683
        %9685 = vrot.lane.b32.xlu0 %v9566, 92
        %v9686 = vpop.permute.xlu0 %9685
        %9687 = vrot.lane.b32.xlu0 %v9570, 92
        %v9688 = vpop.permute.xlu0 %9687
        %9689 = vrot.lane.b32.xlu0 %v9574, 92
        %v9690 = vpop.permute.xlu0 %9689
        %9691 = vrot.lane.b32.xlu0 %v9578, 92
        %v9692 = vpop.permute.xlu0 %9691
        %9693 = vrot.lane.b32.xlu0 %v9582, 92
        %v9694 = vpop.permute.xlu0 %9693
        %9695 = vrot.lane.b32.xlu0 %v9586, 92
        %v9696 = vpop.permute.xlu0 %9695
        %9697 = vrot.lane.b32.xlu0 %v9590, 92
        %v9698 = vpop.permute.xlu0 %9697
        %9699 = vrot.lane.b32.xlu0 %v9594, 92
        %v9700 = vpop.permute.xlu0 %9699
        %9701 = vrot.lane.b32.xlu0 %v9598, 92
        %v9702 = vpop.permute.xlu0 %9701
        %9703 = vrot.lane.b32.xlu0 %v9602, 92
        %v9704 = vpop.permute.xlu0 %9703
        %9705 = vrot.lane.b32.xlu0 %v9606, 92
        %v9706 = vpop.permute.xlu0 %9705
        %9707 = vrot.lane.b32.xlu0 %v9610, 92
        %v9708 = vpop.permute.xlu0 %9707
        %9709 = vrot.lane.b32.xlu0 %v9614, 92
        %v9710 = vpop.permute.xlu0 %9709
        %9711 = vrot.lane.b32.xlu0 %v9618, 92
        %v9712 = vpop.permute.xlu0 %9711
        %9713 = vrot.lane.b32.xlu0 %v9622, 92
        %v9714 = vpop.permute.xlu0 %9713
        %9715 = vrot.lane.b32.xlu0 %v9626, 92
        %v9716 = vpop.permute.xlu0 %9715
        %9717 = vrot.lane.b32.xlu0 %v9630, 92
        %v9718 = vpop.permute.xlu0 %9717
        %9719 = vrot.lane.b32.xlu0 %v9634, 92
        %v9720 = vpop.permute.xlu0 %9719
        %9721 = vrot.lane.b32.xlu0 %v9638, 92
        %v9722 = vpop.permute.xlu0 %9721
        %9723 = vrot.lane.b32.xlu0 %v9642, 92
        %v9724 = vpop.permute.xlu0 %9723
        %9725 = vrot.lane.b32.xlu0 %v9646, 92
        %v9726 = vpop.permute.xlu0 %9725
        %9727 = vrot.lane.b32.xlu0 %v9650, 92
        %v9728 = vpop.permute.xlu0 %9727
        %9729 = vrot.lane.b32.xlu0 %v9654, 92
        %v9730 = vpop.permute.xlu0 %9729
        %9731 = vrot.lane.b32.xlu0 %v9658, 92
        %v9732 = vpop.permute.xlu0 %9731
        %9733 = vrot.lane.b32.xlu0 %v9662, 92
        %v9734 = vpop.permute.xlu0 %9733
        %9735 = vrot.lane.b32.xlu0 %v9666, 92
        %v9736 = vpop.permute.xlu0 %9735
        %9737 = vrot.lane.b32.xlu0 %v9670, 92
        %v9738 = vpop.permute.xlu0 %9737
        %9739 = vrot.lane.b32.xlu0 %v9674, 92
        %v9740 = vpop.permute.xlu0 %9739
        %9741 = vrot.lane.b32.xlu0 %v9678, 92
        %v9742 = vpop.permute.xlu0 %9741
        %vm9775 = vcmask 782048
        %9776 = vst.msk [vmem:[#allocation2] sm:$0xf] %vm9775, %v9680
        %9777 = vst.msk [vmem:[#allocation2 + $0x4] sm:$0xf] %vm9775, %v9682
        %9778 = vst.msk [vmem:[#allocation2 + $0x8] sm:$0xf] %vm9775, %v9684
        %9779 = vst.msk [vmem:[#allocation2 + $0xc] sm:$0xf] %vm9775, %v9686
        %9780 = vst.msk [vmem:[#allocation2 + $0x10] sm:$0xf] %vm9775, %v9688
        %9781 = vst.msk [vmem:[#allocation2 + $0x14] sm:$0xf] %vm9775, %v9690
        %9782 = vst.msk [vmem:[#allocation2 + $0x18] sm:$0xf] %vm9775, %v9692
        %9783 = vst.msk [vmem:[#allocation2 + $0x1c] sm:$0xf] %vm9775, %v9694
        %9784 = vst.msk [vmem:[#allocation2 + $0x20] sm:$0xf] %vm9775, %v9696
        %9785 = vst.msk [vmem:[#allocation2 + $0x24] sm:$0xf] %vm9775, %v9698
        %9786 = vst.msk [vmem:[#allocation2 + $0x28] sm:$0xf] %vm9775, %v9700
        %9787 = vst.msk [vmem:[#allocation2 + $0x2c] sm:$0xf] %vm9775, %v9702
        %9788 = vst.msk [vmem:[#allocation2 + $0x30] sm:$0xf] %vm9775, %v9704
        %9789 = vst.msk [vmem:[#allocation2 + $0x34] sm:$0xf] %vm9775, %v9706
        %9790 = vst.msk [vmem:[#allocation2 + $0x38] sm:$0xf] %vm9775, %v9708
        %9791 = vst.msk [vmem:[#allocation2 + $0x3c] sm:$0xf] %vm9775, %v9710
        %9792 = vst.msk [vmem:[#allocation2 + $0x40] sm:$0xf] %vm9775, %v9712
        %9793 = vst.msk [vmem:[#allocation2 + $0x44] sm:$0xf] %vm9775, %v9714
        %9794 = vst.msk [vmem:[#allocation2 + $0x48] sm:$0xf] %vm9775, %v9716
        %9795 = vst.msk [vmem:[#allocation2 + $0x4c] sm:$0xf] %vm9775, %v9718
        %9796 = vst.msk [vmem:[#allocation2 + $0x50] sm:$0xf] %vm9775, %v9720
        %9797 = vst.msk [vmem:[#allocation2 + $0x54] sm:$0xf] %vm9775, %v9722
        %9798 = vst.msk [vmem:[#allocation2 + $0x58] sm:$0xf] %vm9775, %v9724
        %9799 = vst.msk [vmem:[#allocation2 + $0x5c] sm:$0xf] %vm9775, %v9726
        %9800 = vst.msk [vmem:[#allocation2 + $0x60] sm:$0xf] %vm9775, %v9728
        %9801 = vst.msk [vmem:[#allocation2 + $0x64] sm:$0xf] %vm9775, %v9730
        %9802 = vst.msk [vmem:[#allocation2 + $0x68] sm:$0xf] %vm9775, %v9732
        %9803 = vst.msk [vmem:[#allocation2 + $0x6c] sm:$0xf] %vm9775, %v9734
        %9804 = vst.msk [vmem:[#allocation2 + $0x70] sm:$0xf] %vm9775, %v9736
        %9805 = vst.msk [vmem:[#allocation2 + $0x74] sm:$0xf] %vm9775, %v9738
        %9806 = vst.msk [vmem:[#allocation2 + $0x78] sm:$0xf] %vm9775, %v9740
        %9807 = vst.msk [vmem:[#allocation2 + $0x7c] sm:$0xf] %vm9775, %v9742
        %s9808 = scalar_lea.vmem %s168, 176
        %v9809 = vld [vmem:[%s9808] sm:$0xf]
        %v9810 = vld [vmem:[%s9808 + $0x8] sm:$0xf]
        %v9811 = vld [vmem:[%s9808 + $0x10] sm:$0xf]
        %v9812 = vld [vmem:[%s9808 + $0x18] sm:$0xf]
        %v9813 = vld [vmem:[%s9808 + $0x20] sm:$0xf]
        %v9814 = vld [vmem:[%s9808 + $0x28] sm:$0xf]
        %v9815 = vld [vmem:[%s9808 + $0x30] sm:$0xf]
        %v9816 = vld [vmem:[%s9808 + $0x38] sm:$0xf]
        %v9817 = vld [vmem:[%s9808 + $0x50] sm:$0xf]
        %v9818 = vld [vmem:[%s9808 + $0x58] sm:$0xf]
        %v9819 = vld [vmem:[%s9808 + $0x60] sm:$0xf]
        %v9820 = vld [vmem:[%s9808 + $0x68] sm:$0xf]
        %v9821 = vld [vmem:[%s9808 + $0x70] sm:$0xf]
        %v9822 = vld [vmem:[%s9808 + $0x78] sm:$0xf]
        %v9823 = vld [vmem:[%s9808 + $0x80] sm:$0xf]
        %v9824 = vld [vmem:[%s9808 + $0x88] sm:$0xf]
        %v9825 = vld [vmem:[%s9808 + $0xa0] sm:$0xf]
        %v9826 = vld [vmem:[%s9808 + $0xa8] sm:$0xf]
        %v9827 = vld [vmem:[%s9808 + $0xb0] sm:$0xf]
        %v9828 = vld [vmem:[%s9808 + $0xb8] sm:$0xf]
        %v9829 = vld [vmem:[%s9808 + $0xc0] sm:$0xf]
        %v9830 = vld [vmem:[%s9808 + $0xc8] sm:$0xf]
        %v9831 = vld [vmem:[%s9808 + $0xd0] sm:$0xf]
        %v9832 = vld [vmem:[%s9808 + $0xd8] sm:$0xf]
        %v9833 = vld [vmem:[%s9808 + $0xf0] sm:$0xf]
        %v9834 = vld [vmem:[%s9808 + $0xf8] sm:$0xf]
        %v9835 = vld [vmem:[%s9808 + $0x100] sm:$0xf]
        %v9836 = vld [vmem:[%s9808 + $0x108] sm:$0xf]
        %v9837 = vld [vmem:[%s9808 + $0x110] sm:$0xf]
        %v9838 = vld [vmem:[%s9808 + $0x118] sm:$0xf]
        %v9839 = vld [vmem:[%s9808 + $0x120] sm:$0xf]
        %v9840 = vld [vmem:[%s9808 + $0x128] sm:$0xf]
        %9873 = vrot.lane.b32.xlu0 %v9809, 96
        %v9874 = vpop.permute.xlu0 %9873
        %9875 = vrot.lane.b32.xlu0 %v9810, 96
        %v9876 = vpop.permute.xlu0 %9875
        %9877 = vrot.lane.b32.xlu0 %v9811, 96
        %v9878 = vpop.permute.xlu0 %9877
        %9879 = vrot.lane.b32.xlu0 %v9812, 96
        %v9880 = vpop.permute.xlu0 %9879
        %9881 = vrot.lane.b32.xlu0 %v9813, 96
        %v9882 = vpop.permute.xlu0 %9881
        %9883 = vrot.lane.b32.xlu0 %v9814, 96
        %v9884 = vpop.permute.xlu0 %9883
        %9885 = vrot.lane.b32.xlu0 %v9815, 96
        %v9886 = vpop.permute.xlu0 %9885
        %9887 = vrot.lane.b32.xlu0 %v9816, 96
        %v9888 = vpop.permute.xlu0 %9887
        %9889 = vrot.lane.b32.xlu0 %v9817, 96
        %v9890 = vpop.permute.xlu0 %9889
        %9891 = vrot.lane.b32.xlu0 %v9818, 96
        %v9892 = vpop.permute.xlu0 %9891
        %9893 = vrot.lane.b32.xlu0 %v9819, 96
        %v9894 = vpop.permute.xlu0 %9893
        %9895 = vrot.lane.b32.xlu0 %v9820, 96
        %v9896 = vpop.permute.xlu0 %9895
        %9897 = vrot.lane.b32.xlu0 %v9821, 96
        %v9898 = vpop.permute.xlu0 %9897
        %9899 = vrot.lane.b32.xlu0 %v9822, 96
        %v9900 = vpop.permute.xlu0 %9899
        %9901 = vrot.lane.b32.xlu0 %v9823, 96
        %v9902 = vpop.permute.xlu0 %9901
        %9903 = vrot.lane.b32.xlu0 %v9824, 96
        %v9904 = vpop.permute.xlu0 %9903
        %9905 = vrot.lane.b32.xlu0 %v9825, 96
        %v9906 = vpop.permute.xlu0 %9905
        %9907 = vrot.lane.b32.xlu0 %v9826, 96
        %v9908 = vpop.permute.xlu0 %9907
        %9909 = vrot.lane.b32.xlu0 %v9827, 96
        %v9910 = vpop.permute.xlu0 %9909
        %9911 = vrot.lane.b32.xlu0 %v9828, 96
        %v9912 = vpop.permute.xlu0 %9911
        %9913 = vrot.lane.b32.xlu0 %v9829, 96
        %v9914 = vpop.permute.xlu0 %9913
        %9915 = vrot.lane.b32.xlu0 %v9830, 96
        %v9916 = vpop.permute.xlu0 %9915
        %9917 = vrot.lane.b32.xlu0 %v9831, 96
        %v9918 = vpop.permute.xlu0 %9917
        %9919 = vrot.lane.b32.xlu0 %v9832, 96
        %v9920 = vpop.permute.xlu0 %9919
        %9921 = vrot.lane.b32.xlu0 %v9833, 96
        %v9922 = vpop.permute.xlu0 %9921
        %9923 = vrot.lane.b32.xlu0 %v9834, 96
        %v9924 = vpop.permute.xlu0 %9923
        %9925 = vrot.lane.b32.xlu0 %v9835, 96
        %v9926 = vpop.permute.xlu0 %9925
        %9927 = vrot.lane.b32.xlu0 %v9836, 96
        %v9928 = vpop.permute.xlu0 %9927
        %9929 = vrot.lane.b32.xlu0 %v9837, 96
        %v9930 = vpop.permute.xlu0 %9929
        %9931 = vrot.lane.b32.xlu0 %v9838, 96
        %v9932 = vpop.permute.xlu0 %9931
        %9933 = vrot.lane.b32.xlu0 %v9839, 96
        %v9934 = vpop.permute.xlu0 %9933
        %9935 = vrot.lane.b32.xlu0 %v9840, 96
        %v9936 = vpop.permute.xlu0 %9935
        %vm9969 = vcmask 814848
        %9970 = vst.msk [vmem:[#allocation2] sm:$0xf] %vm9969, %v9874
        %9971 = vst.msk [vmem:[#allocation2 + $0x4] sm:$0xf] %vm9969, %v9876
        %9972 = vst.msk [vmem:[#allocation2 + $0x8] sm:$0xf] %vm9969, %v9878
        %9973 = vst.msk [vmem:[#allocation2 + $0xc] sm:$0xf] %vm9969, %v9880
        %9974 = vst.msk [vmem:[#allocation2 + $0x10] sm:$0xf] %vm9969, %v9882
        %9975 = vst.msk [vmem:[#allocation2 + $0x14] sm:$0xf] %vm9969, %v9884
        %9976 = vst.msk [vmem:[#allocation2 + $0x18] sm:$0xf] %vm9969, %v9886
        %9977 = vst.msk [vmem:[#allocation2 + $0x1c] sm:$0xf] %vm9969, %v9888
        %9978 = vst.msk [vmem:[#allocation2 + $0x20] sm:$0xf] %vm9969, %v9890
        %9979 = vst.msk [vmem:[#allocation2 + $0x24] sm:$0xf] %vm9969, %v9892
        %9980 = vst.msk [vmem:[#allocation2 + $0x28] sm:$0xf] %vm9969, %v9894
        %9981 = vst.msk [vmem:[#allocation2 + $0x2c] sm:$0xf] %vm9969, %v9896
        %9982 = vst.msk [vmem:[#allocation2 + $0x30] sm:$0xf] %vm9969, %v9898
        %9983 = vst.msk [vmem:[#allocation2 + $0x34] sm:$0xf] %vm9969, %v9900
        %9984 = vst.msk [vmem:[#allocation2 + $0x38] sm:$0xf] %vm9969, %v9902
        %9985 = vst.msk [vmem:[#allocation2 + $0x3c] sm:$0xf] %vm9969, %v9904
        %9986 = vst.msk [vmem:[#allocation2 + $0x40] sm:$0xf] %vm9969, %v9906
        %9987 = vst.msk [vmem:[#allocation2 + $0x44] sm:$0xf] %vm9969, %v9908
        %9988 = vst.msk [vmem:[#allocation2 + $0x48] sm:$0xf] %vm9969, %v9910
        %9989 = vst.msk [vmem:[#allocation2 + $0x4c] sm:$0xf] %vm9969, %v9912
        %9990 = vst.msk [vmem:[#allocation2 + $0x50] sm:$0xf] %vm9969, %v9914
        %9991 = vst.msk [vmem:[#allocation2 + $0x54] sm:$0xf] %vm9969, %v9916
        %9992 = vst.msk [vmem:[#allocation2 + $0x58] sm:$0xf] %vm9969, %v9918
        %9993 = vst.msk [vmem:[#allocation2 + $0x5c] sm:$0xf] %vm9969, %v9920
        %9994 = vst.msk [vmem:[#allocation2 + $0x60] sm:$0xf] %vm9969, %v9922
        %9995 = vst.msk [vmem:[#allocation2 + $0x64] sm:$0xf] %vm9969, %v9924
        %9996 = vst.msk [vmem:[#allocation2 + $0x68] sm:$0xf] %vm9969, %v9926
        %9997 = vst.msk [vmem:[#allocation2 + $0x6c] sm:$0xf] %vm9969, %v9928
        %9998 = vst.msk [vmem:[#allocation2 + $0x70] sm:$0xf] %vm9969, %v9930
        %9999 = vst.msk [vmem:[#allocation2 + $0x74] sm:$0xf] %vm9969, %v9932
        %10000 = vst.msk [vmem:[#allocation2 + $0x78] sm:$0xf] %vm9969, %v9934
        %10001 = vst.msk [vmem:[#allocation2 + $0x7c] sm:$0xf] %vm9969, %v9936
        %v10002 = vld [vmem:[%s9808] sm:$0xf]
        %v10003 = vld [vmem:[%s9808 + $0x4] sm:$0x1]
        %v10004 = vld [vmem:[%s9808 + $0x8] sm:$0xf]
        %v10005 = vld [vmem:[%s9808 + $0xc] sm:$0x1]
        %v10006 = vld [vmem:[%s9808 + $0x10] sm:$0xf]
        %v10007 = vld [vmem:[%s9808 + $0x14] sm:$0x1]
        %v10008 = vld [vmem:[%s9808 + $0x18] sm:$0xf]
        %v10009 = vld [vmem:[%s9808 + $0x1c] sm:$0x1]
        %v10010 = vld [vmem:[%s9808 + $0x20] sm:$0xf]
        %v10011 = vld [vmem:[%s9808 + $0x24] sm:$0x1]
        %v10012 = vld [vmem:[%s9808 + $0x28] sm:$0xf]
        %v10013 = vld [vmem:[%s9808 + $0x2c] sm:$0x1]
        %v10014 = vld [vmem:[%s9808 + $0x30] sm:$0xf]
        %v10015 = vld [vmem:[%s9808 + $0x34] sm:$0x1]
        %v10016 = vld [vmem:[%s9808 + $0x38] sm:$0xf]
        %v10017 = vld [vmem:[%s9808 + $0x3c] sm:$0x1]
        %v10018 = vld [vmem:[%s9808 + $0x50] sm:$0xf]
        %v10019 = vld [vmem:[%s9808 + $0x54] sm:$0x1]
        %v10020 = vld [vmem:[%s9808 + $0x58] sm:$0xf]
        %v10021 = vld [vmem:[%s9808 + $0x5c] sm:$0x1]
        %v10022 = vld [vmem:[%s9808 + $0x60] sm:$0xf]
        %v10023 = vld [vmem:[%s9808 + $0x64] sm:$0x1]
        %v10024 = vld [vmem:[%s9808 + $0x68] sm:$0xf]
        %v10025 = vld [vmem:[%s9808 + $0x6c] sm:$0x1]
        %v10026 = vld [vmem:[%s9808 + $0x70] sm:$0xf]
        %v10027 = vld [vmem:[%s9808 + $0x74] sm:$0x1]
        %v10028 = vld [vmem:[%s9808 + $0x78] sm:$0xf]
        %v10029 = vld [vmem:[%s9808 + $0x7c] sm:$0x1]
        %v10030 = vld [vmem:[%s9808 + $0x80] sm:$0xf]
        %v10031 = vld [vmem:[%s9808 + $0x84] sm:$0x1]
        %v10032 = vld [vmem:[%s9808 + $0x88] sm:$0xf]
        %v10033 = vld [vmem:[%s9808 + $0x8c] sm:$0x1]
        %v10034 = vld [vmem:[%s9808 + $0xa0] sm:$0xf]
        %v10035 = vld [vmem:[%s9808 + $0xa4] sm:$0x1]
        %v10036 = vld [vmem:[%s9808 + $0xa8] sm:$0xf]
        %v10037 = vld [vmem:[%s9808 + $0xac] sm:$0x1]
        %v10038 = vld [vmem:[%s9808 + $0xb0] sm:$0xf]
        %v10039 = vld [vmem:[%s9808 + $0xb4] sm:$0x1]
        %v10040 = vld [vmem:[%s9808 + $0xb8] sm:$0xf]
        %v10041 = vld [vmem:[%s9808 + $0xbc] sm:$0x1]
        %v10042 = vld [vmem:[%s9808 + $0xc0] sm:$0xf]
        %v10043 = vld [vmem:[%s9808 + $0xc4] sm:$0x1]
        %v10044 = vld [vmem:[%s9808 + $0xc8] sm:$0xf]
        %v10045 = vld [vmem:[%s9808 + $0xcc] sm:$0x1]
        %v10046 = vld [vmem:[%s9808 + $0xd0] sm:$0xf]
        %v10047 = vld [vmem:[%s9808 + $0xd4] sm:$0x1]
        %v10048 = vld [vmem:[%s9808 + $0xd8] sm:$0xf]
        %v10049 = vld [vmem:[%s9808 + $0xdc] sm:$0x1]
        %v10050 = vld [vmem:[%s9808 + $0xf0] sm:$0xf]
        %v10051 = vld [vmem:[%s9808 + $0xf4] sm:$0x1]
        %v10052 = vld [vmem:[%s9808 + $0xf8] sm:$0xf]
        %v10053 = vld [vmem:[%s9808 + $0xfc] sm:$0x1]
        %v10054 = vld [vmem:[%s9808 + $0x100] sm:$0xf]
        %v10055 = vld [vmem:[%s9808 + $0x104] sm:$0x1]
        %v10056 = vld [vmem:[%s9808 + $0x108] sm:$0xf]
        %v10057 = vld [vmem:[%s9808 + $0x10c] sm:$0x1]
        %v10058 = vld [vmem:[%s9808 + $0x110] sm:$0xf]
        %v10059 = vld [vmem:[%s9808 + $0x114] sm:$0x1]
        %v10060 = vld [vmem:[%s9808 + $0x118] sm:$0xf]
        %v10061 = vld [vmem:[%s9808 + $0x11c] sm:$0x1]
        %v10062 = vld [vmem:[%s9808 + $0x120] sm:$0xf]
        %v10063 = vld [vmem:[%s9808 + $0x124] sm:$0x1]
        %v10064 = vld [vmem:[%s9808 + $0x128] sm:$0xf]
        %v10065 = vld [vmem:[%s9808 + $0x12c] sm:$0x1]
        %v10067 = vshrl.u32 %v10002, 16
        %v10069 = vrot.slane %v10067, 4
        %v10070 = vshll.u32 %v10002, 16
        %v10072 = vrot.slane %v10070, 5
        %v10073 = vor.u32 %v10069, %v10072
        %v10074 = vrot.slane %v10073, 4
        %v10076 = vshll.u32 %v10003, 16
        %v10078 = vrot.slane %v10076, 5
        %v10079 = vsel %vm302, %v10074, %v10078
        %v10081 = vshrl.u32 %v10004, 16
        %v10083 = vrot.slane %v10081, 4
        %v10084 = vshll.u32 %v10004, 16
        %v10086 = vrot.slane %v10084, 5
        %v10087 = vor.u32 %v10083, %v10086
        %v10088 = vrot.slane %v10087, 4
        %v10090 = vshll.u32 %v10005, 16
        %v10092 = vrot.slane %v10090, 5
        %v10093 = vsel %vm302, %v10088, %v10092
        %v10095 = vshrl.u32 %v10006, 16
        %v10097 = vrot.slane %v10095, 4
        %v10098 = vshll.u32 %v10006, 16
        %v10100 = vrot.slane %v10098, 5
        %v10101 = vor.u32 %v10097, %v10100
        %v10102 = vrot.slane %v10101, 4
        %v10104 = vshll.u32 %v10007, 16
        %v10106 = vrot.slane %v10104, 5
        %v10107 = vsel %vm302, %v10102, %v10106
        %v10109 = vshrl.u32 %v10008, 16
        %v10111 = vrot.slane %v10109, 4
        %v10112 = vshll.u32 %v10008, 16
        %v10114 = vrot.slane %v10112, 5
        %v10115 = vor.u32 %v10111, %v10114
        %v10116 = vrot.slane %v10115, 4
        %v10118 = vshll.u32 %v10009, 16
        %v10120 = vrot.slane %v10118, 5
        %v10121 = vsel %vm302, %v10116, %v10120
        %v10123 = vshrl.u32 %v10010, 16
        %v10125 = vrot.slane %v10123, 4
        %v10126 = vshll.u32 %v10010, 16
        %v10128 = vrot.slane %v10126, 5
        %v10129 = vor.u32 %v10125, %v10128
        %v10130 = vrot.slane %v10129, 4
        %v10132 = vshll.u32 %v10011, 16
        %v10134 = vrot.slane %v10132, 5
        %v10135 = vsel %vm302, %v10130, %v10134
        %v10137 = vshrl.u32 %v10012, 16
        %v10139 = vrot.slane %v10137, 4
        %v10140 = vshll.u32 %v10012, 16
        %v10142 = vrot.slane %v10140, 5
        %v10143 = vor.u32 %v10139, %v10142
        %v10144 = vrot.slane %v10143, 4
        %v10146 = vshll.u32 %v10013, 16
        %v10148 = vrot.slane %v10146, 5
        %v10149 = vsel %vm302, %v10144, %v10148
        %v10151 = vshrl.u32 %v10014, 16
        %v10153 = vrot.slane %v10151, 4
        %v10154 = vshll.u32 %v10014, 16
        %v10156 = vrot.slane %v10154, 5
        %v10157 = vor.u32 %v10153, %v10156
        %v10158 = vrot.slane %v10157, 4
        %v10160 = vshll.u32 %v10015, 16
        %v10162 = vrot.slane %v10160, 5
        %v10163 = vsel %vm302, %v10158, %v10162
        %v10165 = vshrl.u32 %v10016, 16
        %v10167 = vrot.slane %v10165, 4
        %v10168 = vshll.u32 %v10016, 16
        %v10170 = vrot.slane %v10168, 5
        %v10171 = vor.u32 %v10167, %v10170
        %v10172 = vrot.slane %v10171, 4
        %v10174 = vshll.u32 %v10017, 16
        %v10176 = vrot.slane %v10174, 5
        %v10177 = vsel %vm302, %v10172, %v10176
        %v10179 = vshrl.u32 %v10018, 16
        %v10181 = vrot.slane %v10179, 4
        %v10182 = vshll.u32 %v10018, 16
        %v10184 = vrot.slane %v10182, 5
        %v10185 = vor.u32 %v10181, %v10184
        %v10186 = vrot.slane %v10185, 4
        %v10188 = vshll.u32 %v10019, 16
        %v10190 = vrot.slane %v10188, 5
        %v10191 = vsel %vm302, %v10186, %v10190
        %v10193 = vshrl.u32 %v10020, 16
        %v10195 = vrot.slane %v10193, 4
        %v10196 = vshll.u32 %v10020, 16
        %v10198 = vrot.slane %v10196, 5
        %v10199 = vor.u32 %v10195, %v10198
        %v10200 = vrot.slane %v10199, 4
        %v10202 = vshll.u32 %v10021, 16
        %v10204 = vrot.slane %v10202, 5
        %v10205 = vsel %vm302, %v10200, %v10204
        %v10207 = vshrl.u32 %v10022, 16
        %v10209 = vrot.slane %v10207, 4
        %v10210 = vshll.u32 %v10022, 16
        %v10212 = vrot.slane %v10210, 5
        %v10213 = vor.u32 %v10209, %v10212
        %v10214 = vrot.slane %v10213, 4
        %v10216 = vshll.u32 %v10023, 16
        %v10218 = vrot.slane %v10216, 5
        %v10219 = vsel %vm302, %v10214, %v10218
        %v10221 = vshrl.u32 %v10024, 16
        %v10223 = vrot.slane %v10221, 4
        %v10224 = vshll.u32 %v10024, 16
        %v10226 = vrot.slane %v10224, 5
        %v10227 = vor.u32 %v10223, %v10226
        %v10228 = vrot.slane %v10227, 4
        %v10230 = vshll.u32 %v10025, 16
        %v10232 = vrot.slane %v10230, 5
        %v10233 = vsel %vm302, %v10228, %v10232
        %v10235 = vshrl.u32 %v10026, 16
        %v10237 = vrot.slane %v10235, 4
        %v10238 = vshll.u32 %v10026, 16
        %v10240 = vrot.slane %v10238, 5
        %v10241 = vor.u32 %v10237, %v10240
        %v10242 = vrot.slane %v10241, 4
        %v10244 = vshll.u32 %v10027, 16
        %v10246 = vrot.slane %v10244, 5
        %v10247 = vsel %vm302, %v10242, %v10246
        %v10249 = vshrl.u32 %v10028, 16
        %v10251 = vrot.slane %v10249, 4
        %v10252 = vshll.u32 %v10028, 16
        %v10254 = vrot.slane %v10252, 5
        %v10255 = vor.u32 %v10251, %v10254
        %v10256 = vrot.slane %v10255, 4
        %v10258 = vshll.u32 %v10029, 16
        %v10260 = vrot.slane %v10258, 5
        %v10261 = vsel %vm302, %v10256, %v10260
        %v10263 = vshrl.u32 %v10030, 16
        %v10265 = vrot.slane %v10263, 4
        %v10266 = vshll.u32 %v10030, 16
        %v10268 = vrot.slane %v10266, 5
        %v10269 = vor.u32 %v10265, %v10268
        %v10270 = vrot.slane %v10269, 4
        %v10272 = vshll.u32 %v10031, 16
        %v10274 = vrot.slane %v10272, 5
        %v10275 = vsel %vm302, %v10270, %v10274
        %v10277 = vshrl.u32 %v10032, 16
        %v10279 = vrot.slane %v10277, 4
        %v10280 = vshll.u32 %v10032, 16
        %v10282 = vrot.slane %v10280, 5
        %v10283 = vor.u32 %v10279, %v10282
        %v10284 = vrot.slane %v10283, 4
        %v10286 = vshll.u32 %v10033, 16
        %v10288 = vrot.slane %v10286, 5
        %v10289 = vsel %vm302, %v10284, %v10288
        %v10291 = vshrl.u32 %v10034, 16
        %v10293 = vrot.slane %v10291, 4
        %v10294 = vshll.u32 %v10034, 16
        %v10296 = vrot.slane %v10294, 5
        %v10297 = vor.u32 %v10293, %v10296
        %v10298 = vrot.slane %v10297, 4
        %v10300 = vshll.u32 %v10035, 16
        %v10302 = vrot.slane %v10300, 5
        %v10303 = vsel %vm302, %v10298, %v10302
        %v10305 = vshrl.u32 %v10036, 16
        %v10307 = vrot.slane %v10305, 4
        %v10308 = vshll.u32 %v10036, 16
        %v10310 = vrot.slane %v10308, 5
        %v10311 = vor.u32 %v10307, %v10310
        %v10312 = vrot.slane %v10311, 4
        %v10314 = vshll.u32 %v10037, 16
        %v10316 = vrot.slane %v10314, 5
        %v10317 = vsel %vm302, %v10312, %v10316
        %v10319 = vshrl.u32 %v10038, 16
        %v10321 = vrot.slane %v10319, 4
        %v10322 = vshll.u32 %v10038, 16
        %v10324 = vrot.slane %v10322, 5
        %v10325 = vor.u32 %v10321, %v10324
        %v10326 = vrot.slane %v10325, 4
        %v10328 = vshll.u32 %v10039, 16
        %v10330 = vrot.slane %v10328, 5
        %v10331 = vsel %vm302, %v10326, %v10330
        %v10333 = vshrl.u32 %v10040, 16
        %v10335 = vrot.slane %v10333, 4
        %v10336 = vshll.u32 %v10040, 16
        %v10338 = vrot.slane %v10336, 5
        %v10339 = vor.u32 %v10335, %v10338
        %v10340 = vrot.slane %v10339, 4
        %v10342 = vshll.u32 %v10041, 16
        %v10344 = vrot.slane %v10342, 5
        %v10345 = vsel %vm302, %v10340, %v10344
        %v10347 = vshrl.u32 %v10042, 16
        %v10349 = vrot.slane %v10347, 4
        %v10350 = vshll.u32 %v10042, 16
        %v10352 = vrot.slane %v10350, 5
        %v10353 = vor.u32 %v10349, %v10352
        %v10354 = vrot.slane %v10353, 4
        %v10356 = vshll.u32 %v10043, 16
        %v10358 = vrot.slane %v10356, 5
        %v10359 = vsel %vm302, %v10354, %v10358
        %v10361 = vshrl.u32 %v10044, 16
        %v10363 = vrot.slane %v10361, 4
        %v10364 = vshll.u32 %v10044, 16
        %v10366 = vrot.slane %v10364, 5
        %v10367 = vor.u32 %v10363, %v10366
        %v10368 = vrot.slane %v10367, 4
        %v10370 = vshll.u32 %v10045, 16
        %v10372 = vrot.slane %v10370, 5
        %v10373 = vsel %vm302, %v10368, %v10372
        %v10375 = vshrl.u32 %v10046, 16
        %v10377 = vrot.slane %v10375, 4
        %v10378 = vshll.u32 %v10046, 16
        %v10380 = vrot.slane %v10378, 5
        %v10381 = vor.u32 %v10377, %v10380
        %v10382 = vrot.slane %v10381, 4
        %v10384 = vshll.u32 %v10047, 16
        %v10386 = vrot.slane %v10384, 5
        %v10387 = vsel %vm302, %v10382, %v10386
        %v10389 = vshrl.u32 %v10048, 16
        %v10391 = vrot.slane %v10389, 4
        %v10392 = vshll.u32 %v10048, 16
        %v10394 = vrot.slane %v10392, 5
        %v10395 = vor.u32 %v10391, %v10394
        %v10396 = vrot.slane %v10395, 4
        %v10398 = vshll.u32 %v10049, 16
        %v10400 = vrot.slane %v10398, 5
        %v10401 = vsel %vm302, %v10396, %v10400
        %v10403 = vshrl.u32 %v10050, 16
        %v10405 = vrot.slane %v10403, 4
        %v10406 = vshll.u32 %v10050, 16
        %v10408 = vrot.slane %v10406, 5
        %v10409 = vor.u32 %v10405, %v10408
        %v10410 = vrot.slane %v10409, 4
        %v10412 = vshll.u32 %v10051, 16
        %v10414 = vrot.slane %v10412, 5
        %v10415 = vsel %vm302, %v10410, %v10414
        %v10417 = vshrl.u32 %v10052, 16
        %v10419 = vrot.slane %v10417, 4
        %v10420 = vshll.u32 %v10052, 16
        %v10422 = vrot.slane %v10420, 5
        %v10423 = vor.u32 %v10419, %v10422
        %v10424 = vrot.slane %v10423, 4
        %v10426 = vshll.u32 %v10053, 16
        %v10428 = vrot.slane %v10426, 5
        %v10429 = vsel %vm302, %v10424, %v10428
        %v10431 = vshrl.u32 %v10054, 16
        %v10433 = vrot.slane %v10431, 4
        %v10434 = vshll.u32 %v10054, 16
        %v10436 = vrot.slane %v10434, 5
        %v10437 = vor.u32 %v10433, %v10436
        %v10438 = vrot.slane %v10437, 4
        %v10440 = vshll.u32 %v10055, 16
        %v10442 = vrot.slane %v10440, 5
        %v10443 = vsel %vm302, %v10438, %v10442
        %v10445 = vshrl.u32 %v10056, 16
        %v10447 = vrot.slane %v10445, 4
        %v10448 = vshll.u32 %v10056, 16
        %v10450 = vrot.slane %v10448, 5
        %v10451 = vor.u32 %v10447, %v10450
        %v10452 = vrot.slane %v10451, 4
        %v10454 = vshll.u32 %v10057, 16
        %v10456 = vrot.slane %v10454, 5
        %v10457 = vsel %vm302, %v10452, %v10456
        %v10459 = vshrl.u32 %v10058, 16
        %v10461 = vrot.slane %v10459, 4
        %v10462 = vshll.u32 %v10058, 16
        %v10464 = vrot.slane %v10462, 5
        %v10465 = vor.u32 %v10461, %v10464
        %v10466 = vrot.slane %v10465, 4
        %v10468 = vshll.u32 %v10059, 16
        %v10470 = vrot.slane %v10468, 5
        %v10471 = vsel %vm302, %v10466, %v10470
        %v10473 = vshrl.u32 %v10060, 16
        %v10475 = vrot.slane %v10473, 4
        %v10476 = vshll.u32 %v10060, 16
        %v10478 = vrot.slane %v10476, 5
        %v10479 = vor.u32 %v10475, %v10478
        %v10480 = vrot.slane %v10479, 4
        %v10482 = vshll.u32 %v10061, 16
        %v10484 = vrot.slane %v10482, 5
        %v10485 = vsel %vm302, %v10480, %v10484
        %v10487 = vshrl.u32 %v10062, 16
        %v10489 = vrot.slane %v10487, 4
        %v10490 = vshll.u32 %v10062, 16
        %v10492 = vrot.slane %v10490, 5
        %v10493 = vor.u32 %v10489, %v10492
        %v10494 = vrot.slane %v10493, 4
        %v10496 = vshll.u32 %v10063, 16
        %v10498 = vrot.slane %v10496, 5
        %v10499 = vsel %vm302, %v10494, %v10498
        %v10501 = vshrl.u32 %v10064, 16
        %v10503 = vrot.slane %v10501, 4
        %v10504 = vshll.u32 %v10064, 16
        %v10506 = vrot.slane %v10504, 5
        %v10507 = vor.u32 %v10503, %v10506
        %v10508 = vrot.slane %v10507, 4
        %v10510 = vshll.u32 %v10065, 16
        %v10512 = vrot.slane %v10510, 5
        %v10513 = vsel %vm302, %v10508, %v10512
        %10514 = vrot.lane.b32.xlu0 %v10079, 100
        %v10515 = vpop.permute.xlu0 %10514
        %10516 = vrot.lane.b32.xlu0 %v10093, 100
        %v10517 = vpop.permute.xlu0 %10516
        %10518 = vrot.lane.b32.xlu0 %v10107, 100
        %v10519 = vpop.permute.xlu0 %10518
        %10520 = vrot.lane.b32.xlu0 %v10121, 100
        %v10521 = vpop.permute.xlu0 %10520
        %10522 = vrot.lane.b32.xlu0 %v10135, 100
        %v10523 = vpop.permute.xlu0 %10522
        %10524 = vrot.lane.b32.xlu0 %v10149, 100
        %v10525 = vpop.permute.xlu0 %10524
        %10526 = vrot.lane.b32.xlu0 %v10163, 100
        %v10527 = vpop.permute.xlu0 %10526
        %10528 = vrot.lane.b32.xlu0 %v10177, 100
        %v10529 = vpop.permute.xlu0 %10528
        %10530 = vrot.lane.b32.xlu0 %v10191, 100
        %v10531 = vpop.permute.xlu0 %10530
        %10532 = vrot.lane.b32.xlu0 %v10205, 100
        %v10533 = vpop.permute.xlu0 %10532
        %10534 = vrot.lane.b32.xlu0 %v10219, 100
        %v10535 = vpop.permute.xlu0 %10534
        %10536 = vrot.lane.b32.xlu0 %v10233, 100
        %v10537 = vpop.permute.xlu0 %10536
        %10538 = vrot.lane.b32.xlu0 %v10247, 100
        %v10539 = vpop.permute.xlu0 %10538
        %10540 = vrot.lane.b32.xlu0 %v10261, 100
        %v10541 = vpop.permute.xlu0 %10540
        %10542 = vrot.lane.b32.xlu0 %v10275, 100
        %v10543 = vpop.permute.xlu0 %10542
        %10544 = vrot.lane.b32.xlu0 %v10289, 100
        %v10545 = vpop.permute.xlu0 %10544
        %10546 = vrot.lane.b32.xlu0 %v10303, 100
        %v10547 = vpop.permute.xlu0 %10546
        %10548 = vrot.lane.b32.xlu0 %v10317, 100
        %v10549 = vpop.permute.xlu0 %10548
        %10550 = vrot.lane.b32.xlu0 %v10331, 100
        %v10551 = vpop.permute.xlu0 %10550
        %10552 = vrot.lane.b32.xlu0 %v10345, 100
        %v10553 = vpop.permute.xlu0 %10552
        %10554 = vrot.lane.b32.xlu0 %v10359, 100
        %v10555 = vpop.permute.xlu0 %10554
        %10556 = vrot.lane.b32.xlu0 %v10373, 100
        %v10557 = vpop.permute.xlu0 %10556
        %10558 = vrot.lane.b32.xlu0 %v10387, 100
        %v10559 = vpop.permute.xlu0 %10558
        %10560 = vrot.lane.b32.xlu0 %v10401, 100
        %v10561 = vpop.permute.xlu0 %10560
        %10562 = vrot.lane.b32.xlu0 %v10415, 100
        %v10563 = vpop.permute.xlu0 %10562
        %10564 = vrot.lane.b32.xlu0 %v10429, 100
        %v10565 = vpop.permute.xlu0 %10564
        %10566 = vrot.lane.b32.xlu0 %v10443, 100
        %v10567 = vpop.permute.xlu0 %10566
        %10568 = vrot.lane.b32.xlu0 %v10457, 100
        %v10569 = vpop.permute.xlu0 %10568
        %10570 = vrot.lane.b32.xlu0 %v10471, 100
        %v10571 = vpop.permute.xlu0 %10570
        %10572 = vrot.lane.b32.xlu0 %v10485, 100
        %v10573 = vpop.permute.xlu0 %10572
        %10574 = vrot.lane.b32.xlu0 %v10499, 100
        %v10575 = vpop.permute.xlu0 %10574
        %10576 = vrot.lane.b32.xlu0 %v10513, 100
        %v10577 = vpop.permute.xlu0 %10576
        %vm10610 = vcmask 847648
        %10611 = vst.msk [vmem:[#allocation2] sm:$0xf] %vm10610, %v10515
        %10612 = vst.msk [vmem:[#allocation2 + $0x4] sm:$0xf] %vm10610, %v10517
        %10613 = vst.msk [vmem:[#allocation2 + $0x8] sm:$0xf] %vm10610, %v10519
        %10614 = vst.msk [vmem:[#allocation2 + $0xc] sm:$0xf] %vm10610, %v10521
        %10615 = vst.msk [vmem:[#allocation2 + $0x10] sm:$0xf] %vm10610, %v10523
        %10616 = vst.msk [vmem:[#allocation2 + $0x14] sm:$0xf] %vm10610, %v10525
        %10617 = vst.msk [vmem:[#allocation2 + $0x18] sm:$0xf] %vm10610, %v10527
        %10618 = vst.msk [vmem:[#allocation2 + $0x1c] sm:$0xf] %vm10610, %v10529
        %10619 = vst.msk [vmem:[#allocation2 + $0x20] sm:$0xf] %vm10610, %v10531
        %10620 = vst.msk [vmem:[#allocation2 + $0x24] sm:$0xf] %vm10610, %v10533
        %10621 = vst.msk [vmem:[#allocation2 + $0x28] sm:$0xf] %vm10610, %v10535
        %10622 = vst.msk [vmem:[#allocation2 + $0x2c] sm:$0xf] %vm10610, %v10537
        %10623 = vst.msk [vmem:[#allocation2 + $0x30] sm:$0xf] %vm10610, %v10539
        %10624 = vst.msk [vmem:[#allocation2 + $0x34] sm:$0xf] %vm10610, %v10541
        %10625 = vst.msk [vmem:[#allocation2 + $0x38] sm:$0xf] %vm10610, %v10543
        %10626 = vst.msk [vmem:[#allocation2 + $0x3c] sm:$0xf] %vm10610, %v10545
        %10627 = vst.msk [vmem:[#allocation2 + $0x40] sm:$0xf] %vm10610, %v10547
        %10628 = vst.msk [vmem:[#allocation2 + $0x44] sm:$0xf] %vm10610, %v10549
        %10629 = vst.msk [vmem:[#allocation2 + $0x48] sm:$0xf] %vm10610, %v10551
        %10630 = vst.msk [vmem:[#allocation2 + $0x4c] sm:$0xf] %vm10610, %v10553
        %10631 = vst.msk [vmem:[#allocation2 + $0x50] sm:$0xf] %vm10610, %v10555
        %10632 = vst.msk [vmem:[#allocation2 + $0x54] sm:$0xf] %vm10610, %v10557
        %10633 = vst.msk [vmem:[#allocation2 + $0x58] sm:$0xf] %vm10610, %v10559
        %10634 = vst.msk [vmem:[#allocation2 + $0x5c] sm:$0xf] %vm10610, %v10561
        %10635 = vst.msk [vmem:[#allocation2 + $0x60] sm:$0xf] %vm10610, %v10563
        %10636 = vst.msk [vmem:[#allocation2 + $0x64] sm:$0xf] %vm10610, %v10565
        %10637 = vst.msk [vmem:[#allocation2 + $0x68] sm:$0xf] %vm10610, %v10567
        %10638 = vst.msk [vmem:[#allocation2 + $0x6c] sm:$0xf] %vm10610, %v10569
        %10639 = vst.msk [vmem:[#allocation2 + $0x70] sm:$0xf] %vm10610, %v10571
        %10640 = vst.msk [vmem:[#allocation2 + $0x74] sm:$0xf] %vm10610, %v10573
        %10641 = vst.msk [vmem:[#allocation2 + $0x78] sm:$0xf] %vm10610, %v10575
        %10642 = vst.msk [vmem:[#allocation2 + $0x7c] sm:$0xf] %vm10610, %v10577
        %v10643 = vld [vmem:[%s9808] sm:$0xe]
        %v10644 = vld [vmem:[%s9808 + $0x4] sm:$0x1]
        %v10645 = vld [vmem:[%s9808 + $0x8] sm:$0xe]
        %v10646 = vld [vmem:[%s9808 + $0xc] sm:$0x1]
        %v10647 = vld [vmem:[%s9808 + $0x10] sm:$0xe]
        %v10648 = vld [vmem:[%s9808 + $0x14] sm:$0x1]
        %v10649 = vld [vmem:[%s9808 + $0x18] sm:$0xe]
        %v10650 = vld [vmem:[%s9808 + $0x1c] sm:$0x1]
        %v10651 = vld [vmem:[%s9808 + $0x20] sm:$0xe]
        %v10652 = vld [vmem:[%s9808 + $0x24] sm:$0x1]
        %v10653 = vld [vmem:[%s9808 + $0x28] sm:$0xe]
        %v10654 = vld [vmem:[%s9808 + $0x2c] sm:$0x1]
        %v10655 = vld [vmem:[%s9808 + $0x30] sm:$0xe]
        %v10656 = vld [vmem:[%s9808 + $0x34] sm:$0x1]
        %v10657 = vld [vmem:[%s9808 + $0x38] sm:$0xe]
        %v10658 = vld [vmem:[%s9808 + $0x3c] sm:$0x1]
        %v10659 = vld [vmem:[%s9808 + $0x50] sm:$0xe]
        %v10660 = vld [vmem:[%s9808 + $0x54] sm:$0x1]
        %v10661 = vld [vmem:[%s9808 + $0x58] sm:$0xe]
        %v10662 = vld [vmem:[%s9808 + $0x5c] sm:$0x1]
        %v10663 = vld [vmem:[%s9808 + $0x60] sm:$0xe]
        %v10664 = vld [vmem:[%s9808 + $0x64] sm:$0x1]
        %v10665 = vld [vmem:[%s9808 + $0x68] sm:$0xe]
        %v10666 = vld [vmem:[%s9808 + $0x6c] sm:$0x1]
        %v10667 = vld [vmem:[%s9808 + $0x70] sm:$0xe]
        %v10668 = vld [vmem:[%s9808 + $0x74] sm:$0x1]
        %v10669 = vld [vmem:[%s9808 + $0x78] sm:$0xe]
        %v10670 = vld [vmem:[%s9808 + $0x7c] sm:$0x1]
        %v10671 = vld [vmem:[%s9808 + $0x80] sm:$0xe]
        %v10672 = vld [vmem:[%s9808 + $0x84] sm:$0x1]
        %v10673 = vld [vmem:[%s9808 + $0x88] sm:$0xe]
        %v10674 = vld [vmem:[%s9808 + $0x8c] sm:$0x1]
        %v10675 = vld [vmem:[%s9808 + $0xa0] sm:$0xe]
        %v10676 = vld [vmem:[%s9808 + $0xa4] sm:$0x1]
        %v10677 = vld [vmem:[%s9808 + $0xa8] sm:$0xe]
        %v10678 = vld [vmem:[%s9808 + $0xac] sm:$0x1]
        %v10679 = vld [vmem:[%s9808 + $0xb0] sm:$0xe]
        %v10680 = vld [vmem:[%s9808 + $0xb4] sm:$0x1]
        %v10681 = vld [vmem:[%s9808 + $0xb8] sm:$0xe]
        %v10682 = vld [vmem:[%s9808 + $0xbc] sm:$0x1]
        %v10683 = vld [vmem:[%s9808 + $0xc0] sm:$0xe]
        %v10684 = vld [vmem:[%s9808 + $0xc4] sm:$0x1]
        %v10685 = vld [vmem:[%s9808 + $0xc8] sm:$0xe]
        %v10686 = vld [vmem:[%s9808 + $0xcc] sm:$0x1]
        %v10687 = vld [vmem:[%s9808 + $0xd0] sm:$0xe]
        %v10688 = vld [vmem:[%s9808 + $0xd4] sm:$0x1]
        %v10689 = vld [vmem:[%s9808 + $0xd8] sm:$0xe]
        %v10690 = vld [vmem:[%s9808 + $0xdc] sm:$0x1]
        %v10691 = vld [vmem:[%s9808 + $0xf0] sm:$0xe]
        %v10692 = vld [vmem:[%s9808 + $0xf4] sm:$0x1]
        %v10693 = vld [vmem:[%s9808 + $0xf8] sm:$0xe]
        %v10694 = vld [vmem:[%s9808 + $0xfc] sm:$0x1]
        %v10695 = vld [vmem:[%s9808 + $0x100] sm:$0xe]
        %v10696 = vld [vmem:[%s9808 + $0x104] sm:$0x1]
        %v10697 = vld [vmem:[%s9808 + $0x108] sm:$0xe]
        %v10698 = vld [vmem:[%s9808 + $0x10c] sm:$0x1]
        %v10699 = vld [vmem:[%s9808 + $0x110] sm:$0xe]
        %v10700 = vld [vmem:[%s9808 + $0x114] sm:$0x1]
        %v10701 = vld [vmem:[%s9808 + $0x118] sm:$0xe]
        %v10702 = vld [vmem:[%s9808 + $0x11c] sm:$0x1]
        %v10703 = vld [vmem:[%s9808 + $0x120] sm:$0xe]
        %v10704 = vld [vmem:[%s9808 + $0x124] sm:$0x1]
        %v10705 = vld [vmem:[%s9808 + $0x128] sm:$0xe]
        %v10706 = vld [vmem:[%s9808 + $0x12c] sm:$0x1]
        %v10771 = vrot.slane %v10643, 5
        %v10772 = vrot.slane %v10771, 4
        %v10773 = vrot.slane %v10644, 5
        %v10774 = vsel %vm1010, %v10772, %v10773
        %v10775 = vrot.slane %v10645, 5
        %v10776 = vrot.slane %v10775, 4
        %v10777 = vrot.slane %v10646, 5
        %v10778 = vsel %vm1010, %v10776, %v10777
        %v10779 = vrot.slane %v10647, 5
        %v10780 = vrot.slane %v10779, 4
        %v10781 = vrot.slane %v10648, 5
        %v10782 = vsel %vm1010, %v10780, %v10781
        %v10783 = vrot.slane %v10649, 5
        %v10784 = vrot.slane %v10783, 4
        %v10785 = vrot.slane %v10650, 5
        %v10786 = vsel %vm1010, %v10784, %v10785
        %v10787 = vrot.slane %v10651, 5
        %v10788 = vrot.slane %v10787, 4
        %v10789 = vrot.slane %v10652, 5
        %v10790 = vsel %vm1010, %v10788, %v10789
        %v10791 = vrot.slane %v10653, 5
        %v10792 = vrot.slane %v10791, 4
        %v10793 = vrot.slane %v10654, 5
        %v10794 = vsel %vm1010, %v10792, %v10793
        %v10795 = vrot.slane %v10655, 5
        %v10796 = vrot.slane %v10795, 4
        %v10797 = vrot.slane %v10656, 5
        %v10798 = vsel %vm1010, %v10796, %v10797
        %v10799 = vrot.slane %v10657, 5
        %v10800 = vrot.slane %v10799, 4
        %v10801 = vrot.slane %v10658, 5
        %v10802 = vsel %vm1010, %v10800, %v10801
        %v10803 = vrot.slane %v10659, 5
        %v10804 = vrot.slane %v10803, 4
        %v10805 = vrot.slane %v10660, 5
        %v10806 = vsel %vm1010, %v10804, %v10805
        %v10807 = vrot.slane %v10661, 5
        %v10808 = vrot.slane %v10807, 4
        %v10809 = vrot.slane %v10662, 5
        %v10810 = vsel %vm1010, %v10808, %v10809
        %v10811 = vrot.slane %v10663, 5
        %v10812 = vrot.slane %v10811, 4
        %v10813 = vrot.slane %v10664, 5
        %v10814 = vsel %vm1010, %v10812, %v10813
        %v10815 = vrot.slane %v10665, 5
        %v10816 = vrot.slane %v10815, 4
        %v10817 = vrot.slane %v10666, 5
        %v10818 = vsel %vm1010, %v10816, %v10817
        %v10819 = vrot.slane %v10667, 5
        %v10820 = vrot.slane %v10819, 4
        %v10821 = vrot.slane %v10668, 5
        %v10822 = vsel %vm1010, %v10820, %v10821
        %v10823 = vrot.slane %v10669, 5
        %v10824 = vrot.slane %v10823, 4
        %v10825 = vrot.slane %v10670, 5
        %v10826 = vsel %vm1010, %v10824, %v10825
        %v10827 = vrot.slane %v10671, 5
        %v10828 = vrot.slane %v10827, 4
        %v10829 = vrot.slane %v10672, 5
        %v10830 = vsel %vm1010, %v10828, %v10829
        %v10831 = vrot.slane %v10673, 5
        %v10832 = vrot.slane %v10831, 4
        %v10833 = vrot.slane %v10674, 5
        %v10834 = vsel %vm1010, %v10832, %v10833
        %v10835 = vrot.slane %v10675, 5
        %v10836 = vrot.slane %v10835, 4
        %v10837 = vrot.slane %v10676, 5
        %v10838 = vsel %vm1010, %v10836, %v10837
        %v10839 = vrot.slane %v10677, 5
        %v10840 = vrot.slane %v10839, 4
        %v10841 = vrot.slane %v10678, 5
        %v10842 = vsel %vm1010, %v10840, %v10841
        %v10843 = vrot.slane %v10679, 5
        %v10844 = vrot.slane %v10843, 4
        %v10845 = vrot.slane %v10680, 5
        %v10846 = vsel %vm1010, %v10844, %v10845
        %v10847 = vrot.slane %v10681, 5
        %v10848 = vrot.slane %v10847, 4
        %v10849 = vrot.slane %v10682, 5
        %v10850 = vsel %vm1010, %v10848, %v10849
        %v10851 = vrot.slane %v10683, 5
        %v10852 = vrot.slane %v10851, 4
        %v10853 = vrot.slane %v10684, 5
        %v10854 = vsel %vm1010, %v10852, %v10853
        %v10855 = vrot.slane %v10685, 5
        %v10856 = vrot.slane %v10855, 4
        %v10857 = vrot.slane %v10686, 5
        %v10858 = vsel %vm1010, %v10856, %v10857
        %v10859 = vrot.slane %v10687, 5
        %v10860 = vrot.slane %v10859, 4
        %v10861 = vrot.slane %v10688, 5
        %v10862 = vsel %vm1010, %v10860, %v10861
        %v10863 = vrot.slane %v10689, 5
        %v10864 = vrot.slane %v10863, 4
        %v10865 = vrot.slane %v10690, 5
        %v10866 = vsel %vm1010, %v10864, %v10865
        %v10867 = vrot.slane %v10691, 5
        %v10868 = vrot.slane %v10867, 4
        %v10869 = vrot.slane %v10692, 5
        %v10870 = vsel %vm1010, %v10868, %v10869
        %v10871 = vrot.slane %v10693, 5
        %v10872 = vrot.slane %v10871, 4
        %v10873 = vrot.slane %v10694, 5
        %v10874 = vsel %vm1010, %v10872, %v10873
        %v10875 = vrot.slane %v10695, 5
        %v10876 = vrot.slane %v10875, 4
        %v10877 = vrot.slane %v10696, 5
        %v10878 = vsel %vm1010, %v10876, %v10877
        %v10879 = vrot.slane %v10697, 5
        %v10880 = vrot.slane %v10879, 4
        %v10881 = vrot.slane %v10698, 5
        %v10882 = vsel %vm1010, %v10880, %v10881
        %v10883 = vrot.slane %v10699, 5
        %v10884 = vrot.slane %v10883, 4
        %v10885 = vrot.slane %v10700, 5
        %v10886 = vsel %vm1010, %v10884, %v10885
        %v10887 = vrot.slane %v10701, 5
        %v10888 = vrot.slane %v10887, 4
        %v10889 = vrot.slane %v10702, 5
        %v10890 = vsel %vm1010, %v10888, %v10889
        %v10891 = vrot.slane %v10703, 5
        %v10892 = vrot.slane %v10891, 4
        %v10893 = vrot.slane %v10704, 5
        %v10894 = vsel %vm1010, %v10892, %v10893
        %v10895 = vrot.slane %v10705, 5
        %v10896 = vrot.slane %v10895, 4
        %v10897 = vrot.slane %v10706, 5
        %v10898 = vsel %vm1010, %v10896, %v10897
        %10899 = vrot.lane.b32.xlu0 %v10774, 104
        %v10900 = vpop.permute.xlu0 %10899
        %10901 = vrot.lane.b32.xlu0 %v10778, 104
        %v10902 = vpop.permute.xlu0 %10901
        %10903 = vrot.lane.b32.xlu0 %v10782, 104
        %v10904 = vpop.permute.xlu0 %10903
        %10905 = vrot.lane.b32.xlu0 %v10786, 104
        %v10906 = vpop.permute.xlu0 %10905
        %10907 = vrot.lane.b32.xlu0 %v10790, 104
        %v10908 = vpop.permute.xlu0 %10907
        %10909 = vrot.lane.b32.xlu0 %v10794, 104
        %v10910 = vpop.permute.xlu0 %10909
        %10911 = vrot.lane.b32.xlu0 %v10798, 104
        %v10912 = vpop.permute.xlu0 %10911
        %10913 = vrot.lane.b32.xlu0 %v10802, 104
        %v10914 = vpop.permute.xlu0 %10913
        %10915 = vrot.lane.b32.xlu0 %v10806, 104
        %v10916 = vpop.permute.xlu0 %10915
        %10917 = vrot.lane.b32.xlu0 %v10810, 104
        %v10918 = vpop.permute.xlu0 %10917
        %10919 = vrot.lane.b32.xlu0 %v10814, 104
        %v10920 = vpop.permute.xlu0 %10919
        %10921 = vrot.lane.b32.xlu0 %v10818, 104
        %v10922 = vpop.permute.xlu0 %10921
        %10923 = vrot.lane.b32.xlu0 %v10822, 104
        %v10924 = vpop.permute.xlu0 %10923
        %10925 = vrot.lane.b32.xlu0 %v10826, 104
        %v10926 = vpop.permute.xlu0 %10925
        %10927 = vrot.lane.b32.xlu0 %v10830, 104
        %v10928 = vpop.permute.xlu0 %10927
        %10929 = vrot.lane.b32.xlu0 %v10834, 104
        %v10930 = vpop.permute.xlu0 %10929
        %10931 = vrot.lane.b32.xlu0 %v10838, 104
        %v10932 = vpop.permute.xlu0 %10931
        %10933 = vrot.lane.b32.xlu0 %v10842, 104
        %v10934 = vpop.permute.xlu0 %10933
        %10935 = vrot.lane.b32.xlu0 %v10846, 104
        %v10936 = vpop.permute.xlu0 %10935
        %10937 = vrot.lane.b32.xlu0 %v10850, 104
        %v10938 = vpop.permute.xlu0 %10937
        %10939 = vrot.lane.b32.xlu0 %v10854, 104
        %v10940 = vpop.permute.xlu0 %10939
        %10941 = vrot.lane.b32.xlu0 %v10858, 104
        %v10942 = vpop.permute.xlu0 %10941
        %10943 = vrot.lane.b32.xlu0 %v10862, 104
        %v10944 = vpop.permute.xlu0 %10943
        %10945 = vrot.lane.b32.xlu0 %v10866, 104
        %v10946 = vpop.permute.xlu0 %10945
        %10947 = vrot.lane.b32.xlu0 %v10870, 104
        %v10948 = vpop.permute.xlu0 %10947
        %10949 = vrot.lane.b32.xlu0 %v10874, 104
        %v10950 = vpop.permute.xlu0 %10949
        %10951 = vrot.lane.b32.xlu0 %v10878, 104
        %v10952 = vpop.permute.xlu0 %10951
        %10953 = vrot.lane.b32.xlu0 %v10882, 104
        %v10954 = vpop.permute.xlu0 %10953
        %10955 = vrot.lane.b32.xlu0 %v10886, 104
        %v10956 = vpop.permute.xlu0 %10955
        %10957 = vrot.lane.b32.xlu0 %v10890, 104
        %v10958 = vpop.permute.xlu0 %10957
        %10959 = vrot.lane.b32.xlu0 %v10894, 104
        %v10960 = vpop.permute.xlu0 %10959
        %10961 = vrot.lane.b32.xlu0 %v10898, 104
        %v10962 = vpop.permute.xlu0 %10961
        %vm10995 = vcmask 880448
        %10996 = vst.msk [vmem:[#allocation2] sm:$0xf] %vm10995, %v10900
        %10997 = vst.msk [vmem:[#allocation2 + $0x4] sm:$0xf] %vm10995, %v10902
        %10998 = vst.msk [vmem:[#allocation2 + $0x8] sm:$0xf] %vm10995, %v10904
        %10999 = vst.msk [vmem:[#allocation2 + $0xc] sm:$0xf] %vm10995, %v10906
        %11000 = vst.msk [vmem:[#allocation2 + $0x10] sm:$0xf] %vm10995, %v10908
        %11001 = vst.msk [vmem:[#allocation2 + $0x14] sm:$0xf] %vm10995, %v10910
        %11002 = vst.msk [vmem:[#allocation2 + $0x18] sm:$0xf] %vm10995, %v10912
        %11003 = vst.msk [vmem:[#allocation2 + $0x1c] sm:$0xf] %vm10995, %v10914
        %11004 = vst.msk [vmem:[#allocation2 + $0x20] sm:$0xf] %vm10995, %v10916
        %11005 = vst.msk [vmem:[#allocation2 + $0x24] sm:$0xf] %vm10995, %v10918
        %11006 = vst.msk [vmem:[#allocation2 + $0x28] sm:$0xf] %vm10995, %v10920
        %11007 = vst.msk [vmem:[#allocation2 + $0x2c] sm:$0xf] %vm10995, %v10922
        %11008 = vst.msk [vmem:[#allocation2 + $0x30] sm:$0xf] %vm10995, %v10924
        %11009 = vst.msk [vmem:[#allocation2 + $0x34] sm:$0xf] %vm10995, %v10926
        %11010 = vst.msk [vmem:[#allocation2 + $0x38] sm:$0xf] %vm10995, %v10928
        %11011 = vst.msk [vmem:[#allocation2 + $0x3c] sm:$0xf] %vm10995, %v10930
        %11012 = vst.msk [vmem:[#allocation2 + $0x40] sm:$0xf] %vm10995, %v10932
        %11013 = vst.msk [vmem:[#allocation2 + $0x44] sm:$0xf] %vm10995, %v10934
        %11014 = vst.msk [vmem:[#allocation2 + $0x48] sm:$0xf] %vm10995, %v10936
        %11015 = vst.msk [vmem:[#allocation2 + $0x4c] sm:$0xf] %vm10995, %v10938
        %11016 = vst.msk [vmem:[#allocation2 + $0x50] sm:$0xf] %vm10995, %v10940
        %11017 = vst.msk [vmem:[#allocation2 + $0x54] sm:$0xf] %vm10995, %v10942
        %11018 = vst.msk [vmem:[#allocation2 + $0x58] sm:$0xf] %vm10995, %v10944
        %11019 = vst.msk [vmem:[#allocation2 + $0x5c] sm:$0xf] %vm10995, %v10946
        %11020 = vst.msk [vmem:[#allocation2 + $0x60] sm:$0xf] %vm10995, %v10948
        %11021 = vst.msk [vmem:[#allocation2 + $0x64] sm:$0xf] %vm10995, %v10950
        %11022 = vst.msk [vmem:[#allocation2 + $0x68] sm:$0xf] %vm10995, %v10952
        %11023 = vst.msk [vmem:[#allocation2 + $0x6c] sm:$0xf] %vm10995, %v10954
        %11024 = vst.msk [vmem:[#allocation2 + $0x70] sm:$0xf] %vm10995, %v10956
        %11025 = vst.msk [vmem:[#allocation2 + $0x74] sm:$0xf] %vm10995, %v10958
        %11026 = vst.msk [vmem:[#allocation2 + $0x78] sm:$0xf] %vm10995, %v10960
        %11027 = vst.msk [vmem:[#allocation2 + $0x7c] sm:$0xf] %vm10995, %v10962
        %vm11028 = vcmask 1044320
        %11029 = vst.msk [vmem:[#allocation2] sm:$0xf] %vm11028, 0
        %11030 = vst.msk [vmem:[#allocation2 + $0x4] sm:$0xf] %vm11028, 0
        %11031 = vst.msk [vmem:[#allocation2 + $0x8] sm:$0xf] %vm11028, 0
        %11032 = vst.msk [vmem:[#allocation2 + $0xc] sm:$0xf] %vm11028, 0
        %11033 = vst.msk [vmem:[#allocation2 + $0x10] sm:$0xf] %vm11028, 0
        %11034 = vst.msk [vmem:[#allocation2 + $0x14] sm:$0xf] %vm11028, 0
        %11035 = vst.msk [vmem:[#allocation2 + $0x18] sm:$0xf] %vm11028, 0
        %11036 = vst.msk [vmem:[#allocation2 + $0x1c] sm:$0xf] %vm11028, 0
        %11037 = vst.msk [vmem:[#allocation2 + $0x20] sm:$0xf] %vm11028, 0
        %11038 = vst.msk [vmem:[#allocation2 + $0x24] sm:$0xf] %vm11028, 0
        %11039 = vst.msk [vmem:[#allocation2 + $0x28] sm:$0xf] %vm11028, 0
        %11040 = vst.msk [vmem:[#allocation2 + $0x2c] sm:$0xf] %vm11028, 0
        %11041 = vst.msk [vmem:[#allocation2 + $0x30] sm:$0xf] %vm11028, 0
        %11042 = vst.msk [vmem:[#allocation2 + $0x34] sm:$0xf] %vm11028, 0
        %11043 = vst.msk [vmem:[#allocation2 + $0x38] sm:$0xf] %vm11028, 0
        %11044 = vst.msk [vmem:[#allocation2 + $0x3c] sm:$0xf] %vm11028, 0
        %11045 = vst.msk [vmem:[#allocation2 + $0x40] sm:$0xf] %vm11028, 0
        %11046 = vst.msk [vmem:[#allocation2 + $0x44] sm:$0xf] %vm11028, 0
        %11047 = vst.msk [vmem:[#allocation2 + $0x48] sm:$0xf] %vm11028, 0
        %11048 = vst.msk [vmem:[#allocation2 + $0x4c] sm:$0xf] %vm11028, 0
        %11049 = vst.msk [vmem:[#allocation2 + $0x50] sm:$0xf] %vm11028, 0
        %11050 = vst.msk [vmem:[#allocation2 + $0x54] sm:$0xf] %vm11028, 0
        %11051 = vst.msk [vmem:[#allocation2 + $0x58] sm:$0xf] %vm11028, 0
        %11052 = vst.msk [vmem:[#allocation2 + $0x5c] sm:$0xf] %vm11028, 0
        %11053 = vst.msk [vmem:[#allocation2 + $0x60] sm:$0xf] %vm11028, 0
        %11054 = vst.msk [vmem:[#allocation2 + $0x64] sm:$0xf] %vm11028, 0
        %11055 = vst.msk [vmem:[#allocation2 + $0x68] sm:$0xf] %vm11028, 0
        %11056 = vst.msk [vmem:[#allocation2 + $0x6c] sm:$0xf] %vm11028, 0
        %11057 = vst.msk [vmem:[#allocation2 + $0x70] sm:$0xf] %vm11028, 0
        %11058 = vst.msk [vmem:[#allocation2 + $0x74] sm:$0xf] %vm11028, 0
        %11059 = vst.msk [vmem:[#allocation2 + $0x78] sm:$0xf] %vm11028, 0
        %11060 = vst.msk [vmem:[#allocation2 + $0x7c] sm:$0xf] %vm11028, 0
        %v11061 = vld [vmem:[#allocation2] sm:$0xf]
        %v11062 = vld [vmem:[#allocation2 + $0x4] sm:$0xf]
        %v11063 = vld [vmem:[#allocation2 + $0x8] sm:$0xf]
        %v11064 = vld [vmem:[#allocation2 + $0xc] sm:$0xf]
        %v11065 = vld [vmem:[#allocation2 + $0x10] sm:$0xf]
        %v11066 = vld [vmem:[#allocation2 + $0x14] sm:$0xf]
        %v11067 = vld [vmem:[#allocation2 + $0x18] sm:$0xf]
        %v11068 = vld [vmem:[#allocation2 + $0x1c] sm:$0xf]
        %v11069 = vld [vmem:[#allocation2 + $0x20] sm:$0xf]
        %v11070 = vld [vmem:[#allocation2 + $0x24] sm:$0xf]
        %v11071 = vld [vmem:[#allocation2 + $0x28] sm:$0xf]
        %v11072 = vld [vmem:[#allocation2 + $0x2c] sm:$0xf]
        %v11073 = vld [vmem:[#allocation2 + $0x30] sm:$0xf]
        %v11074 = vld [vmem:[#allocation2 + $0x34] sm:$0xf]
        %v11075 = vld [vmem:[#allocation2 + $0x38] sm:$0xf]
        %v11076 = vld [vmem:[#allocation2 + $0x3c] sm:$0xf]
        %v11077 = vld [vmem:[#allocation2 + $0x40] sm:$0xf]
        %v11078 = vld [vmem:[#allocation2 + $0x44] sm:$0xf]
        %v11079 = vld [vmem:[#allocation2 + $0x48] sm:$0xf]
        %v11080 = vld [vmem:[#allocation2 + $0x4c] sm:$0xf]
        %v11081 = vld [vmem:[#allocation2 + $0x50] sm:$0xf]
        %v11082 = vld [vmem:[#allocation2 + $0x54] sm:$0xf]
        %v11083 = vld [vmem:[#allocation2 + $0x58] sm:$0xf]
        %v11084 = vld [vmem:[#allocation2 + $0x5c] sm:$0xf]
        %v11085 = vld [vmem:[#allocation2 + $0x60] sm:$0xf]
        %v11086 = vld [vmem:[#allocation2 + $0x64] sm:$0xf]
        %v11087 = vld [vmem:[#allocation2 + $0x68] sm:$0xf]
        %v11088 = vld [vmem:[#allocation2 + $0x6c] sm:$0xf]
        %v11089 = vld [vmem:[#allocation2 + $0x70] sm:$0xf]
        %v11090 = vld [vmem:[#allocation2 + $0x74] sm:$0xf]
        %v11091 = vld [vmem:[#allocation2 + $0x78] sm:$0xf]
        %v11092 = vld [vmem:[#allocation2 + $0x7c] sm:$0xf]
        %v11093 = vld [vmem:[%s1] sm:$0xf]
        %v11094 = vld [vmem:[%s1 + $0x4] sm:$0xf]
        %v11095 = vld [vmem:[%s1 + $0x8] sm:$0xf]
        %v11096 = vld [vmem:[%s1 + $0xc] sm:$0xf]
        %v11097 = vld [vmem:[%s1 + $0x10] sm:$0xf]
        %v11098 = vld [vmem:[%s1 + $0x14] sm:$0xf]
        %v11099 = vld [vmem:[%s1 + $0x18] sm:$0xf]
        %v11100 = vld [vmem:[%s1 + $0x1c] sm:$0xf]
        %v11101 = vld [vmem:[%s1 + $0x20] sm:$0xf]
        %v11102 = vld [vmem:[%s1 + $0x24] sm:$0xf]
        %v11103 = vld [vmem:[%s1 + $0x28] sm:$0xf]
        %v11104 = vld [vmem:[%s1 + $0x2c] sm:$0xf]
        %v11105 = vld [vmem:[%s1 + $0x30] sm:$0xf]
        %v11106 = vld [vmem:[%s1 + $0x34] sm:$0xf]
        %v11107 = vld [vmem:[%s1 + $0x38] sm:$0xf]
        %v11108 = vld [vmem:[%s1 + $0x3c] sm:$0xf]
        %v11109 = vld [vmem:[%s2] sm:$0x1]
        %v11111 = vperm.slane %v11109, 0
        %v11145 = vunpack.c.l.b16 %v11061
        %v11146 = vunpack.c.l.b16 %v11062
        %v11147 = vunpack.c.l.b16 %v11063
        %v11148 = vunpack.c.l.b16 %v11064
        %v11149 = vunpack.c.l.b16 %v11065
        %v11150 = vunpack.c.l.b16 %v11066
        %v11151 = vunpack.c.l.b16 %v11067
        %v11152 = vunpack.c.l.b16 %v11068
        %v11153 = vunpack.c.l.b16 %v11069
        %v11154 = vunpack.c.l.b16 %v11070
        %v11155 = vunpack.c.l.b16 %v11071
        %v11156 = vunpack.c.l.b16 %v11072
        %v11157 = vunpack.c.l.b16 %v11073
        %v11158 = vunpack.c.l.b16 %v11074
        %v11159 = vunpack.c.l.b16 %v11075
        %v11160 = vunpack.c.l.b16 %v11076
        %v11161 = vunpack.c.l.b16 %v11077
        %v11162 = vunpack.c.l.b16 %v11078
        %v11163 = vunpack.c.l.b16 %v11079
        %v11164 = vunpack.c.l.b16 %v11080
        %v11165 = vunpack.c.l.b16 %v11081
        %v11166 = vunpack.c.l.b16 %v11082
        %v11167 = vunpack.c.l.b16 %v11083
        %v11168 = vunpack.c.l.b16 %v11084
        %v11169 = vunpack.c.l.b16 %v11085
        %v11170 = vunpack.c.l.b16 %v11086
        %v11171 = vunpack.c.l.b16 %v11087
        %v11172 = vunpack.c.l.b16 %v11088
        %v11173 = vunpack.c.l.b16 %v11089
        %v11174 = vunpack.c.l.b16 %v11090
        %v11175 = vunpack.c.l.b16 %v11091
        %v11176 = vunpack.c.l.b16 %v11092
        %v11177 = vpack.c.b16 %v11146, %v11145
        %v11178 = vpack.c.b16 %v11148, %v11147
        %v11179 = vpack.c.b16 %v11150, %v11149
        %v11180 = vpack.c.b16 %v11152, %v11151
        %v11181 = vpack.c.b16 %v11154, %v11153
        %v11182 = vpack.c.b16 %v11156, %v11155
        %v11183 = vpack.c.b16 %v11158, %v11157
        %v11184 = vpack.c.b16 %v11160, %v11159
        %v11185 = vpack.c.b16 %v11162, %v11161
        %v11186 = vpack.c.b16 %v11164, %v11163
        %v11187 = vpack.c.b16 %v11166, %v11165
        %v11188 = vpack.c.b16 %v11168, %v11167
        %v11189 = vpack.c.b16 %v11170, %v11169
        %v11190 = vpack.c.b16 %v11172, %v11171
        %v11191 = vpack.c.b16 %v11174, %v11173
        %v11192 = vpack.c.b16 %v11176, %v11175
        %v11225 = vunpack.c.l.b16 %v11093
        %v11226 = vunpack.c.l.b16 %v11094
        %v11227 = vunpack.c.l.b16 %v11095
        %v11228 = vunpack.c.l.b16 %v11096
        %v11229 = vunpack.c.l.b16 %v11097
        %v11230 = vunpack.c.l.b16 %v11098
        %v11231 = vunpack.c.l.b16 %v11099
        %v11232 = vunpack.c.l.b16 %v11100
        %v11233 = vunpack.c.l.b16 %v11101
        %v11234 = vunpack.c.l.b16 %v11102
        %v11235 = vunpack.c.l.b16 %v11103
        %v11236 = vunpack.c.l.b16 %v11104
        %v11237 = vunpack.c.l.b16 %v11105
        %v11238 = vunpack.c.l.b16 %v11106
        %v11239 = vunpack.c.l.b16 %v11107
        %v11240 = vunpack.c.l.b16 %v11108
        %v11241 = vpack.c.b16 %v11226, %v11225
        %v11242 = vpack.c.b16 %v11228, %v11227
        %v11243 = vpack.c.b16 %v11230, %v11229
        %v11244 = vpack.c.b16 %v11232, %v11231
        %v11245 = vpack.c.b16 %v11234, %v11233
        %v11246 = vpack.c.b16 %v11236, %v11235
        %v11247 = vpack.c.b16 %v11238, %v11237
        %v11248 = vpack.c.b16 %v11240, %v11239
        %11257 = vmatpush.bf16.msra.mxu0 %v11248
        %11258 = vmatpush.bf16.msra.mxu0 %v11247
        %11259 = vmatpush.bf16.msra.mxu0 %v11246
        %11260 = vmatpush.bf16.msra.mxu0 %v11245
        %11261 = vmatpush.bf16.msra.mxu0 %v11244
        %11262 = vmatpush.bf16.msra.mxu0 %v11243
        %11263 = vmatpush.bf16.msra.mxu0 %v11242
        %11264 = vmatpush.bf16.msra.mxu0 %v11241
        %11265 = vmatmul.bf16.gmra.mxu0 %v11177
        %v11266 = vpop.f32.mrf.mxu0
        %v11267 = vadd.f32 %v11111, %v11266
        %v11268 = vpop.f32.mrf.mxu0
        %v11269 = vadd.f32 %v11111, %v11268
        %11270 = vmatmul.bf16.gmra.mxu0 %v11178
        %v11271 = vpop.f32.mrf.mxu0
        %v11272 = vadd.f32 %v11111, %v11271
        %v11273 = vpop.f32.mrf.mxu0
        %v11274 = vadd.f32 %v11111, %v11273
        %11275 = vmatmul.bf16.gmra.mxu0 %v11179
        %v11276 = vpop.f32.mrf.mxu0
        %v11277 = vadd.f32 %v11111, %v11276
        %v11278 = vpop.f32.mrf.mxu0
        %v11279 = vadd.f32 %v11111, %v11278
        %11280 = vmatmul.bf16.gmra.mxu0 %v11180
        %v11281 = vpop.f32.mrf.mxu0
        %v11282 = vadd.f32 %v11111, %v11281
        %v11283 = vpop.f32.mrf.mxu0
        %v11284 = vadd.f32 %v11111, %v11283
        %11285 = vmatmul.bf16.gmra.mxu0 %v11181
        %v11286 = vpop.f32.mrf.mxu0
        %v11287 = vadd.f32 %v11111, %v11286
        %v11288 = vpop.f32.mrf.mxu0
        %v11289 = vadd.f32 %v11111, %v11288
        %11290 = vmatmul.bf16.gmra.mxu0 %v11182
        %v11291 = vpop.f32.mrf.mxu0
        %v11292 = vadd.f32 %v11111, %v11291
        %v11293 = vpop.f32.mrf.mxu0
        %v11294 = vadd.f32 %v11111, %v11293
        %11295 = vmatmul.bf16.gmra.mxu0 %v11183
        %v11296 = vpop.f32.mrf.mxu0
        %v11297 = vadd.f32 %v11111, %v11296
        %v11298 = vpop.f32.mrf.mxu0
        %v11299 = vadd.f32 %v11111, %v11298
        %11300 = vmatmul.bf16.gmra.mxu0 %v11184
        %v11301 = vpop.f32.mrf.mxu0
        %v11302 = vadd.f32 %v11111, %v11301
        %v11303 = vpop.f32.mrf.mxu0
        %v11304 = vadd.f32 %v11111, %v11303
        %11305 = vmatmul.bf16.gmra.mxu0 %v11185
        %v11306 = vpop.f32.mrf.mxu0
        %v11307 = vadd.f32 %v11111, %v11306
        %v11308 = vpop.f32.mrf.mxu0
        %v11309 = vadd.f32 %v11111, %v11308
        %11310 = vmatmul.bf16.gmra.mxu0 %v11186
        %v11311 = vpop.f32.mrf.mxu0
        %v11312 = vadd.f32 %v11111, %v11311
        %v11313 = vpop.f32.mrf.mxu0
        %v11314 = vadd.f32 %v11111, %v11313
        %11315 = vmatmul.bf16.gmra.mxu0 %v11187
        %v11316 = vpop.f32.mrf.mxu0
        %v11317 = vadd.f32 %v11111, %v11316
        %v11318 = vpop.f32.mrf.mxu0
        %v11319 = vadd.f32 %v11111, %v11318
        %11320 = vmatmul.bf16.gmra.mxu0 %v11188
        %v11321 = vpop.f32.mrf.mxu0
        %v11322 = vadd.f32 %v11111, %v11321
        %v11323 = vpop.f32.mrf.mxu0
        %v11324 = vadd.f32 %v11111, %v11323
        %11325 = vmatmul.bf16.gmra.mxu0 %v11189
        %v11326 = vpop.f32.mrf.mxu0
        %v11327 = vadd.f32 %v11111, %v11326
        %v11328 = vpop.f32.mrf.mxu0
        %v11329 = vadd.f32 %v11111, %v11328
        %11330 = vmatmul.bf16.gmra.mxu0 %v11190
        %v11331 = vpop.f32.mrf.mxu0
        %v11332 = vadd.f32 %v11111, %v11331
        %v11333 = vpop.f32.mrf.mxu0
        %v11334 = vadd.f32 %v11111, %v11333
        %11335 = vmatmul.bf16.gmra.mxu0 %v11191
        %v11336 = vpop.f32.mrf.mxu0
        %v11337 = vadd.f32 %v11111, %v11336
        %v11338 = vpop.f32.mrf.mxu0
        %v11339 = vadd.f32 %v11111, %v11338
        %11340 = vmatmul.bf16.gmra.mxu0 %v11192
        %v11341 = vpop.f32.mrf.mxu0
        %v11342 = vadd.f32 %v11111, %v11341
        %v11343 = vpop.f32.mrf.mxu0
        %v11344 = vadd.f32 %v11111, %v11343
        %11345 = vdwg.mxu0
        %v11346 = vmul.f32 %v11267, 0.5
        %v11347 = vmul.f32 %v11269, 0.5
        %v11348 = vmul.f32 %v11272, 0.5
        %v11349 = vmul.f32 %v11274, 0.5
        %v11350 = vmul.f32 %v11277, 0.5
        %v11351 = vmul.f32 %v11279, 0.5
        %v11352 = vmul.f32 %v11282, 0.5
        %v11353 = vmul.f32 %v11284, 0.5
        %v11354 = vmul.f32 %v11287, 0.5
        %v11355 = vmul.f32 %v11289, 0.5
        %v11356 = vmul.f32 %v11292, 0.5
        %v11357 = vmul.f32 %v11294, 0.5
        %v11358 = vmul.f32 %v11297, 0.5
        %v11359 = vmul.f32 %v11299, 0.5
        %v11360 = vmul.f32 %v11302, 0.5
        %v11361 = vmul.f32 %v11304, 0.5
        %v11362 = vmul.f32 %v11307, 0.5
        %v11363 = vmul.f32 %v11309, 0.5
        %v11364 = vmul.f32 %v11312, 0.5
        %v11365 = vmul.f32 %v11314, 0.5
        %v11366 = vmul.f32 %v11317, 0.5
        %v11367 = vmul.f32 %v11319, 0.5
        %v11368 = vmul.f32 %v11322, 0.5
        %v11369 = vmul.f32 %v11324, 0.5
        %v11370 = vmul.f32 %v11327, 0.5
        %v11371 = vmul.f32 %v11329, 0.5
        %v11372 = vmul.f32 %v11332, 0.5
        %v11373 = vmul.f32 %v11334, 0.5
        %v11374 = vmul.f32 %v11337, 0.5
        %v11375 = vmul.f32 %v11339, 0.5
        %v11376 = vmul.f32 %v11342, 0.5
        %v11377 = vmul.f32 %v11344, 0.5
        %v11378 = vtanh.pop %v11346
        %v11379 = vtanh.pop %v11347
        %v11380 = vtanh.pop %v11348
        %v11381 = vtanh.pop %v11349
        %v11382 = vtanh.pop %v11350
        %v11383 = vtanh.pop %v11351
        %v11384 = vtanh.pop %v11352
        %v11385 = vtanh.pop %v11353
        %v11386 = vtanh.pop %v11354
        %v11387 = vtanh.pop %v11355
        %v11388 = vtanh.pop %v11356
        %v11389 = vtanh.pop %v11357
        %v11390 = vtanh.pop %v11358
        %v11391 = vtanh.pop %v11359
        %v11392 = vtanh.pop %v11360
        %v11393 = vtanh.pop %v11361
        %v11394 = vtanh.pop %v11362
        %v11395 = vtanh.pop %v11363
        %v11396 = vtanh.pop %v11364
        %v11397 = vtanh.pop %v11365
        %v11398 = vtanh.pop %v11366
        %v11399 = vtanh.pop %v11367
        %v11400 = vtanh.pop %v11368
        %v11401 = vtanh.pop %v11369
        %v11402 = vtanh.pop %v11370
        %v11403 = vtanh.pop %v11371
        %v11404 = vtanh.pop %v11372
        %v11405 = vtanh.pop %v11373
        %v11406 = vtanh.pop %v11374
        %v11407 = vtanh.pop %v11375
        %v11408 = vtanh.pop %v11376
        %v11409 = vtanh.pop %v11377
        %v11410 = vadd.f32 %v11378, 1.0
        %v11411 = vadd.f32 %v11379, 1.0
        %v11412 = vadd.f32 %v11380, 1.0
        %v11413 = vadd.f32 %v11381, 1.0
        %v11414 = vadd.f32 %v11382, 1.0
        %v11415 = vadd.f32 %v11383, 1.0
        %v11416 = vadd.f32 %v11384, 1.0
        %v11417 = vadd.f32 %v11385, 1.0
        %v11418 = vadd.f32 %v11386, 1.0
        %v11419 = vadd.f32 %v11387, 1.0
        %v11420 = vadd.f32 %v11388, 1.0
        %v11421 = vadd.f32 %v11389, 1.0
        %v11422 = vadd.f32 %v11390, 1.0
        %v11423 = vadd.f32 %v11391, 1.0
        %v11424 = vadd.f32 %v11392, 1.0
        %v11425 = vadd.f32 %v11393, 1.0
        %v11426 = vadd.f32 %v11394, 1.0
        %v11427 = vadd.f32 %v11395, 1.0
        %v11428 = vadd.f32 %v11396, 1.0
        %v11429 = vadd.f32 %v11397, 1.0
        %v11430 = vadd.f32 %v11398, 1.0
        %v11431 = vadd.f32 %v11399, 1.0
        %v11432 = vadd.f32 %v11400, 1.0
        %v11433 = vadd.f32 %v11401, 1.0
        %v11434 = vadd.f32 %v11402, 1.0
        %v11435 = vadd.f32 %v11403, 1.0
        %v11436 = vadd.f32 %v11404, 1.0
        %v11437 = vadd.f32 %v11405, 1.0
        %v11438 = vadd.f32 %v11406, 1.0
        %v11439 = vadd.f32 %v11407, 1.0
        %v11440 = vadd.f32 %v11408, 1.0
        %v11441 = vadd.f32 %v11409, 1.0
        %v11442 = vmul.f32 %v11410, 0.5
        %v11443 = vmul.f32 %v11411, 0.5
        %v11444 = vmul.f32 %v11412, 0.5
        %v11445 = vmul.f32 %v11413, 0.5
        %v11446 = vmul.f32 %v11414, 0.5
        %v11447 = vmul.f32 %v11415, 0.5
        %v11448 = vmul.f32 %v11416, 0.5
        %v11449 = vmul.f32 %v11417, 0.5
        %v11450 = vmul.f32 %v11418, 0.5
        %v11451 = vmul.f32 %v11419, 0.5
        %v11452 = vmul.f32 %v11420, 0.5
        %v11453 = vmul.f32 %v11421, 0.5
        %v11454 = vmul.f32 %v11422, 0.5
        %v11455 = vmul.f32 %v11423, 0.5
        %v11456 = vmul.f32 %v11424, 0.5
        %v11457 = vmul.f32 %v11425, 0.5
        %v11458 = vmul.f32 %v11426, 0.5
        %v11459 = vmul.f32 %v11427, 0.5
        %v11460 = vmul.f32 %v11428, 0.5
        %v11461 = vmul.f32 %v11429, 0.5
        %v11462 = vmul.f32 %v11430, 0.5
        %v11463 = vmul.f32 %v11431, 0.5
        %v11464 = vmul.f32 %v11432, 0.5
        %v11465 = vmul.f32 %v11433, 0.5
        %v11466 = vmul.f32 %v11434, 0.5
        %v11467 = vmul.f32 %v11435, 0.5
        %v11468 = vmul.f32 %v11436, 0.5
        %v11469 = vmul.f32 %v11437, 0.5
        %v11470 = vmul.f32 %v11438, 0.5
        %v11471 = vmul.f32 %v11439, 0.5
        %v11472 = vmul.f32 %v11440, 0.5
        %v11473 = vmul.f32 %v11441, 0.5
        %v11474 = vadd.f32 %v11442, 1.0
        %v11475 = vlog2.pop %v11474
        %v11476 = vmul.f32 %v11475, 0.6931472
        %v11477 = vmul.f32 -0.5, %v11442
        %v11478 = vadd.f32 %v11477, 1.0
        %v11479 = vmul.f32 %v11478, %v11442
        %v11480 = vand.u32 2147483647, %v11442
        %vm11481 = vcmp.lt.f32.partialorder %v11480, 0.0004427343
        %v11482 = vsel %vm11481, %v11479, %v11476
        %v11483 = vadd.f32 %v11443, 1.0
        %v11484 = vlog2.pop %v11483
        %v11485 = vmul.f32 %v11484, 0.6931472
        %v11486 = vmul.f32 -0.5, %v11443
        %v11487 = vadd.f32 %v11486, 1.0
        %v11488 = vmul.f32 %v11487, %v11443
        %v11489 = vand.u32 2147483647, %v11443
        %vm11490 = vcmp.lt.f32.partialorder %v11489, 0.0004427343
        %v11491 = vsel %vm11490, %v11488, %v11485
        %v11492 = vadd.f32 %v11444, 1.0
        %v11493 = vlog2.pop %v11492
        %v11494 = vmul.f32 %v11493, 0.6931472
        %v11495 = vmul.f32 -0.5, %v11444
        %v11496 = vadd.f32 %v11495, 1.0
        %v11497 = vmul.f32 %v11496, %v11444
        %v11498 = vand.u32 2147483647, %v11444
        %vm11499 = vcmp.lt.f32.partialorder %v11498, 0.0004427343
        %v11500 = vsel %vm11499, %v11497, %v11494
        %v11501 = vadd.f32 %v11445, 1.0
        %v11502 = vlog2.pop %v11501
        %v11503 = vmul.f32 %v11502, 0.6931472
        %v11504 = vmul.f32 -0.5, %v11445
        %v11505 = vadd.f32 %v11504, 1.0
        %v11506 = vmul.f32 %v11505, %v11445
        %v11507 = vand.u32 2147483647, %v11445
        %vm11508 = vcmp.lt.f32.partialorder %v11507, 0.0004427343
        %v11509 = vsel %vm11508, %v11506, %v11503
        %v11510 = vadd.f32 %v11446, 1.0
        %v11511 = vlog2.pop %v11510
        %v11512 = vmul.f32 %v11511, 0.6931472
        %v11513 = vmul.f32 -0.5, %v11446
        %v11514 = vadd.f32 %v11513, 1.0
        %v11515 = vmul.f32 %v11514, %v11446
        %v11516 = vand.u32 2147483647, %v11446
        %vm11517 = vcmp.lt.f32.partialorder %v11516, 0.0004427343
        %v11518 = vsel %vm11517, %v11515, %v11512
        %v11519 = vadd.f32 %v11447, 1.0
        %v11520 = vlog2.pop %v11519
        %v11521 = vmul.f32 %v11520, 0.6931472
        %v11522 = vmul.f32 -0.5, %v11447
        %v11523 = vadd.f32 %v11522, 1.0
        %v11524 = vmul.f32 %v11523, %v11447
        %v11525 = vand.u32 2147483647, %v11447
        %vm11526 = vcmp.lt.f32.partialorder %v11525, 0.0004427343
        %v11527 = vsel %vm11526, %v11524, %v11521
        %v11528 = vadd.f32 %v11448, 1.0
        %v11529 = vlog2.pop %v11528
        %v11530 = vmul.f32 %v11529, 0.6931472
        %v11531 = vmul.f32 -0.5, %v11448
        %v11532 = vadd.f32 %v11531, 1.0
        %v11533 = vmul.f32 %v11532, %v11448
        %v11534 = vand.u32 2147483647, %v11448
        %vm11535 = vcmp.lt.f32.partialorder %v11534, 0.0004427343
        %v11536 = vsel %vm11535, %v11533, %v11530
        %v11537 = vadd.f32 %v11449, 1.0
        %v11538 = vlog2.pop %v11537
        %v11539 = vmul.f32 %v11538, 0.6931472
        %v11540 = vmul.f32 -0.5, %v11449
        %v11541 = vadd.f32 %v11540, 1.0
        %v11542 = vmul.f32 %v11541, %v11449
        %v11543 = vand.u32 2147483647, %v11449
        %vm11544 = vcmp.lt.f32.partialorder %v11543, 0.0004427343
        %v11545 = vsel %vm11544, %v11542, %v11539
        %v11546 = vadd.f32 %v11450, 1.0
        %v11547 = vlog2.pop %v11546
        %v11548 = vmul.f32 %v11547, 0.6931472
        %v11549 = vmul.f32 -0.5, %v11450
        %v11550 = vadd.f32 %v11549, 1.0
        %v11551 = vmul.f32 %v11550, %v11450
        %v11552 = vand.u32 2147483647, %v11450
        %vm11553 = vcmp.lt.f32.partialorder %v11552, 0.0004427343
        %v11554 = vsel %vm11553, %v11551, %v11548
        %v11555 = vadd.f32 %v11451, 1.0
        %v11556 = vlog2.pop %v11555
        %v11557 = vmul.f32 %v11556, 0.6931472
        %v11558 = vmul.f32 -0.5, %v11451
        %v11559 = vadd.f32 %v11558, 1.0
        %v11560 = vmul.f32 %v11559, %v11451
        %v11561 = vand.u32 2147483647, %v11451
        %vm11562 = vcmp.lt.f32.partialorder %v11561, 0.0004427343
        %v11563 = vsel %vm11562, %v11560, %v11557
        %v11564 = vadd.f32 %v11452, 1.0
        %v11565 = vlog2.pop %v11564
        %v11566 = vmul.f32 %v11565, 0.6931472
        %v11567 = vmul.f32 -0.5, %v11452
        %v11568 = vadd.f32 %v11567, 1.0
        %v11569 = vmul.f32 %v11568, %v11452
        %v11570 = vand.u32 2147483647, %v11452
        %vm11571 = vcmp.lt.f32.partialorder %v11570, 0.0004427343
        %v11572 = vsel %vm11571, %v11569, %v11566
        %v11573 = vadd.f32 %v11453, 1.0
        %v11574 = vlog2.pop %v11573
        %v11575 = vmul.f32 %v11574, 0.6931472
        %v11576 = vmul.f32 -0.5, %v11453
        %v11577 = vadd.f32 %v11576, 1.0
        %v11578 = vmul.f32 %v11577, %v11453
        %v11579 = vand.u32 2147483647, %v11453
        %vm11580 = vcmp.lt.f32.partialorder %v11579, 0.0004427343
        %v11581 = vsel %vm11580, %v11578, %v11575
        %v11582 = vadd.f32 %v11454, 1.0
        %v11583 = vlog2.pop %v11582
        %v11584 = vmul.f32 %v11583, 0.6931472
        %v11585 = vmul.f32 -0.5, %v11454
        %v11586 = vadd.f32 %v11585, 1.0
        %v11587 = vmul.f32 %v11586, %v11454
        %v11588 = vand.u32 2147483647, %v11454
        %vm11589 = vcmp.lt.f32.partialorder %v11588, 0.0004427343
        %v11590 = vsel %vm11589, %v11587, %v11584
        %v11591 = vadd.f32 %v11455, 1.0
        %v11592 = vlog2.pop %v11591
        %v11593 = vmul.f32 %v11592, 0.6931472
        %v11594 = vmul.f32 -0.5, %v11455
        %v11595 = vadd.f32 %v11594, 1.0
        %v11596 = vmul.f32 %v11595, %v11455
        %v11597 = vand.u32 2147483647, %v11455
        %vm11598 = vcmp.lt.f32.partialorder %v11597, 0.0004427343
        %v11599 = vsel %vm11598, %v11596, %v11593
        %v11600 = vadd.f32 %v11456, 1.0
        %v11601 = vlog2.pop %v11600
        %v11602 = vmul.f32 %v11601, 0.6931472
        %v11603 = vmul.f32 -0.5, %v11456
        %v11604 = vadd.f32 %v11603, 1.0
        %v11605 = vmul.f32 %v11604, %v11456
        %v11606 = vand.u32 2147483647, %v11456
        %vm11607 = vcmp.lt.f32.partialorder %v11606, 0.0004427343
        %v11608 = vsel %vm11607, %v11605, %v11602
        %v11609 = vadd.f32 %v11457, 1.0
        %v11610 = vlog2.pop %v11609
        %v11611 = vmul.f32 %v11610, 0.6931472
        %v11612 = vmul.f32 -0.5, %v11457
        %v11613 = vadd.f32 %v11612, 1.0
        %v11614 = vmul.f32 %v11613, %v11457
        %v11615 = vand.u32 2147483647, %v11457
        %vm11616 = vcmp.lt.f32.partialorder %v11615, 0.0004427343
        %v11617 = vsel %vm11616, %v11614, %v11611
        %v11618 = vadd.f32 %v11458, 1.0
        %v11619 = vlog2.pop %v11618
        %v11620 = vmul.f32 %v11619, 0.6931472
        %v11621 = vmul.f32 -0.5, %v11458
        %v11622 = vadd.f32 %v11621, 1.0
        %v11623 = vmul.f32 %v11622, %v11458
        %v11624 = vand.u32 2147483647, %v11458
        %vm11625 = vcmp.lt.f32.partialorder %v11624, 0.0004427343
        %v11626 = vsel %vm11625, %v11623, %v11620
        %v11627 = vadd.f32 %v11459, 1.0
        %v11628 = vlog2.pop %v11627
        %v11629 = vmul.f32 %v11628, 0.6931472
        %v11630 = vmul.f32 -0.5, %v11459
        %v11631 = vadd.f32 %v11630, 1.0
        %v11632 = vmul.f32 %v11631, %v11459
        %v11633 = vand.u32 2147483647, %v11459
        %vm11634 = vcmp.lt.f32.partialorder %v11633, 0.0004427343
        %v11635 = vsel %vm11634, %v11632, %v11629
        %v11636 = vadd.f32 %v11460, 1.0
        %v11637 = vlog2.pop %v11636
        %v11638 = vmul.f32 %v11637, 0.6931472
        %v11639 = vmul.f32 -0.5, %v11460
        %v11640 = vadd.f32 %v11639, 1.0
        %v11641 = vmul.f32 %v11640, %v11460
        %v11642 = vand.u32 2147483647, %v11460
        %vm11643 = vcmp.lt.f32.partialorder %v11642, 0.0004427343
        %v11644 = vsel %vm11643, %v11641, %v11638
        %v11645 = vadd.f32 %v11461, 1.0
        %v11646 = vlog2.pop %v11645
        %v11647 = vmul.f32 %v11646, 0.6931472
        %v11648 = vmul.f32 -0.5, %v11461
        %v11649 = vadd.f32 %v11648, 1.0
        %v11650 = vmul.f32 %v11649, %v11461
        %v11651 = vand.u32 2147483647, %v11461
        %vm11652 = vcmp.lt.f32.partialorder %v11651, 0.0004427343
        %v11653 = vsel %vm11652, %v11650, %v11647
        %v11654 = vadd.f32 %v11462, 1.0
        %v11655 = vlog2.pop %v11654
        %v11656 = vmul.f32 %v11655, 0.6931472
        %v11657 = vmul.f32 -0.5, %v11462
        %v11658 = vadd.f32 %v11657, 1.0
        %v11659 = vmul.f32 %v11658, %v11462
        %v11660 = vand.u32 2147483647, %v11462
        %vm11661 = vcmp.lt.f32.partialorder %v11660, 0.0004427343
        %v11662 = vsel %vm11661, %v11659, %v11656
        %v11663 = vadd.f32 %v11463, 1.0
        %v11664 = vlog2.pop %v11663
        %v11665 = vmul.f32 %v11664, 0.6931472
        %v11666 = vmul.f32 -0.5, %v11463
        %v11667 = vadd.f32 %v11666, 1.0
        %v11668 = vmul.f32 %v11667, %v11463
        %v11669 = vand.u32 2147483647, %v11463
        %vm11670 = vcmp.lt.f32.partialorder %v11669, 0.0004427343
        %v11671 = vsel %vm11670, %v11668, %v11665
        %v11672 = vadd.f32 %v11464, 1.0
        %v11673 = vlog2.pop %v11672
        %v11674 = vmul.f32 %v11673, 0.6931472
        %v11675 = vmul.f32 -0.5, %v11464
        %v11676 = vadd.f32 %v11675, 1.0
        %v11677 = vmul.f32 %v11676, %v11464
        %v11678 = vand.u32 2147483647, %v11464
        %vm11679 = vcmp.lt.f32.partialorder %v11678, 0.0004427343
        %v11680 = vsel %vm11679, %v11677, %v11674
        %v11681 = vadd.f32 %v11465, 1.0
        %v11682 = vlog2.pop %v11681
        %v11683 = vmul.f32 %v11682, 0.6931472
        %v11684 = vmul.f32 -0.5, %v11465
        %v11685 = vadd.f32 %v11684, 1.0
        %v11686 = vmul.f32 %v11685, %v11465
        %v11687 = vand.u32 2147483647, %v11465
        %vm11688 = vcmp.lt.f32.partialorder %v11687, 0.0004427343
        %v11689 = vsel %vm11688, %v11686, %v11683
        %v11690 = vadd.f32 %v11466, 1.0
        %v11691 = vlog2.pop %v11690
        %v11692 = vmul.f32 %v11691, 0.6931472
        %v11693 = vmul.f32 -0.5, %v11466
        %v11694 = vadd.f32 %v11693, 1.0
        %v11695 = vmul.f32 %v11694, %v11466
        %v11696 = vand.u32 2147483647, %v11466
        %vm11697 = vcmp.lt.f32.partialorder %v11696, 0.0004427343
        %v11698 = vsel %vm11697, %v11695, %v11692
        %v11699 = vadd.f32 %v11467, 1.0
        %v11700 = vlog2.pop %v11699
        %v11701 = vmul.f32 %v11700, 0.6931472
        %v11702 = vmul.f32 -0.5, %v11467
        %v11703 = vadd.f32 %v11702, 1.0
        %v11704 = vmul.f32 %v11703, %v11467
        %v11705 = vand.u32 2147483647, %v11467
        %vm11706 = vcmp.lt.f32.partialorder %v11705, 0.0004427343
        %v11707 = vsel %vm11706, %v11704, %v11701
        %v11708 = vadd.f32 %v11468, 1.0
        %v11709 = vlog2.pop %v11708
        %v11710 = vmul.f32 %v11709, 0.6931472
        %v11711 = vmul.f32 -0.5, %v11468
        %v11712 = vadd.f32 %v11711, 1.0
        %v11713 = vmul.f32 %v11712, %v11468
        %v11714 = vand.u32 2147483647, %v11468
        %vm11715 = vcmp.lt.f32.partialorder %v11714, 0.0004427343
        %v11716 = vsel %vm11715, %v11713, %v11710
        %v11717 = vadd.f32 %v11469, 1.0
        %v11718 = vlog2.pop %v11717
        %v11719 = vmul.f32 %v11718, 0.6931472
        %v11720 = vmul.f32 -0.5, %v11469
        %v11721 = vadd.f32 %v11720, 1.0
        %v11722 = vmul.f32 %v11721, %v11469
        %v11723 = vand.u32 2147483647, %v11469
        %vm11724 = vcmp.lt.f32.partialorder %v11723, 0.0004427343
        %v11725 = vsel %vm11724, %v11722, %v11719
        %v11726 = vadd.f32 %v11470, 1.0
        %v11727 = vlog2.pop %v11726
        %v11728 = vmul.f32 %v11727, 0.6931472
        %v11729 = vmul.f32 -0.5, %v11470
        %v11730 = vadd.f32 %v11729, 1.0
        %v11731 = vmul.f32 %v11730, %v11470
        %v11732 = vand.u32 2147483647, %v11470
        %vm11733 = vcmp.lt.f32.partialorder %v11732, 0.0004427343
        %v11734 = vsel %vm11733, %v11731, %v11728
        %v11735 = vadd.f32 %v11471, 1.0
        %v11736 = vlog2.pop %v11735
        %v11737 = vmul.f32 %v11736, 0.6931472
        %v11738 = vmul.f32 -0.5, %v11471
        %v11739 = vadd.f32 %v11738, 1.0
        %v11740 = vmul.f32 %v11739, %v11471
        %v11741 = vand.u32 2147483647, %v11471
        %vm11742 = vcmp.lt.f32.partialorder %v11741, 0.0004427343
        %v11743 = vsel %vm11742, %v11740, %v11737
        %v11744 = vadd.f32 %v11472, 1.0
        %v11745 = vlog2.pop %v11744
        %v11746 = vmul.f32 %v11745, 0.6931472
        %v11747 = vmul.f32 -0.5, %v11472
        %v11748 = vadd.f32 %v11747, 1.0
        %v11749 = vmul.f32 %v11748, %v11472
        %v11750 = vand.u32 2147483647, %v11472
        %vm11751 = vcmp.lt.f32.partialorder %v11750, 0.0004427343
        %v11752 = vsel %vm11751, %v11749, %v11746
        %v11753 = vadd.f32 %v11473, 1.0
        %v11754 = vlog2.pop %v11753
        %v11755 = vmul.f32 %v11754, 0.6931472
        %v11756 = vmul.f32 -0.5, %v11473
        %v11757 = vadd.f32 %v11756, 1.0
        %v11758 = vmul.f32 %v11757, %v11473
        %v11759 = vand.u32 2147483647, %v11473
        %vm11760 = vcmp.lt.f32.partialorder %v11759, 0.0004427343
        %v11761 = vsel %vm11760, %v11758, %v11755
        %v11762 = vtanh.pop %v11482
        %v11763 = vtanh.pop %v11491
        %v11764 = vtanh.pop %v11500
        %v11765 = vtanh.pop %v11509
        %v11766 = vtanh.pop %v11518
        %v11767 = vtanh.pop %v11527
        %v11768 = vtanh.pop %v11536
        %v11769 = vtanh.pop %v11545
        %v11770 = vtanh.pop %v11554
        %v11771 = vtanh.pop %v11563
        %v11772 = vtanh.pop %v11572
        %v11773 = vtanh.pop %v11581
        %v11774 = vtanh.pop %v11590
        %v11775 = vtanh.pop %v11599
        %v11776 = vtanh.pop %v11608
        %v11777 = vtanh.pop %v11617
        %v11778 = vtanh.pop %v11626
        %v11779 = vtanh.pop %v11635
        %v11780 = vtanh.pop %v11644
        %v11781 = vtanh.pop %v11653
        %v11782 = vtanh.pop %v11662
        %v11783 = vtanh.pop %v11671
        %v11784 = vtanh.pop %v11680
        %v11785 = vtanh.pop %v11689
        %v11786 = vtanh.pop %v11698
        %v11787 = vtanh.pop %v11707
        %v11788 = vtanh.pop %v11716
        %v11789 = vtanh.pop %v11725
        %v11790 = vtanh.pop %v11734
        %v11791 = vtanh.pop %v11743
        %v11792 = vtanh.pop %v11752
        %v11793 = vtanh.pop %v11761
        %v11794 = vmul.f32 %v11267, %v11762
        %v11795 = vmul.f32 %v11269, %v11763
        %v11796 = vmul.f32 %v11272, %v11764
        %v11797 = vmul.f32 %v11274, %v11765
        %v11798 = vmul.f32 %v11277, %v11766
        %v11799 = vmul.f32 %v11279, %v11767
        %v11800 = vmul.f32 %v11282, %v11768
        %v11801 = vmul.f32 %v11284, %v11769
        %v11802 = vmul.f32 %v11287, %v11770
        %v11803 = vmul.f32 %v11289, %v11771
        %v11804 = vmul.f32 %v11292, %v11772
        %v11805 = vmul.f32 %v11294, %v11773
        %v11806 = vmul.f32 %v11297, %v11774
        %v11807 = vmul.f32 %v11299, %v11775
        %v11808 = vmul.f32 %v11302, %v11776
        %v11809 = vmul.f32 %v11304, %v11777
        %v11810 = vmul.f32 %v11307, %v11778
        %v11811 = vmul.f32 %v11309, %v11779
        %v11812 = vmul.f32 %v11312, %v11780
        %v11813 = vmul.f32 %v11314, %v11781
        %v11814 = vmul.f32 %v11317, %v11782
        %v11815 = vmul.f32 %v11319, %v11783
        %v11816 = vmul.f32 %v11322, %v11784
        %v11817 = vmul.f32 %v11324, %v11785
        %v11818 = vmul.f32 %v11327, %v11786
        %v11819 = vmul.f32 %v11329, %v11787
        %v11820 = vmul.f32 %v11332, %v11788
        %v11821 = vmul.f32 %v11334, %v11789
        %v11822 = vmul.f32 %v11337, %v11790
        %v11823 = vmul.f32 %v11339, %v11791
        %v11824 = vmul.f32 %v11342, %v11792
        %v11825 = vmul.f32 %v11344, %v11793
        %11826 = vst [vmem:[%s163] sm:$0xff] %v11794
        %11827 = vst [vmem:[%s163 + $0x8] sm:$0xff] %v11795
        %11828 = vst [vmem:[%s163 + $0x10] sm:$0xff] %v11796
        %11829 = vst [vmem:[%s163 + $0x18] sm:$0xff] %v11797
        %11830 = vst [vmem:[%s163 + $0x20] sm:$0xff] %v11798
        %11831 = vst [vmem:[%s163 + $0x28] sm:$0xff] %v11799
        %11832 = vst [vmem:[%s163 + $0x30] sm:$0xff] %v11800
        %11833 = vst [vmem:[%s163 + $0x38] sm:$0xff] %v11801
        %11834 = vst [vmem:[%s163 + $0x40] sm:$0xff] %v11802
        %11835 = vst [vmem:[%s163 + $0x48] sm:$0xff] %v11803
        %11836 = vst [vmem:[%s163 + $0x50] sm:$0xff] %v11804
        %11837 = vst [vmem:[%s163 + $0x58] sm:$0xff] %v11805
        %11838 = vst [vmem:[%s163 + $0x60] sm:$0xff] %v11806
        %11839 = vst [vmem:[%s163 + $0x68] sm:$0xff] %v11807
        %11840 = vst [vmem:[%s163 + $0x70] sm:$0xff] %v11808
        %11841 = vst [vmem:[%s163 + $0x78] sm:$0xff] %v11809
        %11842 = vst [vmem:[%s163 + $0x80] sm:$0xff] %v11810
        %11843 = vst [vmem:[%s163 + $0x88] sm:$0xff] %v11811
        %11844 = vst [vmem:[%s163 + $0x90] sm:$0xff] %v11812
        %11845 = vst [vmem:[%s163 + $0x98] sm:$0xff] %v11813
        %11846 = vst [vmem:[%s163 + $0xa0] sm:$0xff] %v11814
        %11847 = vst [vmem:[%s163 + $0xa8] sm:$0xff] %v11815
        %11848 = vst [vmem:[%s163 + $0xb0] sm:$0xff] %v11816
        %11849 = vst [vmem:[%s163 + $0xb8] sm:$0xff] %v11817
        %11850 = vst [vmem:[%s163 + $0xc0] sm:$0xff] %v11818
        %11851 = vst [vmem:[%s163 + $0xc8] sm:$0xff] %v11819
        %11852 = vst [vmem:[%s163 + $0xd0] sm:$0xff] %v11820
        %11853 = vst [vmem:[%s163 + $0xd8] sm:$0xff] %v11821
        %11854 = vst [vmem:[%s163 + $0xe0] sm:$0xff] %v11822
        %11855 = vst [vmem:[%s163 + $0xe8] sm:$0xff] %v11823
        %11856 = vst [vmem:[%s163 + $0xf0] sm:$0xff] %v11824
        %11857 = vst [vmem:[%s163 + $0xf8] sm:$0xff] %v11825
        %s11858 = sand.u32 %s93, 1
        %s11859 = scalar_lea.sflag [#allocation4], %s11858
        %s11860 = sand.u32 %s93, 1
        %s11861 = smul.addr %s11860, 256
        %s11862 = scalar_lea.vmem [#allocation3], %s11861
        // Predicated region
        $region33: #{tpu_custom_call.1} parent=31 // pred_check
          %p11863 = pneg %p103
        $region34: #{tpu_custom_call.1} parent=31 // pred_check_branch
          %11865 = sbr.rel (%p11863) target = $region36
        $region35: #{tpu_custom_call.1} parent=31 // pred_region
          %s11866 = smul.u32 32, %s17
          %11868 = vsyncadd %s11859, 0
          %s11869 = smul.addr %s11866, 8
          %s11870 = scalar_lea.hbm %s3, %s11869
          %s11871 = sshll.u32 %s11862, 4
          %s11872 = int_to_ptr.vmem [resolvable:$true] %s11871
          %s11873 = sshll.u32 %s11870, 4
          %s11874 = int_to_ptr.hbm [resolvable:$true] %s11873
          %11879 = dma.vmem_to_hbm [thread:$0]  %s11872, 4096, %s11874, %s11859, 128, 128, 8
        $region36: #{tpu_custom_call.1} parent=31 // pred_fallthru
          _
      $region32: #{tpu_custom_call.1} parent=5 // pred_fallthru
        _
      %p11880 = scmp.le.s32.totalorder 2, %s12
      // Predicated region
      $region37: #{tpu_custom_call.1} parent=5 // pred_check
        %p11881 = pneg %p11880
      $region38: #{tpu_custom_call.1} parent=5 // pred_check_branch
        %11883 = sbr.rel (%p11881) target = $region40
      $region39: #{tpu_custom_call.1} parent=5 // pred_region
        %s11884 = ssub.s32 %s12, 2
        // Predicated region
        $region41: #{tpu_custom_call.1} parent=39 // pred_check
          %p11885 = pneg %p109
        $region42: #{tpu_custom_call.1} parent=39 // pred_check_branch
          %11887 = sbr.rel (%p11885) target = $region44
        $region43: #{tpu_custom_call.1} parent=39 // pred_region
          %s11888 = sand.u32 %s94, 1
          %s11889 = scalar_lea.sflag [#allocation4], %s11888
          %s11890 = sand.u32 %s94, 1
          %s11891 = smul.addr %s11890, 256
          %s11892 = scalar_lea.vmem [#allocation3], %s11891
          %11894 = dma.done %s11889, 4096
        $region44: #{tpu_custom_call.1} parent=39 // pred_fallthru
          _
      $region40: #{tpu_custom_call.1} parent=5 // pred_fallthru
        _
    $region6: #{tpu_custom_call.1} parent=1 // loop_footer
      %s16 = sadd.s32 1, %s12
    $region7: #{tpu_custom_call.1} parent=1 // loop_footer_branch
      %11 = sbr.rel target = $region3
    $region8: #{tpu_custom_call.1} parent=1 // loop_exit
      _
    %11895 = vsyncpa [#allocation4], 1
    %s11896 = scalar_lea.sflag [#allocation4], 1
    %11897 = vsyncpa %s11896, 1

</llo_original>
